<compile_context>
chip_gen: v7x
topology: tpu7x:2x2x1
jax: 0.10.0
libtpu: 0.0.40
codegen_flags: <defaults>
</compile_context>

<pallas_src>
import math
import functools

import jax
import jax.numpy as jnp
from jax.experimental import pallas as pl
from jax.experimental.pallas import tpu as pltpu


_LANE = 128


def _round_up(n, m):
    return ((n + m - 1) // m) * m


def _pad2d(a, rows, cols):
    """Zero-pad a 2-D array up to (rows, cols)."""
    return jnp.pad(a, ((0, rows - a.shape[0]), (0, cols - a.shape[1])))


# ----------------------------------------------------------------------------
# Fused Pallas kernel
# ----------------------------------------------------------------------------

def _fused_m2_kernel(
    # data
    x_ref, y_ref, eps_ref,
    # phi_z (recognition net) weights
    wz1x_ref, wz1y_ref, bz1_ref, wz2_ref, bz2_ref,
    wz3m_ref, bz3m_ref, wz3s_ref, bz3s_ref,
    # theta_g (generator net) weights
    wg1z_ref, wg1y_ref, bg1_ref, wg2_ref, bg2_ref, wg3_ref, bg3_ref,
    # phi_y (classifier net) weights
    wy1_ref, by1_ref, wy2_ref, by2_ref, wy3_ref, by3_ref,
    # outputs
    l_ref, ylogits_ref,
    *, dim_y, n_cls_rows):
    """Per-row (row = one (example, label-hypothesis) pair):

         h   = phi_z(x, y)                -> (mu, log_sigma_sq)
         z   = mu + exp(0.5*lss) * eps
         l   = theta_g(z, y)              (Bernoulli logits over pixels)
         L   = -log(dim_y) + sum[x*l - softplus(l)]
               + sum[gaussian_marg(mu,lss) - gaussian_ent(lss)]

       plus phi_y(x) logits for the first `n_cls_rows` rows (x_l then x_u).
    """
    f32 = jnp.float32
    bf16 = jnp.bfloat16

    def mm(a, w_ref):
        # bf16 MXU matmul with f32 accumulation
        return jnp.dot(a.astype(bf16), w_ref[...], preferred_element_type=f32)

    xb = x_ref[...]          # (M, dim_x)  bf16, values in {0, 1}
    yb = y_ref[...]          # (M, dim_y)  bf16, one-hot
    eps = eps_ref[...]       # (M, DZP)    f32, zero-padded past dim_z

    # ---- q(z | x, y): phi_z -------------------------------------------------
    h = jnp.maximum(mm(xb, wz1x_ref) + mm(yb, wz1y_ref) + bz1_ref[...], 0.0)
    h = jnp.maximum(mm(h, wz2_ref) + bz2_ref[...], 0.0)
    mu = mm(h, wz3m_ref) + bz3m_ref[...]           # (M, DZP) f32
    lss = mm(h, wz3s_ref) + bz3s_ref[...]          # (M, DZP) f32

    # Reparameterized sample.
    z = mu + jnp.exp(0.5 * lss) * eps

    # ---- p(x | z, y): theta_g ------------------------------------------------
    g = jnp.maximum(mm(z, wg1z_ref) + mm(yb, wg1y_ref) + bg1_ref[...], 0.0)
    g = jnp.maximum(mm(g, wg2_ref) + bg2_ref[...], 0.0)
    logit = mm(g, wg3_ref) + bg3_ref[...]          # (M, dim_x) f32

    # ---- ELBO term _L ---------------------------------------------------------
    # Bernoulli log-lik in logit space: x*l - softplus(l)   (stable, eps-free)
    softplus = jnp.maximum(logit, 0.0) + jnp.log(1.0 + jnp.exp(-jnp.abs(logit)))
    x32 = xb.astype(f32)
    log_lik = jnp.sum(x32 * logit - softplus, axis=-1, keepdims=True)

    # gaussian_marg(mu,lss) - gaussian_ent(lss), summed over z dims.
    # (log(2*pi) cancels; zero-padded columns have mu = lss = 0 and contribute
    #  exactly 0, so no masking is needed.)
    gauss = 0.5 * jnp.sum(1.0 + lss - mu * mu - jnp.exp(lss),
                          axis=-1, keepdims=True)

    log_prior_y = -math.log(float(dim_y))
    l_per_ex = log_prior_y + log_lik + gauss       # (M, 1)
    # lane-dense store; wrapper reads column 0
    l_ref[...] = jnp.broadcast_to(l_per_ex, l_ref.shape)

    # ---- classifier q(y | x): phi_y on the first n_cls_rows rows -------------
    xc = xb[:n_cls_rows, :]
    p = jnp.maximum(mm(xc, wy1_ref) + by1_ref[...], 0.0)
    p = jnp.maximum(mm(p, wy2_ref) + by2_ref[...], 0.0)
    ylogits_ref[...] = mm(p, wy3_ref) + by3_ref[...]   # (n_cls_rows, 128)


# ----------------------------------------------------------------------------
# Parameter init (deterministic, mimics PyTorch nn.Linear default init)
# ----------------------------------------------------------------------------

def init_linear(key, fan_in, fan_out):
    kw, kb = jax.random.split(key)
    bound = 1.0 / math.sqrt(fan_in)
    w = jax.random.uniform(kw, (fan_in, fan_out), jnp.float32, -bound, bound)
    b = jax.random.uniform(kb, (fan_out,), jnp.float32, -bound, bound)
    return w, b


def init_mlp3(key, dims):
    keys = jax.random.split(key, 3)
    return tuple(init_linear(k, dims[i], dims[i + 1]) for i, k in enumerate(keys))


# ----------------------------------------------------------------------------
# M2 forward pass
# ----------------------------------------------------------------------------

class M2Pallas:
    def __init__(self, key, gamma, num_batches, batch_size,
                 dim_x=28 * 28, dim_z=100, dim_y=10, dim_h=500):
        self.dim_x, self.dim_z, self.dim_y = dim_x, dim_z, dim_y
        self.gamma = float(gamma)
        self.num_batches = num_batches
        self.batch_size = batch_size
        self.hidden_pad = _round_up(dim_h, _LANE)    # 500 -> 512
        self.dim_z_pad = _round_up(dim_z, _LANE)     # 100 -> 128

        k1, k2, k3 = jax.random.split(key, 3)
        theta_g = init_mlp3(k1, (dim_z + dim_y, dim_h, dim_h, dim_x))
        phi_z = init_mlp3(k2, (dim_x + dim_y, dim_h, dim_h, 2 * dim_z))
        phi_y = init_mlp3(k3, (dim_x, dim_h, dim_h, dim_y))

        self.weights = self._pack_weights(theta_g, phi_z, phi_y)
        self._forward = jax.jit(self._forward_impl)

    # -- weight preprocessing: split / zero-pad to lane-aligned, cast to bf16 --
    def _pack_weights(self, theta_g, phi_z, phi_y):
        H, DZP, DYP = self.hidden_pad, self.dim_z_pad, _LANE
        dx, dz, dy = self.dim_x, self.dim_z, self.dim_y
        bf = jnp.bfloat16

        (wz1, bz1), (wz2, bz2), (wz3, bz3) = phi_z
        (wg1, bg1), (wg2, bg2), (wg3, bg3) = theta_g
        (wy1, by1), (wy2, by2), (wy3, by3) = phi_y

        def row(b, n):   # bias -> (1, n) f32, zero-padded
            return _pad2d(b.reshape(1, -1), 1, n)

        return (
            # phi_z: layer1 split into x / y slabs, layer3 split into mu / lss
            _pad2d(wz1[:dx], dx, H).astype(bf),
            _pad2d(wz1[dx:], dy, H).astype(bf),
            row(bz1, H),
            _pad2d(wz2, H, H).astype(bf),
            row(bz2, H),
            _pad2d(wz3[:, :dz], H, DZP).astype(bf),
            row(bz3[:dz], DZP),
            _pad2d(wz3[:, dz:], H, DZP).astype(bf),
            row(bz3[dz:], DZP),
            # theta_g: layer1 split into z / y slabs
            _pad2d(wg1[:dz], DZP, H).astype(bf),
            _pad2d(wg1[dz:], dy, H).astype(bf),
            row(bg1, H),
            _pad2d(wg2, H, H).astype(bf),
            row(bg2, H),
            _pad2d(wg3, H, dx).astype(bf),     # output dim (784) kept exact
            row(bg3, dx),
            # phi_y: output lane-padded 10 -> 128 (padded logits are exactly 0)
            _pad2d(wy1, dx, H).astype(bf),
            row(by1, H),
            _pad2d(wy2, H, H).astype(bf),
            row(by2, H),
            _pad2d(wy3, H, DYP).astype(bf),
            row(by3, DYP),
        )

    # -- one fused pallas_call for the whole forward's heavy compute ----------
    def _fused_call(self, x_stack, y_stack, eps, n_cls_rows):
        M = x_stack.shape[0]
        vmem = pl.BlockSpec(memory_space=pltpu.MemorySpace.VMEM)
        kernel = functools.partial(
            _fused_m2_kernel, dim_y=self.dim_y, n_cls_rows=n_cls_rows)
        out_shape = (
            jax.ShapeDtypeStruct((M, _LANE), jnp.float32),         # per-row L
            jax.ShapeDtypeStruct((n_cls_rows, _LANE), jnp.float32),  # phi_y logits
        )
        l_all, ylogits = pl.pallas_call(
            kernel,
            out_shape=out_shape,
            in_specs=[vmem] * (3 + len(self.weights)),
            out_specs=(vmem, vmem),
            compiler_params=pltpu.CompilerParams(
                vmem_limit_bytes=32 * 1024 * 1024),
        )(x_stack, y_stack, eps, *self.weights)
        return l_all[:, 0], ylogits[:, : self.dim_y]

    # -- full forward ----------------------------------------------------------
    def _forward_impl(self, key, x_l_p, y_l, x_u_p):
        B = x_l_p.shape[0]
        dy, dz = self.dim_y, self.dim_z
        k_bl, k_bu, k_eps = jax.random.split(key, 3)

        # torch.bernoulli equivalents (pixel binarization)
        x_l = (jax.random.uniform(k_bl, x_l_p.shape) < x_l_p).astype(jnp.float32)
        x_u = (jax.random.uniform(k_bu, x_u_p.shape) < x_u_p).astype(jnp.float32)

        # Stack labeled branch + all dim_y label hypotheses of the unlabeled
        # branch into one mega-batch: rows [0,B) = (x_l, y_l);
        # rows [B + label*B + b] = (x_u[b], e_label).
        x_stack = jnp.concatenate([x_l, jnp.tile(x_u, (dy, 1))], axis=0)
        y_stack = jnp.concatenate(
            [y_l, jnp.repeat(jnp.eye(dy, dtype=jnp.float32), B, axis=0)], axis=0)
        M = x_stack.shape[0]

        eps = jax.random.normal(k_eps, (M, dz), jnp.float32)
        eps = jnp.pad(eps, ((0, 0), (0, self.dim_z_pad - dz)))

        l_per, ylogits = self._fused_call(
            x_stack.astype(jnp.bfloat16),
            y_stack.astype(jnp.bfloat16),
            eps,
            n_cls_rows=2 * B,
        )

        # ---- labeled branch -------------------------------------------------
        L_l = jnp.sum(l_per[:B])
        logp = jax.nn.log_softmax(ylogits, axis=1)              # (2B, dim_y)
        D_l = jnp.sum(logp[:B] * y_l)                           # -sum CE

        # ---- unlabeled branch -----------------------------------------------
        logp_u = logp[B:]                                        # (B, dim_y)
        y_u = jnp.exp(logp_u)                                    # softmax
        L_lhat = jnp.transpose(jnp.reshape(l_per[B:], (dy, B)))  # (B, dim_y)
        L_u = jnp.sum(y_u * (L_lhat - logp_u))

        L_tot = L_l + self.gamma * D_l + L_u
        return -L_tot / self.batch_size

    def forward(self, key, x_l_p, y_l, x_u_p):
        return self._forward(key, x_l_p, y_l, x_u_p)

    # TODO(synk): predict() / marginal-likelihood path not implemented (only
    # the training forward pass is required here).


# ----------------------------------------------------------------------------
if __name__ == "__main__":
    batch_size = 8
    dim_x, dim_z, dim_y = 28 * 28, 100, 10
    gamma = 1.0

    root = jax.random.PRNGKey(0)
    k_params, k_data, k_fwd = jax.random.split(root, 3)

    model = M2Pallas(k_params, gamma=gamma, num_batches=1,
                     batch_size=batch_size, dim_x=dim_x, dim_z=dim_z, dim_y=dim_y)

    kx1, ky, kx2 = jax.random.split(k_data, 3)
    x_l_p = jax.random.uniform(kx1, (batch_size, dim_x), jnp.float32)
    x_u_p = jax.random.uniform(kx2, (batch_size, dim_x), jnp.float32)
    labels = jax.random.randint(ky, (batch_size,), 0, dim_y)
    y_l = jax.nn.one_hot(labels, dim_y, dtype=jnp.float32)

    loss = model.forward(k_fwd, x_l_p, y_l, x_u_p)
    loss = jax.block_until_ready(loss)
    assert jnp.isfinite(loss), loss
    print("KERNEL_OK")
</pallas_src>

<mosaic_0001>
module attributes {stable_mosaic.version = 11 : i64} {
  func.func @_fused_m2_kernel(%arg0: memref<88x784xbf16, #tpu.memory_space<vmem>>, %arg1: memref<88x10xbf16, #tpu.memory_space<vmem>>, %arg2: memref<88x128xf32, #tpu.memory_space<vmem>>, %arg3: memref<784x512xbf16, #tpu.memory_space<vmem>>, %arg4: memref<10x512xbf16, #tpu.memory_space<vmem>>, %arg5: memref<1x512xf32, #tpu.memory_space<vmem>>, %arg6: memref<512x512xbf16, #tpu.memory_space<vmem>>, %arg7: memref<1x512xf32, #tpu.memory_space<vmem>>, %arg8: memref<512x128xbf16, #tpu.memory_space<vmem>>, %arg9: memref<1x128xf32, #tpu.memory_space<vmem>>, %arg10: memref<512x128xbf16, #tpu.memory_space<vmem>>, %arg11: memref<1x128xf32, #tpu.memory_space<vmem>>, %arg12: memref<128x512xbf16, #tpu.memory_space<vmem>>, %arg13: memref<10x512xbf16, #tpu.memory_space<vmem>>, %arg14: memref<1x512xf32, #tpu.memory_space<vmem>>, %arg15: memref<512x512xbf16, #tpu.memory_space<vmem>>, %arg16: memref<1x512xf32, #tpu.memory_space<vmem>>, %arg17: memref<512x784xbf16, #tpu.memory_space<vmem>>, %arg18: memref<1x784xf32, #tpu.memory_space<vmem>>, %arg19: memref<784x512xbf16, #tpu.memory_space<vmem>>, %arg20: memref<1x512xf32, #tpu.memory_space<vmem>>, %arg21: memref<512x512xbf16, #tpu.memory_space<vmem>>, %arg22: memref<1x512xf32, #tpu.memory_space<vmem>>, %arg23: memref<512x128xbf16, #tpu.memory_space<vmem>>, %arg24: memref<1x128xf32, #tpu.memory_space<vmem>>, %arg25: memref<88x128xf32, #tpu.memory_space<vmem>>, %arg26: memref<16x128xf32, #tpu.memory_space<vmem>>) attributes {dimension_semantics = [], scalar_prefetch = 0 : i64, scratch_operands = 0 : i64, tpu.core_type = #tpu.core_type<tc>} {
    %c0 = arith.constant 0 : index
    %c0_0 = arith.constant 0 : index
    %0 = vector.load %arg0[%c0, %c0_0] : memref<88x784xbf16, #tpu.memory_space<vmem>>, vector<88x784xbf16>
    %c0_1 = arith.constant 0 : index
    %c0_2 = arith.constant 0 : index
    %1 = vector.load %arg1[%c0_1, %c0_2] : memref<88x10xbf16, #tpu.memory_space<vmem>>, vector<88x10xbf16>
    %c0_3 = arith.constant 0 : index
    %c0_4 = arith.constant 0 : index
    %2 = vector.load %arg2[%c0_3, %c0_4] : memref<88x128xf32, #tpu.memory_space<vmem>>, vector<88x128xf32>
    %c0_5 = arith.constant 0 : index
    %c0_6 = arith.constant 0 : index
    %3 = vector.load %arg3[%c0_5, %c0_6] : memref<784x512xbf16, #tpu.memory_space<vmem>>, vector<784x512xbf16>
    %cst = arith.constant dense<0.000000e+00> : vector<88x512xf32>
    %4 = tpu.matmul %0, %3, %cst {dimension_numbers = #tpu.dot_dimension_numbers<[1], [0], [0], [1], [0, 0, 1, 1], [], []>} : vector<88x784xbf16>, vector<784x512xbf16>, vector<88x512xf32> -> vector<88x512xf32>
    %c0_7 = arith.constant 0 : index
    %c0_8 = arith.constant 0 : index
    %5 = vector.load %arg4[%c0_7, %c0_8] : memref<10x512xbf16, #tpu.memory_space<vmem>>, vector<10x512xbf16>
    %cst_9 = arith.constant dense<0.000000e+00> : vector<88x512xf32>
    %6 = tpu.matmul %1, %5, %cst_9 {dimension_numbers = #tpu.dot_dimension_numbers<[1], [0], [0], [1], [0, 0, 1, 1], [], []>} : vector<88x10xbf16>, vector<10x512xbf16>, vector<88x512xf32> -> vector<88x512xf32>
    %7 = arith.addf %4, %6 : vector<88x512xf32>
    %c0_10 = arith.constant 0 : index
    %c0_11 = arith.constant 0 : index
    %8 = vector.load %arg5[%c0_10, %c0_11] : memref<1x512xf32, #tpu.memory_space<vmem>>, vector<1x512xf32>
    %9 = vector.broadcast %8 : vector<1x512xf32> to vector<88x512xf32>
    %10 = arith.addf %7, %9 : vector<88x512xf32>
    %cst_12 = arith.constant 0.000000e+00 : f32
    %11 = vector.broadcast %cst_12 : f32 to vector<88x512xf32>
    %12 = arith.maximumf %10, %11 : vector<88x512xf32>
    %13 = arith.truncf %12 : vector<88x512xf32> to vector<88x512xbf16>
    %c0_13 = arith.constant 0 : index
    %c0_14 = arith.constant 0 : index
    %14 = vector.load %arg6[%c0_13, %c0_14] : memref<512x512xbf16, #tpu.memory_space<vmem>>, vector<512x512xbf16>
    %cst_15 = arith.constant dense<0.000000e+00> : vector<88x512xf32>
    %15 = tpu.matmul %13, %14, %cst_15 {dimension_numbers = #tpu.dot_dimension_numbers<[1], [0], [0], [1], [0, 0, 1, 1], [], []>} : vector<88x512xbf16>, vector<512x512xbf16>, vector<88x512xf32> -> vector<88x512xf32>
    %c0_16 = arith.constant 0 : index
    %c0_17 = arith.constant 0 : index
    %16 = vector.load %arg7[%c0_16, %c0_17] : memref<1x512xf32, #tpu.memory_space<vmem>>, vector<1x512xf32>
    %17 = vector.broadcast %16 : vector<1x512xf32> to vector<88x512xf32>
    %18 = arith.addf %15, %17 : vector<88x512xf32>
    %cst_18 = arith.constant 0.000000e+00 : f32
    %19 = vector.broadcast %cst_18 : f32 to vector<88x512xf32>
    %20 = arith.maximumf %18, %19 : vector<88x512xf32>
    %21 = arith.truncf %20 : vector<88x512xf32> to vector<88x512xbf16>
    %c0_19 = arith.constant 0 : index
    %c0_20 = arith.constant 0 : index
    %22 = vector.load %arg8[%c0_19, %c0_20] : memref<512x128xbf16, #tpu.memory_space<vmem>>, vector<512x128xbf16>
    %cst_21 = arith.constant dense<0.000000e+00> : vector<88x128xf32>
    %23 = tpu.matmul %21, %22, %cst_21 {dimension_numbers = #tpu.dot_dimension_numbers<[1], [0], [0], [1], [0, 0, 1, 1], [], []>} : vector<88x512xbf16>, vector<512x128xbf16>, vector<88x128xf32> -> vector<88x128xf32>
    %c0_22 = arith.constant 0 : index
    %c0_23 = arith.constant 0 : index
    %24 = vector.load %arg9[%c0_22, %c0_23] : memref<1x128xf32, #tpu.memory_space<vmem>>, vector<1x128xf32>
    %25 = vector.broadcast %24 : vector<1x128xf32> to vector<88x128xf32>
    %26 = arith.addf %23, %25 : vector<88x128xf32>
    %27 = arith.truncf %20 : vector<88x512xf32> to vector<88x512xbf16>
    %c0_24 = arith.constant 0 : index
    %c0_25 = arith.constant 0 : index
    %28 = vector.load %arg10[%c0_24, %c0_25] : memref<512x128xbf16, #tpu.memory_space<vmem>>, vector<512x128xbf16>
    %cst_26 = arith.constant dense<0.000000e+00> : vector<88x128xf32>
    %29 = tpu.matmul %27, %28, %cst_26 {dimension_numbers = #tpu.dot_dimension_numbers<[1], [0], [0], [1], [0, 0, 1, 1], [], []>} : vector<88x512xbf16>, vector<512x128xbf16>, vector<88x128xf32> -> vector<88x128xf32>
    %c0_27 = arith.constant 0 : index
    %c0_28 = arith.constant 0 : index
    %30 = vector.load %arg11[%c0_27, %c0_28] : memref<1x128xf32, #tpu.memory_space<vmem>>, vector<1x128xf32>
    %31 = vector.broadcast %30 : vector<1x128xf32> to vector<88x128xf32>
    %32 = arith.addf %29, %31 : vector<88x128xf32>
    %cst_29 = arith.constant 5.000000e-01 : f32
    %33 = vector.broadcast %cst_29 : f32 to vector<88x128xf32>
    %34 = arith.mulf %33, %32 : vector<88x128xf32>
    %35 = math.exp %34 : vector<88x128xf32>
    %36 = arith.mulf %35, %2 : vector<88x128xf32>
    %37 = arith.addf %26, %36 : vector<88x128xf32>
    %38 = arith.truncf %37 : vector<88x128xf32> to vector<88x128xbf16>
    %c0_30 = arith.constant 0 : index
    %c0_31 = arith.constant 0 : index
    %39 = vector.load %arg12[%c0_30, %c0_31] : memref<128x512xbf16, #tpu.memory_space<vmem>>, vector<128x512xbf16>
    %cst_32 = arith.constant dense<0.000000e+00> : vector<88x512xf32>
    %40 = tpu.matmul %38, %39, %cst_32 {dimension_numbers = #tpu.dot_dimension_numbers<[1], [0], [0], [1], [0, 0, 1, 1], [], []>} : vector<88x128xbf16>, vector<128x512xbf16>, vector<88x512xf32> -> vector<88x512xf32>
    %c0_33 = arith.constant 0 : index
    %c0_34 = arith.constant 0 : index
    %41 = vector.load %arg13[%c0_33, %c0_34] : memref<10x512xbf16, #tpu.memory_space<vmem>>, vector<10x512xbf16>
    %cst_35 = arith.constant dense<0.000000e+00> : vector<88x512xf32>
    %42 = tpu.matmul %1, %41, %cst_35 {dimension_numbers = #tpu.dot_dimension_numbers<[1], [0], [0], [1], [0, 0, 1, 1], [], []>} : vector<88x10xbf16>, vector<10x512xbf16>, vector<88x512xf32> -> vector<88x512xf32>
    %43 = arith.addf %40, %42 : vector<88x512xf32>
    %c0_36 = arith.constant 0 : index
    %c0_37 = arith.constant 0 : index
    %44 = vector.load %arg14[%c0_36, %c0_37] : memref<1x512xf32, #tpu.memory_space<vmem>>, vector<1x512xf32>
    %45 = vector.broadcast %44 : vector<1x512xf32> to vector<88x512xf32>
    %46 = arith.addf %43, %45 : vector<88x512xf32>
    %cst_38 = arith.constant 0.000000e+00 : f32
    %47 = vector.broadcast %cst_38 : f32 to vector<88x512xf32>
    %48 = arith.maximumf %46, %47 : vector<88x512xf32>
    %49 = arith.truncf %48 : vector<88x512xf32> to vector<88x512xbf16>
    %c0_39 = arith.constant 0 : index
    %c0_40 = arith.constant 0 : index
    %50 = vector.load %arg15[%c0_39, %c0_40] : memref<512x512xbf16, #tpu.memory_space<vmem>>, vector<512x512xbf16>
    %cst_41 = arith.constant dense<0.000000e+00> : vector<88x512xf32>
    %51 = tpu.matmul %49, %50, %cst_41 {dimension_numbers = #tpu.dot_dimension_numbers<[1], [0], [0], [1], [0, 0, 1, 1], [], []>} : vector<88x512xbf16>, vector<512x512xbf16>, vector<88x512xf32> -> vector<88x512xf32>
    %c0_42 = arith.constant 0 : index
    %c0_43 = arith.constant 0 : index
    %52 = vector.load %arg16[%c0_42, %c0_43] : memref<1x512xf32, #tpu.memory_space<vmem>>, vector<1x512xf32>
    %53 = vector.broadcast %52 : vector<1x512xf32> to vector<88x512xf32>
    %54 = arith.addf %51, %53 : vector<88x512xf32>
    %cst_44 = arith.constant 0.000000e+00 : f32
    %55 = vector.broadcast %cst_44 : f32 to vector<88x512xf32>
    %56 = arith.maximumf %54, %55 : vector<88x512xf32>
    %57 = arith.truncf %56 : vector<88x512xf32> to vector<88x512xbf16>
    %c0_45 = arith.constant 0 : index
    %c0_46 = arith.constant 0 : index
    %58 = vector.load %arg17[%c0_45, %c0_46] : memref<512x784xbf16, #tpu.memory_space<vmem>>, vector<512x784xbf16>
    %cst_47 = arith.constant dense<0.000000e+00> : vector<88x784xf32>
    %59 = tpu.matmul %57, %58, %cst_47 {dimension_numbers = #tpu.dot_dimension_numbers<[1], [0], [0], [1], [0, 0, 1, 1], [], []>} : vector<88x512xbf16>, vector<512x784xbf16>, vector<88x784xf32> -> vector<88x784xf32>
    %c0_48 = arith.constant 0 : index
    %c0_49 = arith.constant 0 : index
    %60 = vector.load %arg18[%c0_48, %c0_49] : memref<1x784xf32, #tpu.memory_space<vmem>>, vector<1x784xf32>
    %61 = vector.broadcast %60 : vector<1x784xf32> to vector<88x784xf32>
    %62 = arith.addf %59, %61 : vector<88x784xf32>
    %cst_50 = arith.constant 0.000000e+00 : f32
    %63 = vector.broadcast %cst_50 : f32 to vector<88x784xf32>
    %64 = arith.maximumf %62, %63 : vector<88x784xf32>
    %65 = math.absf %62 : vector<88x784xf32>
    %cst_51 = arith.constant 0.000000e+00 : f32
    %66 = vector.broadcast %cst_51 : f32 to vector<88x784xf32>
    %67 = arith.subf %66, %65 : vector<88x784xf32>
    %68 = math.exp %67 : vector<88x784xf32>
    %cst_52 = arith.constant 1.000000e+00 : f32
    %69 = vector.broadcast %cst_52 : f32 to vector<88x784xf32>
    %70 = arith.addf %69, %68 : vector<88x784xf32>
    %71 = math.log %70 : vector<88x784xf32>
    %72 = arith.addf %64, %71 : vector<88x784xf32>
    %73 = arith.extf %0 : vector<88x784xbf16> to vector<88x784xf32>
    %74 = arith.mulf %73, %62 : vector<88x784xf32>
    %75 = arith.subf %74, %72 : vector<88x784xf32>
    %cst_53 = arith.constant dense<0.000000e+00> : vector<88xf32>
    %76 = vector.multi_reduction <add>, %75, %cst_53 [1] : vector<88x784xf32> to vector<88xf32>
    %77 = vector.shape_cast %76 : vector<88xf32> to vector<88x1xf32>
    %cst_54 = arith.constant 1.000000e+00 : f32
    %78 = vector.broadcast %cst_54 : f32 to vector<88x128xf32>
    %79 = arith.addf %78, %32 : vector<88x128xf32>
    %80 = arith.mulf %26, %26 : vector<88x128xf32>
    %81 = arith.subf %79, %80 : vector<88x128xf32>
    %82 = math.exp %32 : vector<88x128xf32>
    %83 = arith.subf %81, %82 : vector<88x128xf32>
    %cst_55 = arith.constant dense<0.000000e+00> : vector<88xf32>
    %84 = vector.multi_reduction <add>, %83, %cst_55 [1] : vector<88x128xf32> to vector<88xf32>
    %85 = vector.shape_cast %84 : vector<88xf32> to vector<88x1xf32>
    %cst_56 = arith.constant 5.000000e-01 : f32
    %86 = vector.broadcast %cst_56 : f32 to vector<88x1xf32>
    %87 = arith.mulf %86, %85 : vector<88x1xf32>
    %cst_57 = arith.constant -2.30258512 : f32
    %88 = vector.broadcast %cst_57 : f32 to vector<88x1xf32>
    %89 = arith.addf %88, %77 : vector<88x1xf32>
    %90 = arith.addf %89, %87 : vector<88x1xf32>
    %91 = vector.shape_cast %90 : vector<88x1xf32> to vector<88x1xf32>
    %92 = vector.broadcast %91 : vector<88x1xf32> to vector<88x128xf32>
    %c0_58 = arith.constant 0 : index
    %c0_59 = arith.constant 0 : index
    %93 = vector.load %arg25[%c0_58, %c0_59] : memref<88x128xf32, #tpu.memory_space<vmem>>, vector<88x128xf32>
    tpu.vector_store %arg25[%c0_58, %c0_59], %92 {strides = array<i32>} : memref<88x128xf32, #tpu.memory_space<vmem>>, vector<88x128xf32>,
    %94 = vector.extract_strided_slice %0 {offsets = [0, 0], sizes = [16, 784], strides = [1, 1]} : vector<88x784xbf16> to vector<16x784xbf16>
    %c0_60 = arith.constant 0 : index
    %c0_61 = arith.constant 0 : index
    %95 = vector.load %arg19[%c0_60, %c0_61] : memref<784x512xbf16, #tpu.memory_space<vmem>>, vector<784x512xbf16>
    %cst_62 = arith.constant dense<0.000000e+00> : vector<16x512xf32>
    %96 = tpu.matmul %94, %95, %cst_62 {dimension_numbers = #tpu.dot_dimension_numbers<[1], [0], [0], [1], [0, 0, 1, 1], [], []>} : vector<16x784xbf16>, vector<784x512xbf16>, vector<16x512xf32> -> vector<16x512xf32>
    %c0_63 = arith.constant 0 : index
    %c0_64 = arith.constant 0 : index
    %97 = vector.load %arg20[%c0_63, %c0_64] : memref<1x512xf32, #tpu.memory_space<vmem>>, vector<1x512xf32>
    %98 = vector.broadcast %97 : vector<1x512xf32> to vector<16x512xf32>
    %99 = arith.addf %96, %98 : vector<16x512xf32>
    %cst_65 = arith.constant 0.000000e+00 : f32
    %100 = vector.broadcast %cst_65 : f32 to vector<16x512xf32>
    %101 = arith.maximumf %99, %100 : vector<16x512xf32>
    %102 = arith.truncf %101 : vector<16x512xf32> to vector<16x512xbf16>
    %c0_66 = arith.constant 0 : index
    %c0_67 = arith.constant 0 : index
    %103 = vector.load %arg21[%c0_66, %c0_67] : memref<512x512xbf16, #tpu.memory_space<vmem>>, vector<512x512xbf16>
    %cst_68 = arith.constant dense<0.000000e+00> : vector<16x512xf32>
    %104 = tpu.matmul %102, %103, %cst_68 {dimension_numbers = #tpu.dot_dimension_numbers<[1], [0], [0], [1], [0, 0, 1, 1], [], []>} : vector<16x512xbf16>, vector<512x512xbf16>, vector<16x512xf32> -> vector<16x512xf32>
    %c0_69 = arith.constant 0 : index
    %c0_70 = arith.constant 0 : index
    %105 = vector.load %arg22[%c0_69, %c0_70] : memref<1x512xf32, #tpu.memory_space<vmem>>, vector<1x512xf32>
    %106 = vector.broadcast %105 : vector<1x512xf32> to vector<16x512xf32>
    %107 = arith.addf %104, %106 : vector<16x512xf32>
    %cst_71 = arith.constant 0.000000e+00 : f32
    %108 = vector.broadcast %cst_71 : f32 to vector<16x512xf32>
    %109 = arith.maximumf %107, %108 : vector<16x512xf32>
    %110 = arith.truncf %109 : vector<16x512xf32> to vector<16x512xbf16>
    %c0_72 = arith.constant 0 : index
    %c0_73 = arith.constant 0 : index
    %111 = vector.load %arg23[%c0_72, %c0_73] : memref<512x128xbf16, #tpu.memory_space<vmem>>, vector<512x128xbf16>
    %cst_74 = arith.constant dense<0.000000e+00> : vector<16x128xf32>
    %112 = tpu.matmul %110, %111, %cst_74 {dimension_numbers = #tpu.dot_dimension_numbers<[1], [0], [0], [1], [0, 0, 1, 1], [], []>} : vector<16x512xbf16>, vector<512x128xbf16>, vector<16x128xf32> -> vector<16x128xf32>
    %c0_75 = arith.constant 0 : index
    %c0_76 = arith.constant 0 : index
    %113 = vector.load %arg24[%c0_75, %c0_76] : memref<1x128xf32, #tpu.memory_space<vmem>>, vector<1x128xf32>
    %114 = vector.broadcast %113 : vector<1x128xf32> to vector<16x128xf32>
    %115 = arith.addf %112, %114 : vector<16x128xf32>
    %c0_77 = arith.constant 0 : index
    %c0_78 = arith.constant 0 : index
    %116 = vector.load %arg26[%c0_77, %c0_78] : memref<16x128xf32, #tpu.memory_space<vmem>>, vector<16x128xf32>
    tpu.vector_store %arg26[%c0_77, %c0_78], %115 {strides = array<i32>} : memref<16x128xf32, #tpu.memory_space<vmem>>, vector<16x128xf32>,
    return
  }
}

</mosaic_0001>

<llo_original>
// kernel: _forward_impl.1
$region0: #{_forward_impl.1}
  #allocation0 [shape = 'u32[]', space=smem, size = 0x4, offset = 0x4, fixed_abs, tag = 'smem constant byte address 0x4 - core index']
  #allocation1 [shape = 'u32[144,128]{1,0:T(1,128)}', space=vmem, size = 0x12000, scoped, tag = 'internal scratch']
  %s0 = inlined_call_operand.vmem [shape: bf16[88,784], index: 0, kind: input, shape index: {}]
  %s1 = inlined_call_operand.vmem [shape: bf16[88,10], index: 1, kind: input, shape index: {}]
  %s2 = inlined_call_operand.vmem [shape: f32[88,128], index: 2, kind: input, shape index: {}]
  %s3 = inlined_call_operand.vmem [shape: bf16[784,512], index: 3, kind: input, shape index: {}]
  %s4 = inlined_call_operand.vmem [shape: bf16[10,512], index: 4, kind: input, shape index: {}]
  %s5 = inlined_call_operand.vmem [shape: f32[1,512], index: 5, kind: input, shape index: {}]
  %s6 = inlined_call_operand.vmem [shape: bf16[512,512], index: 6, kind: input, shape index: {}]
  %s7 = inlined_call_operand.vmem [shape: f32[1,512], index: 7, kind: input, shape index: {}]
  %s8 = inlined_call_operand.vmem [shape: bf16[512,128], index: 8, kind: input, shape index: {}]
  %s9 = inlined_call_operand.vmem [shape: f32[1,128], index: 9, kind: input, shape index: {}]
  %s10 = inlined_call_operand.vmem [shape: bf16[512,128], index: 10, kind: input, shape index: {}]
  %s11 = inlined_call_operand.vmem [shape: f32[1,128], index: 11, kind: input, shape index: {}]
  %s12 = inlined_call_operand.vmem [shape: bf16[128,512], index: 12, kind: input, shape index: {}]
  %s13 = inlined_call_operand.vmem [shape: bf16[10,512], index: 13, kind: input, shape index: {}]
  %s14 = inlined_call_operand.vmem [shape: f32[1,512], index: 14, kind: input, shape index: {}]
  %s15 = inlined_call_operand.vmem [shape: bf16[512,512], index: 15, kind: input, shape index: {}]
  %s16 = inlined_call_operand.vmem [shape: f32[1,512], index: 16, kind: input, shape index: {}]
  %s17 = inlined_call_operand.vmem [shape: bf16[512,784], index: 17, kind: input, shape index: {}]
  %s18 = inlined_call_operand.vmem [shape: f32[1,784], index: 18, kind: input, shape index: {}]
  %s19 = inlined_call_operand.vmem [shape: bf16[784,512], index: 19, kind: input, shape index: {}]
  %s20 = inlined_call_operand.vmem [shape: f32[1,512], index: 20, kind: input, shape index: {}]
  %s21 = inlined_call_operand.vmem [shape: bf16[512,512], index: 21, kind: input, shape index: {}]
  %s22 = inlined_call_operand.vmem [shape: f32[1,512], index: 22, kind: input, shape index: {}]
  %s23 = inlined_call_operand.vmem [shape: bf16[512,128], index: 23, kind: input, shape index: {}]
  %s24 = inlined_call_operand.vmem [shape: f32[1,128], index: 24, kind: input, shape index: {}]
  %s25 = inlined_call_operand.vmem [shape: f32[88,128], index: 25, kind: output, shape index: {0}]
  %s26 = inlined_call_operand.vmem [shape: f32[16,128], index: 26, kind: output, shape index: {1}]
  %27 = xla_tuple %s25, %s26
  %s28 = sld [smem:[#allocation0]]
  $region118: #{_forward_impl.1} parent=0
    _
  %s30 = ssub.s32 1, %s28
  %s31 = scalar_select 0, %s30, %s28
  // Predicated region
  $region2: #{_forward_impl.1} parent=0 // pred_check
    _
  $region3: #{_forward_impl.1} parent=0 // pred_check_branch
    %33 = sbr.rel (0) target = $region5
  $region4: #{_forward_impl.1} parent=0 // pred_region
    _
  $region5: #{_forward_impl.1} parent=0 // pred_fallthru
    _
  // Predicated region
  $region6: #{_forward_impl.1} parent=0 // pred_check
    _
  $region7: #{_forward_impl.1} parent=0 // pred_check_branch
    %35 = sbr.rel (0) target = $region9
  $region8: #{_forward_impl.1} parent=0 // pred_region
    _
  $region9: #{_forward_impl.1} parent=0 // pred_fallthru
    _
  // Predicated region
  $region10: #{_forward_impl.1} parent=0 // pred_check
    _
  $region11: #{_forward_impl.1} parent=0 // pred_check_branch
    %37 = sbr.rel (0) target = $region13
  $region12: #{_forward_impl.1} parent=0 // pred_region
    _
  $region13: #{_forward_impl.1} parent=0 // pred_fallthru
    _
  // Predicated region
  $region14: #{_forward_impl.1} parent=0 // pred_check
    _
  $region15: #{_forward_impl.1} parent=0 // pred_check_branch
    %39 = sbr.rel (0) target = $region17
  $region16: #{_forward_impl.1} parent=0 // pred_region
    _
  $region17: #{_forward_impl.1} parent=0 // pred_fallthru
    _
  // Predicated region
  $region18: #{_forward_impl.1} parent=0 // pred_check
    _
  $region19: #{_forward_impl.1} parent=0 // pred_check_branch
    %41 = sbr.rel (0) target = $region21
  $region20: #{_forward_impl.1} parent=0 // pred_region
    _
  $region21: #{_forward_impl.1} parent=0 // pred_fallthru
    _
  // Predicated region
  $region22: #{_forward_impl.1} parent=0 // pred_check
    _
  $region23: #{_forward_impl.1} parent=0 // pred_check_branch
    %43 = sbr.rel (0) target = $region25
  $region24: #{_forward_impl.1} parent=0 // pred_region
    _
  $region25: #{_forward_impl.1} parent=0 // pred_fallthru
    _
  // Predicated region
  $region26: #{_forward_impl.1} parent=0 // pred_check
    _
  $region27: #{_forward_impl.1} parent=0 // pred_check_branch
    %45 = sbr.rel (0) target = $region29
  $region28: #{_forward_impl.1} parent=0 // pred_region
    _
  $region29: #{_forward_impl.1} parent=0 // pred_fallthru
    _
  // Predicated region
  $region30: #{_forward_impl.1} parent=0 // pred_check
    _
  $region31: #{_forward_impl.1} parent=0 // pred_check_branch
    %47 = sbr.rel (0) target = $region33
  $region32: #{_forward_impl.1} parent=0 // pred_region
    _
  $region33: #{_forward_impl.1} parent=0 // pred_fallthru
    _
  // Predicated region
  $region34: #{_forward_impl.1} parent=0 // pred_check
    _
  $region35: #{_forward_impl.1} parent=0 // pred_check_branch
    %49 = sbr.rel (0) target = $region37
  $region36: #{_forward_impl.1} parent=0 // pred_region
    _
  $region37: #{_forward_impl.1} parent=0 // pred_fallthru
    _
  // Predicated region
  $region38: #{_forward_impl.1} parent=0 // pred_check
    _
  $region39: #{_forward_impl.1} parent=0 // pred_check_branch
    %51 = sbr.rel (0) target = $region41
  $region40: #{_forward_impl.1} parent=0 // pred_region
    _
  $region41: #{_forward_impl.1} parent=0 // pred_fallthru
    _
  // Predicated region
  $region42: #{_forward_impl.1} parent=0 // pred_check
    _
  $region43: #{_forward_impl.1} parent=0 // pred_check_branch
    %53 = sbr.rel (0) target = $region45
  $region44: #{_forward_impl.1} parent=0 // pred_region
    _
  $region45: #{_forward_impl.1} parent=0 // pred_fallthru
    _
  // Predicated region
  $region46: #{_forward_impl.1} parent=0 // pred_check
    _
  $region47: #{_forward_impl.1} parent=0 // pred_check_branch
    %55 = sbr.rel (0) target = $region49
  $region48: #{_forward_impl.1} parent=0 // pred_region
    _
  $region49: #{_forward_impl.1} parent=0 // pred_fallthru
    _
  // Predicated region
  $region50: #{_forward_impl.1} parent=0 // pred_check
    _
  $region51: #{_forward_impl.1} parent=0 // pred_check_branch
    %57 = sbr.rel (0) target = $region53
  $region52: #{_forward_impl.1} parent=0 // pred_region
    _
  $region53: #{_forward_impl.1} parent=0 // pred_fallthru
    _
  // Predicated region
  $region54: #{_forward_impl.1} parent=0 // pred_check
    _
  $region55: #{_forward_impl.1} parent=0 // pred_check_branch
    %59 = sbr.rel (0) target = $region57
  $region56: #{_forward_impl.1} parent=0 // pred_region
    _
  $region57: #{_forward_impl.1} parent=0 // pred_fallthru
    _
  // Predicated region
  $region58: #{_forward_impl.1} parent=0 // pred_check
    _
  $region59: #{_forward_impl.1} parent=0 // pred_check_branch
    %61 = sbr.rel (0) target = $region61
  $region60: #{_forward_impl.1} parent=0 // pred_region
    _
  $region61: #{_forward_impl.1} parent=0 // pred_fallthru
    _
  // Predicated region
  $region62: #{_forward_impl.1} parent=0 // pred_check
    _
  $region63: #{_forward_impl.1} parent=0 // pred_check_branch
    %63 = sbr.rel (0) target = $region65
  $region64: #{_forward_impl.1} parent=0 // pred_region
    _
  $region65: #{_forward_impl.1} parent=0 // pred_fallthru
    _
  // Predicated region
  $region66: #{_forward_impl.1} parent=0 // pred_check
    _
  $region67: #{_forward_impl.1} parent=0 // pred_check_branch
    %65 = sbr.rel (0) target = $region69
  $region68: #{_forward_impl.1} parent=0 // pred_region
    _
  $region69: #{_forward_impl.1} parent=0 // pred_fallthru
    _
  // Predicated region
  $region70: #{_forward_impl.1} parent=0 // pred_check
    _
  $region71: #{_forward_impl.1} parent=0 // pred_check_branch
    %67 = sbr.rel (0) target = $region73
  $region72: #{_forward_impl.1} parent=0 // pred_region
    _
  $region73: #{_forward_impl.1} parent=0 // pred_fallthru
    _
  // Predicated region
  $region74: #{_forward_impl.1} parent=0 // pred_check
    _
  $region75: #{_forward_impl.1} parent=0 // pred_check_branch
    %69 = sbr.rel (0) target = $region77
  $region76: #{_forward_impl.1} parent=0 // pred_region
    _
  $region77: #{_forward_impl.1} parent=0 // pred_fallthru
    _
  // Predicated region
  $region78: #{_forward_impl.1} parent=0 // pred_check
    _
  $region79: #{_forward_impl.1} parent=0 // pred_check_branch
    %71 = sbr.rel (0) target = $region81
  $region80: #{_forward_impl.1} parent=0 // pred_region
    _
  $region81: #{_forward_impl.1} parent=0 // pred_fallthru
    _
  // Predicated region
  $region82: #{_forward_impl.1} parent=0 // pred_check
    _
  $region83: #{_forward_impl.1} parent=0 // pred_check_branch
    %73 = sbr.rel (0) target = $region85
  $region84: #{_forward_impl.1} parent=0 // pred_region
    _
  $region85: #{_forward_impl.1} parent=0 // pred_fallthru
    _
  // Predicated region
  $region86: #{_forward_impl.1} parent=0 // pred_check
    _
  $region87: #{_forward_impl.1} parent=0 // pred_check_branch
    %75 = sbr.rel (0) target = $region89
  $region88: #{_forward_impl.1} parent=0 // pred_region
    _
  $region89: #{_forward_impl.1} parent=0 // pred_fallthru
    _
  // Predicated region
  $region90: #{_forward_impl.1} parent=0 // pred_check
    _
  $region91: #{_forward_impl.1} parent=0 // pred_check_branch
    %77 = sbr.rel (0) target = $region93
  $region92: #{_forward_impl.1} parent=0 // pred_region
    _
  $region93: #{_forward_impl.1} parent=0 // pred_fallthru
    _
  // Predicated region
  $region94: #{_forward_impl.1} parent=0 // pred_check
    _
  $region95: #{_forward_impl.1} parent=0 // pred_check_branch
    %79 = sbr.rel (0) target = $region97
  $region96: #{_forward_impl.1} parent=0 // pred_region
    _
  $region97: #{_forward_impl.1} parent=0 // pred_fallthru
    _
  // Predicated region
  $region98: #{_forward_impl.1} parent=0 // pred_check
    _
  $region99: #{_forward_impl.1} parent=0 // pred_check_branch
    %81 = sbr.rel (0) target = $region101
  $region100: #{_forward_impl.1} parent=0 // pred_region
    _
  $region101: #{_forward_impl.1} parent=0 // pred_fallthru
    _
  %v83 = vld [vmem:[%s0] sm:$0xff]
  %v84 = vld [vmem:[%s0 + $0x8] sm:$0xff]
  %v85 = vld [vmem:[%s0 + $0x10] sm:$0xff]
  %v86 = vld [vmem:[%s0 + $0x18] sm:$0xf]
  %v87 = vld [vmem:[%s0 + $0x1c] sm:$0xff]
  %v88 = vld [vmem:[%s0 + $0x24] sm:$0xff]
  %v89 = vld [vmem:[%s0 + $0x2c] sm:$0xff]
  %v90 = vld [vmem:[%s0 + $0x34] sm:$0xf]
  %v91 = vld [vmem:[%s0 + $0x38] sm:$0xff]
  %v92 = vld [vmem:[%s0 + $0x40] sm:$0xff]
  %v93 = vld [vmem:[%s0 + $0x48] sm:$0xff]
  %v94 = vld [vmem:[%s0 + $0x50] sm:$0xf]
  %v95 = vld [vmem:[%s0 + $0x54] sm:$0xff]
  %v96 = vld [vmem:[%s0 + $0x5c] sm:$0xff]
  %v97 = vld [vmem:[%s0 + $0x64] sm:$0xff]
  %v98 = vld [vmem:[%s0 + $0x6c] sm:$0xf]
  %v99 = vld [vmem:[%s0 + $0x70] sm:$0xff]
  %v100 = vld [vmem:[%s0 + $0x78] sm:$0xff]
  %v101 = vld [vmem:[%s0 + $0x80] sm:$0xff]
  %v102 = vld [vmem:[%s0 + $0x88] sm:$0xf]
  %v103 = vld [vmem:[%s0 + $0x8c] sm:$0xff]
  %v104 = vld [vmem:[%s0 + $0x94] sm:$0xff]
  %v105 = vld [vmem:[%s0 + $0x9c] sm:$0xff]
  %v106 = vld [vmem:[%s0 + $0xa4] sm:$0xf]
  %v107 = vld [vmem:[%s0 + $0xa8] sm:$0xff]
  %v108 = vld [vmem:[%s0 + $0xb0] sm:$0xff]
  %v109 = vld [vmem:[%s0 + $0xb8] sm:$0xff]
  %v110 = vld [vmem:[%s0 + $0xc0] sm:$0xf]
  %v111 = vld [vmem:[%s0 + $0xc4] sm:$0xff]
  %v112 = vld [vmem:[%s0 + $0xcc] sm:$0xff]
  %v113 = vld [vmem:[%s0 + $0xd4] sm:$0xff]
  %v114 = vld [vmem:[%s0 + $0xdc] sm:$0xf]
  %v115 = vld [vmem:[%s0 + $0xe0] sm:$0xff]
  %v116 = vld [vmem:[%s0 + $0xe8] sm:$0xff]
  %v117 = vld [vmem:[%s0 + $0xf0] sm:$0xff]
  %v118 = vld [vmem:[%s0 + $0xf8] sm:$0xf]
  %v119 = vld [vmem:[%s0 + $0xfc] sm:$0xff]
  %v120 = vld [vmem:[%s0 + $0x104] sm:$0xff]
  %v121 = vld [vmem:[%s0 + $0x10c] sm:$0xff]
  %v122 = vld [vmem:[%s0 + $0x114] sm:$0xf]
  %v123 = vld [vmem:[%s0 + $0x118] sm:$0xff]
  %v124 = vld [vmem:[%s0 + $0x120] sm:$0xff]
  %v125 = vld [vmem:[%s0 + $0x128] sm:$0xff]
  %v126 = vld [vmem:[%s0 + $0x130] sm:$0xf]
  %v127 = vld [vmem:[%s1] sm:$0xf]
  %v128 = vld [vmem:[%s1 + $0x4] sm:$0xf]
  %v129 = vld [vmem:[%s1 + $0x8] sm:$0xf]
  %v130 = vld [vmem:[%s1 + $0xc] sm:$0xf]
  %v131 = vld [vmem:[%s1 + $0x10] sm:$0xf]
  %v132 = vld [vmem:[%s1 + $0x14] sm:$0xf]
  %v133 = vld [vmem:[%s1 + $0x18] sm:$0xf]
  %v134 = vld [vmem:[%s1 + $0x1c] sm:$0xf]
  %v135 = vld [vmem:[%s1 + $0x20] sm:$0xf]
  %v136 = vld [vmem:[%s1 + $0x24] sm:$0xf]
  %v137 = vld [vmem:[%s1 + $0x28] sm:$0xf]
  %v138 = vld [vmem:[%s2] sm:$0xff]
  %v139 = vld [vmem:[%s2 + $0x8] sm:$0xff]
  %v140 = vld [vmem:[%s2 + $0x10] sm:$0xff]
  %v141 = vld [vmem:[%s2 + $0x18] sm:$0xff]
  %v142 = vld [vmem:[%s2 + $0x20] sm:$0xff]
  %v143 = vld [vmem:[%s2 + $0x28] sm:$0xff]
  %v144 = vld [vmem:[%s2 + $0x30] sm:$0xff]
  %v145 = vld [vmem:[%s2 + $0x38] sm:$0xff]
  %v146 = vld [vmem:[%s2 + $0x40] sm:$0xff]
  %v147 = vld [vmem:[%s2 + $0x48] sm:$0xff]
  %v148 = vld [vmem:[%s2 + $0x50] sm:$0xff]
  %v149 = vld [vmem:[%s3] sm:$0xff]
  %v150 = vld [vmem:[%s3 + $0x8] sm:$0xff]
  %v151 = vld [vmem:[%s3 + $0x10] sm:$0xff]
  %v152 = vld [vmem:[%s3 + $0x18] sm:$0xff]
  %v153 = vld [vmem:[%s3 + $0x20] sm:$0xff]
  %v154 = vld [vmem:[%s3 + $0x28] sm:$0xff]
  %v155 = vld [vmem:[%s3 + $0x30] sm:$0xff]
  %v156 = vld [vmem:[%s3 + $0x38] sm:$0xff]
  %v157 = vld [vmem:[%s3 + $0x40] sm:$0xff]
  %v158 = vld [vmem:[%s3 + $0x48] sm:$0xff]
  %v159 = vld [vmem:[%s3 + $0x50] sm:$0xff]
  %v160 = vld [vmem:[%s3 + $0x58] sm:$0xff]
  %v161 = vld [vmem:[%s3 + $0x60] sm:$0xff]
  %v162 = vld [vmem:[%s3 + $0x68] sm:$0xff]
  %v163 = vld [vmem:[%s3 + $0x70] sm:$0xff]
  %v164 = vld [vmem:[%s3 + $0x78] sm:$0xff]
  %v165 = vld [vmem:[%s3 + $0x80] sm:$0xff]
  %v166 = vld [vmem:[%s3 + $0x88] sm:$0xff]
  %v167 = vld [vmem:[%s3 + $0x90] sm:$0xff]
  %v168 = vld [vmem:[%s3 + $0x98] sm:$0xff]
  %v169 = vld [vmem:[%s3 + $0xa0] sm:$0xff]
  %v170 = vld [vmem:[%s3 + $0xa8] sm:$0xff]
  %v171 = vld [vmem:[%s3 + $0xb0] sm:$0xff]
  %v172 = vld [vmem:[%s3 + $0xb8] sm:$0xff]
  %v173 = vld [vmem:[%s3 + $0xc0] sm:$0xff]
  %v174 = vld [vmem:[%s3 + $0xc8] sm:$0xff]
  %v175 = vld [vmem:[%s3 + $0xd0] sm:$0xff]
  %v176 = vld [vmem:[%s3 + $0xd8] sm:$0xff]
  %v177 = vld [vmem:[%s3 + $0xe0] sm:$0xff]
  %v178 = vld [vmem:[%s3 + $0xe8] sm:$0xff]
  %v179 = vld [vmem:[%s3 + $0xf0] sm:$0xff]
  %v180 = vld [vmem:[%s3 + $0xf8] sm:$0xff]
  %v181 = vld [vmem:[%s3 + $0x100] sm:$0xff]
  %v182 = vld [vmem:[%s3 + $0x108] sm:$0xff]
  %v183 = vld [vmem:[%s3 + $0x110] sm:$0xff]
  %v184 = vld [vmem:[%s3 + $0x118] sm:$0xff]
  %v185 = vld [vmem:[%s3 + $0x120] sm:$0xff]
  %v186 = vld [vmem:[%s3 + $0x128] sm:$0xff]
  %v187 = vld [vmem:[%s3 + $0x130] sm:$0xff]
  %v188 = vld [vmem:[%s3 + $0x138] sm:$0xff]
  %v189 = vld [vmem:[%s3 + $0x140] sm:$0xff]
  %v190 = vld [vmem:[%s3 + $0x148] sm:$0xff]
  %v191 = vld [vmem:[%s3 + $0x150] sm:$0xff]
  %v192 = vld [vmem:[%s3 + $0x158] sm:$0xff]
  %v193 = vld [vmem:[%s3 + $0x160] sm:$0xff]
  %v194 = vld [vmem:[%s3 + $0x168] sm:$0xff]
  %v195 = vld [vmem:[%s3 + $0x170] sm:$0xff]
  %v196 = vld [vmem:[%s3 + $0x178] sm:$0xff]
  %v197 = vld [vmem:[%s3 + $0x180] sm:$0xff]
  %v198 = vld [vmem:[%s3 + $0x188] sm:$0xff]
  %v199 = vld [vmem:[%s3 + $0x190] sm:$0xff]
  %v200 = vld [vmem:[%s3 + $0x198] sm:$0xff]
  %v201 = vld [vmem:[%s3 + $0x1a0] sm:$0xff]
  %v202 = vld [vmem:[%s3 + $0x1a8] sm:$0xff]
  %v203 = vld [vmem:[%s3 + $0x1b0] sm:$0xff]
  %v204 = vld [vmem:[%s3 + $0x1b8] sm:$0xff]
  %v205 = vld [vmem:[%s3 + $0x1c0] sm:$0xff]
  %v206 = vld [vmem:[%s3 + $0x1c8] sm:$0xff]
  %v207 = vld [vmem:[%s3 + $0x1d0] sm:$0xff]
  %v208 = vld [vmem:[%s3 + $0x1d8] sm:$0xff]
  %v209 = vld [vmem:[%s3 + $0x1e0] sm:$0xff]
  %v210 = vld [vmem:[%s3 + $0x1e8] sm:$0xff]
  %v211 = vld [vmem:[%s3 + $0x1f0] sm:$0xff]
  %v212 = vld [vmem:[%s3 + $0x1f8] sm:$0xff]
  %v213 = vld [vmem:[%s3 + $0x200] sm:$0xff]
  %v214 = vld [vmem:[%s3 + $0x208] sm:$0xff]
  %v215 = vld [vmem:[%s3 + $0x210] sm:$0xff]
  %v216 = vld [vmem:[%s3 + $0x218] sm:$0xff]
  %v217 = vld [vmem:[%s3 + $0x220] sm:$0xff]
  %v218 = vld [vmem:[%s3 + $0x228] sm:$0xff]
  %v219 = vld [vmem:[%s3 + $0x230] sm:$0xff]
  %v220 = vld [vmem:[%s3 + $0x238] sm:$0xff]
  %v221 = vld [vmem:[%s3 + $0x240] sm:$0xff]
  %v222 = vld [vmem:[%s3 + $0x248] sm:$0xff]
  %v223 = vld [vmem:[%s3 + $0x250] sm:$0xff]
  %v224 = vld [vmem:[%s3 + $0x258] sm:$0xff]
  %v225 = vld [vmem:[%s3 + $0x260] sm:$0xff]
  %v226 = vld [vmem:[%s3 + $0x268] sm:$0xff]
  %v227 = vld [vmem:[%s3 + $0x270] sm:$0xff]
  %v228 = vld [vmem:[%s3 + $0x278] sm:$0xff]
  %v229 = vld [vmem:[%s3 + $0x280] sm:$0xff]
  %v230 = vld [vmem:[%s3 + $0x288] sm:$0xff]
  %v231 = vld [vmem:[%s3 + $0x290] sm:$0xff]
  %v232 = vld [vmem:[%s3 + $0x298] sm:$0xff]
  %v233 = vld [vmem:[%s3 + $0x2a0] sm:$0xff]
  %v234 = vld [vmem:[%s3 + $0x2a8] sm:$0xff]
  %v235 = vld [vmem:[%s3 + $0x2b0] sm:$0xff]
  %v236 = vld [vmem:[%s3 + $0x2b8] sm:$0xff]
  %v237 = vld [vmem:[%s3 + $0x2c0] sm:$0xff]
  %v238 = vld [vmem:[%s3 + $0x2c8] sm:$0xff]
  %v239 = vld [vmem:[%s3 + $0x2d0] sm:$0xff]
  %v240 = vld [vmem:[%s3 + $0x2d8] sm:$0xff]
  %v241 = vld [vmem:[%s3 + $0x2e0] sm:$0xff]
  %v242 = vld [vmem:[%s3 + $0x2e8] sm:$0xff]
  %v243 = vld [vmem:[%s3 + $0x2f0] sm:$0xff]
  %v244 = vld [vmem:[%s3 + $0x2f8] sm:$0xff]
  %v245 = vld [vmem:[%s3 + $0x300] sm:$0xff]
  %v246 = vld [vmem:[%s3 + $0x308] sm:$0xff]
  %v247 = vld [vmem:[%s3 + $0x310] sm:$0xff]
  %v248 = vld [vmem:[%s3 + $0x318] sm:$0xff]
  %v249 = vld [vmem:[%s3 + $0x320] sm:$0xff]
  %v250 = vld [vmem:[%s3 + $0x328] sm:$0xff]
  %v251 = vld [vmem:[%s3 + $0x330] sm:$0xff]
  %v252 = vld [vmem:[%s3 + $0x338] sm:$0xff]
  %v253 = vld [vmem:[%s3 + $0x340] sm:$0xff]
  %v254 = vld [vmem:[%s3 + $0x348] sm:$0xff]
  %v255 = vld [vmem:[%s3 + $0x350] sm:$0xff]
  %v256 = vld [vmem:[%s3 + $0x358] sm:$0xff]
  %v257 = vld [vmem:[%s3 + $0x360] sm:$0xff]
  %v258 = vld [vmem:[%s3 + $0x368] sm:$0xff]
  %v259 = vld [vmem:[%s3 + $0x370] sm:$0xff]
  %v260 = vld [vmem:[%s3 + $0x378] sm:$0xff]
  %v261 = vld [vmem:[%s3 + $0x380] sm:$0xff]
  %v262 = vld [vmem:[%s3 + $0x388] sm:$0xff]
  %v263 = vld [vmem:[%s3 + $0x390] sm:$0xff]
  %v264 = vld [vmem:[%s3 + $0x398] sm:$0xff]
  %v265 = vld [vmem:[%s3 + $0x3a0] sm:$0xff]
  %v266 = vld [vmem:[%s3 + $0x3a8] sm:$0xff]
  %v267 = vld [vmem:[%s3 + $0x3b0] sm:$0xff]
  %v268 = vld [vmem:[%s3 + $0x3b8] sm:$0xff]
  %v269 = vld [vmem:[%s3 + $0x3c0] sm:$0xff]
  %v270 = vld [vmem:[%s3 + $0x3c8] sm:$0xff]
  %v271 = vld [vmem:[%s3 + $0x3d0] sm:$0xff]
  %v272 = vld [vmem:[%s3 + $0x3d8] sm:$0xff]
  %v273 = vld [vmem:[%s3 + $0x3e0] sm:$0xff]
  %v274 = vld [vmem:[%s3 + $0x3e8] sm:$0xff]
  %v275 = vld [vmem:[%s3 + $0x3f0] sm:$0xff]
  %v276 = vld [vmem:[%s3 + $0x3f8] sm:$0xff]
  %v277 = vld [vmem:[%s3 + $0x400] sm:$0xff]
  %v278 = vld [vmem:[%s3 + $0x408] sm:$0xff]
  %v279 = vld [vmem:[%s3 + $0x410] sm:$0xff]
  %v280 = vld [vmem:[%s3 + $0x418] sm:$0xff]
  %v281 = vld [vmem:[%s3 + $0x420] sm:$0xff]
  %v282 = vld [vmem:[%s3 + $0x428] sm:$0xff]
  %v283 = vld [vmem:[%s3 + $0x430] sm:$0xff]
  %v284 = vld [vmem:[%s3 + $0x438] sm:$0xff]
  %v285 = vld [vmem:[%s3 + $0x440] sm:$0xff]
  %v286 = vld [vmem:[%s3 + $0x448] sm:$0xff]
  %v287 = vld [vmem:[%s3 + $0x450] sm:$0xff]
  %v288 = vld [vmem:[%s3 + $0x458] sm:$0xff]
  %v289 = vld [vmem:[%s3 + $0x460] sm:$0xff]
  %v290 = vld [vmem:[%s3 + $0x468] sm:$0xff]
  %v291 = vld [vmem:[%s3 + $0x470] sm:$0xff]
  %v292 = vld [vmem:[%s3 + $0x478] sm:$0xff]
  %v293 = vld [vmem:[%s3 + $0x480] sm:$0xff]
  %v294 = vld [vmem:[%s3 + $0x488] sm:$0xff]
  %v295 = vld [vmem:[%s3 + $0x490] sm:$0xff]
  %v296 = vld [vmem:[%s3 + $0x498] sm:$0xff]
  %v297 = vld [vmem:[%s3 + $0x4a0] sm:$0xff]
  %v298 = vld [vmem:[%s3 + $0x4a8] sm:$0xff]
  %v299 = vld [vmem:[%s3 + $0x4b0] sm:$0xff]
  %v300 = vld [vmem:[%s3 + $0x4b8] sm:$0xff]
  %v301 = vld [vmem:[%s3 + $0x4c0] sm:$0xff]
  %v302 = vld [vmem:[%s3 + $0x4c8] sm:$0xff]
  %v303 = vld [vmem:[%s3 + $0x4d0] sm:$0xff]
  %v304 = vld [vmem:[%s3 + $0x4d8] sm:$0xff]
  %v305 = vld [vmem:[%s3 + $0x4e0] sm:$0xff]
  %v306 = vld [vmem:[%s3 + $0x4e8] sm:$0xff]
  %v307 = vld [vmem:[%s3 + $0x4f0] sm:$0xff]
  %v308 = vld [vmem:[%s3 + $0x4f8] sm:$0xff]
  %v309 = vld [vmem:[%s3 + $0x500] sm:$0xff]
  %v310 = vld [vmem:[%s3 + $0x508] sm:$0xff]
  %v311 = vld [vmem:[%s3 + $0x510] sm:$0xff]
  %v312 = vld [vmem:[%s3 + $0x518] sm:$0xff]
  %v313 = vld [vmem:[%s3 + $0x520] sm:$0xff]
  %v314 = vld [vmem:[%s3 + $0x528] sm:$0xff]
  %v315 = vld [vmem:[%s3 + $0x530] sm:$0xff]
  %v316 = vld [vmem:[%s3 + $0x538] sm:$0xff]
  %v317 = vld [vmem:[%s3 + $0x540] sm:$0xff]
  %v318 = vld [vmem:[%s3 + $0x548] sm:$0xff]
  %v319 = vld [vmem:[%s3 + $0x550] sm:$0xff]
  %v320 = vld [vmem:[%s3 + $0x558] sm:$0xff]
  %v321 = vld [vmem:[%s3 + $0x560] sm:$0xff]
  %v322 = vld [vmem:[%s3 + $0x568] sm:$0xff]
  %v323 = vld [vmem:[%s3 + $0x570] sm:$0xff]
  %v324 = vld [vmem:[%s3 + $0x578] sm:$0xff]
  %v325 = vld [vmem:[%s3 + $0x580] sm:$0xff]
  %v326 = vld [vmem:[%s3 + $0x588] sm:$0xff]
  %v327 = vld [vmem:[%s3 + $0x590] sm:$0xff]
  %v328 = vld [vmem:[%s3 + $0x598] sm:$0xff]
  %v329 = vld [vmem:[%s3 + $0x5a0] sm:$0xff]
  %v330 = vld [vmem:[%s3 + $0x5a8] sm:$0xff]
  %v331 = vld [vmem:[%s3 + $0x5b0] sm:$0xff]
  %v332 = vld [vmem:[%s3 + $0x5b8] sm:$0xff]
  %v333 = vld [vmem:[%s3 + $0x5c0] sm:$0xff]
  %v334 = vld [vmem:[%s3 + $0x5c8] sm:$0xff]
  %v335 = vld [vmem:[%s3 + $0x5d0] sm:$0xff]
  %v336 = vld [vmem:[%s3 + $0x5d8] sm:$0xff]
  %v337 = vld [vmem:[%s3 + $0x5e0] sm:$0xff]
  %v338 = vld [vmem:[%s3 + $0x5e8] sm:$0xff]
  %v339 = vld [vmem:[%s3 + $0x5f0] sm:$0xff]
  %v340 = vld [vmem:[%s3 + $0x5f8] sm:$0xff]
  %v341 = vld [vmem:[%s3 + $0x600] sm:$0xff]
  %v342 = vld [vmem:[%s3 + $0x608] sm:$0xff]
  %v343 = vld [vmem:[%s3 + $0x610] sm:$0xff]
  %v344 = vld [vmem:[%s3 + $0x618] sm:$0xff]
  %v345 = vld [vmem:[%s4] sm:$0xff]
  %v346 = vld [vmem:[%s4 + $0x8] sm:$0xff]
  %v347 = vld [vmem:[%s4 + $0x10] sm:$0x11]
  %v348 = vld [vmem:[%s4 + $0x18] sm:$0x11]
  %v360 = vunpack.c.l.b16 %v127
  %v361 = vunpack.c.l.b16 %v128
  %v362 = vunpack.c.l.b16 %v129
  %v363 = vunpack.c.l.b16 %v130
  %v364 = vunpack.c.l.b16 %v131
  %v365 = vunpack.c.l.b16 %v132
  %v366 = vunpack.c.l.b16 %v133
  %v367 = vunpack.c.l.b16 %v134
  %v368 = vunpack.c.l.b16 %v135
  %v369 = vunpack.c.l.b16 %v136
  %v370 = vunpack.c.l.b16 %v137
  %v371 = vpack.c.b16 %v361, %v360
  %v372 = vpack.c.b16 %v363, %v362
  %v373 = vpack.c.b16 %v365, %v364
  %v374 = vpack.c.b16 %v367, %v366
  %v375 = vpack.c.b16 %v369, %v368
  %v376 = vpack.c.b16 %v370, %v370
  %v381 = vunpack.c.l.b16 %v345
  %v382 = vunpack.c.h.b16 %v345
  %v383 = vunpack.c.l.b16 %v346
  %v384 = vunpack.c.h.b16 %v346
  %v385 = vunpack.c.l.b16 %v347
  %v386 = vunpack.c.h.b16 %v347
  %v387 = vunpack.c.l.b16 %v348
  %v388 = vunpack.c.h.b16 %v348
  %v389 = vpack.c.b16 %v385, %v381
  %v390 = vpack.c.b16 %v386, %v382
  %v391 = vpack.c.b16 %v387, %v383
  %v392 = vpack.c.b16 %v388, %v384
  %vm393 = vcmask 80896
  %v395 = vsel %vm393, %v371, 0
  %v398 = vsel %vm393, %v372, 0
  %v401 = vsel %vm393, %v373, 0
  %v404 = vsel %vm393, %v374, 0
  %v407 = vsel %vm393, %v375, 0
  %v410 = vsel %vm393, %v376, 0
  %vm412 = vcmask 1044480
  %v414 = vsel %vm412, %v389, 0
  %v417 = vsel %vm412, %v390, 0
  %v420 = vsel %vm412, %v391, 0
  %v423 = vsel %vm412, %v392, 0
  %425 = vmatprep.subr.bf16.mxu0 %v417
  %426 = vmatpush1.bf16.msra.mxu0 %v414
  %427 = vmatprep.subr.bf16.mxu0 0
  %428 = vmatpush1.bf16.msra.mxu0 0
  %429 = vmatprep.subr.bf16.mxu0 0
  %430 = vmatpush1.bf16.msra.mxu0 0
  %431 = vmatprep.subr.bf16.mxu0 0
  %432 = vmatpush1.bf16.msra.mxu0 0
  %433 = vmatprep.subr.bf16.mxu0 0
  %434 = vmatpush1.bf16.msra.mxu0 0
  %435 = vmatprep.subr.bf16.mxu0 0
  %436 = vmatpush1.bf16.msra.mxu0 0
  %437 = vmatprep.subr.bf16.mxu0 0
  %438 = vmatpush1.bf16.msra.mxu0 0
  %439 = vmatprep.subr.bf16.mxu0 0
  %440 = vmatpush1.bf16.msra.mxu0 0
  %441 = vmatprep.subr.bf16.mxu0 0
  %442 = vmatpush1.bf16.msra.mxu0 0
  %443 = vmatprep.subr.bf16.mxu0 0
  %444 = vmatpush1.bf16.msra.mxu0 0
  %445 = vmatprep.subr.bf16.mxu0 0
  %446 = vmatpush1.bf16.msra.mxu0 0
  %447 = vmatprep.subr.bf16.mxu0 0
  %448 = vmatpush1.bf16.msra.mxu0 0
  %449 = vmatprep.subr.bf16.mxu0 0
  %450 = vmatpush1.bf16.msra.mxu0 0
  %451 = vmatprep.subr.bf16.mxu0 0
  %452 = vmatpush1.bf16.msra.mxu0 0
  %453 = vmatprep.subr.bf16.mxu0 0
  %454 = vmatpush1.bf16.msra.mxu0 0
  %455 = vmatprep.subr.bf16.mxu0 0
  %456 = vmatpush1.bf16.msra.mxu0 0
  %457 = vmatprep.mubr.bf16.mxu0 0
  %458 = vmatmul.mubr.bf16.gmra.mrb[0].mxu0 %v395
  %v459 = vpop.f32.mrb[0].mxu0
  %v460 = vadd.f32 0.0, %v459
  %v461 = vpop.f32.mrb[0].mxu0
  %v462 = vadd.f32 0.0, %v461
  %v463 = vpop.f32.mrb[0].mxu0
  %v464 = vadd.f32 0.0, %v463
  %v465 = vpop.f32.mrb[0].mxu0
  %v466 = vadd.f32 0.0, %v465
  %467 = vmatprep.mubr.bf16.mxu0 0
  %468 = vmatmul.mubr.bf16.gmra.mrb[0].mxu0 %v398
  %v469 = vpop.f32.mrb[0].mxu0
  %v470 = vadd.f32 0.0, %v469
  %v471 = vpop.f32.mrb[0].mxu0
  %v472 = vadd.f32 0.0, %v471
  %v473 = vpop.f32.mrb[0].mxu0
  %v474 = vadd.f32 0.0, %v473
  %v475 = vpop.f32.mrb[0].mxu0
  %v476 = vadd.f32 0.0, %v475
  %477 = vmatprep.mubr.bf16.mxu0 0
  %478 = vmatmul.mubr.bf16.gmra.mrb[0].mxu0 %v401
  %v479 = vpop.f32.mrb[0].mxu0
  %v480 = vadd.f32 0.0, %v479
  %v481 = vpop.f32.mrb[0].mxu0
  %v482 = vadd.f32 0.0, %v481
  %v483 = vpop.f32.mrb[0].mxu0
  %v484 = vadd.f32 0.0, %v483
  %v485 = vpop.f32.mrb[0].mxu0
  %v486 = vadd.f32 0.0, %v485
  %487 = vmatprep.mubr.bf16.mxu0 0
  %488 = vmatmul.mubr.bf16.gmra.mrb[0].mxu0 %v404
  %v489 = vpop.f32.mrb[0].mxu0
  %v490 = vadd.f32 0.0, %v489
  %v491 = vpop.f32.mrb[0].mxu0
  %v492 = vadd.f32 0.0, %v491
  %v493 = vpop.f32.mrb[0].mxu0
  %v494 = vadd.f32 0.0, %v493
  %v495 = vpop.f32.mrb[0].mxu0
  %v496 = vadd.f32 0.0, %v495
  %497 = vmatprep.mubr.bf16.mxu0 0
  %498 = vmatmul.mubr.bf16.gmra.mrb[0].mxu0 %v407
  %v499 = vpop.f32.mrb[0].mxu0
  %v500 = vadd.f32 0.0, %v499
  %v501 = vpop.f32.mrb[0].mxu0
  %v502 = vadd.f32 0.0, %v501
  %v503 = vpop.f32.mrb[0].mxu0
  %v504 = vadd.f32 0.0, %v503
  %v505 = vpop.f32.mrb[0].mxu0
  %v506 = vadd.f32 0.0, %v505
  %507 = vmatprep.mubr.bf16.mxu0 0
  %508 = vmatmul.mubr.bf16.gmra.mrb[0].mxu0 %v410
  %v509 = vpop.f32.mrb[0].mxu0
  %v510 = vadd.f32 0.0, %v509
  %v511 = vpop.f32.mrb[0].mxu0
  %v512 = vadd.f32 0.0, %v511
  %v513 = vpop.f32.mrb[0].mxu0
  %v514 = vpop.f32.mrb[0].mxu0
  %515 = vdwg.mxu0
  %516 = vmatprep.subr.bf16.mxu0 %v423
  %517 = vmatpush1.bf16.msra.mxu0 %v420
  %518 = vmatprep.subr.bf16.mxu0 0
  %519 = vmatpush1.bf16.msra.mxu0 0
  %520 = vmatprep.subr.bf16.mxu0 0
  %521 = vmatpush1.bf16.msra.mxu0 0
  %522 = vmatprep.subr.bf16.mxu0 0
  %523 = vmatpush1.bf16.msra.mxu0 0
  %524 = vmatprep.subr.bf16.mxu0 0
  %525 = vmatpush1.bf16.msra.mxu0 0
  %526 = vmatprep.subr.bf16.mxu0 0
  %527 = vmatpush1.bf16.msra.mxu0 0
  %528 = vmatprep.subr.bf16.mxu0 0
  %529 = vmatpush1.bf16.msra.mxu0 0
  %530 = vmatprep.subr.bf16.mxu0 0
  %531 = vmatpush1.bf16.msra.mxu0 0
  %532 = vmatprep.subr.bf16.mxu0 0
  %533 = vmatpush1.bf16.msra.mxu0 0
  %534 = vmatprep.subr.bf16.mxu0 0
  %535 = vmatpush1.bf16.msra.mxu0 0
  %536 = vmatprep.subr.bf16.mxu0 0
  %537 = vmatpush1.bf16.msra.mxu0 0
  %538 = vmatprep.subr.bf16.mxu0 0
  %539 = vmatpush1.bf16.msra.mxu0 0
  %540 = vmatprep.subr.bf16.mxu0 0
  %541 = vmatpush1.bf16.msra.mxu0 0
  %542 = vmatprep.subr.bf16.mxu0 0
  %543 = vmatpush1.bf16.msra.mxu0 0
  %544 = vmatprep.subr.bf16.mxu0 0
  %545 = vmatpush1.bf16.msra.mxu0 0
  %546 = vmatprep.subr.bf16.mxu0 0
  %547 = vmatpush1.bf16.msra.mxu0 0
  %548 = vmatprep.mubr.bf16.mxu0 0
  %549 = vmatmul.mubr.bf16.gmra.mrb[0].mxu0 %v395
  %v550 = vpop.f32.mrb[0].mxu0
  %v551 = vadd.f32 0.0, %v550
  %v552 = vpop.f32.mrb[0].mxu0
  %v553 = vadd.f32 0.0, %v552
  %v554 = vpop.f32.mrb[0].mxu0
  %v555 = vadd.f32 0.0, %v554
  %v556 = vpop.f32.mrb[0].mxu0
  %v557 = vadd.f32 0.0, %v556
  %558 = vmatprep.mubr.bf16.mxu0 0
  %559 = vmatmul.mubr.bf16.gmra.mrb[0].mxu0 %v398
  %v560 = vpop.f32.mrb[0].mxu0
  %v561 = vadd.f32 0.0, %v560
  %v562 = vpop.f32.mrb[0].mxu0
  %v563 = vadd.f32 0.0, %v562
  %v564 = vpop.f32.mrb[0].mxu0
  %v565 = vadd.f32 0.0, %v564
  %v566 = vpop.f32.mrb[0].mxu0
  %v567 = vadd.f32 0.0, %v566
  %568 = vmatprep.mubr.bf16.mxu0 0
  %569 = vmatmul.mubr.bf16.gmra.mrb[0].mxu0 %v401
  %v570 = vpop.f32.mrb[0].mxu0
  %v571 = vadd.f32 0.0, %v570
  %v572 = vpop.f32.mrb[0].mxu0
  %v573 = vadd.f32 0.0, %v572
  %v574 = vpop.f32.mrb[0].mxu0
  %v575 = vadd.f32 0.0, %v574
  %v576 = vpop.f32.mrb[0].mxu0
  %v577 = vadd.f32 0.0, %v576
  %578 = vmatprep.mubr.bf16.mxu0 0
  %579 = vmatmul.mubr.bf16.gmra.mrb[0].mxu0 %v404
  %v580 = vpop.f32.mrb[0].mxu0
  %v581 = vadd.f32 0.0, %v580
  %v582 = vpop.f32.mrb[0].mxu0
  %v583 = vadd.f32 0.0, %v582
  %v584 = vpop.f32.mrb[0].mxu0
  %v585 = vadd.f32 0.0, %v584
  %v586 = vpop.f32.mrb[0].mxu0
  %v587 = vadd.f32 0.0, %v586
  %588 = vmatprep.mubr.bf16.mxu0 0
  %589 = vmatmul.mubr.bf16.gmra.mrb[0].mxu0 %v407
  %v590 = vpop.f32.mrb[0].mxu0
  %v591 = vadd.f32 0.0, %v590
  %v592 = vpop.f32.mrb[0].mxu0
  %v593 = vadd.f32 0.0, %v592
  %v594 = vpop.f32.mrb[0].mxu0
  %v595 = vadd.f32 0.0, %v594
  %v596 = vpop.f32.mrb[0].mxu0
  %v597 = vadd.f32 0.0, %v596
  %598 = vmatprep.mubr.bf16.mxu0 0
  %599 = vmatmul.mubr.bf16.gmra.mrb[0].mxu0 %v410
  %v600 = vpop.f32.mrb[0].mxu0
  %v601 = vadd.f32 0.0, %v600
  %v602 = vpop.f32.mrb[0].mxu0
  %v603 = vadd.f32 0.0, %v602
  %v604 = vpop.f32.mrb[0].mxu0
  %v605 = vpop.f32.mrb[0].mxu0
  %606 = vdwg.mxu0
  %v651 = vunpack.c.l.b16 %v83
  %v652 = vunpack.c.h.b16 %v83
  %v653 = vunpack.c.l.b16 %v84
  %v654 = vunpack.c.h.b16 %v84
  %v655 = vunpack.c.l.b16 %v85
  %v656 = vunpack.c.h.b16 %v85
  %v657 = vunpack.c.l.b16 %v86
  %v658 = vunpack.c.l.b16 %v87
  %v659 = vunpack.c.h.b16 %v87
  %v660 = vunpack.c.l.b16 %v88
  %v661 = vunpack.c.h.b16 %v88
  %v662 = vunpack.c.l.b16 %v89
  %v663 = vunpack.c.h.b16 %v89
  %v664 = vunpack.c.l.b16 %v90
  %v665 = vunpack.c.l.b16 %v91
  %v666 = vunpack.c.h.b16 %v91
  %v667 = vunpack.c.l.b16 %v92
  %v668 = vunpack.c.h.b16 %v92
  %v669 = vunpack.c.l.b16 %v93
  %v670 = vunpack.c.h.b16 %v93
  %v671 = vunpack.c.l.b16 %v94
  %v672 = vunpack.c.l.b16 %v95
  %v673 = vunpack.c.h.b16 %v95
  %v674 = vunpack.c.l.b16 %v96
  %v675 = vunpack.c.h.b16 %v96
  %v676 = vunpack.c.l.b16 %v97
  %v677 = vunpack.c.h.b16 %v97
  %v678 = vunpack.c.l.b16 %v98
  %v679 = vunpack.c.l.b16 %v99
  %v680 = vunpack.c.h.b16 %v99
  %v681 = vunpack.c.l.b16 %v100
  %v682 = vunpack.c.h.b16 %v100
  %v683 = vunpack.c.l.b16 %v101
  %v684 = vunpack.c.h.b16 %v101
  %v685 = vunpack.c.l.b16 %v102
  %v686 = vunpack.c.l.b16 %v103
  %v687 = vunpack.c.h.b16 %v103
  %v688 = vunpack.c.l.b16 %v104
  %v689 = vunpack.c.h.b16 %v104
  %v690 = vunpack.c.l.b16 %v105
  %v691 = vunpack.c.h.b16 %v105
  %v692 = vunpack.c.l.b16 %v106
  %v693 = vunpack.c.l.b16 %v107
  %v694 = vunpack.c.h.b16 %v107
  %v695 = vunpack.c.l.b16 %v108
  %v696 = vunpack.c.h.b16 %v108
  %v697 = vunpack.c.l.b16 %v109
  %v698 = vunpack.c.h.b16 %v109
  %v699 = vunpack.c.l.b16 %v110
  %v700 = vunpack.c.l.b16 %v111
  %v701 = vunpack.c.h.b16 %v111
  %v702 = vunpack.c.l.b16 %v112
  %v703 = vunpack.c.h.b16 %v112
  %v704 = vunpack.c.l.b16 %v113
  %v705 = vunpack.c.h.b16 %v113
  %v706 = vunpack.c.l.b16 %v114
  %v707 = vunpack.c.l.b16 %v115
  %v708 = vunpack.c.h.b16 %v115
  %v709 = vunpack.c.l.b16 %v116
  %v710 = vunpack.c.h.b16 %v116
  %v711 = vunpack.c.l.b16 %v117
  %v712 = vunpack.c.h.b16 %v117
  %v713 = vunpack.c.l.b16 %v118
  %v714 = vunpack.c.l.b16 %v119
  %v715 = vunpack.c.h.b16 %v119
  %v716 = vunpack.c.l.b16 %v120
  %v717 = vunpack.c.h.b16 %v120
  %v718 = vunpack.c.l.b16 %v121
  %v719 = vunpack.c.h.b16 %v121
  %v720 = vunpack.c.l.b16 %v122
  %v721 = vunpack.c.l.b16 %v123
  %v722 = vunpack.c.h.b16 %v123
  %v723 = vunpack.c.l.b16 %v124
  %v724 = vunpack.c.h.b16 %v124
  %v725 = vunpack.c.l.b16 %v125
  %v726 = vunpack.c.h.b16 %v125
  %v727 = vunpack.c.l.b16 %v126
  %v728 = vpack.c.b16 %v658, %v651
  %v729 = vpack.c.b16 %v659, %v652
  %v730 = vpack.c.b16 %v660, %v653
  %v731 = vpack.c.b16 %v661, %v654
  %v732 = vpack.c.b16 %v662, %v655
  %v733 = vpack.c.b16 %v663, %v656
  %v734 = vpack.c.b16 %v664, %v657
  %v735 = vpack.c.b16 %v672, %v665
  %v736 = vpack.c.b16 %v673, %v666
  %v737 = vpack.c.b16 %v674, %v667
  %v738 = vpack.c.b16 %v675, %v668
  %v739 = vpack.c.b16 %v676, %v669
  %v740 = vpack.c.b16 %v677, %v670
  %v741 = vpack.c.b16 %v678, %v671
  %v742 = vpack.c.b16 %v686, %v679
  %v743 = vpack.c.b16 %v687, %v680
  %v744 = vpack.c.b16 %v688, %v681
  %v745 = vpack.c.b16 %v689, %v682
  %v746 = vpack.c.b16 %v690, %v683
  %v747 = vpack.c.b16 %v691, %v684
  %v748 = vpack.c.b16 %v692, %v685
  %v749 = vpack.c.b16 %v700, %v693
  %v750 = vpack.c.b16 %v701, %v694
  %v751 = vpack.c.b16 %v702, %v695
  %v752 = vpack.c.b16 %v703, %v696
  %v753 = vpack.c.b16 %v704, %v697
  %v754 = vpack.c.b16 %v705, %v698
  %v755 = vpack.c.b16 %v706, %v699
  %v756 = vpack.c.b16 %v714, %v707
  %v757 = vpack.c.b16 %v715, %v708
  %v758 = vpack.c.b16 %v716, %v709
  %v759 = vpack.c.b16 %v717, %v710
  %v760 = vpack.c.b16 %v718, %v711
  %v761 = vpack.c.b16 %v719, %v712
  %v762 = vpack.c.b16 %v720, %v713
  %v763 = vpack.c.b16 %v721, %v721
  %v764 = vpack.c.b16 %v722, %v722
  %v765 = vpack.c.b16 %v723, %v723
  %v766 = vpack.c.b16 %v724, %v724
  %v767 = vpack.c.b16 %v725, %v725
  %v768 = vpack.c.b16 %v726, %v726
  %v769 = vpack.c.b16 %v727, %v727
  %v1002 = vunpack.c.l.b16 %v149
  %v1003 = vunpack.c.h.b16 %v149
  %v1004 = vunpack.c.l.b16 %v150
  %v1005 = vunpack.c.h.b16 %v150
  %v1006 = vunpack.c.l.b16 %v151
  %v1007 = vunpack.c.h.b16 %v151
  %v1008 = vunpack.c.l.b16 %v152
  %v1009 = vunpack.c.h.b16 %v152
  %v1010 = vunpack.c.l.b16 %v153
  %v1011 = vunpack.c.h.b16 %v153
  %v1012 = vunpack.c.l.b16 %v154
  %v1013 = vunpack.c.h.b16 %v154
  %v1014 = vunpack.c.l.b16 %v155
  %v1015 = vunpack.c.h.b16 %v155
  %v1016 = vunpack.c.l.b16 %v156
  %v1017 = vunpack.c.h.b16 %v156
  %v1018 = vunpack.c.l.b16 %v157
  %v1019 = vunpack.c.h.b16 %v157
  %v1020 = vunpack.c.l.b16 %v158
  %v1021 = vunpack.c.h.b16 %v158
  %v1022 = vunpack.c.l.b16 %v159
  %v1023 = vunpack.c.h.b16 %v159
  %v1024 = vunpack.c.l.b16 %v160
  %v1025 = vunpack.c.h.b16 %v160
  %v1026 = vunpack.c.l.b16 %v161
  %v1027 = vunpack.c.h.b16 %v161
  %v1028 = vunpack.c.l.b16 %v162
  %v1029 = vunpack.c.h.b16 %v162
  %v1030 = vunpack.c.l.b16 %v163
  %v1031 = vunpack.c.h.b16 %v163
  %v1032 = vunpack.c.l.b16 %v164
  %v1033 = vunpack.c.h.b16 %v164
  %v1034 = vunpack.c.l.b16 %v165
  %v1035 = vunpack.c.h.b16 %v165
  %v1036 = vunpack.c.l.b16 %v166
  %v1037 = vunpack.c.h.b16 %v166
  %v1038 = vunpack.c.l.b16 %v167
  %v1039 = vunpack.c.h.b16 %v167
  %v1040 = vunpack.c.l.b16 %v168
  %v1041 = vunpack.c.h.b16 %v168
  %v1042 = vunpack.c.l.b16 %v169
  %v1043 = vunpack.c.h.b16 %v169
  %v1044 = vunpack.c.l.b16 %v170
  %v1045 = vunpack.c.h.b16 %v170
  %v1046 = vunpack.c.l.b16 %v171
  %v1047 = vunpack.c.h.b16 %v171
  %v1048 = vunpack.c.l.b16 %v172
  %v1049 = vunpack.c.h.b16 %v172
  %v1050 = vunpack.c.l.b16 %v173
  %v1051 = vunpack.c.h.b16 %v173
  %v1052 = vunpack.c.l.b16 %v174
  %v1053 = vunpack.c.h.b16 %v174
  %v1054 = vunpack.c.l.b16 %v175
  %v1055 = vunpack.c.h.b16 %v175
  %v1056 = vunpack.c.l.b16 %v176
  %v1057 = vunpack.c.h.b16 %v176
  %v1058 = vunpack.c.l.b16 %v177
  %v1059 = vunpack.c.h.b16 %v177
  %v1060 = vunpack.c.l.b16 %v178
  %v1061 = vunpack.c.h.b16 %v178
  %v1062 = vunpack.c.l.b16 %v179
  %v1063 = vunpack.c.h.b16 %v179
  %v1064 = vunpack.c.l.b16 %v180
  %v1065 = vunpack.c.h.b16 %v180
  %v1066 = vunpack.c.l.b16 %v181
  %v1067 = vunpack.c.h.b16 %v181
  %v1068 = vunpack.c.l.b16 %v182
  %v1069 = vunpack.c.h.b16 %v182
  %v1070 = vunpack.c.l.b16 %v183
  %v1071 = vunpack.c.h.b16 %v183
  %v1072 = vunpack.c.l.b16 %v184
  %v1073 = vunpack.c.h.b16 %v184
  %v1074 = vunpack.c.l.b16 %v185
  %v1075 = vunpack.c.h.b16 %v185
  %v1076 = vunpack.c.l.b16 %v186
  %v1077 = vunpack.c.h.b16 %v186
  %v1078 = vunpack.c.l.b16 %v187
  %v1079 = vunpack.c.h.b16 %v187
  %v1080 = vunpack.c.l.b16 %v188
  %v1081 = vunpack.c.h.b16 %v188
  %v1082 = vunpack.c.l.b16 %v189
  %v1083 = vunpack.c.h.b16 %v189
  %v1084 = vunpack.c.l.b16 %v190
  %v1085 = vunpack.c.h.b16 %v190
  %v1086 = vunpack.c.l.b16 %v191
  %v1087 = vunpack.c.h.b16 %v191
  %v1088 = vunpack.c.l.b16 %v192
  %v1089 = vunpack.c.h.b16 %v192
  %v1090 = vunpack.c.l.b16 %v193
  %v1091 = vunpack.c.h.b16 %v193
  %v1092 = vunpack.c.l.b16 %v194
  %v1093 = vunpack.c.h.b16 %v194
  %v1094 = vunpack.c.l.b16 %v195
  %v1095 = vunpack.c.h.b16 %v195
  %v1096 = vunpack.c.l.b16 %v196
  %v1097 = vunpack.c.h.b16 %v196
  %v1098 = vunpack.c.l.b16 %v197
  %v1099 = vunpack.c.h.b16 %v197
  %v1100 = vunpack.c.l.b16 %v198
  %v1101 = vunpack.c.h.b16 %v198
  %v1102 = vunpack.c.l.b16 %v199
  %v1103 = vunpack.c.h.b16 %v199
  %v1104 = vunpack.c.l.b16 %v200
  %v1105 = vunpack.c.h.b16 %v200
  %v1106 = vunpack.c.l.b16 %v201
  %v1107 = vunpack.c.h.b16 %v201
  %v1108 = vunpack.c.l.b16 %v202
  %v1109 = vunpack.c.h.b16 %v202
  %v1110 = vunpack.c.l.b16 %v203
  %v1111 = vunpack.c.h.b16 %v203
  %v1112 = vunpack.c.l.b16 %v204
  %v1113 = vunpack.c.h.b16 %v204
  %v1114 = vunpack.c.l.b16 %v205
  %v1115 = vunpack.c.h.b16 %v205
  %v1116 = vunpack.c.l.b16 %v206
  %v1117 = vunpack.c.h.b16 %v206
  %v1118 = vunpack.c.l.b16 %v207
  %v1119 = vunpack.c.h.b16 %v207
  %v1120 = vunpack.c.l.b16 %v208
  %v1121 = vunpack.c.h.b16 %v208
  %v1122 = vunpack.c.l.b16 %v209
  %v1123 = vunpack.c.h.b16 %v209
  %v1124 = vunpack.c.l.b16 %v210
  %v1125 = vunpack.c.h.b16 %v210
  %v1126 = vunpack.c.l.b16 %v211
  %v1127 = vunpack.c.h.b16 %v211
  %v1128 = vunpack.c.l.b16 %v212
  %v1129 = vunpack.c.h.b16 %v212
  %v1130 = vunpack.c.l.b16 %v213
  %v1131 = vunpack.c.h.b16 %v213
  %v1132 = vunpack.c.l.b16 %v214
  %v1133 = vunpack.c.h.b16 %v214
  %v1134 = vunpack.c.l.b16 %v215
  %v1135 = vunpack.c.h.b16 %v215
  %v1136 = vunpack.c.l.b16 %v216
  %v1137 = vunpack.c.h.b16 %v216
  %v1138 = vunpack.c.l.b16 %v217
  %v1139 = vunpack.c.h.b16 %v217
  %v1140 = vunpack.c.l.b16 %v218
  %v1141 = vunpack.c.h.b16 %v218
  %v1142 = vunpack.c.l.b16 %v219
  %v1143 = vunpack.c.h.b16 %v219
  %v1144 = vunpack.c.l.b16 %v220
  %v1145 = vunpack.c.h.b16 %v220
  %v1146 = vunpack.c.l.b16 %v221
  %v1147 = vunpack.c.h.b16 %v221
  %v1148 = vunpack.c.l.b16 %v222
  %v1149 = vunpack.c.h.b16 %v222
  %v1150 = vunpack.c.l.b16 %v223
  %v1151 = vunpack.c.h.b16 %v223
  %v1152 = vunpack.c.l.b16 %v224
  %v1153 = vunpack.c.h.b16 %v224
  %v1154 = vunpack.c.l.b16 %v225
  %v1155 = vunpack.c.h.b16 %v225
  %v1156 = vunpack.c.l.b16 %v226
  %v1157 = vunpack.c.h.b16 %v226
  %v1158 = vunpack.c.l.b16 %v227
  %v1159 = vunpack.c.h.b16 %v227
  %v1160 = vunpack.c.l.b16 %v228
  %v1161 = vunpack.c.h.b16 %v228
  %v1162 = vunpack.c.l.b16 %v229
  %v1163 = vunpack.c.h.b16 %v229
  %v1164 = vunpack.c.l.b16 %v230
  %v1165 = vunpack.c.h.b16 %v230
  %v1166 = vunpack.c.l.b16 %v231
  %v1167 = vunpack.c.h.b16 %v231
  %v1168 = vunpack.c.l.b16 %v232
  %v1169 = vunpack.c.h.b16 %v232
  %v1170 = vunpack.c.l.b16 %v233
  %v1171 = vunpack.c.h.b16 %v233
  %v1172 = vunpack.c.l.b16 %v234
  %v1173 = vunpack.c.h.b16 %v234
  %v1174 = vunpack.c.l.b16 %v235
  %v1175 = vunpack.c.h.b16 %v235
  %v1176 = vunpack.c.l.b16 %v236
  %v1177 = vunpack.c.h.b16 %v236
  %v1178 = vunpack.c.l.b16 %v237
  %v1179 = vunpack.c.h.b16 %v237
  %v1180 = vunpack.c.l.b16 %v238
  %v1181 = vunpack.c.h.b16 %v238
  %v1182 = vunpack.c.l.b16 %v239
  %v1183 = vunpack.c.h.b16 %v239
  %v1184 = vunpack.c.l.b16 %v240
  %v1185 = vunpack.c.h.b16 %v240
  %v1186 = vunpack.c.l.b16 %v241
  %v1187 = vunpack.c.h.b16 %v241
  %v1188 = vunpack.c.l.b16 %v242
  %v1189 = vunpack.c.h.b16 %v242
  %v1190 = vunpack.c.l.b16 %v243
  %v1191 = vunpack.c.h.b16 %v243
  %v1192 = vunpack.c.l.b16 %v244
  %v1193 = vunpack.c.h.b16 %v244
  %v1194 = vunpack.c.l.b16 %v245
  %v1195 = vunpack.c.h.b16 %v245
  %v1196 = vunpack.c.l.b16 %v246
  %v1197 = vunpack.c.h.b16 %v246
  %v1198 = vunpack.c.l.b16 %v247
  %v1199 = vunpack.c.h.b16 %v247
  %v1200 = vunpack.c.l.b16 %v248
  %v1201 = vunpack.c.h.b16 %v248
  %v1202 = vunpack.c.l.b16 %v249
  %v1203 = vunpack.c.h.b16 %v249
  %v1204 = vunpack.c.l.b16 %v250
  %v1205 = vunpack.c.h.b16 %v250
  %v1206 = vunpack.c.l.b16 %v251
  %v1207 = vunpack.c.h.b16 %v251
  %v1208 = vunpack.c.l.b16 %v252
  %v1209 = vunpack.c.h.b16 %v252
  %v1210 = vunpack.c.l.b16 %v253
  %v1211 = vunpack.c.h.b16 %v253
  %v1212 = vunpack.c.l.b16 %v254
  %v1213 = vunpack.c.h.b16 %v254
  %v1214 = vunpack.c.l.b16 %v255
  %v1215 = vunpack.c.h.b16 %v255
  %v1216 = vunpack.c.l.b16 %v256
  %v1217 = vunpack.c.h.b16 %v256
  %v1218 = vunpack.c.l.b16 %v257
  %v1219 = vunpack.c.h.b16 %v257
  %v1220 = vunpack.c.l.b16 %v258
  %v1221 = vunpack.c.h.b16 %v258
  %v1222 = vunpack.c.l.b16 %v259
  %v1223 = vunpack.c.h.b16 %v259
  %v1224 = vunpack.c.l.b16 %v260
  %v1225 = vunpack.c.h.b16 %v260
  %v1226 = vunpack.c.l.b16 %v261
  %v1227 = vunpack.c.h.b16 %v261
  %v1228 = vunpack.c.l.b16 %v262
  %v1229 = vunpack.c.h.b16 %v262
  %v1230 = vunpack.c.l.b16 %v263
  %v1231 = vunpack.c.h.b16 %v263
  %v1232 = vunpack.c.l.b16 %v264
  %v1233 = vunpack.c.h.b16 %v264
  %v1234 = vunpack.c.l.b16 %v265
  %v1235 = vunpack.c.h.b16 %v265
  %v1236 = vunpack.c.l.b16 %v266
  %v1237 = vunpack.c.h.b16 %v266
  %v1238 = vunpack.c.l.b16 %v267
  %v1239 = vunpack.c.h.b16 %v267
  %v1240 = vunpack.c.l.b16 %v268
  %v1241 = vunpack.c.h.b16 %v268
  %v1242 = vunpack.c.l.b16 %v269
  %v1243 = vunpack.c.h.b16 %v269
  %v1244 = vunpack.c.l.b16 %v270
  %v1245 = vunpack.c.h.b16 %v270
  %v1246 = vunpack.c.l.b16 %v271
  %v1247 = vunpack.c.h.b16 %v271
  %v1248 = vunpack.c.l.b16 %v272
  %v1249 = vunpack.c.h.b16 %v272
  %v1250 = vunpack.c.l.b16 %v273
  %v1251 = vunpack.c.h.b16 %v273
  %v1252 = vunpack.c.l.b16 %v274
  %v1253 = vunpack.c.h.b16 %v274
  %v1254 = vunpack.c.l.b16 %v275
  %v1255 = vunpack.c.h.b16 %v275
  %v1256 = vunpack.c.l.b16 %v276
  %v1257 = vunpack.c.h.b16 %v276
  %v1258 = vunpack.c.l.b16 %v277
  %v1259 = vunpack.c.h.b16 %v277
  %v1260 = vunpack.c.l.b16 %v278
  %v1261 = vunpack.c.h.b16 %v278
  %v1262 = vunpack.c.l.b16 %v279
  %v1263 = vunpack.c.h.b16 %v279
  %v1264 = vunpack.c.l.b16 %v280
  %v1265 = vunpack.c.h.b16 %v280
  %v1266 = vunpack.c.l.b16 %v281
  %v1267 = vunpack.c.h.b16 %v281
  %v1268 = vunpack.c.l.b16 %v282
  %v1269 = vunpack.c.h.b16 %v282
  %v1270 = vunpack.c.l.b16 %v283
  %v1271 = vunpack.c.h.b16 %v283
  %v1272 = vunpack.c.l.b16 %v284
  %v1273 = vunpack.c.h.b16 %v284
  %v1274 = vunpack.c.l.b16 %v285
  %v1275 = vunpack.c.h.b16 %v285
  %v1276 = vunpack.c.l.b16 %v286
  %v1277 = vunpack.c.h.b16 %v286
  %v1278 = vunpack.c.l.b16 %v287
  %v1279 = vunpack.c.h.b16 %v287
  %v1280 = vunpack.c.l.b16 %v288
  %v1281 = vunpack.c.h.b16 %v288
  %v1282 = vunpack.c.l.b16 %v289
  %v1283 = vunpack.c.h.b16 %v289
  %v1284 = vunpack.c.l.b16 %v290
  %v1285 = vunpack.c.h.b16 %v290
  %v1286 = vunpack.c.l.b16 %v291
  %v1287 = vunpack.c.h.b16 %v291
  %v1288 = vunpack.c.l.b16 %v292
  %v1289 = vunpack.c.h.b16 %v292
  %v1290 = vunpack.c.l.b16 %v293
  %v1291 = vunpack.c.h.b16 %v293
  %v1292 = vunpack.c.l.b16 %v294
  %v1293 = vunpack.c.h.b16 %v294
  %v1294 = vunpack.c.l.b16 %v295
  %v1295 = vunpack.c.h.b16 %v295
  %v1296 = vunpack.c.l.b16 %v296
  %v1297 = vunpack.c.h.b16 %v296
  %v1298 = vunpack.c.l.b16 %v297
  %v1299 = vunpack.c.h.b16 %v297
  %v1300 = vunpack.c.l.b16 %v298
  %v1301 = vunpack.c.h.b16 %v298
  %v1302 = vunpack.c.l.b16 %v299
  %v1303 = vunpack.c.h.b16 %v299
  %v1304 = vunpack.c.l.b16 %v300
  %v1305 = vunpack.c.h.b16 %v300
  %v1306 = vunpack.c.l.b16 %v301
  %v1307 = vunpack.c.h.b16 %v301
  %v1308 = vunpack.c.l.b16 %v302
  %v1309 = vunpack.c.h.b16 %v302
  %v1310 = vunpack.c.l.b16 %v303
  %v1311 = vunpack.c.h.b16 %v303
  %v1312 = vunpack.c.l.b16 %v304
  %v1313 = vunpack.c.h.b16 %v304
  %v1314 = vunpack.c.l.b16 %v305
  %v1315 = vunpack.c.h.b16 %v305
  %v1316 = vunpack.c.l.b16 %v306
  %v1317 = vunpack.c.h.b16 %v306
  %v1318 = vunpack.c.l.b16 %v307
  %v1319 = vunpack.c.h.b16 %v307
  %v1320 = vunpack.c.l.b16 %v308
  %v1321 = vunpack.c.h.b16 %v308
  %v1322 = vunpack.c.l.b16 %v309
  %v1323 = vunpack.c.h.b16 %v309
  %v1324 = vunpack.c.l.b16 %v310
  %v1325 = vunpack.c.h.b16 %v310
  %v1326 = vunpack.c.l.b16 %v311
  %v1327 = vunpack.c.h.b16 %v311
  %v1328 = vunpack.c.l.b16 %v312
  %v1329 = vunpack.c.h.b16 %v312
  %v1330 = vunpack.c.l.b16 %v313
  %v1331 = vunpack.c.h.b16 %v313
  %v1332 = vunpack.c.l.b16 %v314
  %v1333 = vunpack.c.h.b16 %v314
  %v1334 = vunpack.c.l.b16 %v315
  %v1335 = vunpack.c.h.b16 %v315
  %v1336 = vunpack.c.l.b16 %v316
  %v1337 = vunpack.c.h.b16 %v316
  %v1338 = vunpack.c.l.b16 %v317
  %v1339 = vunpack.c.h.b16 %v317
  %v1340 = vunpack.c.l.b16 %v318
  %v1341 = vunpack.c.h.b16 %v318
  %v1342 = vunpack.c.l.b16 %v319
  %v1343 = vunpack.c.h.b16 %v319
  %v1344 = vunpack.c.l.b16 %v320
  %v1345 = vunpack.c.h.b16 %v320
  %v1346 = vunpack.c.l.b16 %v321
  %v1347 = vunpack.c.h.b16 %v321
  %v1348 = vunpack.c.l.b16 %v322
  %v1349 = vunpack.c.h.b16 %v322
  %v1350 = vunpack.c.l.b16 %v323
  %v1351 = vunpack.c.h.b16 %v323
  %v1352 = vunpack.c.l.b16 %v324
  %v1353 = vunpack.c.h.b16 %v324
  %v1354 = vunpack.c.l.b16 %v325
  %v1355 = vunpack.c.h.b16 %v325
  %v1356 = vunpack.c.l.b16 %v326
  %v1357 = vunpack.c.h.b16 %v326
  %v1358 = vunpack.c.l.b16 %v327
  %v1359 = vunpack.c.h.b16 %v327
  %v1360 = vunpack.c.l.b16 %v328
  %v1361 = vunpack.c.h.b16 %v328
  %v1362 = vunpack.c.l.b16 %v329
  %v1363 = vunpack.c.h.b16 %v329
  %v1364 = vunpack.c.l.b16 %v330
  %v1365 = vunpack.c.h.b16 %v330
  %v1366 = vunpack.c.l.b16 %v331
  %v1367 = vunpack.c.h.b16 %v331
  %v1368 = vunpack.c.l.b16 %v332
  %v1369 = vunpack.c.h.b16 %v332
  %v1370 = vunpack.c.l.b16 %v333
  %v1371 = vunpack.c.h.b16 %v333
  %v1372 = vunpack.c.l.b16 %v334
  %v1373 = vunpack.c.h.b16 %v334
  %v1374 = vunpack.c.l.b16 %v335
  %v1375 = vunpack.c.h.b16 %v335
  %v1376 = vunpack.c.l.b16 %v336
  %v1377 = vunpack.c.h.b16 %v336
  %v1378 = vunpack.c.l.b16 %v337
  %v1379 = vunpack.c.h.b16 %v337
  %v1380 = vunpack.c.l.b16 %v338
  %v1381 = vunpack.c.h.b16 %v338
  %v1382 = vunpack.c.l.b16 %v339
  %v1383 = vunpack.c.h.b16 %v339
  %v1384 = vunpack.c.l.b16 %v340
  %v1385 = vunpack.c.h.b16 %v340
  %v1386 = vunpack.c.l.b16 %v341
  %v1387 = vunpack.c.h.b16 %v341
  %v1388 = vunpack.c.l.b16 %v342
  %v1389 = vunpack.c.h.b16 %v342
  %v1390 = vunpack.c.l.b16 %v343
  %v1391 = vunpack.c.h.b16 %v343
  %v1392 = vunpack.c.l.b16 %v344
  %v1393 = vunpack.c.h.b16 %v344
  %v1394 = vpack.c.b16 %v1006, %v1002
  %v1395 = vpack.c.b16 %v1007, %v1003
  %v1396 = vpack.c.b16 %v1008, %v1004
  %v1397 = vpack.c.b16 %v1009, %v1005
  %v1398 = vpack.c.b16 %v1014, %v1010
  %v1399 = vpack.c.b16 %v1015, %v1011
  %v1400 = vpack.c.b16 %v1016, %v1012
  %v1401 = vpack.c.b16 %v1017, %v1013
  %v1402 = vpack.c.b16 %v1022, %v1018
  %v1403 = vpack.c.b16 %v1023, %v1019
  %v1404 = vpack.c.b16 %v1024, %v1020
  %v1405 = vpack.c.b16 %v1025, %v1021
  %v1406 = vpack.c.b16 %v1030, %v1026
  %v1407 = vpack.c.b16 %v1031, %v1027
  %v1408 = vpack.c.b16 %v1032, %v1028
  %v1409 = vpack.c.b16 %v1033, %v1029
  %v1410 = vpack.c.b16 %v1038, %v1034
  %v1411 = vpack.c.b16 %v1039, %v1035
  %v1412 = vpack.c.b16 %v1040, %v1036
  %v1413 = vpack.c.b16 %v1041, %v1037
  %v1414 = vpack.c.b16 %v1046, %v1042
  %v1415 = vpack.c.b16 %v1047, %v1043
  %v1416 = vpack.c.b16 %v1048, %v1044
  %v1417 = vpack.c.b16 %v1049, %v1045
  %v1418 = vpack.c.b16 %v1054, %v1050
  %v1419 = vpack.c.b16 %v1055, %v1051
  %v1420 = vpack.c.b16 %v1056, %v1052
  %v1421 = vpack.c.b16 %v1057, %v1053
  %v1422 = vpack.c.b16 %v1062, %v1058
  %v1423 = vpack.c.b16 %v1063, %v1059
  %v1424 = vpack.c.b16 %v1064, %v1060
  %v1425 = vpack.c.b16 %v1065, %v1061
  %v1426 = vpack.c.b16 %v1070, %v1066
  %v1427 = vpack.c.b16 %v1071, %v1067
  %v1428 = vpack.c.b16 %v1072, %v1068
  %v1429 = vpack.c.b16 %v1073, %v1069
  %v1430 = vpack.c.b16 %v1078, %v1074
  %v1431 = vpack.c.b16 %v1079, %v1075
  %v1432 = vpack.c.b16 %v1080, %v1076
  %v1433 = vpack.c.b16 %v1081, %v1077
  %v1434 = vpack.c.b16 %v1086, %v1082
  %v1435 = vpack.c.b16 %v1087, %v1083
  %v1436 = vpack.c.b16 %v1088, %v1084
  %v1437 = vpack.c.b16 %v1089, %v1085
  %v1438 = vpack.c.b16 %v1094, %v1090
  %v1439 = vpack.c.b16 %v1095, %v1091
  %v1440 = vpack.c.b16 %v1096, %v1092
  %v1441 = vpack.c.b16 %v1097, %v1093
  %v1442 = vpack.c.b16 %v1102, %v1098
  %v1443 = vpack.c.b16 %v1103, %v1099
  %v1444 = vpack.c.b16 %v1104, %v1100
  %v1445 = vpack.c.b16 %v1105, %v1101
  %v1446 = vpack.c.b16 %v1110, %v1106
  %v1447 = vpack.c.b16 %v1111, %v1107
  %v1448 = vpack.c.b16 %v1112, %v1108
  %v1449 = vpack.c.b16 %v1113, %v1109
  %v1450 = vpack.c.b16 %v1118, %v1114
  %v1451 = vpack.c.b16 %v1119, %v1115
  %v1452 = vpack.c.b16 %v1120, %v1116
  %v1453 = vpack.c.b16 %v1121, %v1117
  %v1454 = vpack.c.b16 %v1126, %v1122
  %v1455 = vpack.c.b16 %v1127, %v1123
  %v1456 = vpack.c.b16 %v1128, %v1124
  %v1457 = vpack.c.b16 %v1129, %v1125
  %v1458 = vpack.c.b16 %v1134, %v1130
  %v1459 = vpack.c.b16 %v1135, %v1131
  %v1460 = vpack.c.b16 %v1136, %v1132
  %v1461 = vpack.c.b16 %v1137, %v1133
  %v1462 = vpack.c.b16 %v1142, %v1138
  %v1463 = vpack.c.b16 %v1143, %v1139
  %v1464 = vpack.c.b16 %v1144, %v1140
  %v1465 = vpack.c.b16 %v1145, %v1141
  %v1466 = vpack.c.b16 %v1150, %v1146
  %v1467 = vpack.c.b16 %v1151, %v1147
  %v1468 = vpack.c.b16 %v1152, %v1148
  %v1469 = vpack.c.b16 %v1153, %v1149
  %v1470 = vpack.c.b16 %v1158, %v1154
  %v1471 = vpack.c.b16 %v1159, %v1155
  %v1472 = vpack.c.b16 %v1160, %v1156
  %v1473 = vpack.c.b16 %v1161, %v1157
  %v1474 = vpack.c.b16 %v1166, %v1162
  %v1475 = vpack.c.b16 %v1167, %v1163
  %v1476 = vpack.c.b16 %v1168, %v1164
  %v1477 = vpack.c.b16 %v1169, %v1165
  %v1478 = vpack.c.b16 %v1174, %v1170
  %v1479 = vpack.c.b16 %v1175, %v1171
  %v1480 = vpack.c.b16 %v1176, %v1172
  %v1481 = vpack.c.b16 %v1177, %v1173
  %v1482 = vpack.c.b16 %v1182, %v1178
  %v1483 = vpack.c.b16 %v1183, %v1179
  %v1484 = vpack.c.b16 %v1184, %v1180
  %v1485 = vpack.c.b16 %v1185, %v1181
  %v1486 = vpack.c.b16 %v1190, %v1186
  %v1487 = vpack.c.b16 %v1191, %v1187
  %v1488 = vpack.c.b16 %v1192, %v1188
  %v1489 = vpack.c.b16 %v1193, %v1189
  %v1490 = vpack.c.b16 %v1198, %v1194
  %v1491 = vpack.c.b16 %v1199, %v1195
  %v1492 = vpack.c.b16 %v1200, %v1196
  %v1493 = vpack.c.b16 %v1201, %v1197
  %v1494 = vpack.c.b16 %v1206, %v1202
  %v1495 = vpack.c.b16 %v1207, %v1203
  %v1496 = vpack.c.b16 %v1208, %v1204
  %v1497 = vpack.c.b16 %v1209, %v1205
  %v1498 = vpack.c.b16 %v1214, %v1210
  %v1499 = vpack.c.b16 %v1215, %v1211
  %v1500 = vpack.c.b16 %v1216, %v1212
  %v1501 = vpack.c.b16 %v1217, %v1213
  %v1502 = vpack.c.b16 %v1222, %v1218
  %v1503 = vpack.c.b16 %v1223, %v1219
  %v1504 = vpack.c.b16 %v1224, %v1220
  %v1505 = vpack.c.b16 %v1225, %v1221
  %v1506 = vpack.c.b16 %v1230, %v1226
  %v1507 = vpack.c.b16 %v1231, %v1227
  %v1508 = vpack.c.b16 %v1232, %v1228
  %v1509 = vpack.c.b16 %v1233, %v1229
  %v1510 = vpack.c.b16 %v1238, %v1234
  %v1511 = vpack.c.b16 %v1239, %v1235
  %v1512 = vpack.c.b16 %v1240, %v1236
  %v1513 = vpack.c.b16 %v1241, %v1237
  %v1514 = vpack.c.b16 %v1246, %v1242
  %v1515 = vpack.c.b16 %v1247, %v1243
  %v1516 = vpack.c.b16 %v1248, %v1244
  %v1517 = vpack.c.b16 %v1249, %v1245
  %v1518 = vpack.c.b16 %v1254, %v1250
  %v1519 = vpack.c.b16 %v1255, %v1251
  %v1520 = vpack.c.b16 %v1256, %v1252
  %v1521 = vpack.c.b16 %v1257, %v1253
  %v1522 = vpack.c.b16 %v1262, %v1258
  %v1523 = vpack.c.b16 %v1263, %v1259
  %v1524 = vpack.c.b16 %v1264, %v1260
  %v1525 = vpack.c.b16 %v1265, %v1261
  %v1526 = vpack.c.b16 %v1270, %v1266
  %v1527 = vpack.c.b16 %v1271, %v1267
  %v1528 = vpack.c.b16 %v1272, %v1268
  %v1529 = vpack.c.b16 %v1273, %v1269
  %v1530 = vpack.c.b16 %v1278, %v1274
  %v1531 = vpack.c.b16 %v1279, %v1275
  %v1532 = vpack.c.b16 %v1280, %v1276
  %v1533 = vpack.c.b16 %v1281, %v1277
  %v1534 = vpack.c.b16 %v1286, %v1282
  %v1535 = vpack.c.b16 %v1287, %v1283
  %v1536 = vpack.c.b16 %v1288, %v1284
  %v1537 = vpack.c.b16 %v1289, %v1285
  %v1538 = vpack.c.b16 %v1294, %v1290
  %v1539 = vpack.c.b16 %v1295, %v1291
  %v1540 = vpack.c.b16 %v1296, %v1292
  %v1541 = vpack.c.b16 %v1297, %v1293
  %v1542 = vpack.c.b16 %v1302, %v1298
  %v1543 = vpack.c.b16 %v1303, %v1299
  %v1544 = vpack.c.b16 %v1304, %v1300
  %v1545 = vpack.c.b16 %v1305, %v1301
  %v1546 = vpack.c.b16 %v1310, %v1306
  %v1547 = vpack.c.b16 %v1311, %v1307
  %v1548 = vpack.c.b16 %v1312, %v1308
  %v1549 = vpack.c.b16 %v1313, %v1309
  %v1550 = vpack.c.b16 %v1318, %v1314
  %v1551 = vpack.c.b16 %v1319, %v1315
  %v1552 = vpack.c.b16 %v1320, %v1316
  %v1553 = vpack.c.b16 %v1321, %v1317
  %v1554 = vpack.c.b16 %v1326, %v1322
  %v1555 = vpack.c.b16 %v1327, %v1323
  %v1556 = vpack.c.b16 %v1328, %v1324
  %v1557 = vpack.c.b16 %v1329, %v1325
  %v1558 = vpack.c.b16 %v1334, %v1330
  %v1559 = vpack.c.b16 %v1335, %v1331
  %v1560 = vpack.c.b16 %v1336, %v1332
  %v1561 = vpack.c.b16 %v1337, %v1333
  %v1562 = vpack.c.b16 %v1342, %v1338
  %v1563 = vpack.c.b16 %v1343, %v1339
  %v1564 = vpack.c.b16 %v1344, %v1340
  %v1565 = vpack.c.b16 %v1345, %v1341
  %v1566 = vpack.c.b16 %v1350, %v1346
  %v1567 = vpack.c.b16 %v1351, %v1347
  %v1568 = vpack.c.b16 %v1352, %v1348
  %v1569 = vpack.c.b16 %v1353, %v1349
  %v1570 = vpack.c.b16 %v1358, %v1354
  %v1571 = vpack.c.b16 %v1359, %v1355
  %v1572 = vpack.c.b16 %v1360, %v1356
  %v1573 = vpack.c.b16 %v1361, %v1357
  %v1574 = vpack.c.b16 %v1366, %v1362
  %v1575 = vpack.c.b16 %v1367, %v1363
  %v1576 = vpack.c.b16 %v1368, %v1364
  %v1577 = vpack.c.b16 %v1369, %v1365
  %v1578 = vpack.c.b16 %v1374, %v1370
  %v1579 = vpack.c.b16 %v1375, %v1371
  %v1580 = vpack.c.b16 %v1376, %v1372
  %v1581 = vpack.c.b16 %v1377, %v1373
  %v1582 = vpack.c.b16 %v1382, %v1378
  %v1583 = vpack.c.b16 %v1383, %v1379
  %v1584 = vpack.c.b16 %v1384, %v1380
  %v1585 = vpack.c.b16 %v1385, %v1381
  %v1586 = vpack.c.b16 %v1390, %v1386
  %v1587 = vpack.c.b16 %v1391, %v1387
  %v1588 = vpack.c.b16 %v1392, %v1388
  %v1589 = vpack.c.b16 %v1393, %v1389
  %vm1786 = vcmask 130048
  %v1788 = vsel %vm1786, %v734, 0
  %v1791 = vsel %vm1786, %v741, 0
  %v1794 = vsel %vm1786, %v748, 0
  %v1797 = vsel %vm1786, %v755, 0
  %v1800 = vsel %vm1786, %v762, 0
  %v1803 = vsel %vm1786, %v769, 0
  %1805 = vmatprep.subr.bf16.mxu0 %v1395
  %1806 = vmatpush1.bf16.msra.mxu0 %v1394
  %1807 = vmatprep.subr.bf16.mxu0 %v1399
  %1808 = vmatpush1.bf16.msra.mxu0 %v1398
  %1809 = vmatprep.subr.bf16.mxu0 %v1403
  %1810 = vmatpush1.bf16.msra.mxu0 %v1402
  %1811 = vmatprep.subr.bf16.mxu0 %v1407
  %1812 = vmatpush1.bf16.msra.mxu0 %v1406
  %1813 = vmatprep.subr.bf16.mxu0 %v1411
  %1814 = vmatpush1.bf16.msra.mxu0 %v1410
  %1815 = vmatprep.subr.bf16.mxu0 %v1415
  %1816 = vmatpush1.bf16.msra.mxu0 %v1414
  %1817 = vmatprep.subr.bf16.mxu0 %v1419
  %1818 = vmatpush1.bf16.msra.mxu0 %v1418
  %1819 = vmatprep.subr.bf16.mxu0 %v1423
  %1820 = vmatpush1.bf16.msra.mxu0 %v1422
  %1821 = vmatprep.subr.bf16.mxu0 %v1427
  %1822 = vmatpush1.bf16.msra.mxu0 %v1426
  %1823 = vmatprep.subr.bf16.mxu0 %v1431
  %1824 = vmatpush1.bf16.msra.mxu0 %v1430
  %1825 = vmatprep.subr.bf16.mxu0 %v1435
  %1826 = vmatpush1.bf16.msra.mxu0 %v1434
  %1827 = vmatprep.subr.bf16.mxu0 %v1439
  %1828 = vmatpush1.bf16.msra.mxu0 %v1438
  %1829 = vmatprep.subr.bf16.mxu0 %v1443
  %1830 = vmatpush1.bf16.msra.mxu0 %v1442
  %1831 = vmatprep.subr.bf16.mxu0 %v1447
  %1832 = vmatpush1.bf16.msra.mxu0 %v1446
  %1833 = vmatprep.subr.bf16.mxu0 %v1451
  %1834 = vmatpush1.bf16.msra.mxu0 %v1450
  %1835 = vmatprep.subr.bf16.mxu0 %v1455
  %1836 = vmatpush1.bf16.msra.mxu0 %v1454
  %1837 = vmatprep.mubr.bf16.mxu0 %v729
  %1838 = vmatmul.mubr.bf16.gmra.mrb[0].mxu0 %v728
  %v1839 = vpop.f32.mrb[0].mxu0
  %v1840 = vadd.f32 %v460, %v1839
  %v1841 = vpop.f32.mrb[0].mxu0
  %v1842 = vadd.f32 %v462, %v1841
  %v1843 = vpop.f32.mrb[0].mxu0
  %v1844 = vadd.f32 %v464, %v1843
  %v1845 = vpop.f32.mrb[0].mxu0
  %v1846 = vadd.f32 %v466, %v1845
  %1847 = vmatprep.mubr.bf16.mxu0 %v736
  %1848 = vmatmul.mubr.bf16.gmra.mrb[0].mxu0 %v735
  %v1849 = vpop.f32.mrb[0].mxu0
  %v1850 = vadd.f32 %v470, %v1849
  %v1851 = vpop.f32.mrb[0].mxu0
  %v1852 = vadd.f32 %v472, %v1851
  %v1853 = vpop.f32.mrb[0].mxu0
  %v1854 = vadd.f32 %v474, %v1853
  %v1855 = vpop.f32.mrb[0].mxu0
  %v1856 = vadd.f32 %v476, %v1855
  %1857 = vmatprep.mubr.bf16.mxu0 %v743
  %1858 = vmatmul.mubr.bf16.gmra.mrb[0].mxu0 %v742
  %v1859 = vpop.f32.mrb[0].mxu0
  %v1860 = vadd.f32 %v480, %v1859
  %v1861 = vpop.f32.mrb[0].mxu0
  %v1862 = vadd.f32 %v482, %v1861
  %v1863 = vpop.f32.mrb[0].mxu0
  %v1864 = vadd.f32 %v484, %v1863
  %v1865 = vpop.f32.mrb[0].mxu0
  %v1866 = vadd.f32 %v486, %v1865
  %1867 = vmatprep.mubr.bf16.mxu0 %v750
  %1868 = vmatmul.mubr.bf16.gmra.mrb[0].mxu0 %v749
  %v1869 = vpop.f32.mrb[0].mxu0
  %v1870 = vadd.f32 %v490, %v1869
  %v1871 = vpop.f32.mrb[0].mxu0
  %v1872 = vadd.f32 %v492, %v1871
  %v1873 = vpop.f32.mrb[0].mxu0
  %v1874 = vadd.f32 %v494, %v1873
  %v1875 = vpop.f32.mrb[0].mxu0
  %v1876 = vadd.f32 %v496, %v1875
  %1877 = vmatprep.mubr.bf16.mxu0 %v757
  %1878 = vmatmul.mubr.bf16.gmra.mrb[0].mxu0 %v756
  %v1879 = vpop.f32.mrb[0].mxu0
  %v1880 = vadd.f32 %v500, %v1879
  %v1881 = vpop.f32.mrb[0].mxu0
  %v1882 = vadd.f32 %v502, %v1881
  %v1883 = vpop.f32.mrb[0].mxu0
  %v1884 = vadd.f32 %v504, %v1883
  %v1885 = vpop.f32.mrb[0].mxu0
  %v1886 = vadd.f32 %v506, %v1885
  %1887 = vmatprep.mubr.bf16.mxu0 %v764
  %1888 = vmatmul.mubr.bf16.gmra.mrb[0].mxu0 %v763
  %v1889 = vpop.f32.mrb[0].mxu0
  %v1890 = vadd.f32 %v510, %v1889
  %v1891 = vpop.f32.mrb[0].mxu0
  %v1892 = vadd.f32 %v512, %v1891
  %v1893 = vpop.f32.mrb[0].mxu0
  %v1894 = vpop.f32.mrb[0].mxu0
  %1895 = vdwg.mxu0
  %1896 = vmatprep.subr.bf16.mxu0 %v1459
  %1897 = vmatpush1.bf16.msra.mxu0 %v1458
  %1898 = vmatprep.subr.bf16.mxu0 %v1463
  %1899 = vmatpush1.bf16.msra.mxu0 %v1462
  %1900 = vmatprep.subr.bf16.mxu0 %v1467
  %1901 = vmatpush1.bf16.msra.mxu0 %v1466
  %1902 = vmatprep.subr.bf16.mxu0 %v1471
  %1903 = vmatpush1.bf16.msra.mxu0 %v1470
  %1904 = vmatprep.subr.bf16.mxu0 %v1475
  %1905 = vmatpush1.bf16.msra.mxu0 %v1474
  %1906 = vmatprep.subr.bf16.mxu0 %v1479
  %1907 = vmatpush1.bf16.msra.mxu0 %v1478
  %1908 = vmatprep.subr.bf16.mxu0 %v1483
  %1909 = vmatpush1.bf16.msra.mxu0 %v1482
  %1910 = vmatprep.subr.bf16.mxu0 %v1487
  %1911 = vmatpush1.bf16.msra.mxu0 %v1486
  %1912 = vmatprep.subr.bf16.mxu0 %v1491
  %1913 = vmatpush1.bf16.msra.mxu0 %v1490
  %1914 = vmatprep.subr.bf16.mxu0 %v1495
  %1915 = vmatpush1.bf16.msra.mxu0 %v1494
  %1916 = vmatprep.subr.bf16.mxu0 %v1499
  %1917 = vmatpush1.bf16.msra.mxu0 %v1498
  %1918 = vmatprep.subr.bf16.mxu0 %v1503
  %1919 = vmatpush1.bf16.msra.mxu0 %v1502
  %1920 = vmatprep.subr.bf16.mxu0 %v1507
  %1921 = vmatpush1.bf16.msra.mxu0 %v1506
  %1922 = vmatprep.subr.bf16.mxu0 %v1511
  %1923 = vmatpush1.bf16.msra.mxu0 %v1510
  %1924 = vmatprep.subr.bf16.mxu0 %v1515
  %1925 = vmatpush1.bf16.msra.mxu0 %v1514
  %1926 = vmatprep.subr.bf16.mxu0 %v1519
  %1927 = vmatpush1.bf16.msra.mxu0 %v1518
  %1928 = vmatprep.mubr.bf16.mxu0 %v731
  %1929 = vmatmul.mubr.bf16.gmra.mrb[0].mxu0 %v730
  %v1930 = vpop.f32.mrb[0].mxu0
  %v1931 = vadd.f32 %v1840, %v1930
  %v1932 = vpop.f32.mrb[0].mxu0
  %v1933 = vadd.f32 %v1842, %v1932
  %v1934 = vpop.f32.mrb[0].mxu0
  %v1935 = vadd.f32 %v1844, %v1934
  %v1936 = vpop.f32.mrb[0].mxu0
  %v1937 = vadd.f32 %v1846, %v1936
  %1938 = vmatprep.mubr.bf16.mxu0 %v738
  %1939 = vmatmul.mubr.bf16.gmra.mrb[0].mxu0 %v737
  %v1940 = vpop.f32.mrb[0].mxu0
  %v1941 = vadd.f32 %v1850, %v1940
  %v1942 = vpop.f32.mrb[0].mxu0
  %v1943 = vadd.f32 %v1852, %v1942
  %v1944 = vpop.f32.mrb[0].mxu0
  %v1945 = vadd.f32 %v1854, %v1944
  %v1946 = vpop.f32.mrb[0].mxu0
  %v1947 = vadd.f32 %v1856, %v1946
  %1948 = vmatprep.mubr.bf16.mxu0 %v745
  %1949 = vmatmul.mubr.bf16.gmra.mrb[0].mxu0 %v744
  %v1950 = vpop.f32.mrb[0].mxu0
  %v1951 = vadd.f32 %v1860, %v1950
  %v1952 = vpop.f32.mrb[0].mxu0
  %v1953 = vadd.f32 %v1862, %v1952
  %v1954 = vpop.f32.mrb[0].mxu0
  %v1955 = vadd.f32 %v1864, %v1954
  %v1956 = vpop.f32.mrb[0].mxu0
  %v1957 = vadd.f32 %v1866, %v1956
  %1958 = vmatprep.mubr.bf16.mxu0 %v752
  %1959 = vmatmul.mubr.bf16.gmra.mrb[0].mxu0 %v751
  %v1960 = vpop.f32.mrb[0].mxu0
  %v1961 = vadd.f32 %v1870, %v1960
  %v1962 = vpop.f32.mrb[0].mxu0
  %v1963 = vadd.f32 %v1872, %v1962
  %v1964 = vpop.f32.mrb[0].mxu0
  %v1965 = vadd.f32 %v1874, %v1964
  %v1966 = vpop.f32.mrb[0].mxu0
  %v1967 = vadd.f32 %v1876, %v1966
  %1968 = vmatprep.mubr.bf16.mxu0 %v759
  %1969 = vmatmul.mubr.bf16.gmra.mrb[0].mxu0 %v758
  %v1970 = vpop.f32.mrb[0].mxu0
  %v1971 = vadd.f32 %v1880, %v1970
  %v1972 = vpop.f32.mrb[0].mxu0
  %v1973 = vadd.f32 %v1882, %v1972
  %v1974 = vpop.f32.mrb[0].mxu0
  %v1975 = vadd.f32 %v1884, %v1974
  %v1976 = vpop.f32.mrb[0].mxu0
  %v1977 = vadd.f32 %v1886, %v1976
  %1978 = vmatprep.mubr.bf16.mxu0 %v766
  %1979 = vmatmul.mubr.bf16.gmra.mrb[0].mxu0 %v765
  %v1980 = vpop.f32.mrb[0].mxu0
  %v1981 = vadd.f32 %v1890, %v1980
  %v1982 = vpop.f32.mrb[0].mxu0
  %v1983 = vadd.f32 %v1892, %v1982
  %v1984 = vpop.f32.mrb[0].mxu0
  %v1985 = vpop.f32.mrb[0].mxu0
  %1986 = vdwg.mxu0
  %1987 = vmatprep.subr.bf16.mxu0 %v1523
  %1988 = vmatpush1.bf16.msra.mxu0 %v1522
  %1989 = vmatprep.subr.bf16.mxu0 %v1527
  %1990 = vmatpush1.bf16.msra.mxu0 %v1526
  %1991 = vmatprep.subr.bf16.mxu0 %v1531
  %1992 = vmatpush1.bf16.msra.mxu0 %v1530
  %1993 = vmatprep.subr.bf16.mxu0 %v1535
  %1994 = vmatpush1.bf16.msra.mxu0 %v1534
  %1995 = vmatprep.subr.bf16.mxu0 %v1539
  %1996 = vmatpush1.bf16.msra.mxu0 %v1538
  %1997 = vmatprep.subr.bf16.mxu0 %v1543
  %1998 = vmatpush1.bf16.msra.mxu0 %v1542
  %1999 = vmatprep.subr.bf16.mxu0 %v1547
  %2000 = vmatpush1.bf16.msra.mxu0 %v1546
  %2001 = vmatprep.subr.bf16.mxu0 %v1551
  %2002 = vmatpush1.bf16.msra.mxu0 %v1550
  %2003 = vmatprep.subr.bf16.mxu0 %v1555
  %2004 = vmatpush1.bf16.msra.mxu0 %v1554
  %2005 = vmatprep.subr.bf16.mxu0 %v1559
  %2006 = vmatpush1.bf16.msra.mxu0 %v1558
  %2007 = vmatprep.subr.bf16.mxu0 %v1563
  %2008 = vmatpush1.bf16.msra.mxu0 %v1562
  %2009 = vmatprep.subr.bf16.mxu0 %v1567
  %2010 = vmatpush1.bf16.msra.mxu0 %v1566
  %2011 = vmatprep.subr.bf16.mxu0 %v1571
  %2012 = vmatpush1.bf16.msra.mxu0 %v1570
  %2013 = vmatprep.subr.bf16.mxu0 %v1575
  %2014 = vmatpush1.bf16.msra.mxu0 %v1574
  %2015 = vmatprep.subr.bf16.mxu0 %v1579
  %2016 = vmatpush1.bf16.msra.mxu0 %v1578
  %2017 = vmatprep.subr.bf16.mxu0 %v1583
  %2018 = vmatpush1.bf16.msra.mxu0 %v1582
  %2019 = vmatprep.mubr.bf16.mxu0 %v733
  %2020 = vmatmul.mubr.bf16.gmra.mrb[0].mxu0 %v732
  %v2021 = vpop.f32.mrb[0].mxu0
  %v2022 = vadd.f32 %v1931, %v2021
  %v2023 = vpop.f32.mrb[0].mxu0
  %v2024 = vadd.f32 %v1933, %v2023
  %v2025 = vpop.f32.mrb[0].mxu0
  %v2026 = vadd.f32 %v1935, %v2025
  %v2027 = vpop.f32.mrb[0].mxu0
  %v2028 = vadd.f32 %v1937, %v2027
  %2029 = vmatprep.mubr.bf16.mxu0 %v740
  %2030 = vmatmul.mubr.bf16.gmra.mrb[0].mxu0 %v739
  %v2031 = vpop.f32.mrb[0].mxu0
  %v2032 = vadd.f32 %v1941, %v2031
  %v2033 = vpop.f32.mrb[0].mxu0
  %v2034 = vadd.f32 %v1943, %v2033
  %v2035 = vpop.f32.mrb[0].mxu0
  %v2036 = vadd.f32 %v1945, %v2035
  %v2037 = vpop.f32.mrb[0].mxu0
  %v2038 = vadd.f32 %v1947, %v2037
  %2039 = vmatprep.mubr.bf16.mxu0 %v747
  %2040 = vmatmul.mubr.bf16.gmra.mrb[0].mxu0 %v746
  %v2041 = vpop.f32.mrb[0].mxu0
  %v2042 = vadd.f32 %v1951, %v2041
  %v2043 = vpop.f32.mrb[0].mxu0
  %v2044 = vadd.f32 %v1953, %v2043
  %v2045 = vpop.f32.mrb[0].mxu0
  %v2046 = vadd.f32 %v1955, %v2045
  %v2047 = vpop.f32.mrb[0].mxu0
  %v2048 = vadd.f32 %v1957, %v2047
  %2049 = vmatprep.mubr.bf16.mxu0 %v754
  %2050 = vmatmul.mubr.bf16.gmra.mrb[0].mxu0 %v753
  %v2051 = vpop.f32.mrb[0].mxu0
  %v2052 = vadd.f32 %v1961, %v2051
  %v2053 = vpop.f32.mrb[0].mxu0
  %v2054 = vadd.f32 %v1963, %v2053
  %v2055 = vpop.f32.mrb[0].mxu0
  %v2056 = vadd.f32 %v1965, %v2055
  %v2057 = vpop.f32.mrb[0].mxu0
  %v2058 = vadd.f32 %v1967, %v2057
  %2059 = vmatprep.mubr.bf16.mxu0 %v761
  %2060 = vmatmul.mubr.bf16.gmra.mrb[0].mxu0 %v760
  %v2061 = vpop.f32.mrb[0].mxu0
  %v2062 = vadd.f32 %v1971, %v2061
  %v2063 = vpop.f32.mrb[0].mxu0
  %v2064 = vadd.f32 %v1973, %v2063
  %v2065 = vpop.f32.mrb[0].mxu0
  %v2066 = vadd.f32 %v1975, %v2065
  %v2067 = vpop.f32.mrb[0].mxu0
  %v2068 = vadd.f32 %v1977, %v2067
  %2069 = vmatprep.mubr.bf16.mxu0 %v768
  %2070 = vmatmul.mubr.bf16.gmra.mrb[0].mxu0 %v767
  %v2071 = vpop.f32.mrb[0].mxu0
  %v2072 = vadd.f32 %v1981, %v2071
  %v2073 = vpop.f32.mrb[0].mxu0
  %v2074 = vadd.f32 %v1983, %v2073
  %v2075 = vpop.f32.mrb[0].mxu0
  %v2076 = vpop.f32.mrb[0].mxu0
  %2077 = vdwg.mxu0
  %2078 = vmatprep.subr.bf16.mxu0 %v1587
  %2079 = vmatpush1.bf16.msra.mxu0 %v1586
  %2080 = vmatprep.subr.bf16.mxu0 0
  %2081 = vmatpush1.bf16.msra.mxu0 0
  %2082 = vmatprep.subr.bf16.mxu0 0
  %2083 = vmatpush1.bf16.msra.mxu0 0
  %2084 = vmatprep.subr.bf16.mxu0 0
  %2085 = vmatpush1.bf16.msra.mxu0 0
  %2086 = vmatprep.subr.bf16.mxu0 0
  %2087 = vmatpush1.bf16.msra.mxu0 0
  %2088 = vmatprep.subr.bf16.mxu0 0
  %2089 = vmatpush1.bf16.msra.mxu0 0
  %2090 = vmatprep.subr.bf16.mxu0 0
  %2091 = vmatpush1.bf16.msra.mxu0 0
  %2092 = vmatprep.subr.bf16.mxu0 0
  %2093 = vmatpush1.bf16.msra.mxu0 0
  %2094 = vmatprep.subr.bf16.mxu0 0
  %2095 = vmatpush1.bf16.msra.mxu0 0
  %2096 = vmatprep.subr.bf16.mxu0 0
  %2097 = vmatpush1.bf16.msra.mxu0 0
  %2098 = vmatprep.subr.bf16.mxu0 0
  %2099 = vmatpush1.bf16.msra.mxu0 0
  %2100 = vmatprep.subr.bf16.mxu0 0
  %2101 = vmatpush1.bf16.msra.mxu0 0
  %2102 = vmatprep.subr.bf16.mxu0 0
  %2103 = vmatpush1.bf16.msra.mxu0 0
  %2104 = vmatprep.subr.bf16.mxu0 0
  %2105 = vmatpush1.bf16.msra.mxu0 0
  %2106 = vmatprep.subr.bf16.mxu0 0
  %2107 = vmatpush1.bf16.msra.mxu0 0
  %2108 = vmatprep.subr.bf16.mxu0 0
  %2109 = vmatpush1.bf16.msra.mxu0 0
  %2110 = vmatprep.mubr.bf16.mxu0 0
  %2111 = vmatmul.mubr.bf16.gmra.mrb[0].mxu0 %v1788
  %v2112 = vpop.f32.mrb[0].mxu0
  %v2113 = vadd.f32 %v2022, %v2112
  %v2114 = vpop.f32.mrb[0].mxu0
  %v2115 = vadd.f32 %v2024, %v2114
  %v2116 = vpop.f32.mrb[0].mxu0
  %v2117 = vadd.f32 %v2026, %v2116
  %v2118 = vpop.f32.mrb[0].mxu0
  %v2119 = vadd.f32 %v2028, %v2118
  %2120 = vmatprep.mubr.bf16.mxu0 0
  %2121 = vmatmul.mubr.bf16.gmra.mrb[0].mxu0 %v1791
  %v2122 = vpop.f32.mrb[0].mxu0
  %v2123 = vadd.f32 %v2032, %v2122
  %v2124 = vpop.f32.mrb[0].mxu0
  %v2125 = vadd.f32 %v2034, %v2124
  %v2126 = vpop.f32.mrb[0].mxu0
  %v2127 = vadd.f32 %v2036, %v2126
  %v2128 = vpop.f32.mrb[0].mxu0
  %v2129 = vadd.f32 %v2038, %v2128
  %2130 = vmatprep.mubr.bf16.mxu0 0
  %2131 = vmatmul.mubr.bf16.gmra.mrb[0].mxu0 %v1794
  %v2132 = vpop.f32.mrb[0].mxu0
  %v2133 = vadd.f32 %v2042, %v2132
  %v2134 = vpop.f32.mrb[0].mxu0
  %v2135 = vadd.f32 %v2044, %v2134
  %v2136 = vpop.f32.mrb[0].mxu0
  %v2137 = vadd.f32 %v2046, %v2136
  %v2138 = vpop.f32.mrb[0].mxu0
  %v2139 = vadd.f32 %v2048, %v2138
  %2140 = vmatprep.mubr.bf16.mxu0 0
  %2141 = vmatmul.mubr.bf16.gmra.mrb[0].mxu0 %v1797
  %v2142 = vpop.f32.mrb[0].mxu0
  %v2143 = vadd.f32 %v2052, %v2142
  %v2144 = vpop.f32.mrb[0].mxu0
  %v2145 = vadd.f32 %v2054, %v2144
  %v2146 = vpop.f32.mrb[0].mxu0
  %v2147 = vadd.f32 %v2056, %v2146
  %v2148 = vpop.f32.mrb[0].mxu0
  %v2149 = vadd.f32 %v2058, %v2148
  %2150 = vmatprep.mubr.bf16.mxu0 0
  %2151 = vmatmul.mubr.bf16.gmra.mrb[0].mxu0 %v1800
  %v2152 = vpop.f32.mrb[0].mxu0
  %v2153 = vadd.f32 %v2062, %v2152
  %v2154 = vpop.f32.mrb[0].mxu0
  %v2155 = vadd.f32 %v2064, %v2154
  %v2156 = vpop.f32.mrb[0].mxu0
  %v2157 = vadd.f32 %v2066, %v2156
  %v2158 = vpop.f32.mrb[0].mxu0
  %v2159 = vadd.f32 %v2068, %v2158
  %2160 = vmatprep.mubr.bf16.mxu0 0
  %2161 = vmatmul.mubr.bf16.gmra.mrb[0].mxu0 %v1803
  %v2162 = vpop.f32.mrb[0].mxu0
  %v2163 = vadd.f32 %v2072, %v2162
  %v2164 = vpop.f32.mrb[0].mxu0
  %v2165 = vadd.f32 %v2074, %v2164
  %v2166 = vpop.f32.mrb[0].mxu0
  %v2167 = vpop.f32.mrb[0].mxu0
  %2168 = vdwg.mxu0
  %2169 = vmatprep.subr.bf16.mxu0 %v1397
  %2170 = vmatpush1.bf16.msra.mxu0 %v1396
  %2171 = vmatprep.subr.bf16.mxu0 %v1401
  %2172 = vmatpush1.bf16.msra.mxu0 %v1400
  %2173 = vmatprep.subr.bf16.mxu0 %v1405
  %2174 = vmatpush1.bf16.msra.mxu0 %v1404
  %2175 = vmatprep.subr.bf16.mxu0 %v1409
  %2176 = vmatpush1.bf16.msra.mxu0 %v1408
  %2177 = vmatprep.subr.bf16.mxu0 %v1413
  %2178 = vmatpush1.bf16.msra.mxu0 %v1412
  %2179 = vmatprep.subr.bf16.mxu0 %v1417
  %2180 = vmatpush1.bf16.msra.mxu0 %v1416
  %2181 = vmatprep.subr.bf16.mxu0 %v1421
  %2182 = vmatpush1.bf16.msra.mxu0 %v1420
  %2183 = vmatprep.subr.bf16.mxu0 %v1425
  %2184 = vmatpush1.bf16.msra.mxu0 %v1424
  %2185 = vmatprep.subr.bf16.mxu0 %v1429
  %2186 = vmatpush1.bf16.msra.mxu0 %v1428
  %2187 = vmatprep.subr.bf16.mxu0 %v1433
  %2188 = vmatpush1.bf16.msra.mxu0 %v1432
  %2189 = vmatprep.subr.bf16.mxu0 %v1437
  %2190 = vmatpush1.bf16.msra.mxu0 %v1436
  %2191 = vmatprep.subr.bf16.mxu0 %v1441
  %2192 = vmatpush1.bf16.msra.mxu0 %v1440
  %2193 = vmatprep.subr.bf16.mxu0 %v1445
  %2194 = vmatpush1.bf16.msra.mxu0 %v1444
  %2195 = vmatprep.subr.bf16.mxu0 %v1449
  %2196 = vmatpush1.bf16.msra.mxu0 %v1448
  %2197 = vmatprep.subr.bf16.mxu0 %v1453
  %2198 = vmatpush1.bf16.msra.mxu0 %v1452
  %2199 = vmatprep.subr.bf16.mxu0 %v1457
  %2200 = vmatpush1.bf16.msra.mxu0 %v1456
  %2201 = vmatprep.mubr.bf16.mxu0 %v729
  %2202 = vmatmul.mubr.bf16.gmra.mrb[0].mxu0 %v728
  %v2203 = vpop.f32.mrb[0].mxu0
  %v2204 = vadd.f32 %v551, %v2203
  %v2205 = vpop.f32.mrb[0].mxu0
  %v2206 = vadd.f32 %v553, %v2205
  %v2207 = vpop.f32.mrb[0].mxu0
  %v2208 = vadd.f32 %v555, %v2207
  %v2209 = vpop.f32.mrb[0].mxu0
  %v2210 = vadd.f32 %v557, %v2209
  %2211 = vmatprep.mubr.bf16.mxu0 %v736
  %2212 = vmatmul.mubr.bf16.gmra.mrb[0].mxu0 %v735
  %v2213 = vpop.f32.mrb[0].mxu0
  %v2214 = vadd.f32 %v561, %v2213
  %v2215 = vpop.f32.mrb[0].mxu0
  %v2216 = vadd.f32 %v563, %v2215
  %v2217 = vpop.f32.mrb[0].mxu0
  %v2218 = vadd.f32 %v565, %v2217
  %v2219 = vpop.f32.mrb[0].mxu0
  %v2220 = vadd.f32 %v567, %v2219
  %2221 = vmatprep.mubr.bf16.mxu0 %v743
  %2222 = vmatmul.mubr.bf16.gmra.mrb[0].mxu0 %v742
  %v2223 = vpop.f32.mrb[0].mxu0
  %v2224 = vadd.f32 %v571, %v2223
  %v2225 = vpop.f32.mrb[0].mxu0
  %v2226 = vadd.f32 %v573, %v2225
  %v2227 = vpop.f32.mrb[0].mxu0
  %v2228 = vadd.f32 %v575, %v2227
  %v2229 = vpop.f32.mrb[0].mxu0
  %v2230 = vadd.f32 %v577, %v2229
  %2231 = vmatprep.mubr.bf16.mxu0 %v750
  %2232 = vmatmul.mubr.bf16.gmra.mrb[0].mxu0 %v749
  %v2233 = vpop.f32.mrb[0].mxu0
  %v2234 = vadd.f32 %v581, %v2233
  %v2235 = vpop.f32.mrb[0].mxu0
  %v2236 = vadd.f32 %v583, %v2235
  %v2237 = vpop.f32.mrb[0].mxu0
  %v2238 = vadd.f32 %v585, %v2237
  %v2239 = vpop.f32.mrb[0].mxu0
  %v2240 = vadd.f32 %v587, %v2239
  %2241 = vmatprep.mubr.bf16.mxu0 %v757
  %2242 = vmatmul.mubr.bf16.gmra.mrb[0].mxu0 %v756
  %v2243 = vpop.f32.mrb[0].mxu0
  %v2244 = vadd.f32 %v591, %v2243
  %v2245 = vpop.f32.mrb[0].mxu0
  %v2246 = vadd.f32 %v593, %v2245
  %v2247 = vpop.f32.mrb[0].mxu0
  %v2248 = vadd.f32 %v595, %v2247
  %v2249 = vpop.f32.mrb[0].mxu0
  %v2250 = vadd.f32 %v597, %v2249
  %2251 = vmatprep.mubr.bf16.mxu0 %v764
  %2252 = vmatmul.mubr.bf16.gmra.mrb[0].mxu0 %v763
  %v2253 = vpop.f32.mrb[0].mxu0
  %v2254 = vadd.f32 %v601, %v2253
  %v2255 = vpop.f32.mrb[0].mxu0
  %v2256 = vadd.f32 %v603, %v2255
  %v2257 = vpop.f32.mrb[0].mxu0
  %v2258 = vpop.f32.mrb[0].mxu0
  %2259 = vdwg.mxu0
  %2260 = vmatprep.subr.bf16.mxu0 %v1461
  %2261 = vmatpush1.bf16.msra.mxu0 %v1460
  %2262 = vmatprep.subr.bf16.mxu0 %v1465
  %2263 = vmatpush1.bf16.msra.mxu0 %v1464
  %2264 = vmatprep.subr.bf16.mxu0 %v1469
  %2265 = vmatpush1.bf16.msra.mxu0 %v1468
  %2266 = vmatprep.subr.bf16.mxu0 %v1473
  %2267 = vmatpush1.bf16.msra.mxu0 %v1472
  %2268 = vmatprep.subr.bf16.mxu0 %v1477
  %2269 = vmatpush1.bf16.msra.mxu0 %v1476
  %2270 = vmatprep.subr.bf16.mxu0 %v1481
  %2271 = vmatpush1.bf16.msra.mxu0 %v1480
  %2272 = vmatprep.subr.bf16.mxu0 %v1485
  %2273 = vmatpush1.bf16.msra.mxu0 %v1484
  %2274 = vmatprep.subr.bf16.mxu0 %v1489
  %2275 = vmatpush1.bf16.msra.mxu0 %v1488
  %2276 = vmatprep.subr.bf16.mxu0 %v1493
  %2277 = vmatpush1.bf16.msra.mxu0 %v1492
  %2278 = vmatprep.subr.bf16.mxu0 %v1497
  %2279 = vmatpush1.bf16.msra.mxu0 %v1496
  %2280 = vmatprep.subr.bf16.mxu0 %v1501
  %2281 = vmatpush1.bf16.msra.mxu0 %v1500
  %2282 = vmatprep.subr.bf16.mxu0 %v1505
  %2283 = vmatpush1.bf16.msra.mxu0 %v1504
  %2284 = vmatprep.subr.bf16.mxu0 %v1509
  %2285 = vmatpush1.bf16.msra.mxu0 %v1508
  %2286 = vmatprep.subr.bf16.mxu0 %v1513
  %2287 = vmatpush1.bf16.msra.mxu0 %v1512
  %2288 = vmatprep.subr.bf16.mxu0 %v1517
  %2289 = vmatpush1.bf16.msra.mxu0 %v1516
  %2290 = vmatprep.subr.bf16.mxu0 %v1521
  %2291 = vmatpush1.bf16.msra.mxu0 %v1520
  %2292 = vmatprep.mubr.bf16.mxu0 %v731
  %2293 = vmatmul.mubr.bf16.gmra.mrb[0].mxu0 %v730
  %v2294 = vpop.f32.mrb[0].mxu0
  %v2295 = vadd.f32 %v2204, %v2294
  %v2296 = vpop.f32.mrb[0].mxu0
  %v2297 = vadd.f32 %v2206, %v2296
  %v2298 = vpop.f32.mrb[0].mxu0
  %v2299 = vadd.f32 %v2208, %v2298
  %v2300 = vpop.f32.mrb[0].mxu0
  %v2301 = vadd.f32 %v2210, %v2300
  %2302 = vmatprep.mubr.bf16.mxu0 %v738
  %2303 = vmatmul.mubr.bf16.gmra.mrb[0].mxu0 %v737
  %v2304 = vpop.f32.mrb[0].mxu0
  %v2305 = vadd.f32 %v2214, %v2304
  %v2306 = vpop.f32.mrb[0].mxu0
  %v2307 = vadd.f32 %v2216, %v2306
  %v2308 = vpop.f32.mrb[0].mxu0
  %v2309 = vadd.f32 %v2218, %v2308
  %v2310 = vpop.f32.mrb[0].mxu0
  %v2311 = vadd.f32 %v2220, %v2310
  %2312 = vmatprep.mubr.bf16.mxu0 %v745
  %2313 = vmatmul.mubr.bf16.gmra.mrb[0].mxu0 %v744
  %v2314 = vpop.f32.mrb[0].mxu0
  %v2315 = vadd.f32 %v2224, %v2314
  %v2316 = vpop.f32.mrb[0].mxu0
  %v2317 = vadd.f32 %v2226, %v2316
  %v2318 = vpop.f32.mrb[0].mxu0
  %v2319 = vadd.f32 %v2228, %v2318
  %v2320 = vpop.f32.mrb[0].mxu0
  %v2321 = vadd.f32 %v2230, %v2320
  %2322 = vmatprep.mubr.bf16.mxu0 %v752
  %2323 = vmatmul.mubr.bf16.gmra.mrb[0].mxu0 %v751
  %v2324 = vpop.f32.mrb[0].mxu0
  %v2325 = vadd.f32 %v2234, %v2324
  %v2326 = vpop.f32.mrb[0].mxu0
  %v2327 = vadd.f32 %v2236, %v2326
  %v2328 = vpop.f32.mrb[0].mxu0
  %v2329 = vadd.f32 %v2238, %v2328
  %v2330 = vpop.f32.mrb[0].mxu0
  %v2331 = vadd.f32 %v2240, %v2330
  %2332 = vmatprep.mubr.bf16.mxu0 %v759
  %2333 = vmatmul.mubr.bf16.gmra.mrb[0].mxu0 %v758
  %v2334 = vpop.f32.mrb[0].mxu0
  %v2335 = vadd.f32 %v2244, %v2334
  %v2336 = vpop.f32.mrb[0].mxu0
  %v2337 = vadd.f32 %v2246, %v2336
  %v2338 = vpop.f32.mrb[0].mxu0
  %v2339 = vadd.f32 %v2248, %v2338
  %v2340 = vpop.f32.mrb[0].mxu0
  %v2341 = vadd.f32 %v2250, %v2340
  %2342 = vmatprep.mubr.bf16.mxu0 %v766
  %2343 = vmatmul.mubr.bf16.gmra.mrb[0].mxu0 %v765
  %v2344 = vpop.f32.mrb[0].mxu0
  %v2345 = vadd.f32 %v2254, %v2344
  %v2346 = vpop.f32.mrb[0].mxu0
  %v2347 = vadd.f32 %v2256, %v2346
  %v2348 = vpop.f32.mrb[0].mxu0
  %v2349 = vpop.f32.mrb[0].mxu0
  %2350 = vdwg.mxu0
  %2351 = vmatprep.subr.bf16.mxu0 %v1525
  %2352 = vmatpush1.bf16.msra.mxu0 %v1524
  %2353 = vmatprep.subr.bf16.mxu0 %v1529
  %2354 = vmatpush1.bf16.msra.mxu0 %v1528
  %2355 = vmatprep.subr.bf16.mxu0 %v1533
  %2356 = vmatpush1.bf16.msra.mxu0 %v1532
  %2357 = vmatprep.subr.bf16.mxu0 %v1537
  %2358 = vmatpush1.bf16.msra.mxu0 %v1536
  %2359 = vmatprep.subr.bf16.mxu0 %v1541
  %2360 = vmatpush1.bf16.msra.mxu0 %v1540
  %2361 = vmatprep.subr.bf16.mxu0 %v1545
  %2362 = vmatpush1.bf16.msra.mxu0 %v1544
  %2363 = vmatprep.subr.bf16.mxu0 %v1549
  %2364 = vmatpush1.bf16.msra.mxu0 %v1548
  %2365 = vmatprep.subr.bf16.mxu0 %v1553
  %2366 = vmatpush1.bf16.msra.mxu0 %v1552
  %2367 = vmatprep.subr.bf16.mxu0 %v1557
  %2368 = vmatpush1.bf16.msra.mxu0 %v1556
  %2369 = vmatprep.subr.bf16.mxu0 %v1561
  %2370 = vmatpush1.bf16.msra.mxu0 %v1560
  %2371 = vmatprep.subr.bf16.mxu0 %v1565
  %2372 = vmatpush1.bf16.msra.mxu0 %v1564
  %2373 = vmatprep.subr.bf16.mxu0 %v1569
  %2374 = vmatpush1.bf16.msra.mxu0 %v1568
  %2375 = vmatprep.subr.bf16.mxu0 %v1573
  %2376 = vmatpush1.bf16.msra.mxu0 %v1572
  %2377 = vmatprep.subr.bf16.mxu0 %v1577
  %2378 = vmatpush1.bf16.msra.mxu0 %v1576
  %2379 = vmatprep.subr.bf16.mxu0 %v1581
  %2380 = vmatpush1.bf16.msra.mxu0 %v1580
  %2381 = vmatprep.subr.bf16.mxu0 %v1585
  %2382 = vmatpush1.bf16.msra.mxu0 %v1584
  %2383 = vmatprep.mubr.bf16.mxu0 %v733
  %2384 = vmatmul.mubr.bf16.gmra.mrb[0].mxu0 %v732
  %v2385 = vpop.f32.mrb[0].mxu0
  %v2386 = vadd.f32 %v2295, %v2385
  %v2387 = vpop.f32.mrb[0].mxu0
  %v2388 = vadd.f32 %v2297, %v2387
  %v2389 = vpop.f32.mrb[0].mxu0
  %v2390 = vadd.f32 %v2299, %v2389
  %v2391 = vpop.f32.mrb[0].mxu0
  %v2392 = vadd.f32 %v2301, %v2391
  %2393 = vmatprep.mubr.bf16.mxu0 %v740
  %2394 = vmatmul.mubr.bf16.gmra.mrb[0].mxu0 %v739
  %v2395 = vpop.f32.mrb[0].mxu0
  %v2396 = vadd.f32 %v2305, %v2395
  %v2397 = vpop.f32.mrb[0].mxu0
  %v2398 = vadd.f32 %v2307, %v2397
  %v2399 = vpop.f32.mrb[0].mxu0
  %v2400 = vadd.f32 %v2309, %v2399
  %v2401 = vpop.f32.mrb[0].mxu0
  %v2402 = vadd.f32 %v2311, %v2401
  %2403 = vmatprep.mubr.bf16.mxu0 %v747
  %2404 = vmatmul.mubr.bf16.gmra.mrb[0].mxu0 %v746
  %v2405 = vpop.f32.mrb[0].mxu0
  %v2406 = vadd.f32 %v2315, %v2405
  %v2407 = vpop.f32.mrb[0].mxu0
  %v2408 = vadd.f32 %v2317, %v2407
  %v2409 = vpop.f32.mrb[0].mxu0
  %v2410 = vadd.f32 %v2319, %v2409
  %v2411 = vpop.f32.mrb[0].mxu0
  %v2412 = vadd.f32 %v2321, %v2411
  %2413 = vmatprep.mubr.bf16.mxu0 %v754
  %2414 = vmatmul.mubr.bf16.gmra.mrb[0].mxu0 %v753
  %v2415 = vpop.f32.mrb[0].mxu0
  %v2416 = vadd.f32 %v2325, %v2415
  %v2417 = vpop.f32.mrb[0].mxu0
  %v2418 = vadd.f32 %v2327, %v2417
  %v2419 = vpop.f32.mrb[0].mxu0
  %v2420 = vadd.f32 %v2329, %v2419
  %v2421 = vpop.f32.mrb[0].mxu0
  %v2422 = vadd.f32 %v2331, %v2421
  %2423 = vmatprep.mubr.bf16.mxu0 %v761
  %2424 = vmatmul.mubr.bf16.gmra.mrb[0].mxu0 %v760
  %v2425 = vpop.f32.mrb[0].mxu0
  %v2426 = vadd.f32 %v2335, %v2425
  %v2427 = vpop.f32.mrb[0].mxu0
  %v2428 = vadd.f32 %v2337, %v2427
  %v2429 = vpop.f32.mrb[0].mxu0
  %v2430 = vadd.f32 %v2339, %v2429
  %v2431 = vpop.f32.mrb[0].mxu0
  %v2432 = vadd.f32 %v2341, %v2431
  %2433 = vmatprep.mubr.bf16.mxu0 %v768
  %2434 = vmatmul.mubr.bf16.gmra.mrb[0].mxu0 %v767
  %v2435 = vpop.f32.mrb[0].mxu0
  %v2436 = vadd.f32 %v2345, %v2435
  %v2437 = vpop.f32.mrb[0].mxu0
  %v2438 = vadd.f32 %v2347, %v2437
  %v2439 = vpop.f32.mrb[0].mxu0
  %v2440 = vpop.f32.mrb[0].mxu0
  %2441 = vdwg.mxu0
  %2442 = vmatprep.subr.bf16.mxu0 %v1589
  %2443 = vmatpush1.bf16.msra.mxu0 %v1588
  %2444 = vmatprep.subr.bf16.mxu0 0
  %2445 = vmatpush1.bf16.msra.mxu0 0
  %2446 = vmatprep.subr.bf16.mxu0 0
  %2447 = vmatpush1.bf16.msra.mxu0 0
  %2448 = vmatprep.subr.bf16.mxu0 0
  %2449 = vmatpush1.bf16.msra.mxu0 0
  %2450 = vmatprep.subr.bf16.mxu0 0
  %2451 = vmatpush1.bf16.msra.mxu0 0
  %2452 = vmatprep.subr.bf16.mxu0 0
  %2453 = vmatpush1.bf16.msra.mxu0 0
  %2454 = vmatprep.subr.bf16.mxu0 0
  %2455 = vmatpush1.bf16.msra.mxu0 0
  %2456 = vmatprep.subr.bf16.mxu0 0
  %2457 = vmatpush1.bf16.msra.mxu0 0
  %2458 = vmatprep.subr.bf16.mxu0 0
  %2459 = vmatpush1.bf16.msra.mxu0 0
  %2460 = vmatprep.subr.bf16.mxu0 0
  %2461 = vmatpush1.bf16.msra.mxu0 0
  %2462 = vmatprep.subr.bf16.mxu0 0
  %2463 = vmatpush1.bf16.msra.mxu0 0
  %2464 = vmatprep.subr.bf16.mxu0 0
  %2465 = vmatpush1.bf16.msra.mxu0 0
  %2466 = vmatprep.subr.bf16.mxu0 0
  %2467 = vmatpush1.bf16.msra.mxu0 0
  %2468 = vmatprep.subr.bf16.mxu0 0
  %2469 = vmatpush1.bf16.msra.mxu0 0
  %2470 = vmatprep.subr.bf16.mxu0 0
  %2471 = vmatpush1.bf16.msra.mxu0 0
  %2472 = vmatprep.subr.bf16.mxu0 0
  %2473 = vmatpush1.bf16.msra.mxu0 0
  %2474 = vmatprep.mubr.bf16.mxu0 0
  %2475 = vmatmul.mubr.bf16.gmra.mrb[0].mxu0 %v1788
  %v2476 = vpop.f32.mrb[0].mxu0
  %v2477 = vadd.f32 %v2386, %v2476
  %v2478 = vpop.f32.mrb[0].mxu0
  %v2479 = vadd.f32 %v2388, %v2478
  %v2480 = vpop.f32.mrb[0].mxu0
  %v2481 = vadd.f32 %v2390, %v2480
  %v2482 = vpop.f32.mrb[0].mxu0
  %v2483 = vadd.f32 %v2392, %v2482
  %2484 = vmatprep.mubr.bf16.mxu0 0
  %2485 = vmatmul.mubr.bf16.gmra.mrb[0].mxu0 %v1791
  %v2486 = vpop.f32.mrb[0].mxu0
  %v2487 = vadd.f32 %v2396, %v2486
  %v2488 = vpop.f32.mrb[0].mxu0
  %v2489 = vadd.f32 %v2398, %v2488
  %v2490 = vpop.f32.mrb[0].mxu0
  %v2491 = vadd.f32 %v2400, %v2490
  %v2492 = vpop.f32.mrb[0].mxu0
  %v2493 = vadd.f32 %v2402, %v2492
  %2494 = vmatprep.mubr.bf16.mxu0 0
  %2495 = vmatmul.mubr.bf16.gmra.mrb[0].mxu0 %v1794
  %v2496 = vpop.f32.mrb[0].mxu0
  %v2497 = vadd.f32 %v2406, %v2496
  %v2498 = vpop.f32.mrb[0].mxu0
  %v2499 = vadd.f32 %v2408, %v2498
  %v2500 = vpop.f32.mrb[0].mxu0
  %v2501 = vadd.f32 %v2410, %v2500
  %v2502 = vpop.f32.mrb[0].mxu0
  %v2503 = vadd.f32 %v2412, %v2502
  %2504 = vmatprep.mubr.bf16.mxu0 0
  %2505 = vmatmul.mubr.bf16.gmra.mrb[0].mxu0 %v1797
  %v2506 = vpop.f32.mrb[0].mxu0
  %v2507 = vadd.f32 %v2416, %v2506
  %v2508 = vpop.f32.mrb[0].mxu0
  %v2509 = vadd.f32 %v2418, %v2508
  %v2510 = vpop.f32.mrb[0].mxu0
  %v2511 = vadd.f32 %v2420, %v2510
  %v2512 = vpop.f32.mrb[0].mxu0
  %v2513 = vadd.f32 %v2422, %v2512
  %2514 = vmatprep.mubr.bf16.mxu0 0
  %2515 = vmatmul.mubr.bf16.gmra.mrb[0].mxu0 %v1800
  %v2516 = vpop.f32.mrb[0].mxu0
  %v2517 = vadd.f32 %v2426, %v2516
  %v2518 = vpop.f32.mrb[0].mxu0
  %v2519 = vadd.f32 %v2428, %v2518
  %v2520 = vpop.f32.mrb[0].mxu0
  %v2521 = vadd.f32 %v2430, %v2520
  %v2522 = vpop.f32.mrb[0].mxu0
  %v2523 = vadd.f32 %v2432, %v2522
  %2524 = vmatprep.mubr.bf16.mxu0 0
  %2525 = vmatmul.mubr.bf16.gmra.mrb[0].mxu0 %v1803
  %v2526 = vpop.f32.mrb[0].mxu0
  %v2527 = vadd.f32 %v2436, %v2526
  %v2528 = vpop.f32.mrb[0].mxu0
  %v2529 = vadd.f32 %v2438, %v2528
  %v2530 = vpop.f32.mrb[0].mxu0
  %v2531 = vpop.f32.mrb[0].mxu0
  %2532 = vdwg.mxu0
  %v2533 = vld [vmem:[%s5] sm:$0xf]
  %v2535 = vlaneseq
  %v2536 = vshrl.u32 %v2535, 7
  %v2537 = vsub.s32 0, %v2536
  %v2538 = vrot.slane %v2533, %v2537
  %v2539 = vlaneseq
  %v2540 = vshrl.u32 %v2539, 7
  %v2541 = vsub.s32 1, %v2540
  %v2542 = vrot.slane %v2533, %v2541
  %v2543 = vlaneseq
  %v2544 = vshrl.u32 %v2543, 7
  %v2545 = vsub.s32 2, %v2544
  %v2546 = vrot.slane %v2533, %v2545
  %v2547 = vlaneseq
  %v2548 = vshrl.u32 %v2547, 7
  %v2549 = vsub.s32 3, %v2548
  %v2550 = vrot.slane %v2533, %v2549
  %v2555 = vadd.f32 %v2113, %v2538
  %v2556 = vadd.f32 %v2115, %v2542
  %v2557 = vadd.f32 %v2477, %v2546
  %v2558 = vadd.f32 %v2479, %v2550
  %v2559 = vadd.f32 %v2117, %v2538
  %v2560 = vadd.f32 %v2119, %v2542
  %v2561 = vadd.f32 %v2481, %v2546
  %v2562 = vadd.f32 %v2483, %v2550
  %v2563 = vadd.f32 %v2123, %v2538
  %v2564 = vadd.f32 %v2125, %v2542
  %v2565 = vadd.f32 %v2487, %v2546
  %v2566 = vadd.f32 %v2489, %v2550
  %v2567 = vadd.f32 %v2127, %v2538
  %v2568 = vadd.f32 %v2129, %v2542
  %v2569 = vadd.f32 %v2491, %v2546
  %v2570 = vadd.f32 %v2493, %v2550
  %v2571 = vadd.f32 %v2133, %v2538
  %v2572 = vadd.f32 %v2135, %v2542
  %v2573 = vadd.f32 %v2497, %v2546
  %v2574 = vadd.f32 %v2499, %v2550
  %v2575 = vadd.f32 %v2137, %v2538
  %v2576 = vadd.f32 %v2139, %v2542
  %v2577 = vadd.f32 %v2501, %v2546
  %v2578 = vadd.f32 %v2503, %v2550
  %v2579 = vadd.f32 %v2143, %v2538
  %v2580 = vadd.f32 %v2145, %v2542
  %v2581 = vadd.f32 %v2507, %v2546
  %v2582 = vadd.f32 %v2509, %v2550
  %v2583 = vadd.f32 %v2147, %v2538
  %v2584 = vadd.f32 %v2149, %v2542
  %v2585 = vadd.f32 %v2511, %v2546
  %v2586 = vadd.f32 %v2513, %v2550
  %v2587 = vadd.f32 %v2153, %v2538
  %v2588 = vadd.f32 %v2155, %v2542
  %v2589 = vadd.f32 %v2517, %v2546
  %v2590 = vadd.f32 %v2519, %v2550
  %v2591 = vadd.f32 %v2157, %v2538
  %v2592 = vadd.f32 %v2159, %v2542
  %v2593 = vadd.f32 %v2521, %v2546
  %v2594 = vadd.f32 %v2523, %v2550
  %v2595 = vadd.f32 %v2163, %v2538
  %v2596 = vadd.f32 %v2165, %v2542
  %v2597 = vadd.f32 %v2527, %v2546
  %v2598 = vadd.f32 %v2529, %v2550
  %v2599 = vmax.f32 %v2555, 0.0
  %v2600 = vmax.f32 %v2556, 0.0
  %v2601 = vmax.f32 %v2557, 0.0
  %v2602 = vmax.f32 %v2558, 0.0
  %v2603 = vmax.f32 %v2559, 0.0
  %v2604 = vmax.f32 %v2560, 0.0
  %v2605 = vmax.f32 %v2561, 0.0
  %v2606 = vmax.f32 %v2562, 0.0
  %v2607 = vmax.f32 %v2563, 0.0
  %v2608 = vmax.f32 %v2564, 0.0
  %v2609 = vmax.f32 %v2565, 0.0
  %v2610 = vmax.f32 %v2566, 0.0
  %v2611 = vmax.f32 %v2567, 0.0
  %v2612 = vmax.f32 %v2568, 0.0
  %v2613 = vmax.f32 %v2569, 0.0
  %v2614 = vmax.f32 %v2570, 0.0
  %v2615 = vmax.f32 %v2571, 0.0
  %v2616 = vmax.f32 %v2572, 0.0
  %v2617 = vmax.f32 %v2573, 0.0
  %v2618 = vmax.f32 %v2574, 0.0
  %v2619 = vmax.f32 %v2575, 0.0
  %v2620 = vmax.f32 %v2576, 0.0
  %v2621 = vmax.f32 %v2577, 0.0
  %v2622 = vmax.f32 %v2578, 0.0
  %v2623 = vmax.f32 %v2579, 0.0
  %v2624 = vmax.f32 %v2580, 0.0
  %v2625 = vmax.f32 %v2581, 0.0
  %v2626 = vmax.f32 %v2582, 0.0
  %v2627 = vmax.f32 %v2583, 0.0
  %v2628 = vmax.f32 %v2584, 0.0
  %v2629 = vmax.f32 %v2585, 0.0
  %v2630 = vmax.f32 %v2586, 0.0
  %v2631 = vmax.f32 %v2587, 0.0
  %v2632 = vmax.f32 %v2588, 0.0
  %v2633 = vmax.f32 %v2589, 0.0
  %v2634 = vmax.f32 %v2590, 0.0
  %v2635 = vmax.f32 %v2591, 0.0
  %v2636 = vmax.f32 %v2592, 0.0
  %v2637 = vmax.f32 %v2593, 0.0
  %v2638 = vmax.f32 %v2594, 0.0
  %v2639 = vmax.f32 %v2595, 0.0
  %v2640 = vmax.f32 %v2596, 0.0
  %v2641 = vmax.f32 %v2597, 0.0
  %v2642 = vmax.f32 %v2598, 0.0
  %v2643 = vpack.c.bf16 %v2603, %v2599
  %v2644 = vpack.c.bf16 %v2604, %v2600
  %v2645 = vpack.c.bf16 %v2605, %v2601
  %v2646 = vpack.c.bf16 %v2606, %v2602
  %v2647 = vpack.c.bf16 %v2611, %v2607
  %v2648 = vpack.c.bf16 %v2612, %v2608
  %v2649 = vpack.c.bf16 %v2613, %v2609
  %v2650 = vpack.c.bf16 %v2614, %v2610
  %v2651 = vpack.c.bf16 %v2619, %v2615
  %v2652 = vpack.c.bf16 %v2620, %v2616
  %v2653 = vpack.c.bf16 %v2621, %v2617
  %v2654 = vpack.c.bf16 %v2622, %v2618
  %v2655 = vpack.c.bf16 %v2627, %v2623
  %v2656 = vpack.c.bf16 %v2628, %v2624
  %v2657 = vpack.c.bf16 %v2629, %v2625
  %v2658 = vpack.c.bf16 %v2630, %v2626
  %v2659 = vpack.c.bf16 %v2635, %v2631
  %v2660 = vpack.c.bf16 %v2636, %v2632
  %v2661 = vpack.c.bf16 %v2637, %v2633
  %v2662 = vpack.c.bf16 %v2638, %v2634
  %v2663 = vpack.c.bf16 %v2639, %v2639
  %v2664 = vpack.c.bf16 %v2640, %v2640
  %v2665 = vpack.c.bf16 %v2641, %v2641
  %v2666 = vpack.c.bf16 %v2642, %v2642
  %v2667 = vld [vmem:[%s6] sm:$0xff]
  %v2668 = vld [vmem:[%s6 + $0x8] sm:$0xff]
  %v2669 = vld [vmem:[%s6 + $0x10] sm:$0xff]
  %v2670 = vld [vmem:[%s6 + $0x18] sm:$0xff]
  %v2671 = vld [vmem:[%s6 + $0x20] sm:$0xff]
  %v2672 = vld [vmem:[%s6 + $0x28] sm:$0xff]
  %v2673 = vld [vmem:[%s6 + $0x30] sm:$0xff]
  %v2674 = vld [vmem:[%s6 + $0x38] sm:$0xff]
  %v2675 = vld [vmem:[%s6 + $0x40] sm:$0xff]
  %v2676 = vld [vmem:[%s6 + $0x48] sm:$0xff]
  %v2677 = vld [vmem:[%s6 + $0x50] sm:$0xff]
  %v2678 = vld [vmem:[%s6 + $0x58] sm:$0xff]
  %v2679 = vld [vmem:[%s6 + $0x60] sm:$0xff]
  %v2680 = vld [vmem:[%s6 + $0x68] sm:$0xff]
  %v2681 = vld [vmem:[%s6 + $0x70] sm:$0xff]
  %v2682 = vld [vmem:[%s6 + $0x78] sm:$0xff]
  %v2683 = vld [vmem:[%s6 + $0x80] sm:$0xff]
  %v2684 = vld [vmem:[%s6 + $0x88] sm:$0xff]
  %v2685 = vld [vmem:[%s6 + $0x90] sm:$0xff]
  %v2686 = vld [vmem:[%s6 + $0x98] sm:$0xff]
  %v2687 = vld [vmem:[%s6 + $0xa0] sm:$0xff]
  %v2688 = vld [vmem:[%s6 + $0xa8] sm:$0xff]
  %v2689 = vld [vmem:[%s6 + $0xb0] sm:$0xff]
  %v2690 = vld [vmem:[%s6 + $0xb8] sm:$0xff]
  %v2691 = vld [vmem:[%s6 + $0xc0] sm:$0xff]
  %v2692 = vld [vmem:[%s6 + $0xc8] sm:$0xff]
  %v2693 = vld [vmem:[%s6 + $0xd0] sm:$0xff]
  %v2694 = vld [vmem:[%s6 + $0xd8] sm:$0xff]
  %v2695 = vld [vmem:[%s6 + $0xe0] sm:$0xff]
  %v2696 = vld [vmem:[%s6 + $0xe8] sm:$0xff]
  %v2697 = vld [vmem:[%s6 + $0xf0] sm:$0xff]
  %v2698 = vld [vmem:[%s6 + $0xf8] sm:$0xff]
  %v2699 = vld [vmem:[%s6 + $0x100] sm:$0xff]
  %v2700 = vld [vmem:[%s6 + $0x108] sm:$0xff]
  %v2701 = vld [vmem:[%s6 + $0x110] sm:$0xff]
  %v2702 = vld [vmem:[%s6 + $0x118] sm:$0xff]
  %v2703 = vld [vmem:[%s6 + $0x120] sm:$0xff]
  %v2704 = vld [vmem:[%s6 + $0x128] sm:$0xff]
  %v2705 = vld [vmem:[%s6 + $0x130] sm:$0xff]
  %v2706 = vld [vmem:[%s6 + $0x138] sm:$0xff]
  %v2707 = vld [vmem:[%s6 + $0x140] sm:$0xff]
  %v2708 = vld [vmem:[%s6 + $0x148] sm:$0xff]
  %v2709 = vld [vmem:[%s6 + $0x150] sm:$0xff]
  %v2710 = vld [vmem:[%s6 + $0x158] sm:$0xff]
  %v2711 = vld [vmem:[%s6 + $0x160] sm:$0xff]
  %v2712 = vld [vmem:[%s6 + $0x168] sm:$0xff]
  %v2713 = vld [vmem:[%s6 + $0x170] sm:$0xff]
  %v2714 = vld [vmem:[%s6 + $0x178] sm:$0xff]
  %v2715 = vld [vmem:[%s6 + $0x180] sm:$0xff]
  %v2716 = vld [vmem:[%s6 + $0x188] sm:$0xff]
  %v2717 = vld [vmem:[%s6 + $0x190] sm:$0xff]
  %v2718 = vld [vmem:[%s6 + $0x198] sm:$0xff]
  %v2719 = vld [vmem:[%s6 + $0x1a0] sm:$0xff]
  %v2720 = vld [vmem:[%s6 + $0x1a8] sm:$0xff]
  %v2721 = vld [vmem:[%s6 + $0x1b0] sm:$0xff]
  %v2722 = vld [vmem:[%s6 + $0x1b8] sm:$0xff]
  %v2723 = vld [vmem:[%s6 + $0x1c0] sm:$0xff]
  %v2724 = vld [vmem:[%s6 + $0x1c8] sm:$0xff]
  %v2725 = vld [vmem:[%s6 + $0x1d0] sm:$0xff]
  %v2726 = vld [vmem:[%s6 + $0x1d8] sm:$0xff]
  %v2727 = vld [vmem:[%s6 + $0x1e0] sm:$0xff]
  %v2728 = vld [vmem:[%s6 + $0x1e8] sm:$0xff]
  %v2729 = vld [vmem:[%s6 + $0x1f0] sm:$0xff]
  %v2730 = vld [vmem:[%s6 + $0x1f8] sm:$0xff]
  %v2731 = vld [vmem:[%s6 + $0x200] sm:$0xff]
  %v2732 = vld [vmem:[%s6 + $0x208] sm:$0xff]
  %v2733 = vld [vmem:[%s6 + $0x210] sm:$0xff]
  %v2734 = vld [vmem:[%s6 + $0x218] sm:$0xff]
  %v2735 = vld [vmem:[%s6 + $0x220] sm:$0xff]
  %v2736 = vld [vmem:[%s6 + $0x228] sm:$0xff]
  %v2737 = vld [vmem:[%s6 + $0x230] sm:$0xff]
  %v2738 = vld [vmem:[%s6 + $0x238] sm:$0xff]
  %v2739 = vld [vmem:[%s6 + $0x240] sm:$0xff]
  %v2740 = vld [vmem:[%s6 + $0x248] sm:$0xff]
  %v2741 = vld [vmem:[%s6 + $0x250] sm:$0xff]
  %v2742 = vld [vmem:[%s6 + $0x258] sm:$0xff]
  %v2743 = vld [vmem:[%s6 + $0x260] sm:$0xff]
  %v2744 = vld [vmem:[%s6 + $0x268] sm:$0xff]
  %v2745 = vld [vmem:[%s6 + $0x270] sm:$0xff]
  %v2746 = vld [vmem:[%s6 + $0x278] sm:$0xff]
  %v2747 = vld [vmem:[%s6 + $0x280] sm:$0xff]
  %v2748 = vld [vmem:[%s6 + $0x288] sm:$0xff]
  %v2749 = vld [vmem:[%s6 + $0x290] sm:$0xff]
  %v2750 = vld [vmem:[%s6 + $0x298] sm:$0xff]
  %v2751 = vld [vmem:[%s6 + $0x2a0] sm:$0xff]
  %v2752 = vld [vmem:[%s6 + $0x2a8] sm:$0xff]
  %v2753 = vld [vmem:[%s6 + $0x2b0] sm:$0xff]
  %v2754 = vld [vmem:[%s6 + $0x2b8] sm:$0xff]
  %v2755 = vld [vmem:[%s6 + $0x2c0] sm:$0xff]
  %v2756 = vld [vmem:[%s6 + $0x2c8] sm:$0xff]
  %v2757 = vld [vmem:[%s6 + $0x2d0] sm:$0xff]
  %v2758 = vld [vmem:[%s6 + $0x2d8] sm:$0xff]
  %v2759 = vld [vmem:[%s6 + $0x2e0] sm:$0xff]
  %v2760 = vld [vmem:[%s6 + $0x2e8] sm:$0xff]
  %v2761 = vld [vmem:[%s6 + $0x2f0] sm:$0xff]
  %v2762 = vld [vmem:[%s6 + $0x2f8] sm:$0xff]
  %v2763 = vld [vmem:[%s6 + $0x300] sm:$0xff]
  %v2764 = vld [vmem:[%s6 + $0x308] sm:$0xff]
  %v2765 = vld [vmem:[%s6 + $0x310] sm:$0xff]
  %v2766 = vld [vmem:[%s6 + $0x318] sm:$0xff]
  %v2767 = vld [vmem:[%s6 + $0x320] sm:$0xff]
  %v2768 = vld [vmem:[%s6 + $0x328] sm:$0xff]
  %v2769 = vld [vmem:[%s6 + $0x330] sm:$0xff]
  %v2770 = vld [vmem:[%s6 + $0x338] sm:$0xff]
  %v2771 = vld [vmem:[%s6 + $0x340] sm:$0xff]
  %v2772 = vld [vmem:[%s6 + $0x348] sm:$0xff]
  %v2773 = vld [vmem:[%s6 + $0x350] sm:$0xff]
  %v2774 = vld [vmem:[%s6 + $0x358] sm:$0xff]
  %v2775 = vld [vmem:[%s6 + $0x360] sm:$0xff]
  %v2776 = vld [vmem:[%s6 + $0x368] sm:$0xff]
  %v2777 = vld [vmem:[%s6 + $0x370] sm:$0xff]
  %v2778 = vld [vmem:[%s6 + $0x378] sm:$0xff]
  %v2779 = vld [vmem:[%s6 + $0x380] sm:$0xff]
  %v2780 = vld [vmem:[%s6 + $0x388] sm:$0xff]
  %v2781 = vld [vmem:[%s6 + $0x390] sm:$0xff]
  %v2782 = vld [vmem:[%s6 + $0x398] sm:$0xff]
  %v2783 = vld [vmem:[%s6 + $0x3a0] sm:$0xff]
  %v2784 = vld [vmem:[%s6 + $0x3a8] sm:$0xff]
  %v2785 = vld [vmem:[%s6 + $0x3b0] sm:$0xff]
  %v2786 = vld [vmem:[%s6 + $0x3b8] sm:$0xff]
  %v2787 = vld [vmem:[%s6 + $0x3c0] sm:$0xff]
  %v2788 = vld [vmem:[%s6 + $0x3c8] sm:$0xff]
  %v2789 = vld [vmem:[%s6 + $0x3d0] sm:$0xff]
  %v2790 = vld [vmem:[%s6 + $0x3d8] sm:$0xff]
  %v2791 = vld [vmem:[%s6 + $0x3e0] sm:$0xff]
  %v2792 = vld [vmem:[%s6 + $0x3e8] sm:$0xff]
  %v2793 = vld [vmem:[%s6 + $0x3f0] sm:$0xff]
  %v2794 = vld [vmem:[%s6 + $0x3f8] sm:$0xff]
  %v2795 = vld [vmem:[%s7] sm:$0xf]
  %v2797 = vlaneseq
  %v2798 = vshrl.u32 %v2797, 7
  %v2799 = vsub.s32 0, %v2798
  %v2800 = vrot.slane %v2795, %v2799
  %v2801 = vlaneseq
  %v2802 = vshrl.u32 %v2801, 7
  %v2803 = vsub.s32 1, %v2802
  %v2804 = vrot.slane %v2795, %v2803
  %v2805 = vlaneseq
  %v2806 = vshrl.u32 %v2805, 7
  %v2807 = vsub.s32 2, %v2806
  %v2808 = vrot.slane %v2795, %v2807
  %v2809 = vlaneseq
  %v2810 = vshrl.u32 %v2809, 7
  %v2811 = vsub.s32 3, %v2810
  %v2812 = vrot.slane %v2795, %v2811
  %v2945 = vunpack.c.l.b16 %v2667
  %v2946 = vunpack.c.h.b16 %v2667
  %v2947 = vunpack.c.l.b16 %v2668
  %v2948 = vunpack.c.h.b16 %v2668
  %v2949 = vunpack.c.l.b16 %v2669
  %v2950 = vunpack.c.h.b16 %v2669
  %v2951 = vunpack.c.l.b16 %v2670
  %v2952 = vunpack.c.h.b16 %v2670
  %v2953 = vunpack.c.l.b16 %v2671
  %v2954 = vunpack.c.h.b16 %v2671
  %v2955 = vunpack.c.l.b16 %v2672
  %v2956 = vunpack.c.h.b16 %v2672
  %v2957 = vunpack.c.l.b16 %v2673
  %v2958 = vunpack.c.h.b16 %v2673
  %v2959 = vunpack.c.l.b16 %v2674
  %v2960 = vunpack.c.h.b16 %v2674
  %v2961 = vunpack.c.l.b16 %v2675
  %v2962 = vunpack.c.h.b16 %v2675
  %v2963 = vunpack.c.l.b16 %v2676
  %v2964 = vunpack.c.h.b16 %v2676
  %v2965 = vunpack.c.l.b16 %v2677
  %v2966 = vunpack.c.h.b16 %v2677
  %v2967 = vunpack.c.l.b16 %v2678
  %v2968 = vunpack.c.h.b16 %v2678
  %v2969 = vunpack.c.l.b16 %v2679
  %v2970 = vunpack.c.h.b16 %v2679
  %v2971 = vunpack.c.l.b16 %v2680
  %v2972 = vunpack.c.h.b16 %v2680
  %v2973 = vunpack.c.l.b16 %v2681
  %v2974 = vunpack.c.h.b16 %v2681
  %v2975 = vunpack.c.l.b16 %v2682
  %v2976 = vunpack.c.h.b16 %v2682
  %v2977 = vunpack.c.l.b16 %v2683
  %v2978 = vunpack.c.h.b16 %v2683
  %v2979 = vunpack.c.l.b16 %v2684
  %v2980 = vunpack.c.h.b16 %v2684
  %v2981 = vunpack.c.l.b16 %v2685
  %v2982 = vunpack.c.h.b16 %v2685
  %v2983 = vunpack.c.l.b16 %v2686
  %v2984 = vunpack.c.h.b16 %v2686
  %v2985 = vunpack.c.l.b16 %v2687
  %v2986 = vunpack.c.h.b16 %v2687
  %v2987 = vunpack.c.l.b16 %v2688
  %v2988 = vunpack.c.h.b16 %v2688
  %v2989 = vunpack.c.l.b16 %v2689
  %v2990 = vunpack.c.h.b16 %v2689
  %v2991 = vunpack.c.l.b16 %v2690
  %v2992 = vunpack.c.h.b16 %v2690
  %v2993 = vunpack.c.l.b16 %v2691
  %v2994 = vunpack.c.h.b16 %v2691
  %v2995 = vunpack.c.l.b16 %v2692
  %v2996 = vunpack.c.h.b16 %v2692
  %v2997 = vunpack.c.l.b16 %v2693
  %v2998 = vunpack.c.h.b16 %v2693
  %v2999 = vunpack.c.l.b16 %v2694
  %v3000 = vunpack.c.h.b16 %v2694
  %v3001 = vunpack.c.l.b16 %v2695
  %v3002 = vunpack.c.h.b16 %v2695
  %v3003 = vunpack.c.l.b16 %v2696
  %v3004 = vunpack.c.h.b16 %v2696
  %v3005 = vunpack.c.l.b16 %v2697
  %v3006 = vunpack.c.h.b16 %v2697
  %v3007 = vunpack.c.l.b16 %v2698
  %v3008 = vunpack.c.h.b16 %v2698
  %v3009 = vunpack.c.l.b16 %v2699
  %v3010 = vunpack.c.h.b16 %v2699
  %v3011 = vunpack.c.l.b16 %v2700
  %v3012 = vunpack.c.h.b16 %v2700
  %v3013 = vunpack.c.l.b16 %v2701
  %v3014 = vunpack.c.h.b16 %v2701
  %v3015 = vunpack.c.l.b16 %v2702
  %v3016 = vunpack.c.h.b16 %v2702
  %v3017 = vunpack.c.l.b16 %v2703
  %v3018 = vunpack.c.h.b16 %v2703
  %v3019 = vunpack.c.l.b16 %v2704
  %v3020 = vunpack.c.h.b16 %v2704
  %v3021 = vunpack.c.l.b16 %v2705
  %v3022 = vunpack.c.h.b16 %v2705
  %v3023 = vunpack.c.l.b16 %v2706
  %v3024 = vunpack.c.h.b16 %v2706
  %v3025 = vunpack.c.l.b16 %v2707
  %v3026 = vunpack.c.h.b16 %v2707
  %v3027 = vunpack.c.l.b16 %v2708
  %v3028 = vunpack.c.h.b16 %v2708
  %v3029 = vunpack.c.l.b16 %v2709
  %v3030 = vunpack.c.h.b16 %v2709
  %v3031 = vunpack.c.l.b16 %v2710
  %v3032 = vunpack.c.h.b16 %v2710
  %v3033 = vunpack.c.l.b16 %v2711
  %v3034 = vunpack.c.h.b16 %v2711
  %v3035 = vunpack.c.l.b16 %v2712
  %v3036 = vunpack.c.h.b16 %v2712
  %v3037 = vunpack.c.l.b16 %v2713
  %v3038 = vunpack.c.h.b16 %v2713
  %v3039 = vunpack.c.l.b16 %v2714
  %v3040 = vunpack.c.h.b16 %v2714
  %v3041 = vunpack.c.l.b16 %v2715
  %v3042 = vunpack.c.h.b16 %v2715
  %v3043 = vunpack.c.l.b16 %v2716
  %v3044 = vunpack.c.h.b16 %v2716
  %v3045 = vunpack.c.l.b16 %v2717
  %v3046 = vunpack.c.h.b16 %v2717
  %v3047 = vunpack.c.l.b16 %v2718
  %v3048 = vunpack.c.h.b16 %v2718
  %v3049 = vunpack.c.l.b16 %v2719
  %v3050 = vunpack.c.h.b16 %v2719
  %v3051 = vunpack.c.l.b16 %v2720
  %v3052 = vunpack.c.h.b16 %v2720
  %v3053 = vunpack.c.l.b16 %v2721
  %v3054 = vunpack.c.h.b16 %v2721
  %v3055 = vunpack.c.l.b16 %v2722
  %v3056 = vunpack.c.h.b16 %v2722
  %v3057 = vunpack.c.l.b16 %v2723
  %v3058 = vunpack.c.h.b16 %v2723
  %v3059 = vunpack.c.l.b16 %v2724
  %v3060 = vunpack.c.h.b16 %v2724
  %v3061 = vunpack.c.l.b16 %v2725
  %v3062 = vunpack.c.h.b16 %v2725
  %v3063 = vunpack.c.l.b16 %v2726
  %v3064 = vunpack.c.h.b16 %v2726
  %v3065 = vunpack.c.l.b16 %v2727
  %v3066 = vunpack.c.h.b16 %v2727
  %v3067 = vunpack.c.l.b16 %v2728
  %v3068 = vunpack.c.h.b16 %v2728
  %v3069 = vunpack.c.l.b16 %v2729
  %v3070 = vunpack.c.h.b16 %v2729
  %v3071 = vunpack.c.l.b16 %v2730
  %v3072 = vunpack.c.h.b16 %v2730
  %v3073 = vunpack.c.l.b16 %v2731
  %v3074 = vunpack.c.h.b16 %v2731
  %v3075 = vunpack.c.l.b16 %v2732
  %v3076 = vunpack.c.h.b16 %v2732
  %v3077 = vunpack.c.l.b16 %v2733
  %v3078 = vunpack.c.h.b16 %v2733
  %v3079 = vunpack.c.l.b16 %v2734
  %v3080 = vunpack.c.h.b16 %v2734
  %v3081 = vunpack.c.l.b16 %v2735
  %v3082 = vunpack.c.h.b16 %v2735
  %v3083 = vunpack.c.l.b16 %v2736
  %v3084 = vunpack.c.h.b16 %v2736
  %v3085 = vunpack.c.l.b16 %v2737
  %v3086 = vunpack.c.h.b16 %v2737
  %v3087 = vunpack.c.l.b16 %v2738
  %v3088 = vunpack.c.h.b16 %v2738
  %v3089 = vunpack.c.l.b16 %v2739
  %v3090 = vunpack.c.h.b16 %v2739
  %v3091 = vunpack.c.l.b16 %v2740
  %v3092 = vunpack.c.h.b16 %v2740
  %v3093 = vunpack.c.l.b16 %v2741
  %v3094 = vunpack.c.h.b16 %v2741
  %v3095 = vunpack.c.l.b16 %v2742
  %v3096 = vunpack.c.h.b16 %v2742
  %v3097 = vunpack.c.l.b16 %v2743
  %v3098 = vunpack.c.h.b16 %v2743
  %v3099 = vunpack.c.l.b16 %v2744
  %v3100 = vunpack.c.h.b16 %v2744
  %v3101 = vunpack.c.l.b16 %v2745
  %v3102 = vunpack.c.h.b16 %v2745
  %v3103 = vunpack.c.l.b16 %v2746
  %v3104 = vunpack.c.h.b16 %v2746
  %v3105 = vunpack.c.l.b16 %v2747
  %v3106 = vunpack.c.h.b16 %v2747
  %v3107 = vunpack.c.l.b16 %v2748
  %v3108 = vunpack.c.h.b16 %v2748
  %v3109 = vunpack.c.l.b16 %v2749
  %v3110 = vunpack.c.h.b16 %v2749
  %v3111 = vunpack.c.l.b16 %v2750
  %v3112 = vunpack.c.h.b16 %v2750
  %v3113 = vunpack.c.l.b16 %v2751
  %v3114 = vunpack.c.h.b16 %v2751
  %v3115 = vunpack.c.l.b16 %v2752
  %v3116 = vunpack.c.h.b16 %v2752
  %v3117 = vunpack.c.l.b16 %v2753
  %v3118 = vunpack.c.h.b16 %v2753
  %v3119 = vunpack.c.l.b16 %v2754
  %v3120 = vunpack.c.h.b16 %v2754
  %v3121 = vunpack.c.l.b16 %v2755
  %v3122 = vunpack.c.h.b16 %v2755
  %v3123 = vunpack.c.l.b16 %v2756
  %v3124 = vunpack.c.h.b16 %v2756
  %v3125 = vunpack.c.l.b16 %v2757
  %v3126 = vunpack.c.h.b16 %v2757
  %v3127 = vunpack.c.l.b16 %v2758
  %v3128 = vunpack.c.h.b16 %v2758
  %v3129 = vunpack.c.l.b16 %v2759
  %v3130 = vunpack.c.h.b16 %v2759
  %v3131 = vunpack.c.l.b16 %v2760
  %v3132 = vunpack.c.h.b16 %v2760
  %v3133 = vunpack.c.l.b16 %v2761
  %v3134 = vunpack.c.h.b16 %v2761
  %v3135 = vunpack.c.l.b16 %v2762
  %v3136 = vunpack.c.h.b16 %v2762
  %v3137 = vunpack.c.l.b16 %v2763
  %v3138 = vunpack.c.h.b16 %v2763
  %v3139 = vunpack.c.l.b16 %v2764
  %v3140 = vunpack.c.h.b16 %v2764
  %v3141 = vunpack.c.l.b16 %v2765
  %v3142 = vunpack.c.h.b16 %v2765
  %v3143 = vunpack.c.l.b16 %v2766
  %v3144 = vunpack.c.h.b16 %v2766
  %v3145 = vunpack.c.l.b16 %v2767
  %v3146 = vunpack.c.h.b16 %v2767
  %v3147 = vunpack.c.l.b16 %v2768
  %v3148 = vunpack.c.h.b16 %v2768
  %v3149 = vunpack.c.l.b16 %v2769
  %v3150 = vunpack.c.h.b16 %v2769
  %v3151 = vunpack.c.l.b16 %v2770
  %v3152 = vunpack.c.h.b16 %v2770
  %v3153 = vunpack.c.l.b16 %v2771
  %v3154 = vunpack.c.h.b16 %v2771
  %v3155 = vunpack.c.l.b16 %v2772
  %v3156 = vunpack.c.h.b16 %v2772
  %v3157 = vunpack.c.l.b16 %v2773
  %v3158 = vunpack.c.h.b16 %v2773
  %v3159 = vunpack.c.l.b16 %v2774
  %v3160 = vunpack.c.h.b16 %v2774
  %v3161 = vunpack.c.l.b16 %v2775
  %v3162 = vunpack.c.h.b16 %v2775
  %v3163 = vunpack.c.l.b16 %v2776
  %v3164 = vunpack.c.h.b16 %v2776
  %v3165 = vunpack.c.l.b16 %v2777
  %v3166 = vunpack.c.h.b16 %v2777
  %v3167 = vunpack.c.l.b16 %v2778
  %v3168 = vunpack.c.h.b16 %v2778
  %v3169 = vunpack.c.l.b16 %v2779
  %v3170 = vunpack.c.h.b16 %v2779
  %v3171 = vunpack.c.l.b16 %v2780
  %v3172 = vunpack.c.h.b16 %v2780
  %v3173 = vunpack.c.l.b16 %v2781
  %v3174 = vunpack.c.h.b16 %v2781
  %v3175 = vunpack.c.l.b16 %v2782
  %v3176 = vunpack.c.h.b16 %v2782
  %v3177 = vunpack.c.l.b16 %v2783
  %v3178 = vunpack.c.h.b16 %v2783
  %v3179 = vunpack.c.l.b16 %v2784
  %v3180 = vunpack.c.h.b16 %v2784
  %v3181 = vunpack.c.l.b16 %v2785
  %v3182 = vunpack.c.h.b16 %v2785
  %v3183 = vunpack.c.l.b16 %v2786
  %v3184 = vunpack.c.h.b16 %v2786
  %v3185 = vunpack.c.l.b16 %v2787
  %v3186 = vunpack.c.h.b16 %v2787
  %v3187 = vunpack.c.l.b16 %v2788
  %v3188 = vunpack.c.h.b16 %v2788
  %v3189 = vunpack.c.l.b16 %v2789
  %v3190 = vunpack.c.h.b16 %v2789
  %v3191 = vunpack.c.l.b16 %v2790
  %v3192 = vunpack.c.h.b16 %v2790
  %v3193 = vunpack.c.l.b16 %v2791
  %v3194 = vunpack.c.h.b16 %v2791
  %v3195 = vunpack.c.l.b16 %v2792
  %v3196 = vunpack.c.h.b16 %v2792
  %v3197 = vunpack.c.l.b16 %v2793
  %v3198 = vunpack.c.h.b16 %v2793
  %v3199 = vunpack.c.l.b16 %v2794
  %v3200 = vunpack.c.h.b16 %v2794
  %v3201 = vpack.c.b16 %v2949, %v2945
  %v3202 = vpack.c.b16 %v2950, %v2946
  %v3203 = vpack.c.b16 %v2951, %v2947
  %v3204 = vpack.c.b16 %v2952, %v2948
  %v3205 = vpack.c.b16 %v2957, %v2953
  %v3206 = vpack.c.b16 %v2958, %v2954
  %v3207 = vpack.c.b16 %v2959, %v2955
  %v3208 = vpack.c.b16 %v2960, %v2956
  %v3209 = vpack.c.b16 %v2965, %v2961
  %v3210 = vpack.c.b16 %v2966, %v2962
  %v3211 = vpack.c.b16 %v2967, %v2963
  %v3212 = vpack.c.b16 %v2968, %v2964
  %v3213 = vpack.c.b16 %v2973, %v2969
  %v3214 = vpack.c.b16 %v2974, %v2970
  %v3215 = vpack.c.b16 %v2975, %v2971
  %v3216 = vpack.c.b16 %v2976, %v2972
  %v3217 = vpack.c.b16 %v2981, %v2977
  %v3218 = vpack.c.b16 %v2982, %v2978
  %v3219 = vpack.c.b16 %v2983, %v2979
  %v3220 = vpack.c.b16 %v2984, %v2980
  %v3221 = vpack.c.b16 %v2989, %v2985
  %v3222 = vpack.c.b16 %v2990, %v2986
  %v3223 = vpack.c.b16 %v2991, %v2987
  %v3224 = vpack.c.b16 %v2992, %v2988
  %v3225 = vpack.c.b16 %v2997, %v2993
  %v3226 = vpack.c.b16 %v2998, %v2994
  %v3227 = vpack.c.b16 %v2999, %v2995
  %v3228 = vpack.c.b16 %v3000, %v2996
  %v3229 = vpack.c.b16 %v3005, %v3001
  %v3230 = vpack.c.b16 %v3006, %v3002
  %v3231 = vpack.c.b16 %v3007, %v3003
  %v3232 = vpack.c.b16 %v3008, %v3004
  %v3233 = vpack.c.b16 %v3013, %v3009
  %v3234 = vpack.c.b16 %v3014, %v3010
  %v3235 = vpack.c.b16 %v3015, %v3011
  %v3236 = vpack.c.b16 %v3016, %v3012
  %v3237 = vpack.c.b16 %v3021, %v3017
  %v3238 = vpack.c.b16 %v3022, %v3018
  %v3239 = vpack.c.b16 %v3023, %v3019
  %v3240 = vpack.c.b16 %v3024, %v3020
  %v3241 = vpack.c.b16 %v3029, %v3025
  %v3242 = vpack.c.b16 %v3030, %v3026
  %v3243 = vpack.c.b16 %v3031, %v3027
  %v3244 = vpack.c.b16 %v3032, %v3028
  %v3245 = vpack.c.b16 %v3037, %v3033
  %v3246 = vpack.c.b16 %v3038, %v3034
  %v3247 = vpack.c.b16 %v3039, %v3035
  %v3248 = vpack.c.b16 %v3040, %v3036
  %v3249 = vpack.c.b16 %v3045, %v3041
  %v3250 = vpack.c.b16 %v3046, %v3042
  %v3251 = vpack.c.b16 %v3047, %v3043
  %v3252 = vpack.c.b16 %v3048, %v3044
  %v3253 = vpack.c.b16 %v3053, %v3049
  %v3254 = vpack.c.b16 %v3054, %v3050
  %v3255 = vpack.c.b16 %v3055, %v3051
  %v3256 = vpack.c.b16 %v3056, %v3052
  %v3257 = vpack.c.b16 %v3061, %v3057
  %v3258 = vpack.c.b16 %v3062, %v3058
  %v3259 = vpack.c.b16 %v3063, %v3059
  %v3260 = vpack.c.b16 %v3064, %v3060
  %v3261 = vpack.c.b16 %v3069, %v3065
  %v3262 = vpack.c.b16 %v3070, %v3066
  %v3263 = vpack.c.b16 %v3071, %v3067
  %v3264 = vpack.c.b16 %v3072, %v3068
  %v3265 = vpack.c.b16 %v3077, %v3073
  %v3266 = vpack.c.b16 %v3078, %v3074
  %v3267 = vpack.c.b16 %v3079, %v3075
  %v3268 = vpack.c.b16 %v3080, %v3076
  %v3269 = vpack.c.b16 %v3085, %v3081
  %v3270 = vpack.c.b16 %v3086, %v3082
  %v3271 = vpack.c.b16 %v3087, %v3083
  %v3272 = vpack.c.b16 %v3088, %v3084
  %v3273 = vpack.c.b16 %v3093, %v3089
  %v3274 = vpack.c.b16 %v3094, %v3090
  %v3275 = vpack.c.b16 %v3095, %v3091
  %v3276 = vpack.c.b16 %v3096, %v3092
  %v3277 = vpack.c.b16 %v3101, %v3097
  %v3278 = vpack.c.b16 %v3102, %v3098
  %v3279 = vpack.c.b16 %v3103, %v3099
  %v3280 = vpack.c.b16 %v3104, %v3100
  %v3281 = vpack.c.b16 %v3109, %v3105
  %v3282 = vpack.c.b16 %v3110, %v3106
  %v3283 = vpack.c.b16 %v3111, %v3107
  %v3284 = vpack.c.b16 %v3112, %v3108
  %v3285 = vpack.c.b16 %v3117, %v3113
  %v3286 = vpack.c.b16 %v3118, %v3114
  %v3287 = vpack.c.b16 %v3119, %v3115
  %v3288 = vpack.c.b16 %v3120, %v3116
  %v3289 = vpack.c.b16 %v3125, %v3121
  %v3290 = vpack.c.b16 %v3126, %v3122
  %v3291 = vpack.c.b16 %v3127, %v3123
  %v3292 = vpack.c.b16 %v3128, %v3124
  %v3293 = vpack.c.b16 %v3133, %v3129
  %v3294 = vpack.c.b16 %v3134, %v3130
  %v3295 = vpack.c.b16 %v3135, %v3131
  %v3296 = vpack.c.b16 %v3136, %v3132
  %v3297 = vpack.c.b16 %v3141, %v3137
  %v3298 = vpack.c.b16 %v3142, %v3138
  %v3299 = vpack.c.b16 %v3143, %v3139
  %v3300 = vpack.c.b16 %v3144, %v3140
  %v3301 = vpack.c.b16 %v3149, %v3145
  %v3302 = vpack.c.b16 %v3150, %v3146
  %v3303 = vpack.c.b16 %v3151, %v3147
  %v3304 = vpack.c.b16 %v3152, %v3148
  %v3305 = vpack.c.b16 %v3157, %v3153
  %v3306 = vpack.c.b16 %v3158, %v3154
  %v3307 = vpack.c.b16 %v3159, %v3155
  %v3308 = vpack.c.b16 %v3160, %v3156
  %v3309 = vpack.c.b16 %v3165, %v3161
  %v3310 = vpack.c.b16 %v3166, %v3162
  %v3311 = vpack.c.b16 %v3167, %v3163
  %v3312 = vpack.c.b16 %v3168, %v3164
  %v3313 = vpack.c.b16 %v3173, %v3169
  %v3314 = vpack.c.b16 %v3174, %v3170
  %v3315 = vpack.c.b16 %v3175, %v3171
  %v3316 = vpack.c.b16 %v3176, %v3172
  %v3317 = vpack.c.b16 %v3181, %v3177
  %v3318 = vpack.c.b16 %v3182, %v3178
  %v3319 = vpack.c.b16 %v3183, %v3179
  %v3320 = vpack.c.b16 %v3184, %v3180
  %v3321 = vpack.c.b16 %v3189, %v3185
  %v3322 = vpack.c.b16 %v3190, %v3186
  %v3323 = vpack.c.b16 %v3191, %v3187
  %v3324 = vpack.c.b16 %v3192, %v3188
  %v3325 = vpack.c.b16 %v3197, %v3193
  %v3326 = vpack.c.b16 %v3198, %v3194
  %v3327 = vpack.c.b16 %v3199, %v3195
  %v3328 = vpack.c.b16 %v3200, %v3196
  %3457 = vmatprep.subr.bf16.mxu0 %v3202
  %3458 = vmatpush1.bf16.msra.mxu0 %v3201
  %3459 = vmatprep.subr.bf16.mxu0 %v3206
  %3460 = vmatpush1.bf16.msra.mxu0 %v3205
  %3461 = vmatprep.subr.bf16.mxu0 %v3210
  %3462 = vmatpush1.bf16.msra.mxu0 %v3209
  %3463 = vmatprep.subr.bf16.mxu0 %v3214
  %3464 = vmatpush1.bf16.msra.mxu0 %v3213
  %3465 = vmatprep.subr.bf16.mxu0 %v3218
  %3466 = vmatpush1.bf16.msra.mxu0 %v3217
  %3467 = vmatprep.subr.bf16.mxu0 %v3222
  %3468 = vmatpush1.bf16.msra.mxu0 %v3221
  %3469 = vmatprep.subr.bf16.mxu0 %v3226
  %3470 = vmatpush1.bf16.msra.mxu0 %v3225
  %3471 = vmatprep.subr.bf16.mxu0 %v3230
  %3472 = vmatpush1.bf16.msra.mxu0 %v3229
  %3473 = vmatprep.subr.bf16.mxu0 %v3234
  %3474 = vmatpush1.bf16.msra.mxu0 %v3233
  %3475 = vmatprep.subr.bf16.mxu0 %v3238
  %3476 = vmatpush1.bf16.msra.mxu0 %v3237
  %3477 = vmatprep.subr.bf16.mxu0 %v3242
  %3478 = vmatpush1.bf16.msra.mxu0 %v3241
  %3479 = vmatprep.subr.bf16.mxu0 %v3246
  %3480 = vmatpush1.bf16.msra.mxu0 %v3245
  %3481 = vmatprep.subr.bf16.mxu0 %v3250
  %3482 = vmatpush1.bf16.msra.mxu0 %v3249
  %3483 = vmatprep.subr.bf16.mxu0 %v3254
  %3484 = vmatpush1.bf16.msra.mxu0 %v3253
  %3485 = vmatprep.subr.bf16.mxu0 %v3258
  %3486 = vmatpush1.bf16.msra.mxu0 %v3257
  %3487 = vmatprep.subr.bf16.mxu0 %v3262
  %3488 = vmatpush1.bf16.msra.mxu0 %v3261
  %3489 = vmatprep.mubr.bf16.mxu0 %v2644
  %3490 = vmatmul.mubr.bf16.gmra.mrb[0].mxu0 %v2643
  %v3491 = vpop.f32.mrb[0].mxu0
  %v3492 = vadd.f32 %v2800, %v3491
  %v3493 = vpop.f32.mrb[0].mxu0
  %v3494 = vadd.f32 %v2804, %v3493
  %v3495 = vpop.f32.mrb[0].mxu0
  %v3496 = vadd.f32 %v2800, %v3495
  %v3497 = vpop.f32.mrb[0].mxu0
  %v3498 = vadd.f32 %v2804, %v3497
  %3499 = vmatprep.mubr.bf16.mxu0 %v2648
  %3500 = vmatmul.mubr.bf16.gmra.mrb[0].mxu0 %v2647
  %v3501 = vpop.f32.mrb[0].mxu0
  %v3502 = vadd.f32 %v2800, %v3501
  %v3503 = vpop.f32.mrb[0].mxu0
  %v3504 = vadd.f32 %v2804, %v3503
  %v3505 = vpop.f32.mrb[0].mxu0
  %v3506 = vadd.f32 %v2800, %v3505
  %v3507 = vpop.f32.mrb[0].mxu0
  %v3508 = vadd.f32 %v2804, %v3507
  %3509 = vmatprep.mubr.bf16.mxu0 %v2652
  %3510 = vmatmul.mubr.bf16.gmra.mrb[0].mxu0 %v2651
  %v3511 = vpop.f32.mrb[0].mxu0
  %v3512 = vadd.f32 %v2800, %v3511
  %v3513 = vpop.f32.mrb[0].mxu0
  %v3514 = vadd.f32 %v2804, %v3513
  %v3515 = vpop.f32.mrb[0].mxu0
  %v3516 = vadd.f32 %v2800, %v3515
  %v3517 = vpop.f32.mrb[0].mxu0
  %v3518 = vadd.f32 %v2804, %v3517
  %3519 = vmatprep.mubr.bf16.mxu0 %v2656
  %3520 = vmatmul.mubr.bf16.gmra.mrb[0].mxu0 %v2655
  %v3521 = vpop.f32.mrb[0].mxu0
  %v3522 = vadd.f32 %v2800, %v3521
  %v3523 = vpop.f32.mrb[0].mxu0
  %v3524 = vadd.f32 %v2804, %v3523
  %v3525 = vpop.f32.mrb[0].mxu0
  %v3526 = vadd.f32 %v2800, %v3525
  %v3527 = vpop.f32.mrb[0].mxu0
  %v3528 = vadd.f32 %v2804, %v3527
  %3529 = vmatprep.mubr.bf16.mxu0 %v2660
  %3530 = vmatmul.mubr.bf16.gmra.mrb[0].mxu0 %v2659
  %v3531 = vpop.f32.mrb[0].mxu0
  %v3532 = vadd.f32 %v2800, %v3531
  %v3533 = vpop.f32.mrb[0].mxu0
  %v3534 = vadd.f32 %v2804, %v3533
  %v3535 = vpop.f32.mrb[0].mxu0
  %v3536 = vadd.f32 %v2800, %v3535
  %v3537 = vpop.f32.mrb[0].mxu0
  %v3538 = vadd.f32 %v2804, %v3537
  %3539 = vmatprep.mubr.bf16.mxu0 %v2664
  %3540 = vmatmul.mubr.bf16.gmra.mrb[0].mxu0 %v2663
  %v3541 = vpop.f32.mrb[0].mxu0
  %v3542 = vadd.f32 %v2800, %v3541
  %v3543 = vpop.f32.mrb[0].mxu0
  %v3544 = vadd.f32 %v2804, %v3543
  %v3545 = vpop.f32.mrb[0].mxu0
  %v3546 = vpop.f32.mrb[0].mxu0
  %3547 = vdwg.mxu0
  %3548 = vmatprep.subr.bf16.mxu0 %v3266
  %3549 = vmatpush1.bf16.msra.mxu0 %v3265
  %3550 = vmatprep.subr.bf16.mxu0 %v3270
  %3551 = vmatpush1.bf16.msra.mxu0 %v3269
  %3552 = vmatprep.subr.bf16.mxu0 %v3274
  %3553 = vmatpush1.bf16.msra.mxu0 %v3273
  %3554 = vmatprep.subr.bf16.mxu0 %v3278
  %3555 = vmatpush1.bf16.msra.mxu0 %v3277
  %3556 = vmatprep.subr.bf16.mxu0 %v3282
  %3557 = vmatpush1.bf16.msra.mxu0 %v3281
  %3558 = vmatprep.subr.bf16.mxu0 %v3286
  %3559 = vmatpush1.bf16.msra.mxu0 %v3285
  %3560 = vmatprep.subr.bf16.mxu0 %v3290
  %3561 = vmatpush1.bf16.msra.mxu0 %v3289
  %3562 = vmatprep.subr.bf16.mxu0 %v3294
  %3563 = vmatpush1.bf16.msra.mxu0 %v3293
  %3564 = vmatprep.subr.bf16.mxu0 %v3298
  %3565 = vmatpush1.bf16.msra.mxu0 %v3297
  %3566 = vmatprep.subr.bf16.mxu0 %v3302
  %3567 = vmatpush1.bf16.msra.mxu0 %v3301
  %3568 = vmatprep.subr.bf16.mxu0 %v3306
  %3569 = vmatpush1.bf16.msra.mxu0 %v3305
  %3570 = vmatprep.subr.bf16.mxu0 %v3310
  %3571 = vmatpush1.bf16.msra.mxu0 %v3309
  %3572 = vmatprep.subr.bf16.mxu0 %v3314
  %3573 = vmatpush1.bf16.msra.mxu0 %v3313
  %3574 = vmatprep.subr.bf16.mxu0 %v3318
  %3575 = vmatpush1.bf16.msra.mxu0 %v3317
  %3576 = vmatprep.subr.bf16.mxu0 %v3322
  %3577 = vmatpush1.bf16.msra.mxu0 %v3321
  %3578 = vmatprep.subr.bf16.mxu0 %v3326
  %3579 = vmatpush1.bf16.msra.mxu0 %v3325
  %3580 = vmatprep.mubr.bf16.mxu0 %v2646
  %3581 = vmatmul.mubr.bf16.gmra.mrb[0].mxu0 %v2645
  %v3582 = vpop.f32.mrb[0].mxu0
  %v3583 = vadd.f32 %v3492, %v3582
  %v3584 = vpop.f32.mrb[0].mxu0
  %v3585 = vadd.f32 %v3494, %v3584
  %v3586 = vpop.f32.mrb[0].mxu0
  %v3587 = vadd.f32 %v3496, %v3586
  %v3588 = vpop.f32.mrb[0].mxu0
  %v3589 = vadd.f32 %v3498, %v3588
  %3590 = vmatprep.mubr.bf16.mxu0 %v2650
  %3591 = vmatmul.mubr.bf16.gmra.mrb[0].mxu0 %v2649
  %v3592 = vpop.f32.mrb[0].mxu0
  %v3593 = vadd.f32 %v3502, %v3592
  %v3594 = vpop.f32.mrb[0].mxu0
  %v3595 = vadd.f32 %v3504, %v3594
  %v3596 = vpop.f32.mrb[0].mxu0
  %v3597 = vadd.f32 %v3506, %v3596
  %v3598 = vpop.f32.mrb[0].mxu0
  %v3599 = vadd.f32 %v3508, %v3598
  %3600 = vmatprep.mubr.bf16.mxu0 %v2654
  %3601 = vmatmul.mubr.bf16.gmra.mrb[0].mxu0 %v2653
  %v3602 = vpop.f32.mrb[0].mxu0
  %v3603 = vadd.f32 %v3512, %v3602
  %v3604 = vpop.f32.mrb[0].mxu0
  %v3605 = vadd.f32 %v3514, %v3604
  %v3606 = vpop.f32.mrb[0].mxu0
  %v3607 = vadd.f32 %v3516, %v3606
  %v3608 = vpop.f32.mrb[0].mxu0
  %v3609 = vadd.f32 %v3518, %v3608
  %3610 = vmatprep.mubr.bf16.mxu0 %v2658
  %3611 = vmatmul.mubr.bf16.gmra.mrb[0].mxu0 %v2657
  %v3612 = vpop.f32.mrb[0].mxu0
  %v3613 = vadd.f32 %v3522, %v3612
  %v3614 = vpop.f32.mrb[0].mxu0
  %v3615 = vadd.f32 %v3524, %v3614
  %v3616 = vpop.f32.mrb[0].mxu0
  %v3617 = vadd.f32 %v3526, %v3616
  %v3618 = vpop.f32.mrb[0].mxu0
  %v3619 = vadd.f32 %v3528, %v3618
  %3620 = vmatprep.mubr.bf16.mxu0 %v2662
  %3621 = vmatmul.mubr.bf16.gmra.mrb[0].mxu0 %v2661
  %v3622 = vpop.f32.mrb[0].mxu0
  %v3623 = vadd.f32 %v3532, %v3622
  %v3624 = vpop.f32.mrb[0].mxu0
  %v3625 = vadd.f32 %v3534, %v3624
  %v3626 = vpop.f32.mrb[0].mxu0
  %v3627 = vadd.f32 %v3536, %v3626
  %v3628 = vpop.f32.mrb[0].mxu0
  %v3629 = vadd.f32 %v3538, %v3628
  %3630 = vmatprep.mubr.bf16.mxu0 %v2666
  %3631 = vmatmul.mubr.bf16.gmra.mrb[0].mxu0 %v2665
  %v3632 = vpop.f32.mrb[0].mxu0
  %v3633 = vadd.f32 %v3542, %v3632
  %v3634 = vpop.f32.mrb[0].mxu0
  %v3635 = vadd.f32 %v3544, %v3634
  %v3636 = vpop.f32.mrb[0].mxu0
  %v3637 = vpop.f32.mrb[0].mxu0
  %3638 = vdwg.mxu0
  %3639 = vmatprep.subr.bf16.mxu0 %v3204
  %3640 = vmatpush1.bf16.msra.mxu0 %v3203
  %3641 = vmatprep.subr.bf16.mxu0 %v3208
  %3642 = vmatpush1.bf16.msra.mxu0 %v3207
  %3643 = vmatprep.subr.bf16.mxu0 %v3212
  %3644 = vmatpush1.bf16.msra.mxu0 %v3211
  %3645 = vmatprep.subr.bf16.mxu0 %v3216
  %3646 = vmatpush1.bf16.msra.mxu0 %v3215
  %3647 = vmatprep.subr.bf16.mxu0 %v3220
  %3648 = vmatpush1.bf16.msra.mxu0 %v3219
  %3649 = vmatprep.subr.bf16.mxu0 %v3224
  %3650 = vmatpush1.bf16.msra.mxu0 %v3223
  %3651 = vmatprep.subr.bf16.mxu0 %v3228
  %3652 = vmatpush1.bf16.msra.mxu0 %v3227
  %3653 = vmatprep.subr.bf16.mxu0 %v3232
  %3654 = vmatpush1.bf16.msra.mxu0 %v3231
  %3655 = vmatprep.subr.bf16.mxu0 %v3236
  %3656 = vmatpush1.bf16.msra.mxu0 %v3235
  %3657 = vmatprep.subr.bf16.mxu0 %v3240
  %3658 = vmatpush1.bf16.msra.mxu0 %v3239
  %3659 = vmatprep.subr.bf16.mxu0 %v3244
  %3660 = vmatpush1.bf16.msra.mxu0 %v3243
  %3661 = vmatprep.subr.bf16.mxu0 %v3248
  %3662 = vmatpush1.bf16.msra.mxu0 %v3247
  %3663 = vmatprep.subr.bf16.mxu0 %v3252
  %3664 = vmatpush1.bf16.msra.mxu0 %v3251
  %3665 = vmatprep.subr.bf16.mxu0 %v3256
  %3666 = vmatpush1.bf16.msra.mxu0 %v3255
  %3667 = vmatprep.subr.bf16.mxu0 %v3260
  %3668 = vmatpush1.bf16.msra.mxu0 %v3259
  %3669 = vmatprep.subr.bf16.mxu0 %v3264
  %3670 = vmatpush1.bf16.msra.mxu0 %v3263
  %3671 = vmatprep.mubr.bf16.mxu0 %v2644
  %3672 = vmatmul.mubr.bf16.gmra.mrb[0].mxu0 %v2643
  %v3673 = vpop.f32.mrb[0].mxu0
  %v3674 = vadd.f32 %v2808, %v3673
  %v3675 = vpop.f32.mrb[0].mxu0
  %v3676 = vadd.f32 %v2812, %v3675
  %v3677 = vpop.f32.mrb[0].mxu0
  %v3678 = vadd.f32 %v2808, %v3677
  %v3679 = vpop.f32.mrb[0].mxu0
  %v3680 = vadd.f32 %v2812, %v3679
  %3681 = vmatprep.mubr.bf16.mxu0 %v2648
  %3682 = vmatmul.mubr.bf16.gmra.mrb[0].mxu0 %v2647
  %v3683 = vpop.f32.mrb[0].mxu0
  %v3684 = vadd.f32 %v2808, %v3683
  %v3685 = vpop.f32.mrb[0].mxu0
  %v3686 = vadd.f32 %v2812, %v3685
  %v3687 = vpop.f32.mrb[0].mxu0
  %v3688 = vadd.f32 %v2808, %v3687
  %v3689 = vpop.f32.mrb[0].mxu0
  %v3690 = vadd.f32 %v2812, %v3689
  %3691 = vmatprep.mubr.bf16.mxu0 %v2652
  %3692 = vmatmul.mubr.bf16.gmra.mrb[0].mxu0 %v2651
  %v3693 = vpop.f32.mrb[0].mxu0
  %v3694 = vadd.f32 %v2808, %v3693
  %v3695 = vpop.f32.mrb[0].mxu0
  %v3696 = vadd.f32 %v2812, %v3695
  %v3697 = vpop.f32.mrb[0].mxu0
  %v3698 = vadd.f32 %v2808, %v3697
  %v3699 = vpop.f32.mrb[0].mxu0
  %v3700 = vadd.f32 %v2812, %v3699
  %3701 = vmatprep.mubr.bf16.mxu0 %v2656
  %3702 = vmatmul.mubr.bf16.gmra.mrb[0].mxu0 %v2655
  %v3703 = vpop.f32.mrb[0].mxu0
  %v3704 = vadd.f32 %v2808, %v3703
  %v3705 = vpop.f32.mrb[0].mxu0
  %v3706 = vadd.f32 %v2812, %v3705
  %v3707 = vpop.f32.mrb[0].mxu0
  %v3708 = vadd.f32 %v2808, %v3707
  %v3709 = vpop.f32.mrb[0].mxu0
  %v3710 = vadd.f32 %v2812, %v3709
  %3711 = vmatprep.mubr.bf16.mxu0 %v2660
  %3712 = vmatmul.mubr.bf16.gmra.mrb[0].mxu0 %v2659
  %v3713 = vpop.f32.mrb[0].mxu0
  %v3714 = vadd.f32 %v2808, %v3713
  %v3715 = vpop.f32.mrb[0].mxu0
  %v3716 = vadd.f32 %v2812, %v3715
  %v3717 = vpop.f32.mrb[0].mxu0
  %v3718 = vadd.f32 %v2808, %v3717
  %v3719 = vpop.f32.mrb[0].mxu0
  %v3720 = vadd.f32 %v2812, %v3719
  %3721 = vmatprep.mubr.bf16.mxu0 %v2664
  %3722 = vmatmul.mubr.bf16.gmra.mrb[0].mxu0 %v2663
  %v3723 = vpop.f32.mrb[0].mxu0
  %v3724 = vadd.f32 %v2808, %v3723
  %v3725 = vpop.f32.mrb[0].mxu0
  %v3726 = vadd.f32 %v2812, %v3725
  %v3727 = vpop.f32.mrb[0].mxu0
  %v3728 = vpop.f32.mrb[0].mxu0
  %3729 = vdwg.mxu0
  %3730 = vmatprep.subr.bf16.mxu0 %v3268
  %3731 = vmatpush1.bf16.msra.mxu0 %v3267
  %3732 = vmatprep.subr.bf16.mxu0 %v3272
  %3733 = vmatpush1.bf16.msra.mxu0 %v3271
  %3734 = vmatprep.subr.bf16.mxu0 %v3276
  %3735 = vmatpush1.bf16.msra.mxu0 %v3275
  %3736 = vmatprep.subr.bf16.mxu0 %v3280
  %3737 = vmatpush1.bf16.msra.mxu0 %v3279
  %3738 = vmatprep.subr.bf16.mxu0 %v3284
  %3739 = vmatpush1.bf16.msra.mxu0 %v3283
  %3740 = vmatprep.subr.bf16.mxu0 %v3288
  %3741 = vmatpush1.bf16.msra.mxu0 %v3287
  %3742 = vmatprep.subr.bf16.mxu0 %v3292
  %3743 = vmatpush1.bf16.msra.mxu0 %v3291
  %3744 = vmatprep.subr.bf16.mxu0 %v3296
  %3745 = vmatpush1.bf16.msra.mxu0 %v3295
  %3746 = vmatprep.subr.bf16.mxu0 %v3300
  %3747 = vmatpush1.bf16.msra.mxu0 %v3299
  %3748 = vmatprep.subr.bf16.mxu0 %v3304
  %3749 = vmatpush1.bf16.msra.mxu0 %v3303
  %3750 = vmatprep.subr.bf16.mxu0 %v3308
  %3751 = vmatpush1.bf16.msra.mxu0 %v3307
  %3752 = vmatprep.subr.bf16.mxu0 %v3312
  %3753 = vmatpush1.bf16.msra.mxu0 %v3311
  %3754 = vmatprep.subr.bf16.mxu0 %v3316
  %3755 = vmatpush1.bf16.msra.mxu0 %v3315
  %3756 = vmatprep.subr.bf16.mxu0 %v3320
  %3757 = vmatpush1.bf16.msra.mxu0 %v3319
  %3758 = vmatprep.subr.bf16.mxu0 %v3324
  %3759 = vmatpush1.bf16.msra.mxu0 %v3323
  %3760 = vmatprep.subr.bf16.mxu0 %v3328
  %3761 = vmatpush1.bf16.msra.mxu0 %v3327
  %3762 = vmatprep.mubr.bf16.mxu0 %v2646
  %3763 = vmatmul.mubr.bf16.gmra.mrb[0].mxu0 %v2645
  %v3764 = vpop.f32.mrb[0].mxu0
  %v3765 = vadd.f32 %v3674, %v3764
  %v3766 = vpop.f32.mrb[0].mxu0
  %v3767 = vadd.f32 %v3676, %v3766
  %v3768 = vpop.f32.mrb[0].mxu0
  %v3769 = vadd.f32 %v3678, %v3768
  %v3770 = vpop.f32.mrb[0].mxu0
  %v3771 = vadd.f32 %v3680, %v3770
  %3772 = vmatprep.mubr.bf16.mxu0 %v2650
  %3773 = vmatmul.mubr.bf16.gmra.mrb[0].mxu0 %v2649
  %v3774 = vpop.f32.mrb[0].mxu0
  %v3775 = vadd.f32 %v3684, %v3774
  %v3776 = vpop.f32.mrb[0].mxu0
  %v3777 = vadd.f32 %v3686, %v3776
  %v3778 = vpop.f32.mrb[0].mxu0
  %v3779 = vadd.f32 %v3688, %v3778
  %v3780 = vpop.f32.mrb[0].mxu0
  %v3781 = vadd.f32 %v3690, %v3780
  %3782 = vmatprep.mubr.bf16.mxu0 %v2654
  %3783 = vmatmul.mubr.bf16.gmra.mrb[0].mxu0 %v2653
  %v3784 = vpop.f32.mrb[0].mxu0
  %v3785 = vadd.f32 %v3694, %v3784
  %v3786 = vpop.f32.mrb[0].mxu0
  %v3787 = vadd.f32 %v3696, %v3786
  %v3788 = vpop.f32.mrb[0].mxu0
  %v3789 = vadd.f32 %v3698, %v3788
  %v3790 = vpop.f32.mrb[0].mxu0
  %v3791 = vadd.f32 %v3700, %v3790
  %3792 = vmatprep.mubr.bf16.mxu0 %v2658
  %3793 = vmatmul.mubr.bf16.gmra.mrb[0].mxu0 %v2657
  %v3794 = vpop.f32.mrb[0].mxu0
  %v3795 = vadd.f32 %v3704, %v3794
  %v3796 = vpop.f32.mrb[0].mxu0
  %v3797 = vadd.f32 %v3706, %v3796
  %v3798 = vpop.f32.mrb[0].mxu0
  %v3799 = vadd.f32 %v3708, %v3798
  %v3800 = vpop.f32.mrb[0].mxu0
  %v3801 = vadd.f32 %v3710, %v3800
  %3802 = vmatprep.mubr.bf16.mxu0 %v2662
  %3803 = vmatmul.mubr.bf16.gmra.mrb[0].mxu0 %v2661
  %v3804 = vpop.f32.mrb[0].mxu0
  %v3805 = vadd.f32 %v3714, %v3804
  %v3806 = vpop.f32.mrb[0].mxu0
  %v3807 = vadd.f32 %v3716, %v3806
  %v3808 = vpop.f32.mrb[0].mxu0
  %v3809 = vadd.f32 %v3718, %v3808
  %v3810 = vpop.f32.mrb[0].mxu0
  %v3811 = vadd.f32 %v3720, %v3810
  %3812 = vmatprep.mubr.bf16.mxu0 %v2666
  %3813 = vmatmul.mubr.bf16.gmra.mrb[0].mxu0 %v2665
  %v3814 = vpop.f32.mrb[0].mxu0
  %v3815 = vadd.f32 %v3724, %v3814
  %v3816 = vpop.f32.mrb[0].mxu0
  %v3817 = vadd.f32 %v3726, %v3816
  %v3818 = vpop.f32.mrb[0].mxu0
  %v3819 = vpop.f32.mrb[0].mxu0
  %3820 = vdwg.mxu0
  %v3821 = vmax.f32 %v3583, 0.0
  %v3822 = vmax.f32 %v3585, 0.0
  %v3823 = vmax.f32 %v3765, 0.0
  %v3824 = vmax.f32 %v3767, 0.0
  %v3825 = vmax.f32 %v3587, 0.0
  %v3826 = vmax.f32 %v3589, 0.0
  %v3827 = vmax.f32 %v3769, 0.0
  %v3828 = vmax.f32 %v3771, 0.0
  %v3829 = vmax.f32 %v3593, 0.0
  %v3830 = vmax.f32 %v3595, 0.0
  %v3831 = vmax.f32 %v3775, 0.0
  %v3832 = vmax.f32 %v3777, 0.0
  %v3833 = vmax.f32 %v3597, 0.0
  %v3834 = vmax.f32 %v3599, 0.0
  %v3835 = vmax.f32 %v3779, 0.0
  %v3836 = vmax.f32 %v3781, 0.0
  %v3837 = vmax.f32 %v3603, 0.0
  %v3838 = vmax.f32 %v3605, 0.0
  %v3839 = vmax.f32 %v3785, 0.0
  %v3840 = vmax.f32 %v3787, 0.0
  %v3841 = vmax.f32 %v3607, 0.0
  %v3842 = vmax.f32 %v3609, 0.0
  %v3843 = vmax.f32 %v3789, 0.0
  %v3844 = vmax.f32 %v3791, 0.0
  %v3845 = vmax.f32 %v3613, 0.0
  %v3846 = vmax.f32 %v3615, 0.0
  %v3847 = vmax.f32 %v3795, 0.0
  %v3848 = vmax.f32 %v3797, 0.0
  %v3849 = vmax.f32 %v3617, 0.0
  %v3850 = vmax.f32 %v3619, 0.0
  %v3851 = vmax.f32 %v3799, 0.0
  %v3852 = vmax.f32 %v3801, 0.0
  %v3853 = vmax.f32 %v3623, 0.0
  %v3854 = vmax.f32 %v3625, 0.0
  %v3855 = vmax.f32 %v3805, 0.0
  %v3856 = vmax.f32 %v3807, 0.0
  %v3857 = vmax.f32 %v3627, 0.0
  %v3858 = vmax.f32 %v3629, 0.0
  %v3859 = vmax.f32 %v3809, 0.0
  %v3860 = vmax.f32 %v3811, 0.0
  %v3861 = vmax.f32 %v3633, 0.0
  %v3862 = vmax.f32 %v3635, 0.0
  %v3863 = vmax.f32 %v3815, 0.0
  %v3864 = vmax.f32 %v3817, 0.0
  %v3865 = vpack.c.bf16 %v3825, %v3821
  %v3866 = vpack.c.bf16 %v3826, %v3822
  %v3867 = vpack.c.bf16 %v3827, %v3823
  %v3868 = vpack.c.bf16 %v3828, %v3824
  %v3869 = vpack.c.bf16 %v3833, %v3829
  %v3870 = vpack.c.bf16 %v3834, %v3830
  %v3871 = vpack.c.bf16 %v3835, %v3831
  %v3872 = vpack.c.bf16 %v3836, %v3832
  %v3873 = vpack.c.bf16 %v3841, %v3837
  %v3874 = vpack.c.bf16 %v3842, %v3838
  %v3875 = vpack.c.bf16 %v3843, %v3839
  %v3876 = vpack.c.bf16 %v3844, %v3840
  %v3877 = vpack.c.bf16 %v3849, %v3845
  %v3878 = vpack.c.bf16 %v3850, %v3846
  %v3879 = vpack.c.bf16 %v3851, %v3847
  %v3880 = vpack.c.bf16 %v3852, %v3848
  %v3881 = vpack.c.bf16 %v3857, %v3853
  %v3882 = vpack.c.bf16 %v3858, %v3854
  %v3883 = vpack.c.bf16 %v3859, %v3855
  %v3884 = vpack.c.bf16 %v3860, %v3856
  %v3885 = vpack.c.bf16 %v3861, %v3861
  %v3886 = vpack.c.bf16 %v3862, %v3862
  %v3887 = vpack.c.bf16 %v3863, %v3863
  %v3888 = vpack.c.bf16 %v3864, %v3864
  %v3889 = vld [vmem:[%s8] sm:$0xf]
  %v3890 = vld [vmem:[%s8 + $0x4] sm:$0xf]
  %v3891 = vld [vmem:[%s8 + $0x8] sm:$0xf]
  %v3892 = vld [vmem:[%s8 + $0xc] sm:$0xf]
  %v3893 = vld [vmem:[%s8 + $0x10] sm:$0xf]
  %v3894 = vld [vmem:[%s8 + $0x14] sm:$0xf]
  %v3895 = vld [vmem:[%s8 + $0x18] sm:$0xf]
  %v3896 = vld [vmem:[%s8 + $0x1c] sm:$0xf]
  %v3897 = vld [vmem:[%s8 + $0x20] sm:$0xf]
  %v3898 = vld [vmem:[%s8 + $0x24] sm:$0xf]
  %v3899 = vld [vmem:[%s8 + $0x28] sm:$0xf]
  %v3900 = vld [vmem:[%s8 + $0x2c] sm:$0xf]
  %v3901 = vld [vmem:[%s8 + $0x30] sm:$0xf]
  %v3902 = vld [vmem:[%s8 + $0x34] sm:$0xf]
  %v3903 = vld [vmem:[%s8 + $0x38] sm:$0xf]
  %v3904 = vld [vmem:[%s8 + $0x3c] sm:$0xf]
  %v3905 = vld [vmem:[%s8 + $0x40] sm:$0xf]
  %v3906 = vld [vmem:[%s8 + $0x44] sm:$0xf]
  %v3907 = vld [vmem:[%s8 + $0x48] sm:$0xf]
  %v3908 = vld [vmem:[%s8 + $0x4c] sm:$0xf]
  %v3909 = vld [vmem:[%s8 + $0x50] sm:$0xf]
  %v3910 = vld [vmem:[%s8 + $0x54] sm:$0xf]
  %v3911 = vld [vmem:[%s8 + $0x58] sm:$0xf]
  %v3912 = vld [vmem:[%s8 + $0x5c] sm:$0xf]
  %v3913 = vld [vmem:[%s8 + $0x60] sm:$0xf]
  %v3914 = vld [vmem:[%s8 + $0x64] sm:$0xf]
  %v3915 = vld [vmem:[%s8 + $0x68] sm:$0xf]
  %v3916 = vld [vmem:[%s8 + $0x6c] sm:$0xf]
  %v3917 = vld [vmem:[%s8 + $0x70] sm:$0xf]
  %v3918 = vld [vmem:[%s8 + $0x74] sm:$0xf]
  %v3919 = vld [vmem:[%s8 + $0x78] sm:$0xf]
  %v3920 = vld [vmem:[%s8 + $0x7c] sm:$0xf]
  %v3921 = vld [vmem:[%s8 + $0x80] sm:$0xf]
  %v3922 = vld [vmem:[%s8 + $0x84] sm:$0xf]
  %v3923 = vld [vmem:[%s8 + $0x88] sm:$0xf]
  %v3924 = vld [vmem:[%s8 + $0x8c] sm:$0xf]
  %v3925 = vld [vmem:[%s8 + $0x90] sm:$0xf]
  %v3926 = vld [vmem:[%s8 + $0x94] sm:$0xf]
  %v3927 = vld [vmem:[%s8 + $0x98] sm:$0xf]
  %v3928 = vld [vmem:[%s8 + $0x9c] sm:$0xf]
  %v3929 = vld [vmem:[%s8 + $0xa0] sm:$0xf]
  %v3930 = vld [vmem:[%s8 + $0xa4] sm:$0xf]
  %v3931 = vld [vmem:[%s8 + $0xa8] sm:$0xf]
  %v3932 = vld [vmem:[%s8 + $0xac] sm:$0xf]
  %v3933 = vld [vmem:[%s8 + $0xb0] sm:$0xf]
  %v3934 = vld [vmem:[%s8 + $0xb4] sm:$0xf]
  %v3935 = vld [vmem:[%s8 + $0xb8] sm:$0xf]
  %v3936 = vld [vmem:[%s8 + $0xbc] sm:$0xf]
  %v3937 = vld [vmem:[%s8 + $0xc0] sm:$0xf]
  %v3938 = vld [vmem:[%s8 + $0xc4] sm:$0xf]
  %v3939 = vld [vmem:[%s8 + $0xc8] sm:$0xf]
  %v3940 = vld [vmem:[%s8 + $0xcc] sm:$0xf]
  %v3941 = vld [vmem:[%s8 + $0xd0] sm:$0xf]
  %v3942 = vld [vmem:[%s8 + $0xd4] sm:$0xf]
  %v3943 = vld [vmem:[%s8 + $0xd8] sm:$0xf]
  %v3944 = vld [vmem:[%s8 + $0xdc] sm:$0xf]
  %v3945 = vld [vmem:[%s8 + $0xe0] sm:$0xf]
  %v3946 = vld [vmem:[%s8 + $0xe4] sm:$0xf]
  %v3947 = vld [vmem:[%s8 + $0xe8] sm:$0xf]
  %v3948 = vld [vmem:[%s8 + $0xec] sm:$0xf]
  %v3949 = vld [vmem:[%s8 + $0xf0] sm:$0xf]
  %v3950 = vld [vmem:[%s8 + $0xf4] sm:$0xf]
  %v3951 = vld [vmem:[%s8 + $0xf8] sm:$0xf]
  %v3952 = vld [vmem:[%s8 + $0xfc] sm:$0xf]
  %v3953 = vld [vmem:[%s9] sm:$0x1]
  %v3955 = vlaneseq
  %v3956 = vshrl.u32 %v3955, 7
  %v3957 = vsub.s32 0, %v3956
  %v3958 = vrot.slane %v3953, %v3957
  %v4024 = vunpack.c.l.b16 %v3889
  %v4025 = vunpack.c.l.b16 %v3890
  %v4026 = vunpack.c.l.b16 %v3891
  %v4027 = vunpack.c.l.b16 %v3892
  %v4028 = vunpack.c.l.b16 %v3893
  %v4029 = vunpack.c.l.b16 %v3894
  %v4030 = vunpack.c.l.b16 %v3895
  %v4031 = vunpack.c.l.b16 %v3896
  %v4032 = vunpack.c.l.b16 %v3897
  %v4033 = vunpack.c.l.b16 %v3898
  %v4034 = vunpack.c.l.b16 %v3899
  %v4035 = vunpack.c.l.b16 %v3900
  %v4036 = vunpack.c.l.b16 %v3901
  %v4037 = vunpack.c.l.b16 %v3902
  %v4038 = vunpack.c.l.b16 %v3903
  %v4039 = vunpack.c.l.b16 %v3904
  %v4040 = vunpack.c.l.b16 %v3905
  %v4041 = vunpack.c.l.b16 %v3906
  %v4042 = vunpack.c.l.b16 %v3907
  %v4043 = vunpack.c.l.b16 %v3908
  %v4044 = vunpack.c.l.b16 %v3909
  %v4045 = vunpack.c.l.b16 %v3910
  %v4046 = vunpack.c.l.b16 %v3911
  %v4047 = vunpack.c.l.b16 %v3912
  %v4048 = vunpack.c.l.b16 %v3913
  %v4049 = vunpack.c.l.b16 %v3914
  %v4050 = vunpack.c.l.b16 %v3915
  %v4051 = vunpack.c.l.b16 %v3916
  %v4052 = vunpack.c.l.b16 %v3917
  %v4053 = vunpack.c.l.b16 %v3918
  %v4054 = vunpack.c.l.b16 %v3919
  %v4055 = vunpack.c.l.b16 %v3920
  %v4056 = vunpack.c.l.b16 %v3921
  %v4057 = vunpack.c.l.b16 %v3922
  %v4058 = vunpack.c.l.b16 %v3923
  %v4059 = vunpack.c.l.b16 %v3924
  %v4060 = vunpack.c.l.b16 %v3925
  %v4061 = vunpack.c.l.b16 %v3926
  %v4062 = vunpack.c.l.b16 %v3927
  %v4063 = vunpack.c.l.b16 %v3928
  %v4064 = vunpack.c.l.b16 %v3929
  %v4065 = vunpack.c.l.b16 %v3930
  %v4066 = vunpack.c.l.b16 %v3931
  %v4067 = vunpack.c.l.b16 %v3932
  %v4068 = vunpack.c.l.b16 %v3933
  %v4069 = vunpack.c.l.b16 %v3934
  %v4070 = vunpack.c.l.b16 %v3935
  %v4071 = vunpack.c.l.b16 %v3936
  %v4072 = vunpack.c.l.b16 %v3937
  %v4073 = vunpack.c.l.b16 %v3938
  %v4074 = vunpack.c.l.b16 %v3939
  %v4075 = vunpack.c.l.b16 %v3940
  %v4076 = vunpack.c.l.b16 %v3941
  %v4077 = vunpack.c.l.b16 %v3942
  %v4078 = vunpack.c.l.b16 %v3943
  %v4079 = vunpack.c.l.b16 %v3944
  %v4080 = vunpack.c.l.b16 %v3945
  %v4081 = vunpack.c.l.b16 %v3946
  %v4082 = vunpack.c.l.b16 %v3947
  %v4083 = vunpack.c.l.b16 %v3948
  %v4084 = vunpack.c.l.b16 %v3949
  %v4085 = vunpack.c.l.b16 %v3950
  %v4086 = vunpack.c.l.b16 %v3951
  %v4087 = vunpack.c.l.b16 %v3952
  %v4088 = vpack.c.b16 %v4025, %v4024
  %v4089 = vpack.c.b16 %v4027, %v4026
  %v4090 = vpack.c.b16 %v4029, %v4028
  %v4091 = vpack.c.b16 %v4031, %v4030
  %v4092 = vpack.c.b16 %v4033, %v4032
  %v4093 = vpack.c.b16 %v4035, %v4034
  %v4094 = vpack.c.b16 %v4037, %v4036
  %v4095 = vpack.c.b16 %v4039, %v4038
  %v4096 = vpack.c.b16 %v4041, %v4040
  %v4097 = vpack.c.b16 %v4043, %v4042
  %v4098 = vpack.c.b16 %v4045, %v4044
  %v4099 = vpack.c.b16 %v4047, %v4046
  %v4100 = vpack.c.b16 %v4049, %v4048
  %v4101 = vpack.c.b16 %v4051, %v4050
  %v4102 = vpack.c.b16 %v4053, %v4052
  %v4103 = vpack.c.b16 %v4055, %v4054
  %v4104 = vpack.c.b16 %v4057, %v4056
  %v4105 = vpack.c.b16 %v4059, %v4058
  %v4106 = vpack.c.b16 %v4061, %v4060
  %v4107 = vpack.c.b16 %v4063, %v4062
  %v4108 = vpack.c.b16 %v4065, %v4064
  %v4109 = vpack.c.b16 %v4067, %v4066
  %v4110 = vpack.c.b16 %v4069, %v4068
  %v4111 = vpack.c.b16 %v4071, %v4070
  %v4112 = vpack.c.b16 %v4073, %v4072
  %v4113 = vpack.c.b16 %v4075, %v4074
  %v4114 = vpack.c.b16 %v4077, %v4076
  %v4115 = vpack.c.b16 %v4079, %v4078
  %v4116 = vpack.c.b16 %v4081, %v4080
  %v4117 = vpack.c.b16 %v4083, %v4082
  %v4118 = vpack.c.b16 %v4085, %v4084
  %v4119 = vpack.c.b16 %v4087, %v4086
  %4152 = vmatprep.subr.bf16.mxu0 0
  %4153 = vmatpush1.bf16.msra.mxu0 %v4088
  %4154 = vmatprep.subr.bf16.mxu0 0
  %4155 = vmatpush1.bf16.msra.mxu0 %v4089
  %4156 = vmatprep.subr.bf16.mxu0 0
  %4157 = vmatpush1.bf16.msra.mxu0 %v4090
  %4158 = vmatprep.subr.bf16.mxu0 0
  %4159 = vmatpush1.bf16.msra.mxu0 %v4091
  %4160 = vmatprep.subr.bf16.mxu0 0
  %4161 = vmatpush1.bf16.msra.mxu0 %v4092
  %4162 = vmatprep.subr.bf16.mxu0 0
  %4163 = vmatpush1.bf16.msra.mxu0 %v4093
  %4164 = vmatprep.subr.bf16.mxu0 0
  %4165 = vmatpush1.bf16.msra.mxu0 %v4094
  %4166 = vmatprep.subr.bf16.mxu0 0
  %4167 = vmatpush1.bf16.msra.mxu0 %v4095
  %4168 = vmatprep.subr.bf16.mxu0 0
  %4169 = vmatpush1.bf16.msra.mxu0 %v4096
  %4170 = vmatprep.subr.bf16.mxu0 0
  %4171 = vmatpush1.bf16.msra.mxu0 %v4097
  %4172 = vmatprep.subr.bf16.mxu0 0
  %4173 = vmatpush1.bf16.msra.mxu0 %v4098
  %4174 = vmatprep.subr.bf16.mxu0 0
  %4175 = vmatpush1.bf16.msra.mxu0 %v4099
  %4176 = vmatprep.subr.bf16.mxu0 0
  %4177 = vmatpush1.bf16.msra.mxu0 %v4100
  %4178 = vmatprep.subr.bf16.mxu0 0
  %4179 = vmatpush1.bf16.msra.mxu0 %v4101
  %4180 = vmatprep.subr.bf16.mxu0 0
  %4181 = vmatpush1.bf16.msra.mxu0 %v4102
  %4182 = vmatprep.subr.bf16.mxu0 0
  %4183 = vmatpush1.bf16.msra.mxu0 %v4103
  %4184 = vmatprep.mubr.bf16.mxu0 %v3866
  %4185 = vmatmul.mubr.bf16.gmra.mrb[0].mxu0 %v3865
  %v4186 = vpop.f32.mrb[0].mxu0
  %v4187 = vadd.f32 %v3958, %v4186
  %v4188 = vpop.f32.mrb[0].mxu0
  %v4189 = vpop.f32.mrb[0].mxu0
  %v4190 = vadd.f32 %v3958, %v4189
  %v4191 = vpop.f32.mrb[0].mxu0
  %4192 = vmatprep.mubr.bf16.mxu0 %v3870
  %4193 = vmatmul.mubr.bf16.gmra.mrb[0].mxu0 %v3869
  %v4194 = vpop.f32.mrb[0].mxu0
  %v4195 = vadd.f32 %v3958, %v4194
  %v4196 = vpop.f32.mrb[0].mxu0
  %v4197 = vpop.f32.mrb[0].mxu0
  %v4198 = vadd.f32 %v3958, %v4197
  %v4199 = vpop.f32.mrb[0].mxu0
  %4200 = vmatprep.mubr.bf16.mxu0 %v3874
  %4201 = vmatmul.mubr.bf16.gmra.mrb[0].mxu0 %v3873
  %v4202 = vpop.f32.mrb[0].mxu0
  %v4203 = vadd.f32 %v3958, %v4202
  %v4204 = vpop.f32.mrb[0].mxu0
  %v4205 = vpop.f32.mrb[0].mxu0
  %v4206 = vadd.f32 %v3958, %v4205
  %v4207 = vpop.f32.mrb[0].mxu0
  %4208 = vmatprep.mubr.bf16.mxu0 %v3878
  %4209 = vmatmul.mubr.bf16.gmra.mrb[0].mxu0 %v3877
  %v4210 = vpop.f32.mrb[0].mxu0
  %v4211 = vadd.f32 %v3958, %v4210
  %v4212 = vpop.f32.mrb[0].mxu0
  %v4213 = vpop.f32.mrb[0].mxu0
  %v4214 = vadd.f32 %v3958, %v4213
  %v4215 = vpop.f32.mrb[0].mxu0
  %4216 = vmatprep.mubr.bf16.mxu0 %v3882
  %4217 = vmatmul.mubr.bf16.gmra.mrb[0].mxu0 %v3881
  %v4218 = vpop.f32.mrb[0].mxu0
  %v4219 = vadd.f32 %v3958, %v4218
  %v4220 = vpop.f32.mrb[0].mxu0
  %v4221 = vpop.f32.mrb[0].mxu0
  %v4222 = vadd.f32 %v3958, %v4221
  %v4223 = vpop.f32.mrb[0].mxu0
  %4224 = vmatprep.mubr.bf16.mxu0 %v3886
  %4225 = vmatmul.mubr.bf16.gmra.mrb[0].mxu0 %v3885
  %v4226 = vpop.f32.mrb[0].mxu0
  %v4227 = vadd.f32 %v3958, %v4226
  %v4228 = vpop.f32.mrb[0].mxu0
  %v4229 = vpop.f32.mrb[0].mxu0
  %v4230 = vpop.f32.mrb[0].mxu0
  %4231 = vdwg.mxu0
  %4232 = vmatprep.subr.bf16.mxu0 0
  %4233 = vmatpush1.bf16.msra.mxu0 %v4104
  %4234 = vmatprep.subr.bf16.mxu0 0
  %4235 = vmatpush1.bf16.msra.mxu0 %v4105
  %4236 = vmatprep.subr.bf16.mxu0 0
  %4237 = vmatpush1.bf16.msra.mxu0 %v4106
  %4238 = vmatprep.subr.bf16.mxu0 0
  %4239 = vmatpush1.bf16.msra.mxu0 %v4107
  %4240 = vmatprep.subr.bf16.mxu0 0
  %4241 = vmatpush1.bf16.msra.mxu0 %v4108
  %4242 = vmatprep.subr.bf16.mxu0 0
  %4243 = vmatpush1.bf16.msra.mxu0 %v4109
  %4244 = vmatprep.subr.bf16.mxu0 0
  %4245 = vmatpush1.bf16.msra.mxu0 %v4110
  %4246 = vmatprep.subr.bf16.mxu0 0
  %4247 = vmatpush1.bf16.msra.mxu0 %v4111
  %4248 = vmatprep.subr.bf16.mxu0 0
  %4249 = vmatpush1.bf16.msra.mxu0 %v4112
  %4250 = vmatprep.subr.bf16.mxu0 0
  %4251 = vmatpush1.bf16.msra.mxu0 %v4113
  %4252 = vmatprep.subr.bf16.mxu0 0
  %4253 = vmatpush1.bf16.msra.mxu0 %v4114
  %4254 = vmatprep.subr.bf16.mxu0 0
  %4255 = vmatpush1.bf16.msra.mxu0 %v4115
  %4256 = vmatprep.subr.bf16.mxu0 0
  %4257 = vmatpush1.bf16.msra.mxu0 %v4116
  %4258 = vmatprep.subr.bf16.mxu0 0
  %4259 = vmatpush1.bf16.msra.mxu0 %v4117
  %4260 = vmatprep.subr.bf16.mxu0 0
  %4261 = vmatpush1.bf16.msra.mxu0 %v4118
  %4262 = vmatprep.subr.bf16.mxu0 0
  %4263 = vmatpush1.bf16.msra.mxu0 %v4119
  %4264 = vmatprep.mubr.bf16.mxu0 %v3868
  %4265 = vmatmul.mubr.bf16.gmra.mrb[0].mxu0 %v3867
  %v4266 = vpop.f32.mrb[0].mxu0
  %v4267 = vadd.f32 %v4187, %v4266
  %v4268 = vpop.f32.mrb[0].mxu0
  %v4269 = vpop.f32.mrb[0].mxu0
  %v4270 = vadd.f32 %v4190, %v4269
  %v4271 = vpop.f32.mrb[0].mxu0
  %4272 = vmatprep.mubr.bf16.mxu0 %v3872
  %4273 = vmatmul.mubr.bf16.gmra.mrb[0].mxu0 %v3871
  %v4274 = vpop.f32.mrb[0].mxu0
  %v4275 = vadd.f32 %v4195, %v4274
  %v4276 = vpop.f32.mrb[0].mxu0
  %v4277 = vpop.f32.mrb[0].mxu0
  %v4278 = vadd.f32 %v4198, %v4277
  %v4279 = vpop.f32.mrb[0].mxu0
  %4280 = vmatprep.mubr.bf16.mxu0 %v3876
  %4281 = vmatmul.mubr.bf16.gmra.mrb[0].mxu0 %v3875
  %v4282 = vpop.f32.mrb[0].mxu0
  %v4283 = vadd.f32 %v4203, %v4282
  %v4284 = vpop.f32.mrb[0].mxu0
  %v4285 = vpop.f32.mrb[0].mxu0
  %v4286 = vadd.f32 %v4206, %v4285
  %v4287 = vpop.f32.mrb[0].mxu0
  %4288 = vmatprep.mubr.bf16.mxu0 %v3880
  %4289 = vmatmul.mubr.bf16.gmra.mrb[0].mxu0 %v3879
  %v4290 = vpop.f32.mrb[0].mxu0
  %v4291 = vadd.f32 %v4211, %v4290
  %v4292 = vpop.f32.mrb[0].mxu0
  %v4293 = vpop.f32.mrb[0].mxu0
  %v4294 = vadd.f32 %v4214, %v4293
  %v4295 = vpop.f32.mrb[0].mxu0
  %4296 = vmatprep.mubr.bf16.mxu0 %v3884
  %4297 = vmatmul.mubr.bf16.gmra.mrb[0].mxu0 %v3883
  %v4298 = vpop.f32.mrb[0].mxu0
  %v4299 = vadd.f32 %v4219, %v4298
  %v4300 = vpop.f32.mrb[0].mxu0
  %v4301 = vpop.f32.mrb[0].mxu0
  %v4302 = vadd.f32 %v4222, %v4301
  %v4303 = vpop.f32.mrb[0].mxu0
  %4304 = vmatprep.mubr.bf16.mxu0 %v3888
  %4305 = vmatmul.mubr.bf16.gmra.mrb[0].mxu0 %v3887
  %v4306 = vpop.f32.mrb[0].mxu0
  %v4307 = vadd.f32 %v4227, %v4306
  %v4308 = vpop.f32.mrb[0].mxu0
  %v4309 = vpop.f32.mrb[0].mxu0
  %v4310 = vpop.f32.mrb[0].mxu0
  %4311 = vdwg.mxu0
  %v4312 = vld [vmem:[%s10] sm:$0xf]
  %v4313 = vld [vmem:[%s10 + $0x4] sm:$0xf]
  %v4314 = vld [vmem:[%s10 + $0x8] sm:$0xf]
  %v4315 = vld [vmem:[%s10 + $0xc] sm:$0xf]
  %v4316 = vld [vmem:[%s10 + $0x10] sm:$0xf]
  %v4317 = vld [vmem:[%s10 + $0x14] sm:$0xf]
  %v4318 = vld [vmem:[%s10 + $0x18] sm:$0xf]
  %v4319 = vld [vmem:[%s10 + $0x1c] sm:$0xf]
  %v4320 = vld [vmem:[%s10 + $0x20] sm:$0xf]
  %v4321 = vld [vmem:[%s10 + $0x24] sm:$0xf]
  %v4322 = vld [vmem:[%s10 + $0x28] sm:$0xf]
  %v4323 = vld [vmem:[%s10 + $0x2c] sm:$0xf]
  %v4324 = vld [vmem:[%s10 + $0x30] sm:$0xf]
  %v4325 = vld [vmem:[%s10 + $0x34] sm:$0xf]
  %v4326 = vld [vmem:[%s10 + $0x38] sm:$0xf]
  %v4327 = vld [vmem:[%s10 + $0x3c] sm:$0xf]
  %v4328 = vld [vmem:[%s10 + $0x40] sm:$0xf]
  %v4329 = vld [vmem:[%s10 + $0x44] sm:$0xf]
  %v4330 = vld [vmem:[%s10 + $0x48] sm:$0xf]
  %v4331 = vld [vmem:[%s10 + $0x4c] sm:$0xf]
  %v4332 = vld [vmem:[%s10 + $0x50] sm:$0xf]
  %v4333 = vld [vmem:[%s10 + $0x54] sm:$0xf]
  %v4334 = vld [vmem:[%s10 + $0x58] sm:$0xf]
  %v4335 = vld [vmem:[%s10 + $0x5c] sm:$0xf]
  %v4336 = vld [vmem:[%s10 + $0x60] sm:$0xf]
  %v4337 = vld [vmem:[%s10 + $0x64] sm:$0xf]
  %v4338 = vld [vmem:[%s10 + $0x68] sm:$0xf]
  %v4339 = vld [vmem:[%s10 + $0x6c] sm:$0xf]
  %v4340 = vld [vmem:[%s10 + $0x70] sm:$0xf]
  %v4341 = vld [vmem:[%s10 + $0x74] sm:$0xf]
  %v4342 = vld [vmem:[%s10 + $0x78] sm:$0xf]
  %v4343 = vld [vmem:[%s10 + $0x7c] sm:$0xf]
  %v4344 = vld [vmem:[%s10 + $0x80] sm:$0xf]
  %v4345 = vld [vmem:[%s10 + $0x84] sm:$0xf]
  %v4346 = vld [vmem:[%s10 + $0x88] sm:$0xf]
  %v4347 = vld [vmem:[%s10 + $0x8c] sm:$0xf]
  %v4348 = vld [vmem:[%s10 + $0x90] sm:$0xf]
  %v4349 = vld [vmem:[%s10 + $0x94] sm:$0xf]
  %v4350 = vld [vmem:[%s10 + $0x98] sm:$0xf]
  %v4351 = vld [vmem:[%s10 + $0x9c] sm:$0xf]
  %v4352 = vld [vmem:[%s10 + $0xa0] sm:$0xf]
  %v4353 = vld [vmem:[%s10 + $0xa4] sm:$0xf]
  %v4354 = vld [vmem:[%s10 + $0xa8] sm:$0xf]
  %v4355 = vld [vmem:[%s10 + $0xac] sm:$0xf]
  %v4356 = vld [vmem:[%s10 + $0xb0] sm:$0xf]
  %v4357 = vld [vmem:[%s10 + $0xb4] sm:$0xf]
  %v4358 = vld [vmem:[%s10 + $0xb8] sm:$0xf]
  %v4359 = vld [vmem:[%s10 + $0xbc] sm:$0xf]
  %v4360 = vld [vmem:[%s10 + $0xc0] sm:$0xf]
  %v4361 = vld [vmem:[%s10 + $0xc4] sm:$0xf]
  %v4362 = vld [vmem:[%s10 + $0xc8] sm:$0xf]
  %v4363 = vld [vmem:[%s10 + $0xcc] sm:$0xf]
  %v4364 = vld [vmem:[%s10 + $0xd0] sm:$0xf]
  %v4365 = vld [vmem:[%s10 + $0xd4] sm:$0xf]
  %v4366 = vld [vmem:[%s10 + $0xd8] sm:$0xf]
  %v4367 = vld [vmem:[%s10 + $0xdc] sm:$0xf]
  %v4368 = vld [vmem:[%s10 + $0xe0] sm:$0xf]
  %v4369 = vld [vmem:[%s10 + $0xe4] sm:$0xf]
  %v4370 = vld [vmem:[%s10 + $0xe8] sm:$0xf]
  %v4371 = vld [vmem:[%s10 + $0xec] sm:$0xf]
  %v4372 = vld [vmem:[%s10 + $0xf0] sm:$0xf]
  %v4373 = vld [vmem:[%s10 + $0xf4] sm:$0xf]
  %v4374 = vld [vmem:[%s10 + $0xf8] sm:$0xf]
  %v4375 = vld [vmem:[%s10 + $0xfc] sm:$0xf]
  %v4376 = vld [vmem:[%s11] sm:$0x1]
  %v4378 = vlaneseq
  %v4379 = vshrl.u32 %v4378, 7
  %v4380 = vsub.s32 0, %v4379
  %v4381 = vrot.slane %v4376, %v4380
  %v4447 = vunpack.c.l.b16 %v4312
  %v4448 = vunpack.c.l.b16 %v4313
  %v4449 = vunpack.c.l.b16 %v4314
  %v4450 = vunpack.c.l.b16 %v4315
  %v4451 = vunpack.c.l.b16 %v4316
  %v4452 = vunpack.c.l.b16 %v4317
  %v4453 = vunpack.c.l.b16 %v4318
  %v4454 = vunpack.c.l.b16 %v4319
  %v4455 = vunpack.c.l.b16 %v4320
  %v4456 = vunpack.c.l.b16 %v4321
  %v4457 = vunpack.c.l.b16 %v4322
  %v4458 = vunpack.c.l.b16 %v4323
  %v4459 = vunpack.c.l.b16 %v4324
  %v4460 = vunpack.c.l.b16 %v4325
  %v4461 = vunpack.c.l.b16 %v4326
  %v4462 = vunpack.c.l.b16 %v4327
  %v4463 = vunpack.c.l.b16 %v4328
  %v4464 = vunpack.c.l.b16 %v4329
  %v4465 = vunpack.c.l.b16 %v4330
  %v4466 = vunpack.c.l.b16 %v4331
  %v4467 = vunpack.c.l.b16 %v4332
  %v4468 = vunpack.c.l.b16 %v4333
  %v4469 = vunpack.c.l.b16 %v4334
  %v4470 = vunpack.c.l.b16 %v4335
  %v4471 = vunpack.c.l.b16 %v4336
  %v4472 = vunpack.c.l.b16 %v4337
  %v4473 = vunpack.c.l.b16 %v4338
  %v4474 = vunpack.c.l.b16 %v4339
  %v4475 = vunpack.c.l.b16 %v4340
  %v4476 = vunpack.c.l.b16 %v4341
  %v4477 = vunpack.c.l.b16 %v4342
  %v4478 = vunpack.c.l.b16 %v4343
  %v4479 = vunpack.c.l.b16 %v4344
  %v4480 = vunpack.c.l.b16 %v4345
  %v4481 = vunpack.c.l.b16 %v4346
  %v4482 = vunpack.c.l.b16 %v4347
  %v4483 = vunpack.c.l.b16 %v4348
  %v4484 = vunpack.c.l.b16 %v4349
  %v4485 = vunpack.c.l.b16 %v4350
  %v4486 = vunpack.c.l.b16 %v4351
  %v4487 = vunpack.c.l.b16 %v4352
  %v4488 = vunpack.c.l.b16 %v4353
  %v4489 = vunpack.c.l.b16 %v4354
  %v4490 = vunpack.c.l.b16 %v4355
  %v4491 = vunpack.c.l.b16 %v4356
  %v4492 = vunpack.c.l.b16 %v4357
  %v4493 = vunpack.c.l.b16 %v4358
  %v4494 = vunpack.c.l.b16 %v4359
  %v4495 = vunpack.c.l.b16 %v4360
  %v4496 = vunpack.c.l.b16 %v4361
  %v4497 = vunpack.c.l.b16 %v4362
  %v4498 = vunpack.c.l.b16 %v4363
  %v4499 = vunpack.c.l.b16 %v4364
  %v4500 = vunpack.c.l.b16 %v4365
  %v4501 = vunpack.c.l.b16 %v4366
  %v4502 = vunpack.c.l.b16 %v4367
  %v4503 = vunpack.c.l.b16 %v4368
  %v4504 = vunpack.c.l.b16 %v4369
  %v4505 = vunpack.c.l.b16 %v4370
  %v4506 = vunpack.c.l.b16 %v4371
  %v4507 = vunpack.c.l.b16 %v4372
  %v4508 = vunpack.c.l.b16 %v4373
  %v4509 = vunpack.c.l.b16 %v4374
  %v4510 = vunpack.c.l.b16 %v4375
  %v4511 = vpack.c.b16 %v4448, %v4447
  %v4512 = vpack.c.b16 %v4450, %v4449
  %v4513 = vpack.c.b16 %v4452, %v4451
  %v4514 = vpack.c.b16 %v4454, %v4453
  %v4515 = vpack.c.b16 %v4456, %v4455
  %v4516 = vpack.c.b16 %v4458, %v4457
  %v4517 = vpack.c.b16 %v4460, %v4459
  %v4518 = vpack.c.b16 %v4462, %v4461
  %v4519 = vpack.c.b16 %v4464, %v4463
  %v4520 = vpack.c.b16 %v4466, %v4465
  %v4521 = vpack.c.b16 %v4468, %v4467
  %v4522 = vpack.c.b16 %v4470, %v4469
  %v4523 = vpack.c.b16 %v4472, %v4471
  %v4524 = vpack.c.b16 %v4474, %v4473
  %v4525 = vpack.c.b16 %v4476, %v4475
  %v4526 = vpack.c.b16 %v4478, %v4477
  %v4527 = vpack.c.b16 %v4480, %v4479
  %v4528 = vpack.c.b16 %v4482, %v4481
  %v4529 = vpack.c.b16 %v4484, %v4483
  %v4530 = vpack.c.b16 %v4486, %v4485
  %v4531 = vpack.c.b16 %v4488, %v4487
  %v4532 = vpack.c.b16 %v4490, %v4489
  %v4533 = vpack.c.b16 %v4492, %v4491
  %v4534 = vpack.c.b16 %v4494, %v4493
  %v4535 = vpack.c.b16 %v4496, %v4495
  %v4536 = vpack.c.b16 %v4498, %v4497
  %v4537 = vpack.c.b16 %v4500, %v4499
  %v4538 = vpack.c.b16 %v4502, %v4501
  %v4539 = vpack.c.b16 %v4504, %v4503
  %v4540 = vpack.c.b16 %v4506, %v4505
  %v4541 = vpack.c.b16 %v4508, %v4507
  %v4542 = vpack.c.b16 %v4510, %v4509
  %4575 = vmatprep.subr.bf16.mxu0 0
  %4576 = vmatpush1.bf16.msra.mxu0 %v4511
  %4577 = vmatprep.subr.bf16.mxu0 0
  %4578 = vmatpush1.bf16.msra.mxu0 %v4512
  %4579 = vmatprep.subr.bf16.mxu0 0
  %4580 = vmatpush1.bf16.msra.mxu0 %v4513
  %4581 = vmatprep.subr.bf16.mxu0 0
  %4582 = vmatpush1.bf16.msra.mxu0 %v4514
  %4583 = vmatprep.subr.bf16.mxu0 0
  %4584 = vmatpush1.bf16.msra.mxu0 %v4515
  %4585 = vmatprep.subr.bf16.mxu0 0
  %4586 = vmatpush1.bf16.msra.mxu0 %v4516
  %4587 = vmatprep.subr.bf16.mxu0 0
  %4588 = vmatpush1.bf16.msra.mxu0 %v4517
  %4589 = vmatprep.subr.bf16.mxu0 0
  %4590 = vmatpush1.bf16.msra.mxu0 %v4518
  %4591 = vmatprep.subr.bf16.mxu0 0
  %4592 = vmatpush1.bf16.msra.mxu0 %v4519
  %4593 = vmatprep.subr.bf16.mxu0 0
  %4594 = vmatpush1.bf16.msra.mxu0 %v4520
  %4595 = vmatprep.subr.bf16.mxu0 0
  %4596 = vmatpush1.bf16.msra.mxu0 %v4521
  %4597 = vmatprep.subr.bf16.mxu0 0
  %4598 = vmatpush1.bf16.msra.mxu0 %v4522
  %4599 = vmatprep.subr.bf16.mxu0 0
  %4600 = vmatpush1.bf16.msra.mxu0 %v4523
  %4601 = vmatprep.subr.bf16.mxu0 0
  %4602 = vmatpush1.bf16.msra.mxu0 %v4524
  %4603 = vmatprep.subr.bf16.mxu0 0
  %4604 = vmatpush1.bf16.msra.mxu0 %v4525
  %4605 = vmatprep.subr.bf16.mxu0 0
  %4606 = vmatpush1.bf16.msra.mxu0 %v4526
  %4607 = vmatprep.mubr.bf16.mxu0 %v3866
  %4608 = vmatmul.mubr.bf16.gmra.mrb[0].mxu0 %v3865
  %v4609 = vpop.f32.mrb[0].mxu0
  %v4610 = vadd.f32 %v4381, %v4609
  %v4611 = vpop.f32.mrb[0].mxu0
  %v4612 = vpop.f32.mrb[0].mxu0
  %v4613 = vadd.f32 %v4381, %v4612
  %v4614 = vpop.f32.mrb[0].mxu0
  %4615 = vmatprep.mubr.bf16.mxu0 %v3870
  %4616 = vmatmul.mubr.bf16.gmra.mrb[0].mxu0 %v3869
  %v4617 = vpop.f32.mrb[0].mxu0
  %v4618 = vadd.f32 %v4381, %v4617
  %v4619 = vpop.f32.mrb[0].mxu0
  %v4620 = vpop.f32.mrb[0].mxu0
  %v4621 = vadd.f32 %v4381, %v4620
  %v4622 = vpop.f32.mrb[0].mxu0
  %4623 = vmatprep.mubr.bf16.mxu0 %v3874
  %4624 = vmatmul.mubr.bf16.gmra.mrb[0].mxu0 %v3873
  %v4625 = vpop.f32.mrb[0].mxu0
  %v4626 = vadd.f32 %v4381, %v4625
  %v4627 = vpop.f32.mrb[0].mxu0
  %v4628 = vpop.f32.mrb[0].mxu0
  %v4629 = vadd.f32 %v4381, %v4628
  %v4630 = vpop.f32.mrb[0].mxu0
  %4631 = vmatprep.mubr.bf16.mxu0 %v3878
  %4632 = vmatmul.mubr.bf16.gmra.mrb[0].mxu0 %v3877
  %v4633 = vpop.f32.mrb[0].mxu0
  %v4634 = vadd.f32 %v4381, %v4633
  %v4635 = vpop.f32.mrb[0].mxu0
  %v4636 = vpop.f32.mrb[0].mxu0
  %v4637 = vadd.f32 %v4381, %v4636
  %v4638 = vpop.f32.mrb[0].mxu0
  %4639 = vmatprep.mubr.bf16.mxu0 %v3882
  %4640 = vmatmul.mubr.bf16.gmra.mrb[0].mxu0 %v3881
  %v4641 = vpop.f32.mrb[0].mxu0
  %v4642 = vadd.f32 %v4381, %v4641
  %v4643 = vpop.f32.mrb[0].mxu0
  %v4644 = vpop.f32.mrb[0].mxu0
  %v4645 = vadd.f32 %v4381, %v4644
  %v4646 = vpop.f32.mrb[0].mxu0
  %4647 = vmatprep.mubr.bf16.mxu0 %v3886
  %4648 = vmatmul.mubr.bf16.gmra.mrb[0].mxu0 %v3885
  %v4649 = vpop.f32.mrb[0].mxu0
  %v4650 = vadd.f32 %v4381, %v4649
  %v4651 = vpop.f32.mrb[0].mxu0
  %v4652 = vpop.f32.mrb[0].mxu0
  %v4653 = vpop.f32.mrb[0].mxu0
  %4654 = vdwg.mxu0
  %4655 = vmatprep.subr.bf16.mxu0 0
  %4656 = vmatpush1.bf16.msra.mxu0 %v4527
  %4657 = vmatprep.subr.bf16.mxu0 0
  %4658 = vmatpush1.bf16.msra.mxu0 %v4528
  %4659 = vmatprep.subr.bf16.mxu0 0
  %4660 = vmatpush1.bf16.msra.mxu0 %v4529
  %4661 = vmatprep.subr.bf16.mxu0 0
  %4662 = vmatpush1.bf16.msra.mxu0 %v4530
  %4663 = vmatprep.subr.bf16.mxu0 0
  %4664 = vmatpush1.bf16.msra.mxu0 %v4531
  %4665 = vmatprep.subr.bf16.mxu0 0
  %4666 = vmatpush1.bf16.msra.mxu0 %v4532
  %4667 = vmatprep.subr.bf16.mxu0 0
  %4668 = vmatpush1.bf16.msra.mxu0 %v4533
  %4669 = vmatprep.subr.bf16.mxu0 0
  %4670 = vmatpush1.bf16.msra.mxu0 %v4534
  %4671 = vmatprep.subr.bf16.mxu0 0
  %4672 = vmatpush1.bf16.msra.mxu0 %v4535
  %4673 = vmatprep.subr.bf16.mxu0 0
  %4674 = vmatpush1.bf16.msra.mxu0 %v4536
  %4675 = vmatprep.subr.bf16.mxu0 0
  %4676 = vmatpush1.bf16.msra.mxu0 %v4537
  %4677 = vmatprep.subr.bf16.mxu0 0
  %4678 = vmatpush1.bf16.msra.mxu0 %v4538
  %4679 = vmatprep.subr.bf16.mxu0 0
  %4680 = vmatpush1.bf16.msra.mxu0 %v4539
  %4681 = vmatprep.subr.bf16.mxu0 0
  %4682 = vmatpush1.bf16.msra.mxu0 %v4540
  %4683 = vmatprep.subr.bf16.mxu0 0
  %4684 = vmatpush1.bf16.msra.mxu0 %v4541
  %4685 = vmatprep.subr.bf16.mxu0 0
  %4686 = vmatpush1.bf16.msra.mxu0 %v4542
  %4687 = vmatprep.mubr.bf16.mxu0 %v3868
  %4688 = vmatmul.mubr.bf16.gmra.mrb[0].mxu0 %v3867
  %v4689 = vpop.f32.mrb[0].mxu0
  %v4690 = vadd.f32 %v4610, %v4689
  %v4691 = vpop.f32.mrb[0].mxu0
  %v4692 = vpop.f32.mrb[0].mxu0
  %v4693 = vadd.f32 %v4613, %v4692
  %v4694 = vpop.f32.mrb[0].mxu0
  %4695 = vmatprep.mubr.bf16.mxu0 %v3872
  %4696 = vmatmul.mubr.bf16.gmra.mrb[0].mxu0 %v3871
  %v4697 = vpop.f32.mrb[0].mxu0
  %v4698 = vadd.f32 %v4618, %v4697
  %v4699 = vpop.f32.mrb[0].mxu0
  %v4700 = vpop.f32.mrb[0].mxu0
  %v4701 = vadd.f32 %v4621, %v4700
  %v4702 = vpop.f32.mrb[0].mxu0
  %4703 = vmatprep.mubr.bf16.mxu0 %v3876
  %4704 = vmatmul.mubr.bf16.gmra.mrb[0].mxu0 %v3875
  %v4705 = vpop.f32.mrb[0].mxu0
  %v4706 = vadd.f32 %v4626, %v4705
  %v4707 = vpop.f32.mrb[0].mxu0
  %v4708 = vpop.f32.mrb[0].mxu0
  %v4709 = vadd.f32 %v4629, %v4708
  %v4710 = vpop.f32.mrb[0].mxu0
  %4711 = vmatprep.mubr.bf16.mxu0 %v3880
  %4712 = vmatmul.mubr.bf16.gmra.mrb[0].mxu0 %v3879
  %v4713 = vpop.f32.mrb[0].mxu0
  %v4714 = vadd.f32 %v4634, %v4713
  %v4715 = vpop.f32.mrb[0].mxu0
  %v4716 = vpop.f32.mrb[0].mxu0
  %v4717 = vadd.f32 %v4637, %v4716
  %v4718 = vpop.f32.mrb[0].mxu0
  %4719 = vmatprep.mubr.bf16.mxu0 %v3884
  %4720 = vmatmul.mubr.bf16.gmra.mrb[0].mxu0 %v3883
  %v4721 = vpop.f32.mrb[0].mxu0
  %v4722 = vadd.f32 %v4642, %v4721
  %v4723 = vpop.f32.mrb[0].mxu0
  %v4724 = vpop.f32.mrb[0].mxu0
  %v4725 = vadd.f32 %v4645, %v4724
  %v4726 = vpop.f32.mrb[0].mxu0
  %4727 = vmatprep.mubr.bf16.mxu0 %v3888
  %4728 = vmatmul.mubr.bf16.gmra.mrb[0].mxu0 %v3887
  %v4729 = vpop.f32.mrb[0].mxu0
  %v4730 = vadd.f32 %v4650, %v4729
  %v4731 = vpop.f32.mrb[0].mxu0
  %v4732 = vpop.f32.mrb[0].mxu0
  %v4733 = vpop.f32.mrb[0].mxu0
  %4734 = vdwg.mxu0
  %v4735 = vmul.f32 %v4690, 0.5
  %v4736 = vmul.f32 %v4693, 0.5
  %v4737 = vmul.f32 %v4698, 0.5
  %v4738 = vmul.f32 %v4701, 0.5
  %v4739 = vmul.f32 %v4706, 0.5
  %v4740 = vmul.f32 %v4709, 0.5
  %v4741 = vmul.f32 %v4714, 0.5
  %v4742 = vmul.f32 %v4717, 0.5
  %v4743 = vmul.f32 %v4722, 0.5
  %v4744 = vmul.f32 %v4725, 0.5
  %v4745 = vmul.f32 %v4730, 0.5
  %v4746 = vmul.f32 %v4735, 1.442695
  %v4747 = vpow.pop %v4746
  %v4748 = vmul.f32 %v4736, 1.442695
  %v4749 = vpow.pop %v4748
  %v4750 = vmul.f32 %v4737, 1.442695
  %v4751 = vpow.pop %v4750
  %v4752 = vmul.f32 %v4738, 1.442695
  %v4753 = vpow.pop %v4752
  %v4754 = vmul.f32 %v4739, 1.442695
  %v4755 = vpow.pop %v4754
  %v4756 = vmul.f32 %v4740, 1.442695
  %v4757 = vpow.pop %v4756
  %v4758 = vmul.f32 %v4741, 1.442695
  %v4759 = vpow.pop %v4758
  %v4760 = vmul.f32 %v4742, 1.442695
  %v4761 = vpow.pop %v4760
  %v4762 = vmul.f32 %v4743, 1.442695
  %v4763 = vpow.pop %v4762
  %v4764 = vmul.f32 %v4744, 1.442695
  %v4765 = vpow.pop %v4764
  %v4766 = vmul.f32 %v4745, 1.442695
  %v4767 = vpow.pop %v4766
  %v4768 = vmul.f32 %v4747, %v138
  %v4769 = vmul.f32 %v4749, %v139
  %v4770 = vmul.f32 %v4751, %v140
  %v4771 = vmul.f32 %v4753, %v141
  %v4772 = vmul.f32 %v4755, %v142
  %v4773 = vmul.f32 %v4757, %v143
  %v4774 = vmul.f32 %v4759, %v144
  %v4775 = vmul.f32 %v4761, %v145
  %v4776 = vmul.f32 %v4763, %v146
  %v4777 = vmul.f32 %v4765, %v147
  %v4778 = vmul.f32 %v4767, %v148
  %v4779 = vadd.f32 %v4267, %v4768
  %v4780 = vadd.f32 %v4270, %v4769
  %v4781 = vadd.f32 %v4275, %v4770
  %v4782 = vadd.f32 %v4278, %v4771
  %v4783 = vadd.f32 %v4283, %v4772
  %v4784 = vadd.f32 %v4286, %v4773
  %v4785 = vadd.f32 %v4291, %v4774
  %v4786 = vadd.f32 %v4294, %v4775
  %v4787 = vadd.f32 %v4299, %v4776
  %v4788 = vadd.f32 %v4302, %v4777
  %v4789 = vadd.f32 %v4307, %v4778
  %v4790 = vpack.c.bf16 %v4780, %v4779
  %v4791 = vpack.c.bf16 %v4782, %v4781
  %v4792 = vpack.c.bf16 %v4784, %v4783
  %v4793 = vpack.c.bf16 %v4786, %v4785
  %v4794 = vpack.c.bf16 %v4788, %v4787
  %v4795 = vpack.c.bf16 %v4789, %v4789
  %v4796 = vld [vmem:[%s12] sm:$0xff]
  %v4797 = vld [vmem:[%s12 + $0x8] sm:$0xff]
  %v4798 = vld [vmem:[%s12 + $0x10] sm:$0xff]
  %v4799 = vld [vmem:[%s12 + $0x18] sm:$0xff]
  %v4800 = vld [vmem:[%s12 + $0x20] sm:$0xff]
  %v4801 = vld [vmem:[%s12 + $0x28] sm:$0xff]
  %v4802 = vld [vmem:[%s12 + $0x30] sm:$0xff]
  %v4803 = vld [vmem:[%s12 + $0x38] sm:$0xff]
  %v4804 = vld [vmem:[%s12 + $0x40] sm:$0xff]
  %v4805 = vld [vmem:[%s12 + $0x48] sm:$0xff]
  %v4806 = vld [vmem:[%s12 + $0x50] sm:$0xff]
  %v4807 = vld [vmem:[%s12 + $0x58] sm:$0xff]
  %v4808 = vld [vmem:[%s12 + $0x60] sm:$0xff]
  %v4809 = vld [vmem:[%s12 + $0x68] sm:$0xff]
  %v4810 = vld [vmem:[%s12 + $0x70] sm:$0xff]
  %v4811 = vld [vmem:[%s12 + $0x78] sm:$0xff]
  %v4812 = vld [vmem:[%s12 + $0x80] sm:$0xff]
  %v4813 = vld [vmem:[%s12 + $0x88] sm:$0xff]
  %v4814 = vld [vmem:[%s12 + $0x90] sm:$0xff]
  %v4815 = vld [vmem:[%s12 + $0x98] sm:$0xff]
  %v4816 = vld [vmem:[%s12 + $0xa0] sm:$0xff]
  %v4817 = vld [vmem:[%s12 + $0xa8] sm:$0xff]
  %v4818 = vld [vmem:[%s12 + $0xb0] sm:$0xff]
  %v4819 = vld [vmem:[%s12 + $0xb8] sm:$0xff]
  %v4820 = vld [vmem:[%s12 + $0xc0] sm:$0xff]
  %v4821 = vld [vmem:[%s12 + $0xc8] sm:$0xff]
  %v4822 = vld [vmem:[%s12 + $0xd0] sm:$0xff]
  %v4823 = vld [vmem:[%s12 + $0xd8] sm:$0xff]
  %v4824 = vld [vmem:[%s12 + $0xe0] sm:$0xff]
  %v4825 = vld [vmem:[%s12 + $0xe8] sm:$0xff]
  %v4826 = vld [vmem:[%s12 + $0xf0] sm:$0xff]
  %v4827 = vld [vmem:[%s12 + $0xf8] sm:$0xff]
  %v4828 = vld [vmem:[%s13] sm:$0xff]
  %v4829 = vld [vmem:[%s13 + $0x8] sm:$0xff]
  %v4830 = vld [vmem:[%s13 + $0x10] sm:$0x11]
  %v4831 = vld [vmem:[%s13 + $0x18] sm:$0x11]
  %v4836 = vunpack.c.l.b16 %v4828
  %v4837 = vunpack.c.h.b16 %v4828
  %v4838 = vunpack.c.l.b16 %v4829
  %v4839 = vunpack.c.h.b16 %v4829
  %v4840 = vunpack.c.l.b16 %v4830
  %v4841 = vunpack.c.h.b16 %v4830
  %v4842 = vunpack.c.l.b16 %v4831
  %v4843 = vunpack.c.h.b16 %v4831
  %v4844 = vpack.c.b16 %v4840, %v4836
  %v4845 = vpack.c.b16 %v4841, %v4837
  %v4846 = vpack.c.b16 %v4842, %v4838
  %v4847 = vpack.c.b16 %v4843, %v4839
  %v4849 = vsel %vm412, %v4844, 0
  %v4852 = vsel %vm412, %v4845, 0
  %v4855 = vsel %vm412, %v4846, 0
  %v4858 = vsel %vm412, %v4847, 0
  %4860 = vmatprep.subr.bf16.mxu0 %v4852
  %4861 = vmatpush1.bf16.msra.mxu0 %v4849
  %4862 = vmatprep.subr.bf16.mxu0 0
  %4863 = vmatpush1.bf16.msra.mxu0 0
  %4864 = vmatprep.subr.bf16.mxu0 0
  %4865 = vmatpush1.bf16.msra.mxu0 0
  %4866 = vmatprep.subr.bf16.mxu0 0
  %4867 = vmatpush1.bf16.msra.mxu0 0
  %4868 = vmatprep.subr.bf16.mxu0 0
  %4869 = vmatpush1.bf16.msra.mxu0 0
  %4870 = vmatprep.subr.bf16.mxu0 0
  %4871 = vmatpush1.bf16.msra.mxu0 0
  %4872 = vmatprep.subr.bf16.mxu0 0
  %4873 = vmatpush1.bf16.msra.mxu0 0
  %4874 = vmatprep.subr.bf16.mxu0 0
  %4875 = vmatpush1.bf16.msra.mxu0 0
  %4876 = vmatprep.subr.bf16.mxu0 0
  %4877 = vmatpush1.bf16.msra.mxu0 0
  %4878 = vmatprep.subr.bf16.mxu0 0
  %4879 = vmatpush1.bf16.msra.mxu0 0
  %4880 = vmatprep.subr.bf16.mxu0 0
  %4881 = vmatpush1.bf16.msra.mxu0 0
  %4882 = vmatprep.subr.bf16.mxu0 0
  %4883 = vmatpush1.bf16.msra.mxu0 0
  %4884 = vmatprep.subr.bf16.mxu0 0
  %4885 = vmatpush1.bf16.msra.mxu0 0
  %4886 = vmatprep.subr.bf16.mxu0 0
  %4887 = vmatpush1.bf16.msra.mxu0 0
  %4888 = vmatprep.subr.bf16.mxu0 0
  %4889 = vmatpush1.bf16.msra.mxu0 0
  %4890 = vmatprep.subr.bf16.mxu0 0
  %4891 = vmatpush1.bf16.msra.mxu0 0
  %4892 = vmatprep.mubr.bf16.mxu0 0
  %4893 = vmatmul.mubr.bf16.gmra.mrb[0].mxu0 %v395
  %v4894 = vpop.f32.mrb[0].mxu0
  %v4895 = vadd.f32 0.0, %v4894
  %v4896 = vpop.f32.mrb[0].mxu0
  %v4897 = vadd.f32 0.0, %v4896
  %v4898 = vpop.f32.mrb[0].mxu0
  %v4899 = vadd.f32 0.0, %v4898
  %v4900 = vpop.f32.mrb[0].mxu0
  %v4901 = vadd.f32 0.0, %v4900
  %4902 = vmatprep.mubr.bf16.mxu0 0
  %4903 = vmatmul.mubr.bf16.gmra.mrb[0].mxu0 %v398
  %v4904 = vpop.f32.mrb[0].mxu0
  %v4905 = vadd.f32 0.0, %v4904
  %v4906 = vpop.f32.mrb[0].mxu0
  %v4907 = vadd.f32 0.0, %v4906
  %v4908 = vpop.f32.mrb[0].mxu0
  %v4909 = vadd.f32 0.0, %v4908
  %v4910 = vpop.f32.mrb[0].mxu0
  %v4911 = vadd.f32 0.0, %v4910
  %4912 = vmatprep.mubr.bf16.mxu0 0
  %4913 = vmatmul.mubr.bf16.gmra.mrb[0].mxu0 %v401
  %v4914 = vpop.f32.mrb[0].mxu0
  %v4915 = vadd.f32 0.0, %v4914
  %v4916 = vpop.f32.mrb[0].mxu0
  %v4917 = vadd.f32 0.0, %v4916
  %v4918 = vpop.f32.mrb[0].mxu0
  %v4919 = vadd.f32 0.0, %v4918
  %v4920 = vpop.f32.mrb[0].mxu0
  %v4921 = vadd.f32 0.0, %v4920
  %4922 = vmatprep.mubr.bf16.mxu0 0
  %4923 = vmatmul.mubr.bf16.gmra.mrb[0].mxu0 %v404
  %v4924 = vpop.f32.mrb[0].mxu0
  %v4925 = vadd.f32 0.0, %v4924
  %v4926 = vpop.f32.mrb[0].mxu0
  %v4927 = vadd.f32 0.0, %v4926
  %v4928 = vpop.f32.mrb[0].mxu0
  %v4929 = vadd.f32 0.0, %v4928
  %v4930 = vpop.f32.mrb[0].mxu0
  %v4931 = vadd.f32 0.0, %v4930
  %4932 = vmatprep.mubr.bf16.mxu0 0
  %4933 = vmatmul.mubr.bf16.gmra.mrb[0].mxu0 %v407
  %v4934 = vpop.f32.mrb[0].mxu0
  %v4935 = vadd.f32 0.0, %v4934
  %v4936 = vpop.f32.mrb[0].mxu0
  %v4937 = vadd.f32 0.0, %v4936
  %v4938 = vpop.f32.mrb[0].mxu0
  %v4939 = vadd.f32 0.0, %v4938
  %v4940 = vpop.f32.mrb[0].mxu0
  %v4941 = vadd.f32 0.0, %v4940
  %4942 = vmatprep.mubr.bf16.mxu0 0
  %4943 = vmatmul.mubr.bf16.gmra.mrb[0].mxu0 %v410
  %v4944 = vpop.f32.mrb[0].mxu0
  %v4945 = vadd.f32 0.0, %v4944
  %v4946 = vpop.f32.mrb[0].mxu0
  %v4947 = vadd.f32 0.0, %v4946
  %v4948 = vpop.f32.mrb[0].mxu0
  %v4949 = vpop.f32.mrb[0].mxu0
  %4950 = vdwg.mxu0
  %4951 = vmatprep.subr.bf16.mxu0 %v4858
  %4952 = vmatpush1.bf16.msra.mxu0 %v4855
  %4953 = vmatprep.subr.bf16.mxu0 0
  %4954 = vmatpush1.bf16.msra.mxu0 0
  %4955 = vmatprep.subr.bf16.mxu0 0
  %4956 = vmatpush1.bf16.msra.mxu0 0
  %4957 = vmatprep.subr.bf16.mxu0 0
  %4958 = vmatpush1.bf16.msra.mxu0 0
  %4959 = vmatprep.subr.bf16.mxu0 0
  %4960 = vmatpush1.bf16.msra.mxu0 0
  %4961 = vmatprep.subr.bf16.mxu0 0
  %4962 = vmatpush1.bf16.msra.mxu0 0
  %4963 = vmatprep.subr.bf16.mxu0 0
  %4964 = vmatpush1.bf16.msra.mxu0 0
  %4965 = vmatprep.subr.bf16.mxu0 0
  %4966 = vmatpush1.bf16.msra.mxu0 0
  %4967 = vmatprep.subr.bf16.mxu0 0
  %4968 = vmatpush1.bf16.msra.mxu0 0
  %4969 = vmatprep.subr.bf16.mxu0 0
  %4970 = vmatpush1.bf16.msra.mxu0 0
  %4971 = vmatprep.subr.bf16.mxu0 0
  %4972 = vmatpush1.bf16.msra.mxu0 0
  %4973 = vmatprep.subr.bf16.mxu0 0
  %4974 = vmatpush1.bf16.msra.mxu0 0
  %4975 = vmatprep.subr.bf16.mxu0 0
  %4976 = vmatpush1.bf16.msra.mxu0 0
  %4977 = vmatprep.subr.bf16.mxu0 0
  %4978 = vmatpush1.bf16.msra.mxu0 0
  %4979 = vmatprep.subr.bf16.mxu0 0
  %4980 = vmatpush1.bf16.msra.mxu0 0
  %4981 = vmatprep.subr.bf16.mxu0 0
  %4982 = vmatpush1.bf16.msra.mxu0 0
  %4983 = vmatprep.mubr.bf16.mxu0 0
  %4984 = vmatmul.mubr.bf16.gmra.mrb[0].mxu0 %v395
  %v4985 = vpop.f32.mrb[0].mxu0
  %v4986 = vadd.f32 0.0, %v4985
  %v4987 = vpop.f32.mrb[0].mxu0
  %v4988 = vadd.f32 0.0, %v4987
  %v4989 = vpop.f32.mrb[0].mxu0
  %v4990 = vadd.f32 0.0, %v4989
  %v4991 = vpop.f32.mrb[0].mxu0
  %v4992 = vadd.f32 0.0, %v4991
  %4993 = vmatprep.mubr.bf16.mxu0 0
  %4994 = vmatmul.mubr.bf16.gmra.mrb[0].mxu0 %v398
  %v4995 = vpop.f32.mrb[0].mxu0
  %v4996 = vadd.f32 0.0, %v4995
  %v4997 = vpop.f32.mrb[0].mxu0
  %v4998 = vadd.f32 0.0, %v4997
  %v4999 = vpop.f32.mrb[0].mxu0
  %v5000 = vadd.f32 0.0, %v4999
  %v5001 = vpop.f32.mrb[0].mxu0
  %v5002 = vadd.f32 0.0, %v5001
  %5003 = vmatprep.mubr.bf16.mxu0 0
  %5004 = vmatmul.mubr.bf16.gmra.mrb[0].mxu0 %v401
  %v5005 = vpop.f32.mrb[0].mxu0
  %v5006 = vadd.f32 0.0, %v5005
  %v5007 = vpop.f32.mrb[0].mxu0
  %v5008 = vadd.f32 0.0, %v5007
  %v5009 = vpop.f32.mrb[0].mxu0
  %v5010 = vadd.f32 0.0, %v5009
  %v5011 = vpop.f32.mrb[0].mxu0
  %v5012 = vadd.f32 0.0, %v5011
  %5013 = vmatprep.mubr.bf16.mxu0 0
  %5014 = vmatmul.mubr.bf16.gmra.mrb[0].mxu0 %v404
  %v5015 = vpop.f32.mrb[0].mxu0
  %v5016 = vadd.f32 0.0, %v5015
  %v5017 = vpop.f32.mrb[0].mxu0
  %v5018 = vadd.f32 0.0, %v5017
  %v5019 = vpop.f32.mrb[0].mxu0
  %v5020 = vadd.f32 0.0, %v5019
  %v5021 = vpop.f32.mrb[0].mxu0
  %v5022 = vadd.f32 0.0, %v5021
  %5023 = vmatprep.mubr.bf16.mxu0 0
  %5024 = vmatmul.mubr.bf16.gmra.mrb[0].mxu0 %v407
  %v5025 = vpop.f32.mrb[0].mxu0
  %v5026 = vadd.f32 0.0, %v5025
  %v5027 = vpop.f32.mrb[0].mxu0
  %v5028 = vadd.f32 0.0, %v5027
  %v5029 = vpop.f32.mrb[0].mxu0
  %v5030 = vadd.f32 0.0, %v5029
  %v5031 = vpop.f32.mrb[0].mxu0
  %v5032 = vadd.f32 0.0, %v5031
  %5033 = vmatprep.mubr.bf16.mxu0 0
  %5034 = vmatmul.mubr.bf16.gmra.mrb[0].mxu0 %v410
  %v5035 = vpop.f32.mrb[0].mxu0
  %v5036 = vadd.f32 0.0, %v5035
  %v5037 = vpop.f32.mrb[0].mxu0
  %v5038 = vadd.f32 0.0, %v5037
  %v5039 = vpop.f32.mrb[0].mxu0
  %v5040 = vpop.f32.mrb[0].mxu0
  %5041 = vdwg.mxu0
  %v5074 = vunpack.c.l.b16 %v4796
  %v5075 = vunpack.c.h.b16 %v4796
  %v5076 = vunpack.c.l.b16 %v4797
  %v5077 = vunpack.c.h.b16 %v4797
  %v5078 = vunpack.c.l.b16 %v4798
  %v5079 = vunpack.c.h.b16 %v4798
  %v5080 = vunpack.c.l.b16 %v4799
  %v5081 = vunpack.c.h.b16 %v4799
  %v5082 = vunpack.c.l.b16 %v4800
  %v5083 = vunpack.c.h.b16 %v4800
  %v5084 = vunpack.c.l.b16 %v4801
  %v5085 = vunpack.c.h.b16 %v4801
  %v5086 = vunpack.c.l.b16 %v4802
  %v5087 = vunpack.c.h.b16 %v4802
  %v5088 = vunpack.c.l.b16 %v4803
  %v5089 = vunpack.c.h.b16 %v4803
  %v5090 = vunpack.c.l.b16 %v4804
  %v5091 = vunpack.c.h.b16 %v4804
  %v5092 = vunpack.c.l.b16 %v4805
  %v5093 = vunpack.c.h.b16 %v4805
  %v5094 = vunpack.c.l.b16 %v4806
  %v5095 = vunpack.c.h.b16 %v4806
  %v5096 = vunpack.c.l.b16 %v4807
  %v5097 = vunpack.c.h.b16 %v4807
  %v5098 = vunpack.c.l.b16 %v4808
  %v5099 = vunpack.c.h.b16 %v4808
  %v5100 = vunpack.c.l.b16 %v4809
  %v5101 = vunpack.c.h.b16 %v4809
  %v5102 = vunpack.c.l.b16 %v4810
  %v5103 = vunpack.c.h.b16 %v4810
  %v5104 = vunpack.c.l.b16 %v4811
  %v5105 = vunpack.c.h.b16 %v4811
  %v5106 = vunpack.c.l.b16 %v4812
  %v5107 = vunpack.c.h.b16 %v4812
  %v5108 = vunpack.c.l.b16 %v4813
  %v5109 = vunpack.c.h.b16 %v4813
  %v5110 = vunpack.c.l.b16 %v4814
  %v5111 = vunpack.c.h.b16 %v4814
  %v5112 = vunpack.c.l.b16 %v4815
  %v5113 = vunpack.c.h.b16 %v4815
  %v5114 = vunpack.c.l.b16 %v4816
  %v5115 = vunpack.c.h.b16 %v4816
  %v5116 = vunpack.c.l.b16 %v4817
  %v5117 = vunpack.c.h.b16 %v4817
  %v5118 = vunpack.c.l.b16 %v4818
  %v5119 = vunpack.c.h.b16 %v4818
  %v5120 = vunpack.c.l.b16 %v4819
  %v5121 = vunpack.c.h.b16 %v4819
  %v5122 = vunpack.c.l.b16 %v4820
  %v5123 = vunpack.c.h.b16 %v4820
  %v5124 = vunpack.c.l.b16 %v4821
  %v5125 = vunpack.c.h.b16 %v4821
  %v5126 = vunpack.c.l.b16 %v4822
  %v5127 = vunpack.c.h.b16 %v4822
  %v5128 = vunpack.c.l.b16 %v4823
  %v5129 = vunpack.c.h.b16 %v4823
  %v5130 = vunpack.c.l.b16 %v4824
  %v5131 = vunpack.c.h.b16 %v4824
  %v5132 = vunpack.c.l.b16 %v4825
  %v5133 = vunpack.c.h.b16 %v4825
  %v5134 = vunpack.c.l.b16 %v4826
  %v5135 = vunpack.c.h.b16 %v4826
  %v5136 = vunpack.c.l.b16 %v4827
  %v5137 = vunpack.c.h.b16 %v4827
  %v5138 = vpack.c.b16 %v5078, %v5074
  %v5139 = vpack.c.b16 %v5079, %v5075
  %v5140 = vpack.c.b16 %v5080, %v5076
  %v5141 = vpack.c.b16 %v5081, %v5077
  %v5142 = vpack.c.b16 %v5086, %v5082
  %v5143 = vpack.c.b16 %v5087, %v5083
  %v5144 = vpack.c.b16 %v5088, %v5084
  %v5145 = vpack.c.b16 %v5089, %v5085
  %v5146 = vpack.c.b16 %v5094, %v5090
  %v5147 = vpack.c.b16 %v5095, %v5091
  %v5148 = vpack.c.b16 %v5096, %v5092
  %v5149 = vpack.c.b16 %v5097, %v5093
  %v5150 = vpack.c.b16 %v5102, %v5098
  %v5151 = vpack.c.b16 %v5103, %v5099
  %v5152 = vpack.c.b16 %v5104, %v5100
  %v5153 = vpack.c.b16 %v5105, %v5101
  %v5154 = vpack.c.b16 %v5110, %v5106
  %v5155 = vpack.c.b16 %v5111, %v5107
  %v5156 = vpack.c.b16 %v5112, %v5108
  %v5157 = vpack.c.b16 %v5113, %v5109
  %v5158 = vpack.c.b16 %v5118, %v5114
  %v5159 = vpack.c.b16 %v5119, %v5115
  %v5160 = vpack.c.b16 %v5120, %v5116
  %v5161 = vpack.c.b16 %v5121, %v5117
  %v5162 = vpack.c.b16 %v5126, %v5122
  %v5163 = vpack.c.b16 %v5127, %v5123
  %v5164 = vpack.c.b16 %v5128, %v5124
  %v5165 = vpack.c.b16 %v5129, %v5125
  %v5166 = vpack.c.b16 %v5134, %v5130
  %v5167 = vpack.c.b16 %v5135, %v5131
  %v5168 = vpack.c.b16 %v5136, %v5132
  %v5169 = vpack.c.b16 %v5137, %v5133
  %5202 = vmatprep.subr.bf16.mxu0 %v5139
  %5203 = vmatpush1.bf16.msra.mxu0 %v5138
  %5204 = vmatprep.subr.bf16.mxu0 %v5143
  %5205 = vmatpush1.bf16.msra.mxu0 %v5142
  %5206 = vmatprep.subr.bf16.mxu0 %v5147
  %5207 = vmatpush1.bf16.msra.mxu0 %v5146
  %5208 = vmatprep.subr.bf16.mxu0 %v5151
  %5209 = vmatpush1.bf16.msra.mxu0 %v5150
  %5210 = vmatprep.subr.bf16.mxu0 %v5155
  %5211 = vmatpush1.bf16.msra.mxu0 %v5154
  %5212 = vmatprep.subr.bf16.mxu0 %v5159
  %5213 = vmatpush1.bf16.msra.mxu0 %v5158
  %5214 = vmatprep.subr.bf16.mxu0 %v5163
  %5215 = vmatpush1.bf16.msra.mxu0 %v5162
  %5216 = vmatprep.subr.bf16.mxu0 %v5167
  %5217 = vmatpush1.bf16.msra.mxu0 %v5166
  %5218 = vmatprep.subr.bf16.mxu0 0
  %5219 = vmatpush1.bf16.msra.mxu0 0
  %5220 = vmatprep.subr.bf16.mxu0 0
  %5221 = vmatpush1.bf16.msra.mxu0 0
  %5222 = vmatprep.subr.bf16.mxu0 0
  %5223 = vmatpush1.bf16.msra.mxu0 0
  %5224 = vmatprep.subr.bf16.mxu0 0
  %5225 = vmatpush1.bf16.msra.mxu0 0
  %5226 = vmatprep.subr.bf16.mxu0 0
  %5227 = vmatpush1.bf16.msra.mxu0 0
  %5228 = vmatprep.subr.bf16.mxu0 0
  %5229 = vmatpush1.bf16.msra.mxu0 0
  %5230 = vmatprep.subr.bf16.mxu0 0
  %5231 = vmatpush1.bf16.msra.mxu0 0
  %5232 = vmatprep.subr.bf16.mxu0 0
  %5233 = vmatpush1.bf16.msra.mxu0 0
  %5234 = vmatprep.mubr.bf16.mxu0 0
  %5235 = vmatmul.mubr.bf16.gmra.mrb[0].mxu0 %v4790
  %v5236 = vpop.f32.mrb[0].mxu0
  %v5237 = vadd.f32 %v4895, %v5236
  %v5238 = vpop.f32.mrb[0].mxu0
  %v5239 = vadd.f32 %v4897, %v5238
  %v5240 = vpop.f32.mrb[0].mxu0
  %v5241 = vadd.f32 %v4899, %v5240
  %v5242 = vpop.f32.mrb[0].mxu0
  %v5243 = vadd.f32 %v4901, %v5242
  %5244 = vmatprep.mubr.bf16.mxu0 0
  %5245 = vmatmul.mubr.bf16.gmra.mrb[0].mxu0 %v4791
  %v5246 = vpop.f32.mrb[0].mxu0
  %v5247 = vadd.f32 %v4905, %v5246
  %v5248 = vpop.f32.mrb[0].mxu0
  %v5249 = vadd.f32 %v4907, %v5248
  %v5250 = vpop.f32.mrb[0].mxu0
  %v5251 = vadd.f32 %v4909, %v5250
  %v5252 = vpop.f32.mrb[0].mxu0
  %v5253 = vadd.f32 %v4911, %v5252
  %5254 = vmatprep.mubr.bf16.mxu0 0
  %5255 = vmatmul.mubr.bf16.gmra.mrb[0].mxu0 %v4792
  %v5256 = vpop.f32.mrb[0].mxu0
  %v5257 = vadd.f32 %v4915, %v5256
  %v5258 = vpop.f32.mrb[0].mxu0
  %v5259 = vadd.f32 %v4917, %v5258
  %v5260 = vpop.f32.mrb[0].mxu0
  %v5261 = vadd.f32 %v4919, %v5260
  %v5262 = vpop.f32.mrb[0].mxu0
  %v5263 = vadd.f32 %v4921, %v5262
  %5264 = vmatprep.mubr.bf16.mxu0 0
  %5265 = vmatmul.mubr.bf16.gmra.mrb[0].mxu0 %v4793
  %v5266 = vpop.f32.mrb[0].mxu0
  %v5267 = vadd.f32 %v4925, %v5266
  %v5268 = vpop.f32.mrb[0].mxu0
  %v5269 = vadd.f32 %v4927, %v5268
  %v5270 = vpop.f32.mrb[0].mxu0
  %v5271 = vadd.f32 %v4929, %v5270
  %v5272 = vpop.f32.mrb[0].mxu0
  %v5273 = vadd.f32 %v4931, %v5272
  %5274 = vmatprep.mubr.bf16.mxu0 0
  %5275 = vmatmul.mubr.bf16.gmra.mrb[0].mxu0 %v4794
  %v5276 = vpop.f32.mrb[0].mxu0
  %v5277 = vadd.f32 %v4935, %v5276
  %v5278 = vpop.f32.mrb[0].mxu0
  %v5279 = vadd.f32 %v4937, %v5278
  %v5280 = vpop.f32.mrb[0].mxu0
  %v5281 = vadd.f32 %v4939, %v5280
  %v5282 = vpop.f32.mrb[0].mxu0
  %v5283 = vadd.f32 %v4941, %v5282
  %5284 = vmatprep.mubr.bf16.mxu0 0
  %5285 = vmatmul.mubr.bf16.gmra.mrb[0].mxu0 %v4795
  %v5286 = vpop.f32.mrb[0].mxu0
  %v5287 = vadd.f32 %v4945, %v5286
  %v5288 = vpop.f32.mrb[0].mxu0
  %v5289 = vadd.f32 %v4947, %v5288
  %v5290 = vpop.f32.mrb[0].mxu0
  %v5291 = vpop.f32.mrb[0].mxu0
  %5292 = vdwg.mxu0
  %5293 = vmatprep.subr.bf16.mxu0 %v5141
  %5294 = vmatpush1.bf16.msra.mxu0 %v5140
  %5295 = vmatprep.subr.bf16.mxu0 %v5145
  %5296 = vmatpush1.bf16.msra.mxu0 %v5144
  %5297 = vmatprep.subr.bf16.mxu0 %v5149
  %5298 = vmatpush1.bf16.msra.mxu0 %v5148
  %5299 = vmatprep.subr.bf16.mxu0 %v5153
  %5300 = vmatpush1.bf16.msra.mxu0 %v5152
  %5301 = vmatprep.subr.bf16.mxu0 %v5157
  %5302 = vmatpush1.bf16.msra.mxu0 %v5156
  %5303 = vmatprep.subr.bf16.mxu0 %v5161
  %5304 = vmatpush1.bf16.msra.mxu0 %v5160
  %5305 = vmatprep.subr.bf16.mxu0 %v5165
  %5306 = vmatpush1.bf16.msra.mxu0 %v5164
  %5307 = vmatprep.subr.bf16.mxu0 %v5169
  %5308 = vmatpush1.bf16.msra.mxu0 %v5168
  %5309 = vmatprep.subr.bf16.mxu0 0
  %5310 = vmatpush1.bf16.msra.mxu0 0
  %5311 = vmatprep.subr.bf16.mxu0 0
  %5312 = vmatpush1.bf16.msra.mxu0 0
  %5313 = vmatprep.subr.bf16.mxu0 0
  %5314 = vmatpush1.bf16.msra.mxu0 0
  %5315 = vmatprep.subr.bf16.mxu0 0
  %5316 = vmatpush1.bf16.msra.mxu0 0
  %5317 = vmatprep.subr.bf16.mxu0 0
  %5318 = vmatpush1.bf16.msra.mxu0 0
  %5319 = vmatprep.subr.bf16.mxu0 0
  %5320 = vmatpush1.bf16.msra.mxu0 0
  %5321 = vmatprep.subr.bf16.mxu0 0
  %5322 = vmatpush1.bf16.msra.mxu0 0
  %5323 = vmatprep.subr.bf16.mxu0 0
  %5324 = vmatpush1.bf16.msra.mxu0 0
  %5325 = vmatprep.mubr.bf16.mxu0 0
  %5326 = vmatmul.mubr.bf16.gmra.mrb[0].mxu0 %v4790
  %v5327 = vpop.f32.mrb[0].mxu0
  %v5328 = vadd.f32 %v4986, %v5327
  %v5329 = vpop.f32.mrb[0].mxu0
  %v5330 = vadd.f32 %v4988, %v5329
  %v5331 = vpop.f32.mrb[0].mxu0
  %v5332 = vadd.f32 %v4990, %v5331
  %v5333 = vpop.f32.mrb[0].mxu0
  %v5334 = vadd.f32 %v4992, %v5333
  %5335 = vmatprep.mubr.bf16.mxu0 0
  %5336 = vmatmul.mubr.bf16.gmra.mrb[0].mxu0 %v4791
  %v5337 = vpop.f32.mrb[0].mxu0
  %v5338 = vadd.f32 %v4996, %v5337
  %v5339 = vpop.f32.mrb[0].mxu0
  %v5340 = vadd.f32 %v4998, %v5339
  %v5341 = vpop.f32.mrb[0].mxu0
  %v5342 = vadd.f32 %v5000, %v5341
  %v5343 = vpop.f32.mrb[0].mxu0
  %v5344 = vadd.f32 %v5002, %v5343
  %5345 = vmatprep.mubr.bf16.mxu0 0
  %5346 = vmatmul.mubr.bf16.gmra.mrb[0].mxu0 %v4792
  %v5347 = vpop.f32.mrb[0].mxu0
  %v5348 = vadd.f32 %v5006, %v5347
  %v5349 = vpop.f32.mrb[0].mxu0
  %v5350 = vadd.f32 %v5008, %v5349
  %v5351 = vpop.f32.mrb[0].mxu0
  %v5352 = vadd.f32 %v5010, %v5351
  %v5353 = vpop.f32.mrb[0].mxu0
  %v5354 = vadd.f32 %v5012, %v5353
  %5355 = vmatprep.mubr.bf16.mxu0 0
  %5356 = vmatmul.mubr.bf16.gmra.mrb[0].mxu0 %v4793
  %v5357 = vpop.f32.mrb[0].mxu0
  %v5358 = vadd.f32 %v5016, %v5357
  %v5359 = vpop.f32.mrb[0].mxu0
  %v5360 = vadd.f32 %v5018, %v5359
  %v5361 = vpop.f32.mrb[0].mxu0
  %v5362 = vadd.f32 %v5020, %v5361
  %v5363 = vpop.f32.mrb[0].mxu0
  %v5364 = vadd.f32 %v5022, %v5363
  %5365 = vmatprep.mubr.bf16.mxu0 0
  %5366 = vmatmul.mubr.bf16.gmra.mrb[0].mxu0 %v4794
  %v5367 = vpop.f32.mrb[0].mxu0
  %v5368 = vadd.f32 %v5026, %v5367
  %v5369 = vpop.f32.mrb[0].mxu0
  %v5370 = vadd.f32 %v5028, %v5369
  %v5371 = vpop.f32.mrb[0].mxu0
  %v5372 = vadd.f32 %v5030, %v5371
  %v5373 = vpop.f32.mrb[0].mxu0
  %v5374 = vadd.f32 %v5032, %v5373
  %5375 = vmatprep.mubr.bf16.mxu0 0
  %5376 = vmatmul.mubr.bf16.gmra.mrb[0].mxu0 %v4795
  %v5377 = vpop.f32.mrb[0].mxu0
  %v5378 = vadd.f32 %v5036, %v5377
  %v5379 = vpop.f32.mrb[0].mxu0
  %v5380 = vadd.f32 %v5038, %v5379
  %v5381 = vpop.f32.mrb[0].mxu0
  %v5382 = vpop.f32.mrb[0].mxu0
  %5383 = vdwg.mxu0
  %v5384 = vld [vmem:[%s14] sm:$0xf]
  %v5386 = vlaneseq
  %v5387 = vshrl.u32 %v5386, 7
  %v5388 = vsub.s32 0, %v5387
  %v5389 = vrot.slane %v5384, %v5388
  %v5390 = vlaneseq
  %v5391 = vshrl.u32 %v5390, 7
  %v5392 = vsub.s32 1, %v5391
  %v5393 = vrot.slane %v5384, %v5392
  %v5394 = vlaneseq
  %v5395 = vshrl.u32 %v5394, 7
  %v5396 = vsub.s32 2, %v5395
  %v5397 = vrot.slane %v5384, %v5396
  %v5398 = vlaneseq
  %v5399 = vshrl.u32 %v5398, 7
  %v5400 = vsub.s32 3, %v5399
  %v5401 = vrot.slane %v5384, %v5400
  %v5406 = vadd.f32 %v5237, %v5389
  %v5407 = vadd.f32 %v5239, %v5393
  %v5408 = vadd.f32 %v5328, %v5397
  %v5409 = vadd.f32 %v5330, %v5401
  %v5410 = vadd.f32 %v5241, %v5389
  %v5411 = vadd.f32 %v5243, %v5393
  %v5412 = vadd.f32 %v5332, %v5397
  %v5413 = vadd.f32 %v5334, %v5401
  %v5414 = vadd.f32 %v5247, %v5389
  %v5415 = vadd.f32 %v5249, %v5393
  %v5416 = vadd.f32 %v5338, %v5397
  %v5417 = vadd.f32 %v5340, %v5401
  %v5418 = vadd.f32 %v5251, %v5389
  %v5419 = vadd.f32 %v5253, %v5393
  %v5420 = vadd.f32 %v5342, %v5397
  %v5421 = vadd.f32 %v5344, %v5401
  %v5422 = vadd.f32 %v5257, %v5389
  %v5423 = vadd.f32 %v5259, %v5393
  %v5424 = vadd.f32 %v5348, %v5397
  %v5425 = vadd.f32 %v5350, %v5401
  %v5426 = vadd.f32 %v5261, %v5389
  %v5427 = vadd.f32 %v5263, %v5393
  %v5428 = vadd.f32 %v5352, %v5397
  %v5429 = vadd.f32 %v5354, %v5401
  %v5430 = vadd.f32 %v5267, %v5389
  %v5431 = vadd.f32 %v5269, %v5393
  %v5432 = vadd.f32 %v5358, %v5397
  %v5433 = vadd.f32 %v5360, %v5401
  %v5434 = vadd.f32 %v5271, %v5389
  %v5435 = vadd.f32 %v5273, %v5393
  %v5436 = vadd.f32 %v5362, %v5397
  %v5437 = vadd.f32 %v5364, %v5401
  %v5438 = vadd.f32 %v5277, %v5389
  %v5439 = vadd.f32 %v5279, %v5393
  %v5440 = vadd.f32 %v5368, %v5397
  %v5441 = vadd.f32 %v5370, %v5401
  %v5442 = vadd.f32 %v5281, %v5389
  %v5443 = vadd.f32 %v5283, %v5393
  %v5444 = vadd.f32 %v5372, %v5397
  %v5445 = vadd.f32 %v5374, %v5401
  %v5446 = vadd.f32 %v5287, %v5389
  %v5447 = vadd.f32 %v5289, %v5393
  %v5448 = vadd.f32 %v5378, %v5397
  %v5449 = vadd.f32 %v5380, %v5401
  %v5450 = vmax.f32 %v5406, 0.0
  %v5451 = vmax.f32 %v5407, 0.0
  %v5452 = vmax.f32 %v5408, 0.0
  %v5453 = vmax.f32 %v5409, 0.0
  %v5454 = vmax.f32 %v5410, 0.0
  %v5455 = vmax.f32 %v5411, 0.0
  %v5456 = vmax.f32 %v5412, 0.0
  %v5457 = vmax.f32 %v5413, 0.0
  %v5458 = vmax.f32 %v5414, 0.0
  %v5459 = vmax.f32 %v5415, 0.0
  %v5460 = vmax.f32 %v5416, 0.0
  %v5461 = vmax.f32 %v5417, 0.0
  %v5462 = vmax.f32 %v5418, 0.0
  %v5463 = vmax.f32 %v5419, 0.0
  %v5464 = vmax.f32 %v5420, 0.0
  %v5465 = vmax.f32 %v5421, 0.0
  %v5466 = vmax.f32 %v5422, 0.0
  %v5467 = vmax.f32 %v5423, 0.0
  %v5468 = vmax.f32 %v5424, 0.0
  %v5469 = vmax.f32 %v5425, 0.0
  %v5470 = vmax.f32 %v5426, 0.0
  %v5471 = vmax.f32 %v5427, 0.0
  %v5472 = vmax.f32 %v5428, 0.0
  %v5473 = vmax.f32 %v5429, 0.0
  %v5474 = vmax.f32 %v5430, 0.0
  %v5475 = vmax.f32 %v5431, 0.0
  %v5476 = vmax.f32 %v5432, 0.0
  %v5477 = vmax.f32 %v5433, 0.0
  %v5478 = vmax.f32 %v5434, 0.0
  %v5479 = vmax.f32 %v5435, 0.0
  %v5480 = vmax.f32 %v5436, 0.0
  %v5481 = vmax.f32 %v5437, 0.0
  %v5482 = vmax.f32 %v5438, 0.0
  %v5483 = vmax.f32 %v5439, 0.0
  %v5484 = vmax.f32 %v5440, 0.0
  %v5485 = vmax.f32 %v5441, 0.0
  %v5486 = vmax.f32 %v5442, 0.0
  %v5487 = vmax.f32 %v5443, 0.0
  %v5488 = vmax.f32 %v5444, 0.0
  %v5489 = vmax.f32 %v5445, 0.0
  %v5490 = vmax.f32 %v5446, 0.0
  %v5491 = vmax.f32 %v5447, 0.0
  %v5492 = vmax.f32 %v5448, 0.0
  %v5493 = vmax.f32 %v5449, 0.0
  %v5494 = vpack.c.bf16 %v5454, %v5450
  %v5495 = vpack.c.bf16 %v5455, %v5451
  %v5496 = vpack.c.bf16 %v5456, %v5452
  %v5497 = vpack.c.bf16 %v5457, %v5453
  %v5498 = vpack.c.bf16 %v5462, %v5458
  %v5499 = vpack.c.bf16 %v5463, %v5459
  %v5500 = vpack.c.bf16 %v5464, %v5460
  %v5501 = vpack.c.bf16 %v5465, %v5461
  %v5502 = vpack.c.bf16 %v5470, %v5466
  %v5503 = vpack.c.bf16 %v5471, %v5467
  %v5504 = vpack.c.bf16 %v5472, %v5468
  %v5505 = vpack.c.bf16 %v5473, %v5469
  %v5506 = vpack.c.bf16 %v5478, %v5474
  %v5507 = vpack.c.bf16 %v5479, %v5475
  %v5508 = vpack.c.bf16 %v5480, %v5476
  %v5509 = vpack.c.bf16 %v5481, %v5477
  %v5510 = vpack.c.bf16 %v5486, %v5482
  %v5511 = vpack.c.bf16 %v5487, %v5483
  %v5512 = vpack.c.bf16 %v5488, %v5484
  %v5513 = vpack.c.bf16 %v5489, %v5485
  %v5514 = vpack.c.bf16 %v5490, %v5490
  %v5515 = vpack.c.bf16 %v5491, %v5491
  %v5516 = vpack.c.bf16 %v5492, %v5492
  %v5517 = vpack.c.bf16 %v5493, %v5493
  %v5518 = vld [vmem:[%s15] sm:$0xff]
  %v5519 = vld [vmem:[%s15 + $0x8] sm:$0xff]
  %v5520 = vld [vmem:[%s15 + $0x10] sm:$0xff]
  %v5521 = vld [vmem:[%s15 + $0x18] sm:$0xff]
  %v5522 = vld [vmem:[%s15 + $0x20] sm:$0xff]
  %v5523 = vld [vmem:[%s15 + $0x28] sm:$0xff]
  %v5524 = vld [vmem:[%s15 + $0x30] sm:$0xff]
  %v5525 = vld [vmem:[%s15 + $0x38] sm:$0xff]
  %v5526 = vld [vmem:[%s15 + $0x40] sm:$0xff]
  %v5527 = vld [vmem:[%s15 + $0x48] sm:$0xff]
  %v5528 = vld [vmem:[%s15 + $0x50] sm:$0xff]
  %v5529 = vld [vmem:[%s15 + $0x58] sm:$0xff]
  %v5530 = vld [vmem:[%s15 + $0x60] sm:$0xff]
  %v5531 = vld [vmem:[%s15 + $0x68] sm:$0xff]
  %v5532 = vld [vmem:[%s15 + $0x70] sm:$0xff]
  %v5533 = vld [vmem:[%s15 + $0x78] sm:$0xff]
  %v5534 = vld [vmem:[%s15 + $0x80] sm:$0xff]
  %v5535 = vld [vmem:[%s15 + $0x88] sm:$0xff]
  %v5536 = vld [vmem:[%s15 + $0x90] sm:$0xff]
  %v5537 = vld [vmem:[%s15 + $0x98] sm:$0xff]
  %v5538 = vld [vmem:[%s15 + $0xa0] sm:$0xff]
  %v5539 = vld [vmem:[%s15 + $0xa8] sm:$0xff]
  %v5540 = vld [vmem:[%s15 + $0xb0] sm:$0xff]
  %v5541 = vld [vmem:[%s15 + $0xb8] sm:$0xff]
  %v5542 = vld [vmem:[%s15 + $0xc0] sm:$0xff]
  %v5543 = vld [vmem:[%s15 + $0xc8] sm:$0xff]
  %v5544 = vld [vmem:[%s15 + $0xd0] sm:$0xff]
  %v5545 = vld [vmem:[%s15 + $0xd8] sm:$0xff]
  %v5546 = vld [vmem:[%s15 + $0xe0] sm:$0xff]
  %v5547 = vld [vmem:[%s15 + $0xe8] sm:$0xff]
  %v5548 = vld [vmem:[%s15 + $0xf0] sm:$0xff]
  %v5549 = vld [vmem:[%s15 + $0xf8] sm:$0xff]
  %v5550 = vld [vmem:[%s15 + $0x100] sm:$0xff]
  %v5551 = vld [vmem:[%s15 + $0x108] sm:$0xff]
  %v5552 = vld [vmem:[%s15 + $0x110] sm:$0xff]
  %v5553 = vld [vmem:[%s15 + $0x118] sm:$0xff]
  %v5554 = vld [vmem:[%s15 + $0x120] sm:$0xff]
  %v5555 = vld [vmem:[%s15 + $0x128] sm:$0xff]
  %v5556 = vld [vmem:[%s15 + $0x130] sm:$0xff]
  %v5557 = vld [vmem:[%s15 + $0x138] sm:$0xff]
  %v5558 = vld [vmem:[%s15 + $0x140] sm:$0xff]
  %v5559 = vld [vmem:[%s15 + $0x148] sm:$0xff]
  %v5560 = vld [vmem:[%s15 + $0x150] sm:$0xff]
  %v5561 = vld [vmem:[%s15 + $0x158] sm:$0xff]
  %v5562 = vld [vmem:[%s15 + $0x160] sm:$0xff]
  %v5563 = vld [vmem:[%s15 + $0x168] sm:$0xff]
  %v5564 = vld [vmem:[%s15 + $0x170] sm:$0xff]
  %v5565 = vld [vmem:[%s15 + $0x178] sm:$0xff]
  %v5566 = vld [vmem:[%s15 + $0x180] sm:$0xff]
  %v5567 = vld [vmem:[%s15 + $0x188] sm:$0xff]
  %v5568 = vld [vmem:[%s15 + $0x190] sm:$0xff]
  %v5569 = vld [vmem:[%s15 + $0x198] sm:$0xff]
  %v5570 = vld [vmem:[%s15 + $0x1a0] sm:$0xff]
  %v5571 = vld [vmem:[%s15 + $0x1a8] sm:$0xff]
  %v5572 = vld [vmem:[%s15 + $0x1b0] sm:$0xff]
  %v5573 = vld [vmem:[%s15 + $0x1b8] sm:$0xff]
  %v5574 = vld [vmem:[%s15 + $0x1c0] sm:$0xff]
  %v5575 = vld [vmem:[%s15 + $0x1c8] sm:$0xff]
  %v5576 = vld [vmem:[%s15 + $0x1d0] sm:$0xff]
  %v5577 = vld [vmem:[%s15 + $0x1d8] sm:$0xff]
  %v5578 = vld [vmem:[%s15 + $0x1e0] sm:$0xff]
  %v5579 = vld [vmem:[%s15 + $0x1e8] sm:$0xff]
  %v5580 = vld [vmem:[%s15 + $0x1f0] sm:$0xff]
  %v5581 = vld [vmem:[%s15 + $0x1f8] sm:$0xff]
  %v5582 = vld [vmem:[%s15 + $0x200] sm:$0xff]
  %v5583 = vld [vmem:[%s15 + $0x208] sm:$0xff]
  %v5584 = vld [vmem:[%s15 + $0x210] sm:$0xff]
  %v5585 = vld [vmem:[%s15 + $0x218] sm:$0xff]
  %v5586 = vld [vmem:[%s15 + $0x220] sm:$0xff]
  %v5587 = vld [vmem:[%s15 + $0x228] sm:$0xff]
  %v5588 = vld [vmem:[%s15 + $0x230] sm:$0xff]
  %v5589 = vld [vmem:[%s15 + $0x238] sm:$0xff]
  %v5590 = vld [vmem:[%s15 + $0x240] sm:$0xff]
  %v5591 = vld [vmem:[%s15 + $0x248] sm:$0xff]
  %v5592 = vld [vmem:[%s15 + $0x250] sm:$0xff]
  %v5593 = vld [vmem:[%s15 + $0x258] sm:$0xff]
  %v5594 = vld [vmem:[%s15 + $0x260] sm:$0xff]
  %v5595 = vld [vmem:[%s15 + $0x268] sm:$0xff]
  %v5596 = vld [vmem:[%s15 + $0x270] sm:$0xff]
  %v5597 = vld [vmem:[%s15 + $0x278] sm:$0xff]
  %v5598 = vld [vmem:[%s15 + $0x280] sm:$0xff]
  %v5599 = vld [vmem:[%s15 + $0x288] sm:$0xff]
  %v5600 = vld [vmem:[%s15 + $0x290] sm:$0xff]
  %v5601 = vld [vmem:[%s15 + $0x298] sm:$0xff]
  %v5602 = vld [vmem:[%s15 + $0x2a0] sm:$0xff]
  %v5603 = vld [vmem:[%s15 + $0x2a8] sm:$0xff]
  %v5604 = vld [vmem:[%s15 + $0x2b0] sm:$0xff]
  %v5605 = vld [vmem:[%s15 + $0x2b8] sm:$0xff]
  %v5606 = vld [vmem:[%s15 + $0x2c0] sm:$0xff]
  %v5607 = vld [vmem:[%s15 + $0x2c8] sm:$0xff]
  %v5608 = vld [vmem:[%s15 + $0x2d0] sm:$0xff]
  %v5609 = vld [vmem:[%s15 + $0x2d8] sm:$0xff]
  %v5610 = vld [vmem:[%s15 + $0x2e0] sm:$0xff]
  %v5611 = vld [vmem:[%s15 + $0x2e8] sm:$0xff]
  %v5612 = vld [vmem:[%s15 + $0x2f0] sm:$0xff]
  %v5613 = vld [vmem:[%s15 + $0x2f8] sm:$0xff]
  %v5614 = vld [vmem:[%s15 + $0x300] sm:$0xff]
  %v5615 = vld [vmem:[%s15 + $0x308] sm:$0xff]
  %v5616 = vld [vmem:[%s15 + $0x310] sm:$0xff]
  %v5617 = vld [vmem:[%s15 + $0x318] sm:$0xff]
  %v5618 = vld [vmem:[%s15 + $0x320] sm:$0xff]
  %v5619 = vld [vmem:[%s15 + $0x328] sm:$0xff]
  %v5620 = vld [vmem:[%s15 + $0x330] sm:$0xff]
  %v5621 = vld [vmem:[%s15 + $0x338] sm:$0xff]
  %v5622 = vld [vmem:[%s15 + $0x340] sm:$0xff]
  %v5623 = vld [vmem:[%s15 + $0x348] sm:$0xff]
  %v5624 = vld [vmem:[%s15 + $0x350] sm:$0xff]
  %v5625 = vld [vmem:[%s15 + $0x358] sm:$0xff]
  %v5626 = vld [vmem:[%s15 + $0x360] sm:$0xff]
  %v5627 = vld [vmem:[%s15 + $0x368] sm:$0xff]
  %v5628 = vld [vmem:[%s15 + $0x370] sm:$0xff]
  %v5629 = vld [vmem:[%s15 + $0x378] sm:$0xff]
  %v5630 = vld [vmem:[%s15 + $0x380] sm:$0xff]
  %v5631 = vld [vmem:[%s15 + $0x388] sm:$0xff]
  %v5632 = vld [vmem:[%s15 + $0x390] sm:$0xff]
  %v5633 = vld [vmem:[%s15 + $0x398] sm:$0xff]
  %v5634 = vld [vmem:[%s15 + $0x3a0] sm:$0xff]
  %v5635 = vld [vmem:[%s15 + $0x3a8] sm:$0xff]
  %v5636 = vld [vmem:[%s15 + $0x3b0] sm:$0xff]
  %v5637 = vld [vmem:[%s15 + $0x3b8] sm:$0xff]
  %v5638 = vld [vmem:[%s15 + $0x3c0] sm:$0xff]
  %v5639 = vld [vmem:[%s15 + $0x3c8] sm:$0xff]
  %v5640 = vld [vmem:[%s15 + $0x3d0] sm:$0xff]
  %v5641 = vld [vmem:[%s15 + $0x3d8] sm:$0xff]
  %v5642 = vld [vmem:[%s15 + $0x3e0] sm:$0xff]
  %v5643 = vld [vmem:[%s15 + $0x3e8] sm:$0xff]
  %v5644 = vld [vmem:[%s15 + $0x3f0] sm:$0xff]
  %v5645 = vld [vmem:[%s15 + $0x3f8] sm:$0xff]
  %v5646 = vld [vmem:[%s16] sm:$0xf]
  %v5648 = vlaneseq
  %v5649 = vshrl.u32 %v5648, 7
  %v5650 = vsub.s32 0, %v5649
  %v5651 = vrot.slane %v5646, %v5650
  %v5652 = vlaneseq
  %v5653 = vshrl.u32 %v5652, 7
  %v5654 = vsub.s32 1, %v5653
  %v5655 = vrot.slane %v5646, %v5654
  %v5656 = vlaneseq
  %v5657 = vshrl.u32 %v5656, 7
  %v5658 = vsub.s32 2, %v5657
  %v5659 = vrot.slane %v5646, %v5658
  %v5660 = vlaneseq
  %v5661 = vshrl.u32 %v5660, 7
  %v5662 = vsub.s32 3, %v5661
  %v5663 = vrot.slane %v5646, %v5662
  %v5796 = vunpack.c.l.b16 %v5518
  %v5797 = vunpack.c.h.b16 %v5518
  %v5798 = vunpack.c.l.b16 %v5519
  %v5799 = vunpack.c.h.b16 %v5519
  %v5800 = vunpack.c.l.b16 %v5520
  %v5801 = vunpack.c.h.b16 %v5520
  %v5802 = vunpack.c.l.b16 %v5521
  %v5803 = vunpack.c.h.b16 %v5521
  %v5804 = vunpack.c.l.b16 %v5522
  %v5805 = vunpack.c.h.b16 %v5522
  %v5806 = vunpack.c.l.b16 %v5523
  %v5807 = vunpack.c.h.b16 %v5523
  %v5808 = vunpack.c.l.b16 %v5524
  %v5809 = vunpack.c.h.b16 %v5524
  %v5810 = vunpack.c.l.b16 %v5525
  %v5811 = vunpack.c.h.b16 %v5525
  %v5812 = vunpack.c.l.b16 %v5526
  %v5813 = vunpack.c.h.b16 %v5526
  %v5814 = vunpack.c.l.b16 %v5527
  %v5815 = vunpack.c.h.b16 %v5527
  %v5816 = vunpack.c.l.b16 %v5528
  %v5817 = vunpack.c.h.b16 %v5528
  %v5818 = vunpack.c.l.b16 %v5529
  %v5819 = vunpack.c.h.b16 %v5529
  %v5820 = vunpack.c.l.b16 %v5530
  %v5821 = vunpack.c.h.b16 %v5530
  %v5822 = vunpack.c.l.b16 %v5531
  %v5823 = vunpack.c.h.b16 %v5531
  %v5824 = vunpack.c.l.b16 %v5532
  %v5825 = vunpack.c.h.b16 %v5532
  %v5826 = vunpack.c.l.b16 %v5533
  %v5827 = vunpack.c.h.b16 %v5533
  %v5828 = vunpack.c.l.b16 %v5534
  %v5829 = vunpack.c.h.b16 %v5534
  %v5830 = vunpack.c.l.b16 %v5535
  %v5831 = vunpack.c.h.b16 %v5535
  %v5832 = vunpack.c.l.b16 %v5536
  %v5833 = vunpack.c.h.b16 %v5536
  %v5834 = vunpack.c.l.b16 %v5537
  %v5835 = vunpack.c.h.b16 %v5537
  %v5836 = vunpack.c.l.b16 %v5538
  %v5837 = vunpack.c.h.b16 %v5538
  %v5838 = vunpack.c.l.b16 %v5539
  %v5839 = vunpack.c.h.b16 %v5539
  %v5840 = vunpack.c.l.b16 %v5540
  %v5841 = vunpack.c.h.b16 %v5540
  %v5842 = vunpack.c.l.b16 %v5541
  %v5843 = vunpack.c.h.b16 %v5541
  %v5844 = vunpack.c.l.b16 %v5542
  %v5845 = vunpack.c.h.b16 %v5542
  %v5846 = vunpack.c.l.b16 %v5543
  %v5847 = vunpack.c.h.b16 %v5543
  %v5848 = vunpack.c.l.b16 %v5544
  %v5849 = vunpack.c.h.b16 %v5544
  %v5850 = vunpack.c.l.b16 %v5545
  %v5851 = vunpack.c.h.b16 %v5545
  %v5852 = vunpack.c.l.b16 %v5546
  %v5853 = vunpack.c.h.b16 %v5546
  %v5854 = vunpack.c.l.b16 %v5547
  %v5855 = vunpack.c.h.b16 %v5547
  %v5856 = vunpack.c.l.b16 %v5548
  %v5857 = vunpack.c.h.b16 %v5548
  %v5858 = vunpack.c.l.b16 %v5549
  %v5859 = vunpack.c.h.b16 %v5549
  %v5860 = vunpack.c.l.b16 %v5550
  %v5861 = vunpack.c.h.b16 %v5550
  %v5862 = vunpack.c.l.b16 %v5551
  %v5863 = vunpack.c.h.b16 %v5551
  %v5864 = vunpack.c.l.b16 %v5552
  %v5865 = vunpack.c.h.b16 %v5552
  %v5866 = vunpack.c.l.b16 %v5553
  %v5867 = vunpack.c.h.b16 %v5553
  %v5868 = vunpack.c.l.b16 %v5554
  %v5869 = vunpack.c.h.b16 %v5554
  %v5870 = vunpack.c.l.b16 %v5555
  %v5871 = vunpack.c.h.b16 %v5555
  %v5872 = vunpack.c.l.b16 %v5556
  %v5873 = vunpack.c.h.b16 %v5556
  %v5874 = vunpack.c.l.b16 %v5557
  %v5875 = vunpack.c.h.b16 %v5557
  %v5876 = vunpack.c.l.b16 %v5558
  %v5877 = vunpack.c.h.b16 %v5558
  %v5878 = vunpack.c.l.b16 %v5559
  %v5879 = vunpack.c.h.b16 %v5559
  %v5880 = vunpack.c.l.b16 %v5560
  %v5881 = vunpack.c.h.b16 %v5560
  %v5882 = vunpack.c.l.b16 %v5561
  %v5883 = vunpack.c.h.b16 %v5561
  %v5884 = vunpack.c.l.b16 %v5562
  %v5885 = vunpack.c.h.b16 %v5562
  %v5886 = vunpack.c.l.b16 %v5563
  %v5887 = vunpack.c.h.b16 %v5563
  %v5888 = vunpack.c.l.b16 %v5564
  %v5889 = vunpack.c.h.b16 %v5564
  %v5890 = vunpack.c.l.b16 %v5565
  %v5891 = vunpack.c.h.b16 %v5565
  %v5892 = vunpack.c.l.b16 %v5566
  %v5893 = vunpack.c.h.b16 %v5566
  %v5894 = vunpack.c.l.b16 %v5567
  %v5895 = vunpack.c.h.b16 %v5567
  %v5896 = vunpack.c.l.b16 %v5568
  %v5897 = vunpack.c.h.b16 %v5568
  %v5898 = vunpack.c.l.b16 %v5569
  %v5899 = vunpack.c.h.b16 %v5569
  %v5900 = vunpack.c.l.b16 %v5570
  %v5901 = vunpack.c.h.b16 %v5570
  %v5902 = vunpack.c.l.b16 %v5571
  %v5903 = vunpack.c.h.b16 %v5571
  %v5904 = vunpack.c.l.b16 %v5572
  %v5905 = vunpack.c.h.b16 %v5572
  %v5906 = vunpack.c.l.b16 %v5573
  %v5907 = vunpack.c.h.b16 %v5573
  %v5908 = vunpack.c.l.b16 %v5574
  %v5909 = vunpack.c.h.b16 %v5574
  %v5910 = vunpack.c.l.b16 %v5575
  %v5911 = vunpack.c.h.b16 %v5575
  %v5912 = vunpack.c.l.b16 %v5576
  %v5913 = vunpack.c.h.b16 %v5576
  %v5914 = vunpack.c.l.b16 %v5577
  %v5915 = vunpack.c.h.b16 %v5577
  %v5916 = vunpack.c.l.b16 %v5578
  %v5917 = vunpack.c.h.b16 %v5578
  %v5918 = vunpack.c.l.b16 %v5579
  %v5919 = vunpack.c.h.b16 %v5579
  %v5920 = vunpack.c.l.b16 %v5580
  %v5921 = vunpack.c.h.b16 %v5580
  %v5922 = vunpack.c.l.b16 %v5581
  %v5923 = vunpack.c.h.b16 %v5581
  %v5924 = vunpack.c.l.b16 %v5582
  %v5925 = vunpack.c.h.b16 %v5582
  %v5926 = vunpack.c.l.b16 %v5583
  %v5927 = vunpack.c.h.b16 %v5583
  %v5928 = vunpack.c.l.b16 %v5584
  %v5929 = vunpack.c.h.b16 %v5584
  %v5930 = vunpack.c.l.b16 %v5585
  %v5931 = vunpack.c.h.b16 %v5585
  %v5932 = vunpack.c.l.b16 %v5586
  %v5933 = vunpack.c.h.b16 %v5586
  %v5934 = vunpack.c.l.b16 %v5587
  %v5935 = vunpack.c.h.b16 %v5587
  %v5936 = vunpack.c.l.b16 %v5588
  %v5937 = vunpack.c.h.b16 %v5588
  %v5938 = vunpack.c.l.b16 %v5589
  %v5939 = vunpack.c.h.b16 %v5589
  %v5940 = vunpack.c.l.b16 %v5590
  %v5941 = vunpack.c.h.b16 %v5590
  %v5942 = vunpack.c.l.b16 %v5591
  %v5943 = vunpack.c.h.b16 %v5591
  %v5944 = vunpack.c.l.b16 %v5592
  %v5945 = vunpack.c.h.b16 %v5592
  %v5946 = vunpack.c.l.b16 %v5593
  %v5947 = vunpack.c.h.b16 %v5593
  %v5948 = vunpack.c.l.b16 %v5594
  %v5949 = vunpack.c.h.b16 %v5594
  %v5950 = vunpack.c.l.b16 %v5595
  %v5951 = vunpack.c.h.b16 %v5595
  %v5952 = vunpack.c.l.b16 %v5596
  %v5953 = vunpack.c.h.b16 %v5596
  %v5954 = vunpack.c.l.b16 %v5597
  %v5955 = vunpack.c.h.b16 %v5597
  %v5956 = vunpack.c.l.b16 %v5598
  %v5957 = vunpack.c.h.b16 %v5598
  %v5958 = vunpack.c.l.b16 %v5599
  %v5959 = vunpack.c.h.b16 %v5599
  %v5960 = vunpack.c.l.b16 %v5600
  %v5961 = vunpack.c.h.b16 %v5600
  %v5962 = vunpack.c.l.b16 %v5601
  %v5963 = vunpack.c.h.b16 %v5601
  %v5964 = vunpack.c.l.b16 %v5602
  %v5965 = vunpack.c.h.b16 %v5602
  %v5966 = vunpack.c.l.b16 %v5603
  %v5967 = vunpack.c.h.b16 %v5603
  %v5968 = vunpack.c.l.b16 %v5604
  %v5969 = vunpack.c.h.b16 %v5604
  %v5970 = vunpack.c.l.b16 %v5605
  %v5971 = vunpack.c.h.b16 %v5605
  %v5972 = vunpack.c.l.b16 %v5606
  %v5973 = vunpack.c.h.b16 %v5606
  %v5974 = vunpack.c.l.b16 %v5607
  %v5975 = vunpack.c.h.b16 %v5607
  %v5976 = vunpack.c.l.b16 %v5608
  %v5977 = vunpack.c.h.b16 %v5608
  %v5978 = vunpack.c.l.b16 %v5609
  %v5979 = vunpack.c.h.b16 %v5609
  %v5980 = vunpack.c.l.b16 %v5610
  %v5981 = vunpack.c.h.b16 %v5610
  %v5982 = vunpack.c.l.b16 %v5611
  %v5983 = vunpack.c.h.b16 %v5611
  %v5984 = vunpack.c.l.b16 %v5612
  %v5985 = vunpack.c.h.b16 %v5612
  %v5986 = vunpack.c.l.b16 %v5613
  %v5987 = vunpack.c.h.b16 %v5613
  %v5988 = vunpack.c.l.b16 %v5614
  %v5989 = vunpack.c.h.b16 %v5614
  %v5990 = vunpack.c.l.b16 %v5615
  %v5991 = vunpack.c.h.b16 %v5615
  %v5992 = vunpack.c.l.b16 %v5616
  %v5993 = vunpack.c.h.b16 %v5616
  %v5994 = vunpack.c.l.b16 %v5617
  %v5995 = vunpack.c.h.b16 %v5617
  %v5996 = vunpack.c.l.b16 %v5618
  %v5997 = vunpack.c.h.b16 %v5618
  %v5998 = vunpack.c.l.b16 %v5619
  %v5999 = vunpack.c.h.b16 %v5619
  %v6000 = vunpack.c.l.b16 %v5620
  %v6001 = vunpack.c.h.b16 %v5620
  %v6002 = vunpack.c.l.b16 %v5621
  %v6003 = vunpack.c.h.b16 %v5621
  %v6004 = vunpack.c.l.b16 %v5622
  %v6005 = vunpack.c.h.b16 %v5622
  %v6006 = vunpack.c.l.b16 %v5623
  %v6007 = vunpack.c.h.b16 %v5623
  %v6008 = vunpack.c.l.b16 %v5624
  %v6009 = vunpack.c.h.b16 %v5624
  %v6010 = vunpack.c.l.b16 %v5625
  %v6011 = vunpack.c.h.b16 %v5625
  %v6012 = vunpack.c.l.b16 %v5626
  %v6013 = vunpack.c.h.b16 %v5626
  %v6014 = vunpack.c.l.b16 %v5627
  %v6015 = vunpack.c.h.b16 %v5627
  %v6016 = vunpack.c.l.b16 %v5628
  %v6017 = vunpack.c.h.b16 %v5628
  %v6018 = vunpack.c.l.b16 %v5629
  %v6019 = vunpack.c.h.b16 %v5629
  %v6020 = vunpack.c.l.b16 %v5630
  %v6021 = vunpack.c.h.b16 %v5630
  %v6022 = vunpack.c.l.b16 %v5631
  %v6023 = vunpack.c.h.b16 %v5631
  %v6024 = vunpack.c.l.b16 %v5632
  %v6025 = vunpack.c.h.b16 %v5632
  %v6026 = vunpack.c.l.b16 %v5633
  %v6027 = vunpack.c.h.b16 %v5633
  %v6028 = vunpack.c.l.b16 %v5634
  %v6029 = vunpack.c.h.b16 %v5634
  %v6030 = vunpack.c.l.b16 %v5635
  %v6031 = vunpack.c.h.b16 %v5635
  %v6032 = vunpack.c.l.b16 %v5636
  %v6033 = vunpack.c.h.b16 %v5636
  %v6034 = vunpack.c.l.b16 %v5637
  %v6035 = vunpack.c.h.b16 %v5637
  %v6036 = vunpack.c.l.b16 %v5638
  %v6037 = vunpack.c.h.b16 %v5638
  %v6038 = vunpack.c.l.b16 %v5639
  %v6039 = vunpack.c.h.b16 %v5639
  %v6040 = vunpack.c.l.b16 %v5640
  %v6041 = vunpack.c.h.b16 %v5640
  %v6042 = vunpack.c.l.b16 %v5641
  %v6043 = vunpack.c.h.b16 %v5641
  %v6044 = vunpack.c.l.b16 %v5642
  %v6045 = vunpack.c.h.b16 %v5642
  %v6046 = vunpack.c.l.b16 %v5643
  %v6047 = vunpack.c.h.b16 %v5643
  %v6048 = vunpack.c.l.b16 %v5644
  %v6049 = vunpack.c.h.b16 %v5644
  %v6050 = vunpack.c.l.b16 %v5645
  %v6051 = vunpack.c.h.b16 %v5645
  %v6052 = vpack.c.b16 %v5800, %v5796
  %v6053 = vpack.c.b16 %v5801, %v5797
  %v6054 = vpack.c.b16 %v5802, %v5798
  %v6055 = vpack.c.b16 %v5803, %v5799
  %v6056 = vpack.c.b16 %v5808, %v5804
  %v6057 = vpack.c.b16 %v5809, %v5805
  %v6058 = vpack.c.b16 %v5810, %v5806
  %v6059 = vpack.c.b16 %v5811, %v5807
  %v6060 = vpack.c.b16 %v5816, %v5812
  %v6061 = vpack.c.b16 %v5817, %v5813
  %v6062 = vpack.c.b16 %v5818, %v5814
  %v6063 = vpack.c.b16 %v5819, %v5815
  %v6064 = vpack.c.b16 %v5824, %v5820
  %v6065 = vpack.c.b16 %v5825, %v5821
  %v6066 = vpack.c.b16 %v5826, %v5822
  %v6067 = vpack.c.b16 %v5827, %v5823
  %v6068 = vpack.c.b16 %v5832, %v5828
  %v6069 = vpack.c.b16 %v5833, %v5829
  %v6070 = vpack.c.b16 %v5834, %v5830
  %v6071 = vpack.c.b16 %v5835, %v5831
  %v6072 = vpack.c.b16 %v5840, %v5836
  %v6073 = vpack.c.b16 %v5841, %v5837
  %v6074 = vpack.c.b16 %v5842, %v5838
  %v6075 = vpack.c.b16 %v5843, %v5839
  %v6076 = vpack.c.b16 %v5848, %v5844
  %v6077 = vpack.c.b16 %v5849, %v5845
  %v6078 = vpack.c.b16 %v5850, %v5846
  %v6079 = vpack.c.b16 %v5851, %v5847
  %v6080 = vpack.c.b16 %v5856, %v5852
  %v6081 = vpack.c.b16 %v5857, %v5853
  %v6082 = vpack.c.b16 %v5858, %v5854
  %v6083 = vpack.c.b16 %v5859, %v5855
  %v6084 = vpack.c.b16 %v5864, %v5860
  %v6085 = vpack.c.b16 %v5865, %v5861
  %v6086 = vpack.c.b16 %v5866, %v5862
  %v6087 = vpack.c.b16 %v5867, %v5863
  %v6088 = vpack.c.b16 %v5872, %v5868
  %v6089 = vpack.c.b16 %v5873, %v5869
  %v6090 = vpack.c.b16 %v5874, %v5870
  %v6091 = vpack.c.b16 %v5875, %v5871
  %v6092 = vpack.c.b16 %v5880, %v5876
  %v6093 = vpack.c.b16 %v5881, %v5877
  %v6094 = vpack.c.b16 %v5882, %v5878
  %v6095 = vpack.c.b16 %v5883, %v5879
  %v6096 = vpack.c.b16 %v5888, %v5884
  %v6097 = vpack.c.b16 %v5889, %v5885
  %v6098 = vpack.c.b16 %v5890, %v5886
  %v6099 = vpack.c.b16 %v5891, %v5887
  %v6100 = vpack.c.b16 %v5896, %v5892
  %v6101 = vpack.c.b16 %v5897, %v5893
  %v6102 = vpack.c.b16 %v5898, %v5894
  %v6103 = vpack.c.b16 %v5899, %v5895
  %v6104 = vpack.c.b16 %v5904, %v5900
  %v6105 = vpack.c.b16 %v5905, %v5901
  %v6106 = vpack.c.b16 %v5906, %v5902
  %v6107 = vpack.c.b16 %v5907, %v5903
  %v6108 = vpack.c.b16 %v5912, %v5908
  %v6109 = vpack.c.b16 %v5913, %v5909
  %v6110 = vpack.c.b16 %v5914, %v5910
  %v6111 = vpack.c.b16 %v5915, %v5911
  %v6112 = vpack.c.b16 %v5920, %v5916
  %v6113 = vpack.c.b16 %v5921, %v5917
  %v6114 = vpack.c.b16 %v5922, %v5918
  %v6115 = vpack.c.b16 %v5923, %v5919
  %v6116 = vpack.c.b16 %v5928, %v5924
  %v6117 = vpack.c.b16 %v5929, %v5925
  %v6118 = vpack.c.b16 %v5930, %v5926
  %v6119 = vpack.c.b16 %v5931, %v5927
  %v6120 = vpack.c.b16 %v5936, %v5932
  %v6121 = vpack.c.b16 %v5937, %v5933
  %v6122 = vpack.c.b16 %v5938, %v5934
  %v6123 = vpack.c.b16 %v5939, %v5935
  %v6124 = vpack.c.b16 %v5944, %v5940
  %v6125 = vpack.c.b16 %v5945, %v5941
  %v6126 = vpack.c.b16 %v5946, %v5942
  %v6127 = vpack.c.b16 %v5947, %v5943
  %v6128 = vpack.c.b16 %v5952, %v5948
  %v6129 = vpack.c.b16 %v5953, %v5949
  %v6130 = vpack.c.b16 %v5954, %v5950
  %v6131 = vpack.c.b16 %v5955, %v5951
  %v6132 = vpack.c.b16 %v5960, %v5956
  %v6133 = vpack.c.b16 %v5961, %v5957
  %v6134 = vpack.c.b16 %v5962, %v5958
  %v6135 = vpack.c.b16 %v5963, %v5959
  %v6136 = vpack.c.b16 %v5968, %v5964
  %v6137 = vpack.c.b16 %v5969, %v5965
  %v6138 = vpack.c.b16 %v5970, %v5966
  %v6139 = vpack.c.b16 %v5971, %v5967
  %v6140 = vpack.c.b16 %v5976, %v5972
  %v6141 = vpack.c.b16 %v5977, %v5973
  %v6142 = vpack.c.b16 %v5978, %v5974
  %v6143 = vpack.c.b16 %v5979, %v5975
  %v6144 = vpack.c.b16 %v5984, %v5980
  %v6145 = vpack.c.b16 %v5985, %v5981
  %v6146 = vpack.c.b16 %v5986, %v5982
  %v6147 = vpack.c.b16 %v5987, %v5983
  %v6148 = vpack.c.b16 %v5992, %v5988
  %v6149 = vpack.c.b16 %v5993, %v5989
  %v6150 = vpack.c.b16 %v5994, %v5990
  %v6151 = vpack.c.b16 %v5995, %v5991
  %v6152 = vpack.c.b16 %v6000, %v5996
  %v6153 = vpack.c.b16 %v6001, %v5997
  %v6154 = vpack.c.b16 %v6002, %v5998
  %v6155 = vpack.c.b16 %v6003, %v5999
  %v6156 = vpack.c.b16 %v6008, %v6004
  %v6157 = vpack.c.b16 %v6009, %v6005
  %v6158 = vpack.c.b16 %v6010, %v6006
  %v6159 = vpack.c.b16 %v6011, %v6007
  %v6160 = vpack.c.b16 %v6016, %v6012
  %v6161 = vpack.c.b16 %v6017, %v6013
  %v6162 = vpack.c.b16 %v6018, %v6014
  %v6163 = vpack.c.b16 %v6019, %v6015
  %v6164 = vpack.c.b16 %v6024, %v6020
  %v6165 = vpack.c.b16 %v6025, %v6021
  %v6166 = vpack.c.b16 %v6026, %v6022
  %v6167 = vpack.c.b16 %v6027, %v6023
  %v6168 = vpack.c.b16 %v6032, %v6028
  %v6169 = vpack.c.b16 %v6033, %v6029
  %v6170 = vpack.c.b16 %v6034, %v6030
  %v6171 = vpack.c.b16 %v6035, %v6031
  %v6172 = vpack.c.b16 %v6040, %v6036
  %v6173 = vpack.c.b16 %v6041, %v6037
  %v6174 = vpack.c.b16 %v6042, %v6038
  %v6175 = vpack.c.b16 %v6043, %v6039
  %v6176 = vpack.c.b16 %v6048, %v6044
  %v6177 = vpack.c.b16 %v6049, %v6045
  %v6178 = vpack.c.b16 %v6050, %v6046
  %v6179 = vpack.c.b16 %v6051, %v6047
  %6308 = vmatprep.subr.bf16.mxu0 %v6053
  %6309 = vmatpush1.bf16.msra.mxu0 %v6052
  %6310 = vmatprep.subr.bf16.mxu0 %v6057
  %6311 = vmatpush1.bf16.msra.mxu0 %v6056
  %6312 = vmatprep.subr.bf16.mxu0 %v6061
  %6313 = vmatpush1.bf16.msra.mxu0 %v6060
  %6314 = vmatprep.subr.bf16.mxu0 %v6065
  %6315 = vmatpush1.bf16.msra.mxu0 %v6064
  %6316 = vmatprep.subr.bf16.mxu0 %v6069
  %6317 = vmatpush1.bf16.msra.mxu0 %v6068
  %6318 = vmatprep.subr.bf16.mxu0 %v6073
  %6319 = vmatpush1.bf16.msra.mxu0 %v6072
  %6320 = vmatprep.subr.bf16.mxu0 %v6077
  %6321 = vmatpush1.bf16.msra.mxu0 %v6076
  %6322 = vmatprep.subr.bf16.mxu0 %v6081
  %6323 = vmatpush1.bf16.msra.mxu0 %v6080
  %6324 = vmatprep.subr.bf16.mxu0 %v6085
  %6325 = vmatpush1.bf16.msra.mxu0 %v6084
  %6326 = vmatprep.subr.bf16.mxu0 %v6089
  %6327 = vmatpush1.bf16.msra.mxu0 %v6088
  %6328 = vmatprep.subr.bf16.mxu0 %v6093
  %6329 = vmatpush1.bf16.msra.mxu0 %v6092
  %6330 = vmatprep.subr.bf16.mxu0 %v6097
  %6331 = vmatpush1.bf16.msra.mxu0 %v6096
  %6332 = vmatprep.subr.bf16.mxu0 %v6101
  %6333 = vmatpush1.bf16.msra.mxu0 %v6100
  %6334 = vmatprep.subr.bf16.mxu0 %v6105
  %6335 = vmatpush1.bf16.msra.mxu0 %v6104
  %6336 = vmatprep.subr.bf16.mxu0 %v6109
  %6337 = vmatpush1.bf16.msra.mxu0 %v6108
  %6338 = vmatprep.subr.bf16.mxu0 %v6113
  %6339 = vmatpush1.bf16.msra.mxu0 %v6112
  %6340 = vmatprep.mubr.bf16.mxu0 %v5495
  %6341 = vmatmul.mubr.bf16.gmra.mrb[0].mxu0 %v5494
  %v6342 = vpop.f32.mrb[0].mxu0
  %v6343 = vadd.f32 %v5651, %v6342
  %v6344 = vpop.f32.mrb[0].mxu0
  %v6345 = vadd.f32 %v5655, %v6344
  %v6346 = vpop.f32.mrb[0].mxu0
  %v6347 = vadd.f32 %v5651, %v6346
  %v6348 = vpop.f32.mrb[0].mxu0
  %v6349 = vadd.f32 %v5655, %v6348
  %6350 = vmatprep.mubr.bf16.mxu0 %v5499
  %6351 = vmatmul.mubr.bf16.gmra.mrb[0].mxu0 %v5498
  %v6352 = vpop.f32.mrb[0].mxu0
  %v6353 = vadd.f32 %v5651, %v6352
  %v6354 = vpop.f32.mrb[0].mxu0
  %v6355 = vadd.f32 %v5655, %v6354
  %v6356 = vpop.f32.mrb[0].mxu0
  %v6357 = vadd.f32 %v5651, %v6356
  %v6358 = vpop.f32.mrb[0].mxu0
  %v6359 = vadd.f32 %v5655, %v6358
  %6360 = vmatprep.mubr.bf16.mxu0 %v5503
  %6361 = vmatmul.mubr.bf16.gmra.mrb[0].mxu0 %v5502
  %v6362 = vpop.f32.mrb[0].mxu0
  %v6363 = vadd.f32 %v5651, %v6362
  %v6364 = vpop.f32.mrb[0].mxu0
  %v6365 = vadd.f32 %v5655, %v6364
  %v6366 = vpop.f32.mrb[0].mxu0
  %v6367 = vadd.f32 %v5651, %v6366
  %v6368 = vpop.f32.mrb[0].mxu0
  %v6369 = vadd.f32 %v5655, %v6368
  %6370 = vmatprep.mubr.bf16.mxu0 %v5507
  %6371 = vmatmul.mubr.bf16.gmra.mrb[0].mxu0 %v5506
  %v6372 = vpop.f32.mrb[0].mxu0
  %v6373 = vadd.f32 %v5651, %v6372
  %v6374 = vpop.f32.mrb[0].mxu0
  %v6375 = vadd.f32 %v5655, %v6374
  %v6376 = vpop.f32.mrb[0].mxu0
  %v6377 = vadd.f32 %v5651, %v6376
  %v6378 = vpop.f32.mrb[0].mxu0
  %v6379 = vadd.f32 %v5655, %v6378
  %6380 = vmatprep.mubr.bf16.mxu0 %v5511
  %6381 = vmatmul.mubr.bf16.gmra.mrb[0].mxu0 %v5510
  %v6382 = vpop.f32.mrb[0].mxu0
  %v6383 = vadd.f32 %v5651, %v6382
  %v6384 = vpop.f32.mrb[0].mxu0
  %v6385 = vadd.f32 %v5655, %v6384
  %v6386 = vpop.f32.mrb[0].mxu0
  %v6387 = vadd.f32 %v5651, %v6386
  %v6388 = vpop.f32.mrb[0].mxu0
  %v6389 = vadd.f32 %v5655, %v6388
  %6390 = vmatprep.mubr.bf16.mxu0 %v5515
  %6391 = vmatmul.mubr.bf16.gmra.mrb[0].mxu0 %v5514
  %v6392 = vpop.f32.mrb[0].mxu0
  %v6393 = vadd.f32 %v5651, %v6392
  %v6394 = vpop.f32.mrb[0].mxu0
  %v6395 = vadd.f32 %v5655, %v6394
  %v6396 = vpop.f32.mrb[0].mxu0
  %v6397 = vpop.f32.mrb[0].mxu0
  %6398 = vdwg.mxu0
  %6399 = vmatprep.subr.bf16.mxu0 %v6117
  %6400 = vmatpush1.bf16.msra.mxu0 %v6116
  %6401 = vmatprep.subr.bf16.mxu0 %v6121
  %6402 = vmatpush1.bf16.msra.mxu0 %v6120
  %6403 = vmatprep.subr.bf16.mxu0 %v6125
  %6404 = vmatpush1.bf16.msra.mxu0 %v6124
  %6405 = vmatprep.subr.bf16.mxu0 %v6129
  %6406 = vmatpush1.bf16.msra.mxu0 %v6128
  %6407 = vmatprep.subr.bf16.mxu0 %v6133
  %6408 = vmatpush1.bf16.msra.mxu0 %v6132
  %6409 = vmatprep.subr.bf16.mxu0 %v6137
  %6410 = vmatpush1.bf16.msra.mxu0 %v6136
  %6411 = vmatprep.subr.bf16.mxu0 %v6141
  %6412 = vmatpush1.bf16.msra.mxu0 %v6140
  %6413 = vmatprep.subr.bf16.mxu0 %v6145
  %6414 = vmatpush1.bf16.msra.mxu0 %v6144
  %6415 = vmatprep.subr.bf16.mxu0 %v6149
  %6416 = vmatpush1.bf16.msra.mxu0 %v6148
  %6417 = vmatprep.subr.bf16.mxu0 %v6153
  %6418 = vmatpush1.bf16.msra.mxu0 %v6152
  %6419 = vmatprep.subr.bf16.mxu0 %v6157
  %6420 = vmatpush1.bf16.msra.mxu0 %v6156
  %6421 = vmatprep.subr.bf16.mxu0 %v6161
  %6422 = vmatpush1.bf16.msra.mxu0 %v6160
  %6423 = vmatprep.subr.bf16.mxu0 %v6165
  %6424 = vmatpush1.bf16.msra.mxu0 %v6164
  %6425 = vmatprep.subr.bf16.mxu0 %v6169
  %6426 = vmatpush1.bf16.msra.mxu0 %v6168
  %6427 = vmatprep.subr.bf16.mxu0 %v6173
  %6428 = vmatpush1.bf16.msra.mxu0 %v6172
  %6429 = vmatprep.subr.bf16.mxu0 %v6177
  %6430 = vmatpush1.bf16.msra.mxu0 %v6176
  %6431 = vmatprep.mubr.bf16.mxu0 %v5497
  %6432 = vmatmul.mubr.bf16.gmra.mrb[0].mxu0 %v5496
  %v6433 = vpop.f32.mrb[0].mxu0
  %v6434 = vadd.f32 %v6343, %v6433
  %v6435 = vpop.f32.mrb[0].mxu0
  %v6436 = vadd.f32 %v6345, %v6435
  %v6437 = vpop.f32.mrb[0].mxu0
  %v6438 = vadd.f32 %v6347, %v6437
  %v6439 = vpop.f32.mrb[0].mxu0
  %v6440 = vadd.f32 %v6349, %v6439
  %6441 = vmatprep.mubr.bf16.mxu0 %v5501
  %6442 = vmatmul.mubr.bf16.gmra.mrb[0].mxu0 %v5500
  %v6443 = vpop.f32.mrb[0].mxu0
  %v6444 = vadd.f32 %v6353, %v6443
  %v6445 = vpop.f32.mrb[0].mxu0
  %v6446 = vadd.f32 %v6355, %v6445
  %v6447 = vpop.f32.mrb[0].mxu0
  %v6448 = vadd.f32 %v6357, %v6447
  %v6449 = vpop.f32.mrb[0].mxu0
  %v6450 = vadd.f32 %v6359, %v6449
  %6451 = vmatprep.mubr.bf16.mxu0 %v5505
  %6452 = vmatmul.mubr.bf16.gmra.mrb[0].mxu0 %v5504
  %v6453 = vpop.f32.mrb[0].mxu0
  %v6454 = vadd.f32 %v6363, %v6453
  %v6455 = vpop.f32.mrb[0].mxu0
  %v6456 = vadd.f32 %v6365, %v6455
  %v6457 = vpop.f32.mrb[0].mxu0
  %v6458 = vadd.f32 %v6367, %v6457
  %v6459 = vpop.f32.mrb[0].mxu0
  %v6460 = vadd.f32 %v6369, %v6459
  %6461 = vmatprep.mubr.bf16.mxu0 %v5509
  %6462 = vmatmul.mubr.bf16.gmra.mrb[0].mxu0 %v5508
  %v6463 = vpop.f32.mrb[0].mxu0
  %v6464 = vadd.f32 %v6373, %v6463
  %v6465 = vpop.f32.mrb[0].mxu0
  %v6466 = vadd.f32 %v6375, %v6465
  %v6467 = vpop.f32.mrb[0].mxu0
  %v6468 = vadd.f32 %v6377, %v6467
  %v6469 = vpop.f32.mrb[0].mxu0
  %v6470 = vadd.f32 %v6379, %v6469
  %6471 = vmatprep.mubr.bf16.mxu0 %v5513
  %6472 = vmatmul.mubr.bf16.gmra.mrb[0].mxu0 %v5512
  %v6473 = vpop.f32.mrb[0].mxu0
  %v6474 = vadd.f32 %v6383, %v6473
  %v6475 = vpop.f32.mrb[0].mxu0
  %v6476 = vadd.f32 %v6385, %v6475
  %v6477 = vpop.f32.mrb[0].mxu0
  %v6478 = vadd.f32 %v6387, %v6477
  %v6479 = vpop.f32.mrb[0].mxu0
  %v6480 = vadd.f32 %v6389, %v6479
  %6481 = vmatprep.mubr.bf16.mxu0 %v5517
  %6482 = vmatmul.mubr.bf16.gmra.mrb[0].mxu0 %v5516
  %v6483 = vpop.f32.mrb[0].mxu0
  %v6484 = vadd.f32 %v6393, %v6483
  %v6485 = vpop.f32.mrb[0].mxu0
  %v6486 = vadd.f32 %v6395, %v6485
  %v6487 = vpop.f32.mrb[0].mxu0
  %v6488 = vpop.f32.mrb[0].mxu0
  %6489 = vdwg.mxu0
  %6490 = vmatprep.subr.bf16.mxu0 %v6055
  %6491 = vmatpush1.bf16.msra.mxu0 %v6054
  %6492 = vmatprep.subr.bf16.mxu0 %v6059
  %6493 = vmatpush1.bf16.msra.mxu0 %v6058
  %6494 = vmatprep.subr.bf16.mxu0 %v6063
  %6495 = vmatpush1.bf16.msra.mxu0 %v6062
  %6496 = vmatprep.subr.bf16.mxu0 %v6067
  %6497 = vmatpush1.bf16.msra.mxu0 %v6066
  %6498 = vmatprep.subr.bf16.mxu0 %v6071
  %6499 = vmatpush1.bf16.msra.mxu0 %v6070
  %6500 = vmatprep.subr.bf16.mxu0 %v6075
  %6501 = vmatpush1.bf16.msra.mxu0 %v6074
  %6502 = vmatprep.subr.bf16.mxu0 %v6079
  %6503 = vmatpush1.bf16.msra.mxu0 %v6078
  %6504 = vmatprep.subr.bf16.mxu0 %v6083
  %6505 = vmatpush1.bf16.msra.mxu0 %v6082
  %6506 = vmatprep.subr.bf16.mxu0 %v6087
  %6507 = vmatpush1.bf16.msra.mxu0 %v6086
  %6508 = vmatprep.subr.bf16.mxu0 %v6091
  %6509 = vmatpush1.bf16.msra.mxu0 %v6090
  %6510 = vmatprep.subr.bf16.mxu0 %v6095
  %6511 = vmatpush1.bf16.msra.mxu0 %v6094
  %6512 = vmatprep.subr.bf16.mxu0 %v6099
  %6513 = vmatpush1.bf16.msra.mxu0 %v6098
  %6514 = vmatprep.subr.bf16.mxu0 %v6103
  %6515 = vmatpush1.bf16.msra.mxu0 %v6102
  %6516 = vmatprep.subr.bf16.mxu0 %v6107
  %6517 = vmatpush1.bf16.msra.mxu0 %v6106
  %6518 = vmatprep.subr.bf16.mxu0 %v6111
  %6519 = vmatpush1.bf16.msra.mxu0 %v6110
  %6520 = vmatprep.subr.bf16.mxu0 %v6115
  %6521 = vmatpush1.bf16.msra.mxu0 %v6114
  %6522 = vmatprep.mubr.bf16.mxu0 %v5495
  %6523 = vmatmul.mubr.bf16.gmra.mrb[0].mxu0 %v5494
  %v6524 = vpop.f32.mrb[0].mxu0
  %v6525 = vadd.f32 %v5659, %v6524
  %v6526 = vpop.f32.mrb[0].mxu0
  %v6527 = vadd.f32 %v5663, %v6526
  %v6528 = vpop.f32.mrb[0].mxu0
  %v6529 = vadd.f32 %v5659, %v6528
  %v6530 = vpop.f32.mrb[0].mxu0
  %v6531 = vadd.f32 %v5663, %v6530
  %6532 = vmatprep.mubr.bf16.mxu0 %v5499
  %6533 = vmatmul.mubr.bf16.gmra.mrb[0].mxu0 %v5498
  %v6534 = vpop.f32.mrb[0].mxu0
  %v6535 = vadd.f32 %v5659, %v6534
  %v6536 = vpop.f32.mrb[0].mxu0
  %v6537 = vadd.f32 %v5663, %v6536
  %v6538 = vpop.f32.mrb[0].mxu0
  %v6539 = vadd.f32 %v5659, %v6538
  %v6540 = vpop.f32.mrb[0].mxu0
  %v6541 = vadd.f32 %v5663, %v6540
  %6542 = vmatprep.mubr.bf16.mxu0 %v5503
  %6543 = vmatmul.mubr.bf16.gmra.mrb[0].mxu0 %v5502
  %v6544 = vpop.f32.mrb[0].mxu0
  %v6545 = vadd.f32 %v5659, %v6544
  %v6546 = vpop.f32.mrb[0].mxu0
  %v6547 = vadd.f32 %v5663, %v6546
  %v6548 = vpop.f32.mrb[0].mxu0
  %v6549 = vadd.f32 %v5659, %v6548
  %v6550 = vpop.f32.mrb[0].mxu0
  %v6551 = vadd.f32 %v5663, %v6550
  %6552 = vmatprep.mubr.bf16.mxu0 %v5507
  %6553 = vmatmul.mubr.bf16.gmra.mrb[0].mxu0 %v5506
  %v6554 = vpop.f32.mrb[0].mxu0
  %v6555 = vadd.f32 %v5659, %v6554
  %v6556 = vpop.f32.mrb[0].mxu0
  %v6557 = vadd.f32 %v5663, %v6556
  %v6558 = vpop.f32.mrb[0].mxu0
  %v6559 = vadd.f32 %v5659, %v6558
  %v6560 = vpop.f32.mrb[0].mxu0
  %v6561 = vadd.f32 %v5663, %v6560
  %6562 = vmatprep.mubr.bf16.mxu0 %v5511
  %6563 = vmatmul.mubr.bf16.gmra.mrb[0].mxu0 %v5510
  %v6564 = vpop.f32.mrb[0].mxu0
  %v6565 = vadd.f32 %v5659, %v6564
  %v6566 = vpop.f32.mrb[0].mxu0
  %v6567 = vadd.f32 %v5663, %v6566
  %v6568 = vpop.f32.mrb[0].mxu0
  %v6569 = vadd.f32 %v5659, %v6568
  %v6570 = vpop.f32.mrb[0].mxu0
  %v6571 = vadd.f32 %v5663, %v6570
  %6572 = vmatprep.mubr.bf16.mxu0 %v5515
  %6573 = vmatmul.mubr.bf16.gmra.mrb[0].mxu0 %v5514
  %v6574 = vpop.f32.mrb[0].mxu0
  %v6575 = vadd.f32 %v5659, %v6574
  %v6576 = vpop.f32.mrb[0].mxu0
  %v6577 = vadd.f32 %v5663, %v6576
  %v6578 = vpop.f32.mrb[0].mxu0
  %v6579 = vpop.f32.mrb[0].mxu0
  %6580 = vdwg.mxu0
  %6581 = vmatprep.subr.bf16.mxu0 %v6119
  %6582 = vmatpush1.bf16.msra.mxu0 %v6118
  %6583 = vmatprep.subr.bf16.mxu0 %v6123
  %6584 = vmatpush1.bf16.msra.mxu0 %v6122
  %6585 = vmatprep.subr.bf16.mxu0 %v6127
  %6586 = vmatpush1.bf16.msra.mxu0 %v6126
  %6587 = vmatprep.subr.bf16.mxu0 %v6131
  %6588 = vmatpush1.bf16.msra.mxu0 %v6130
  %6589 = vmatprep.subr.bf16.mxu0 %v6135
  %6590 = vmatpush1.bf16.msra.mxu0 %v6134
  %6591 = vmatprep.subr.bf16.mxu0 %v6139
  %6592 = vmatpush1.bf16.msra.mxu0 %v6138
  %6593 = vmatprep.subr.bf16.mxu0 %v6143
  %6594 = vmatpush1.bf16.msra.mxu0 %v6142
  %6595 = vmatprep.subr.bf16.mxu0 %v6147
  %6596 = vmatpush1.bf16.msra.mxu0 %v6146
  %6597 = vmatprep.subr.bf16.mxu0 %v6151
  %6598 = vmatpush1.bf16.msra.mxu0 %v6150
  %6599 = vmatprep.subr.bf16.mxu0 %v6155
  %6600 = vmatpush1.bf16.msra.mxu0 %v6154
  %6601 = vmatprep.subr.bf16.mxu0 %v6159
  %6602 = vmatpush1.bf16.msra.mxu0 %v6158
  %6603 = vmatprep.subr.bf16.mxu0 %v6163
  %6604 = vmatpush1.bf16.msra.mxu0 %v6162
  %6605 = vmatprep.subr.bf16.mxu0 %v6167
  %6606 = vmatpush1.bf16.msra.mxu0 %v6166
  %6607 = vmatprep.subr.bf16.mxu0 %v6171
  %6608 = vmatpush1.bf16.msra.mxu0 %v6170
  %6609 = vmatprep.subr.bf16.mxu0 %v6175
  %6610 = vmatpush1.bf16.msra.mxu0 %v6174
  %6611 = vmatprep.subr.bf16.mxu0 %v6179
  %6612 = vmatpush1.bf16.msra.mxu0 %v6178
  %6613 = vmatprep.mubr.bf16.mxu0 %v5497
  %6614 = vmatmul.mubr.bf16.gmra.mrb[0].mxu0 %v5496
  %v6615 = vpop.f32.mrb[0].mxu0
  %v6616 = vadd.f32 %v6525, %v6615
  %v6617 = vpop.f32.mrb[0].mxu0
  %v6618 = vadd.f32 %v6527, %v6617
  %v6619 = vpop.f32.mrb[0].mxu0
  %v6620 = vadd.f32 %v6529, %v6619
  %v6621 = vpop.f32.mrb[0].mxu0
  %v6622 = vadd.f32 %v6531, %v6621
  %6623 = vmatprep.mubr.bf16.mxu0 %v5501
  %6624 = vmatmul.mubr.bf16.gmra.mrb[0].mxu0 %v5500
  %v6625 = vpop.f32.mrb[0].mxu0
  %v6626 = vadd.f32 %v6535, %v6625
  %v6627 = vpop.f32.mrb[0].mxu0
  %v6628 = vadd.f32 %v6537, %v6627
  %v6629 = vpop.f32.mrb[0].mxu0
  %v6630 = vadd.f32 %v6539, %v6629
  %v6631 = vpop.f32.mrb[0].mxu0
  %v6632 = vadd.f32 %v6541, %v6631
  %6633 = vmatprep.mubr.bf16.mxu0 %v5505
  %6634 = vmatmul.mubr.bf16.gmra.mrb[0].mxu0 %v5504
  %v6635 = vpop.f32.mrb[0].mxu0
  %v6636 = vadd.f32 %v6545, %v6635
  %v6637 = vpop.f32.mrb[0].mxu0
  %v6638 = vadd.f32 %v6547, %v6637
  %v6639 = vpop.f32.mrb[0].mxu0
  %v6640 = vadd.f32 %v6549, %v6639
  %v6641 = vpop.f32.mrb[0].mxu0
  %v6642 = vadd.f32 %v6551, %v6641
  %6643 = vmatprep.mubr.bf16.mxu0 %v5509
  %6644 = vmatmul.mubr.bf16.gmra.mrb[0].mxu0 %v5508
  %v6645 = vpop.f32.mrb[0].mxu0
  %v6646 = vadd.f32 %v6555, %v6645
  %v6647 = vpop.f32.mrb[0].mxu0
  %v6648 = vadd.f32 %v6557, %v6647
  %v6649 = vpop.f32.mrb[0].mxu0
  %v6650 = vadd.f32 %v6559, %v6649
  %v6651 = vpop.f32.mrb[0].mxu0
  %v6652 = vadd.f32 %v6561, %v6651
  %6653 = vmatprep.mubr.bf16.mxu0 %v5513
  %6654 = vmatmul.mubr.bf16.gmra.mrb[0].mxu0 %v5512
  %v6655 = vpop.f32.mrb[0].mxu0
  %v6656 = vadd.f32 %v6565, %v6655
  %v6657 = vpop.f32.mrb[0].mxu0
  %v6658 = vadd.f32 %v6567, %v6657
  %v6659 = vpop.f32.mrb[0].mxu0
  %v6660 = vadd.f32 %v6569, %v6659
  %v6661 = vpop.f32.mrb[0].mxu0
  %v6662 = vadd.f32 %v6571, %v6661
  %6663 = vmatprep.mubr.bf16.mxu0 %v5517
  %6664 = vmatmul.mubr.bf16.gmra.mrb[0].mxu0 %v5516
  %v6665 = vpop.f32.mrb[0].mxu0
  %v6666 = vadd.f32 %v6575, %v6665
  %v6667 = vpop.f32.mrb[0].mxu0
  %v6668 = vadd.f32 %v6577, %v6667
  %v6669 = vpop.f32.mrb[0].mxu0
  %v6670 = vpop.f32.mrb[0].mxu0
  %6671 = vdwg.mxu0
  %v6672 = vmax.f32 %v6434, 0.0
  %v6673 = vmax.f32 %v6436, 0.0
  %v6674 = vmax.f32 %v6616, 0.0
  %v6675 = vmax.f32 %v6618, 0.0
  %v6676 = vmax.f32 %v6438, 0.0
  %v6677 = vmax.f32 %v6440, 0.0
  %v6678 = vmax.f32 %v6620, 0.0
  %v6679 = vmax.f32 %v6622, 0.0
  %v6680 = vmax.f32 %v6444, 0.0
  %v6681 = vmax.f32 %v6446, 0.0
  %v6682 = vmax.f32 %v6626, 0.0
  %v6683 = vmax.f32 %v6628, 0.0
  %v6684 = vmax.f32 %v6448, 0.0
  %v6685 = vmax.f32 %v6450, 0.0
  %v6686 = vmax.f32 %v6630, 0.0
  %v6687 = vmax.f32 %v6632, 0.0
  %v6688 = vmax.f32 %v6454, 0.0
  %v6689 = vmax.f32 %v6456, 0.0
  %v6690 = vmax.f32 %v6636, 0.0
  %v6691 = vmax.f32 %v6638, 0.0
  %v6692 = vmax.f32 %v6458, 0.0
  %v6693 = vmax.f32 %v6460, 0.0
  %v6694 = vmax.f32 %v6640, 0.0
  %v6695 = vmax.f32 %v6642, 0.0
  %v6696 = vmax.f32 %v6464, 0.0
  %v6697 = vmax.f32 %v6466, 0.0
  %v6698 = vmax.f32 %v6646, 0.0
  %v6699 = vmax.f32 %v6648, 0.0
  %v6700 = vmax.f32 %v6468, 0.0
  %v6701 = vmax.f32 %v6470, 0.0
  %v6702 = vmax.f32 %v6650, 0.0
  %v6703 = vmax.f32 %v6652, 0.0
  %v6704 = vmax.f32 %v6474, 0.0
  %v6705 = vmax.f32 %v6476, 0.0
  %v6706 = vmax.f32 %v6656, 0.0
  %v6707 = vmax.f32 %v6658, 0.0
  %v6708 = vmax.f32 %v6478, 0.0
  %v6709 = vmax.f32 %v6480, 0.0
  %v6710 = vmax.f32 %v6660, 0.0
  %v6711 = vmax.f32 %v6662, 0.0
  %v6712 = vmax.f32 %v6484, 0.0
  %v6713 = vmax.f32 %v6486, 0.0
  %v6714 = vmax.f32 %v6666, 0.0
  %v6715 = vmax.f32 %v6668, 0.0
  %v6716 = vpack.c.bf16 %v6676, %v6672
  %v6717 = vpack.c.bf16 %v6677, %v6673
  %v6718 = vpack.c.bf16 %v6678, %v6674
  %v6719 = vpack.c.bf16 %v6679, %v6675
  %v6720 = vpack.c.bf16 %v6684, %v6680
  %v6721 = vpack.c.bf16 %v6685, %v6681
  %v6722 = vpack.c.bf16 %v6686, %v6682
  %v6723 = vpack.c.bf16 %v6687, %v6683
  %v6724 = vpack.c.bf16 %v6692, %v6688
  %v6725 = vpack.c.bf16 %v6693, %v6689
  %v6726 = vpack.c.bf16 %v6694, %v6690
  %v6727 = vpack.c.bf16 %v6695, %v6691
  %v6728 = vpack.c.bf16 %v6700, %v6696
  %v6729 = vpack.c.bf16 %v6701, %v6697
  %v6730 = vpack.c.bf16 %v6702, %v6698
  %v6731 = vpack.c.bf16 %v6703, %v6699
  %v6732 = vpack.c.bf16 %v6708, %v6704
  %v6733 = vpack.c.bf16 %v6709, %v6705
  %v6734 = vpack.c.bf16 %v6710, %v6706
  %v6735 = vpack.c.bf16 %v6711, %v6707
  %v6736 = vpack.c.bf16 %v6712, %v6712
  %v6737 = vpack.c.bf16 %v6713, %v6713
  %v6738 = vpack.c.bf16 %v6714, %v6714
  %v6739 = vpack.c.bf16 %v6715, %v6715
  %v6740 = vld [vmem:[%s17] sm:$0xff]
  %v6741 = vld [vmem:[%s17 + $0x8] sm:$0xff]
  %v6742 = vld [vmem:[%s17 + $0x10] sm:$0xff]
  %v6743 = vld [vmem:[%s17 + $0x18] sm:$0xf]
  %v6744 = vld [vmem:[%s17 + $0x1c] sm:$0xff]
  %v6745 = vld [vmem:[%s17 + $0x24] sm:$0xff]
  %v6746 = vld [vmem:[%s17 + $0x2c] sm:$0xff]
  %v6747 = vld [vmem:[%s17 + $0x34] sm:$0xf]
  %v6748 = vld [vmem:[%s17 + $0x38] sm:$0xff]
  %v6749 = vld [vmem:[%s17 + $0x40] sm:$0xff]
  %v6750 = vld [vmem:[%s17 + $0x48] sm:$0xff]
  %v6751 = vld [vmem:[%s17 + $0x50] sm:$0xf]
  %v6752 = vld [vmem:[%s17 + $0x54] sm:$0xff]
  %v6753 = vld [vmem:[%s17 + $0x5c] sm:$0xff]
  %v6754 = vld [vmem:[%s17 + $0x64] sm:$0xff]
  %v6755 = vld [vmem:[%s17 + $0x6c] sm:$0xf]
  %v6756 = vld [vmem:[%s17 + $0x70] sm:$0xff]
  %v6757 = vld [vmem:[%s17 + $0x78] sm:$0xff]
  %v6758 = vld [vmem:[%s17 + $0x80] sm:$0xff]
  %v6759 = vld [vmem:[%s17 + $0x88] sm:$0xf]
  %v6760 = vld [vmem:[%s17 + $0x8c] sm:$0xff]
  %v6761 = vld [vmem:[%s17 + $0x94] sm:$0xff]
  %v6762 = vld [vmem:[%s17 + $0x9c] sm:$0xff]
  %v6763 = vld [vmem:[%s17 + $0xa4] sm:$0xf]
  %v6764 = vld [vmem:[%s17 + $0xa8] sm:$0xff]
  %v6765 = vld [vmem:[%s17 + $0xb0] sm:$0xff]
  %v6766 = vld [vmem:[%s17 + $0xb8] sm:$0xff]
  %v6767 = vld [vmem:[%s17 + $0xc0] sm:$0xf]
  %v6768 = vld [vmem:[%s17 + $0xc4] sm:$0xff]
  %v6769 = vld [vmem:[%s17 + $0xcc] sm:$0xff]
  %v6770 = vld [vmem:[%s17 + $0xd4] sm:$0xff]
  %v6771 = vld [vmem:[%s17 + $0xdc] sm:$0xf]
  %v6772 = vld [vmem:[%s17 + $0xe0] sm:$0xff]
  %v6773 = vld [vmem:[%s17 + $0xe8] sm:$0xff]
  %v6774 = vld [vmem:[%s17 + $0xf0] sm:$0xff]
  %v6775 = vld [vmem:[%s17 + $0xf8] sm:$0xf]
  %v6776 = vld [vmem:[%s17 + $0xfc] sm:$0xff]
  %v6777 = vld [vmem:[%s17 + $0x104] sm:$0xff]
  %v6778 = vld [vmem:[%s17 + $0x10c] sm:$0xff]
  %v6779 = vld [vmem:[%s17 + $0x114] sm:$0xf]
  %v6780 = vld [vmem:[%s17 + $0x118] sm:$0xff]
  %v6781 = vld [vmem:[%s17 + $0x120] sm:$0xff]
  %v6782 = vld [vmem:[%s17 + $0x128] sm:$0xff]
  %v6783 = vld [vmem:[%s17 + $0x130] sm:$0xf]
  %v6784 = vld [vmem:[%s17 + $0x134] sm:$0xff]
  %v6785 = vld [vmem:[%s17 + $0x13c] sm:$0xff]
  %v6786 = vld [vmem:[%s17 + $0x144] sm:$0xff]
  %v6787 = vld [vmem:[%s17 + $0x14c] sm:$0xf]
  %v6788 = vld [vmem:[%s17 + $0x150] sm:$0xff]
  %v6789 = vld [vmem:[%s17 + $0x158] sm:$0xff]
  %v6790 = vld [vmem:[%s17 + $0x160] sm:$0xff]
  %v6791 = vld [vmem:[%s17 + $0x168] sm:$0xf]
  %v6792 = vld [vmem:[%s17 + $0x16c] sm:$0xff]
  %v6793 = vld [vmem:[%s17 + $0x174] sm:$0xff]
  %v6794 = vld [vmem:[%s17 + $0x17c] sm:$0xff]
  %v6795 = vld [vmem:[%s17 + $0x184] sm:$0xf]
  %v6796 = vld [vmem:[%s17 + $0x188] sm:$0xff]
  %v6797 = vld [vmem:[%s17 + $0x190] sm:$0xff]
  %v6798 = vld [vmem:[%s17 + $0x198] sm:$0xff]
  %v6799 = vld [vmem:[%s17 + $0x1a0] sm:$0xf]
  %v6800 = vld [vmem:[%s17 + $0x1a4] sm:$0xff]
  %v6801 = vld [vmem:[%s17 + $0x1ac] sm:$0xff]
  %v6802 = vld [vmem:[%s17 + $0x1b4] sm:$0xff]
  %v6803 = vld [vmem:[%s17 + $0x1bc] sm:$0xf]
  %v6804 = vld [vmem:[%s17 + $0x1c0] sm:$0xff]
  %v6805 = vld [vmem:[%s17 + $0x1c8] sm:$0xff]
  %v6806 = vld [vmem:[%s17 + $0x1d0] sm:$0xff]
  %v6807 = vld [vmem:[%s17 + $0x1d8] sm:$0xf]
  %v6808 = vld [vmem:[%s17 + $0x1dc] sm:$0xff]
  %v6809 = vld [vmem:[%s17 + $0x1e4] sm:$0xff]
  %v6810 = vld [vmem:[%s17 + $0x1ec] sm:$0xff]
  %v6811 = vld [vmem:[%s17 + $0x1f4] sm:$0xf]
  %v6812 = vld [vmem:[%s17 + $0x1f8] sm:$0xff]
  %v6813 = vld [vmem:[%s17 + $0x200] sm:$0xff]
  %v6814 = vld [vmem:[%s17 + $0x208] sm:$0xff]
  %v6815 = vld [vmem:[%s17 + $0x210] sm:$0xf]
  %v6816 = vld [vmem:[%s17 + $0x214] sm:$0xff]
  %v6817 = vld [vmem:[%s17 + $0x21c] sm:$0xff]
  %v6818 = vld [vmem:[%s17 + $0x224] sm:$0xff]
  %v6819 = vld [vmem:[%s17 + $0x22c] sm:$0xf]
  %v6820 = vld [vmem:[%s17 + $0x230] sm:$0xff]
  %v6821 = vld [vmem:[%s17 + $0x238] sm:$0xff]
  %v6822 = vld [vmem:[%s17 + $0x240] sm:$0xff]
  %v6823 = vld [vmem:[%s17 + $0x248] sm:$0xf]
  %v6824 = vld [vmem:[%s17 + $0x24c] sm:$0xff]
  %v6825 = vld [vmem:[%s17 + $0x254] sm:$0xff]
  %v6826 = vld [vmem:[%s17 + $0x25c] sm:$0xff]
  %v6827 = vld [vmem:[%s17 + $0x264] sm:$0xf]
  %v6828 = vld [vmem:[%s17 + $0x268] sm:$0xff]
  %v6829 = vld [vmem:[%s17 + $0x270] sm:$0xff]
  %v6830 = vld [vmem:[%s17 + $0x278] sm:$0xff]
  %v6831 = vld [vmem:[%s17 + $0x280] sm:$0xf]
  %v6832 = vld [vmem:[%s17 + $0x284] sm:$0xff]
  %v6833 = vld [vmem:[%s17 + $0x28c] sm:$0xff]
  %v6834 = vld [vmem:[%s17 + $0x294] sm:$0xff]
  %v6835 = vld [vmem:[%s17 + $0x29c] sm:$0xf]
  %v6836 = vld [vmem:[%s17 + $0x2a0] sm:$0xff]
  %v6837 = vld [vmem:[%s17 + $0x2a8] sm:$0xff]
  %v6838 = vld [vmem:[%s17 + $0x2b0] sm:$0xff]
  %v6839 = vld [vmem:[%s17 + $0x2b8] sm:$0xf]
  %v6840 = vld [vmem:[%s17 + $0x2bc] sm:$0xff]
  %v6841 = vld [vmem:[%s17 + $0x2c4] sm:$0xff]
  %v6842 = vld [vmem:[%s17 + $0x2cc] sm:$0xff]
  %v6843 = vld [vmem:[%s17 + $0x2d4] sm:$0xf]
  %v6844 = vld [vmem:[%s17 + $0x2d8] sm:$0xff]
  %v6845 = vld [vmem:[%s17 + $0x2e0] sm:$0xff]
  %v6846 = vld [vmem:[%s17 + $0x2e8] sm:$0xff]
  %v6847 = vld [vmem:[%s17 + $0x2f0] sm:$0xf]
  %v6848 = vld [vmem:[%s17 + $0x2f4] sm:$0xff]
  %v6849 = vld [vmem:[%s17 + $0x2fc] sm:$0xff]
  %v6850 = vld [vmem:[%s17 + $0x304] sm:$0xff]
  %v6851 = vld [vmem:[%s17 + $0x30c] sm:$0xf]
  %v6852 = vld [vmem:[%s17 + $0x310] sm:$0xff]
  %v6853 = vld [vmem:[%s17 + $0x318] sm:$0xff]
  %v6854 = vld [vmem:[%s17 + $0x320] sm:$0xff]
  %v6855 = vld [vmem:[%s17 + $0x328] sm:$0xf]
  %v6856 = vld [vmem:[%s17 + $0x32c] sm:$0xff]
  %v6857 = vld [vmem:[%s17 + $0x334] sm:$0xff]
  %v6858 = vld [vmem:[%s17 + $0x33c] sm:$0xff]
  %v6859 = vld [vmem:[%s17 + $0x344] sm:$0xf]
  %v6860 = vld [vmem:[%s17 + $0x348] sm:$0xff]
  %v6861 = vld [vmem:[%s17 + $0x350] sm:$0xff]
  %v6862 = vld [vmem:[%s17 + $0x358] sm:$0xff]
  %v6863 = vld [vmem:[%s17 + $0x360] sm:$0xf]
  %v6864 = vld [vmem:[%s17 + $0x364] sm:$0xff]
  %v6865 = vld [vmem:[%s17 + $0x36c] sm:$0xff]
  %v6866 = vld [vmem:[%s17 + $0x374] sm:$0xff]
  %v6867 = vld [vmem:[%s17 + $0x37c] sm:$0xf]
  %v6868 = vld [vmem:[%s17 + $0x380] sm:$0xff]
  %v6869 = vld [vmem:[%s17 + $0x388] sm:$0xff]
  %v6870 = vld [vmem:[%s17 + $0x390] sm:$0xff]
  %v6871 = vld [vmem:[%s17 + $0x398] sm:$0xf]
  %v6872 = vld [vmem:[%s17 + $0x39c] sm:$0xff]
  %v6873 = vld [vmem:[%s17 + $0x3a4] sm:$0xff]
  %v6874 = vld [vmem:[%s17 + $0x3ac] sm:$0xff]
  %v6875 = vld [vmem:[%s17 + $0x3b4] sm:$0xf]
  %v6876 = vld [vmem:[%s17 + $0x3b8] sm:$0xff]
  %v6877 = vld [vmem:[%s17 + $0x3c0] sm:$0xff]
  %v6878 = vld [vmem:[%s17 + $0x3c8] sm:$0xff]
  %v6879 = vld [vmem:[%s17 + $0x3d0] sm:$0xf]
  %v6880 = vld [vmem:[%s17 + $0x3d4] sm:$0xff]
  %v6881 = vld [vmem:[%s17 + $0x3dc] sm:$0xff]
  %v6882 = vld [vmem:[%s17 + $0x3e4] sm:$0xff]
  %v6883 = vld [vmem:[%s17 + $0x3ec] sm:$0xf]
  %v6884 = vld [vmem:[%s17 + $0x3f0] sm:$0xff]
  %v6885 = vld [vmem:[%s17 + $0x3f8] sm:$0xff]
  %v6886 = vld [vmem:[%s17 + $0x400] sm:$0xff]
  %v6887 = vld [vmem:[%s17 + $0x408] sm:$0xf]
  %v6888 = vld [vmem:[%s17 + $0x40c] sm:$0xff]
  %v6889 = vld [vmem:[%s17 + $0x414] sm:$0xff]
  %v6890 = vld [vmem:[%s17 + $0x41c] sm:$0xff]
  %v6891 = vld [vmem:[%s17 + $0x424] sm:$0xf]
  %v6892 = vld [vmem:[%s17 + $0x428] sm:$0xff]
  %v6893 = vld [vmem:[%s17 + $0x430] sm:$0xff]
  %v6894 = vld [vmem:[%s17 + $0x438] sm:$0xff]
  %v6895 = vld [vmem:[%s17 + $0x440] sm:$0xf]
  %v6896 = vld [vmem:[%s17 + $0x444] sm:$0xff]
  %v6897 = vld [vmem:[%s17 + $0x44c] sm:$0xff]
  %v6898 = vld [vmem:[%s17 + $0x454] sm:$0xff]
  %v6899 = vld [vmem:[%s17 + $0x45c] sm:$0xf]
  %v6900 = vld [vmem:[%s17 + $0x460] sm:$0xff]
  %v6901 = vld [vmem:[%s17 + $0x468] sm:$0xff]
  %v6902 = vld [vmem:[%s17 + $0x470] sm:$0xff]
  %v6903 = vld [vmem:[%s17 + $0x478] sm:$0xf]
  %v6904 = vld [vmem:[%s17 + $0x47c] sm:$0xff]
  %v6905 = vld [vmem:[%s17 + $0x484] sm:$0xff]
  %v6906 = vld [vmem:[%s17 + $0x48c] sm:$0xff]
  %v6907 = vld [vmem:[%s17 + $0x494] sm:$0xf]
  %v6908 = vld [vmem:[%s17 + $0x498] sm:$0xff]
  %v6909 = vld [vmem:[%s17 + $0x4a0] sm:$0xff]
  %v6910 = vld [vmem:[%s17 + $0x4a8] sm:$0xff]
  %v6911 = vld [vmem:[%s17 + $0x4b0] sm:$0xf]
  %v6912 = vld [vmem:[%s17 + $0x4b4] sm:$0xff]
  %v6913 = vld [vmem:[%s17 + $0x4bc] sm:$0xff]
  %v6914 = vld [vmem:[%s17 + $0x4c4] sm:$0xff]
  %v6915 = vld [vmem:[%s17 + $0x4cc] sm:$0xf]
  %v6916 = vld [vmem:[%s17 + $0x4d0] sm:$0xff]
  %v6917 = vld [vmem:[%s17 + $0x4d8] sm:$0xff]
  %v6918 = vld [vmem:[%s17 + $0x4e0] sm:$0xff]
  %v6919 = vld [vmem:[%s17 + $0x4e8] sm:$0xf]
  %v6920 = vld [vmem:[%s17 + $0x4ec] sm:$0xff]
  %v6921 = vld [vmem:[%s17 + $0x4f4] sm:$0xff]
  %v6922 = vld [vmem:[%s17 + $0x4fc] sm:$0xff]
  %v6923 = vld [vmem:[%s17 + $0x504] sm:$0xf]
  %v6924 = vld [vmem:[%s17 + $0x508] sm:$0xff]
  %v6925 = vld [vmem:[%s17 + $0x510] sm:$0xff]
  %v6926 = vld [vmem:[%s17 + $0x518] sm:$0xff]
  %v6927 = vld [vmem:[%s17 + $0x520] sm:$0xf]
  %v6928 = vld [vmem:[%s17 + $0x524] sm:$0xff]
  %v6929 = vld [vmem:[%s17 + $0x52c] sm:$0xff]
  %v6930 = vld [vmem:[%s17 + $0x534] sm:$0xff]
  %v6931 = vld [vmem:[%s17 + $0x53c] sm:$0xf]
  %v6932 = vld [vmem:[%s17 + $0x540] sm:$0xff]
  %v6933 = vld [vmem:[%s17 + $0x548] sm:$0xff]
  %v6934 = vld [vmem:[%s17 + $0x550] sm:$0xff]
  %v6935 = vld [vmem:[%s17 + $0x558] sm:$0xf]
  %v6936 = vld [vmem:[%s17 + $0x55c] sm:$0xff]
  %v6937 = vld [vmem:[%s17 + $0x564] sm:$0xff]
  %v6938 = vld [vmem:[%s17 + $0x56c] sm:$0xff]
  %v6939 = vld [vmem:[%s17 + $0x574] sm:$0xf]
  %v6940 = vld [vmem:[%s17 + $0x578] sm:$0xff]
  %v6941 = vld [vmem:[%s17 + $0x580] sm:$0xff]
  %v6942 = vld [vmem:[%s17 + $0x588] sm:$0xff]
  %v6943 = vld [vmem:[%s17 + $0x590] sm:$0xf]
  %v6944 = vld [vmem:[%s17 + $0x594] sm:$0xff]
  %v6945 = vld [vmem:[%s17 + $0x59c] sm:$0xff]
  %v6946 = vld [vmem:[%s17 + $0x5a4] sm:$0xff]
  %v6947 = vld [vmem:[%s17 + $0x5ac] sm:$0xf]
  %v6948 = vld [vmem:[%s17 + $0x5b0] sm:$0xff]
  %v6949 = vld [vmem:[%s17 + $0x5b8] sm:$0xff]
  %v6950 = vld [vmem:[%s17 + $0x5c0] sm:$0xff]
  %v6951 = vld [vmem:[%s17 + $0x5c8] sm:$0xf]
  %v6952 = vld [vmem:[%s17 + $0x5cc] sm:$0xff]
  %v6953 = vld [vmem:[%s17 + $0x5d4] sm:$0xff]
  %v6954 = vld [vmem:[%s17 + $0x5dc] sm:$0xff]
  %v6955 = vld [vmem:[%s17 + $0x5e4] sm:$0xf]
  %v6956 = vld [vmem:[%s17 + $0x5e8] sm:$0xff]
  %v6957 = vld [vmem:[%s17 + $0x5f0] sm:$0xff]
  %v6958 = vld [vmem:[%s17 + $0x5f8] sm:$0xff]
  %v6959 = vld [vmem:[%s17 + $0x600] sm:$0xf]
  %v6960 = vld [vmem:[%s17 + $0x604] sm:$0xff]
  %v6961 = vld [vmem:[%s17 + $0x60c] sm:$0xff]
  %v6962 = vld [vmem:[%s17 + $0x614] sm:$0xff]
  %v6963 = vld [vmem:[%s17 + $0x61c] sm:$0xf]
  %v6964 = vld [vmem:[%s17 + $0x620] sm:$0xff]
  %v6965 = vld [vmem:[%s17 + $0x628] sm:$0xff]
  %v6966 = vld [vmem:[%s17 + $0x630] sm:$0xff]
  %v6967 = vld [vmem:[%s17 + $0x638] sm:$0xf]
  %v6968 = vld [vmem:[%s17 + $0x63c] sm:$0xff]
  %v6969 = vld [vmem:[%s17 + $0x644] sm:$0xff]
  %v6970 = vld [vmem:[%s17 + $0x64c] sm:$0xff]
  %v6971 = vld [vmem:[%s17 + $0x654] sm:$0xf]
  %v6972 = vld [vmem:[%s17 + $0x658] sm:$0xff]
  %v6973 = vld [vmem:[%s17 + $0x660] sm:$0xff]
  %v6974 = vld [vmem:[%s17 + $0x668] sm:$0xff]
  %v6975 = vld [vmem:[%s17 + $0x670] sm:$0xf]
  %v6976 = vld [vmem:[%s17 + $0x674] sm:$0xff]
  %v6977 = vld [vmem:[%s17 + $0x67c] sm:$0xff]
  %v6978 = vld [vmem:[%s17 + $0x684] sm:$0xff]
  %v6979 = vld [vmem:[%s17 + $0x68c] sm:$0xf]
  %v6980 = vld [vmem:[%s17 + $0x690] sm:$0xff]
  %v6981 = vld [vmem:[%s17 + $0x698] sm:$0xff]
  %v6982 = vld [vmem:[%s17 + $0x6a0] sm:$0xff]
  %v6983 = vld [vmem:[%s17 + $0x6a8] sm:$0xf]
  %v6984 = vld [vmem:[%s17 + $0x6ac] sm:$0xff]
  %v6985 = vld [vmem:[%s17 + $0x6b4] sm:$0xff]
  %v6986 = vld [vmem:[%s17 + $0x6bc] sm:$0xff]
  %v6987 = vld [vmem:[%s17 + $0x6c4] sm:$0xf]
  %v6988 = vld [vmem:[%s17 + $0x6c8] sm:$0xff]
  %v6989 = vld [vmem:[%s17 + $0x6d0] sm:$0xff]
  %v6990 = vld [vmem:[%s17 + $0x6d8] sm:$0xff]
  %v6991 = vld [vmem:[%s17 + $0x6e0] sm:$0xf]
  %v6992 = vld [vmem:[%s17 + $0x6e4] sm:$0xff]
  %v6993 = vld [vmem:[%s17 + $0x6ec] sm:$0xff]
  %v6994 = vld [vmem:[%s17 + $0x6f4] sm:$0xff]
  %v6995 = vld [vmem:[%s17 + $0x6fc] sm:$0xf]
  %v6996 = vld [vmem:[%s18] sm:$0x7f]
  %v6998 = vlaneseq
  %v6999 = vshrl.u32 %v6998, 7
  %v7000 = vsub.s32 0, %v6999
  %v7001 = vrot.slane %v6996, %v7000
  %v7002 = vlaneseq
  %v7003 = vshrl.u32 %v7002, 7
  %v7004 = vsub.s32 1, %v7003
  %v7005 = vrot.slane %v6996, %v7004
  %v7006 = vlaneseq
  %v7007 = vshrl.u32 %v7006, 7
  %v7008 = vsub.s32 2, %v7007
  %v7009 = vrot.slane %v6996, %v7008
  %v7010 = vlaneseq
  %v7011 = vshrl.u32 %v7010, 7
  %v7012 = vsub.s32 3, %v7011
  %v7013 = vrot.slane %v6996, %v7012
  %v7014 = vlaneseq
  %v7015 = vshrl.u32 %v7014, 7
  %v7016 = vsub.s32 4, %v7015
  %v7017 = vrot.slane %v6996, %v7016
  %v7018 = vlaneseq
  %v7019 = vshrl.u32 %v7018, 7
  %v7020 = vsub.s32 5, %v7019
  %v7021 = vrot.slane %v6996, %v7020
  %v7022 = vlaneseq
  %v7023 = vshrl.u32 %v7022, 7
  %v7024 = vsub.s32 6, %v7023
  %v7025 = vrot.slane %v6996, %v7024
  %v7289 = vunpack.c.l.b16 %v6740
  %v7290 = vunpack.c.h.b16 %v6740
  %v7291 = vunpack.c.l.b16 %v6741
  %v7292 = vunpack.c.h.b16 %v6741
  %v7293 = vunpack.c.l.b16 %v6742
  %v7294 = vunpack.c.h.b16 %v6742
  %v7295 = vunpack.c.l.b16 %v6743
  %v7296 = vunpack.c.l.b16 %v6744
  %v7297 = vunpack.c.h.b16 %v6744
  %v7298 = vunpack.c.l.b16 %v6745
  %v7299 = vunpack.c.h.b16 %v6745
  %v7300 = vunpack.c.l.b16 %v6746
  %v7301 = vunpack.c.h.b16 %v6746
  %v7302 = vunpack.c.l.b16 %v6747
  %v7303 = vunpack.c.l.b16 %v6748
  %v7304 = vunpack.c.h.b16 %v6748
  %v7305 = vunpack.c.l.b16 %v6749
  %v7306 = vunpack.c.h.b16 %v6749
  %v7307 = vunpack.c.l.b16 %v6750
  %v7308 = vunpack.c.h.b16 %v6750
  %v7309 = vunpack.c.l.b16 %v6751
  %v7310 = vunpack.c.l.b16 %v6752
  %v7311 = vunpack.c.h.b16 %v6752
  %v7312 = vunpack.c.l.b16 %v6753
  %v7313 = vunpack.c.h.b16 %v6753
  %v7314 = vunpack.c.l.b16 %v6754
  %v7315 = vunpack.c.h.b16 %v6754
  %v7316 = vunpack.c.l.b16 %v6755
  %v7317 = vunpack.c.l.b16 %v6756
  %v7318 = vunpack.c.h.b16 %v6756
  %v7319 = vunpack.c.l.b16 %v6757
  %v7320 = vunpack.c.h.b16 %v6757
  %v7321 = vunpack.c.l.b16 %v6758
  %v7322 = vunpack.c.h.b16 %v6758
  %v7323 = vunpack.c.l.b16 %v6759
  %v7324 = vunpack.c.l.b16 %v6760
  %v7325 = vunpack.c.h.b16 %v6760
  %v7326 = vunpack.c.l.b16 %v6761
  %v7327 = vunpack.c.h.b16 %v6761
  %v7328 = vunpack.c.l.b16 %v6762
  %v7329 = vunpack.c.h.b16 %v6762
  %v7330 = vunpack.c.l.b16 %v6763
  %v7331 = vunpack.c.l.b16 %v6764
  %v7332 = vunpack.c.h.b16 %v6764
  %v7333 = vunpack.c.l.b16 %v6765
  %v7334 = vunpack.c.h.b16 %v6765
  %v7335 = vunpack.c.l.b16 %v6766
  %v7336 = vunpack.c.h.b16 %v6766
  %v7337 = vunpack.c.l.b16 %v6767
  %v7338 = vunpack.c.l.b16 %v6768
  %v7339 = vunpack.c.h.b16 %v6768
  %v7340 = vunpack.c.l.b16 %v6769
  %v7341 = vunpack.c.h.b16 %v6769
  %v7342 = vunpack.c.l.b16 %v6770
  %v7343 = vunpack.c.h.b16 %v6770
  %v7344 = vunpack.c.l.b16 %v6771
  %v7345 = vunpack.c.l.b16 %v6772
  %v7346 = vunpack.c.h.b16 %v6772
  %v7347 = vunpack.c.l.b16 %v6773
  %v7348 = vunpack.c.h.b16 %v6773
  %v7349 = vunpack.c.l.b16 %v6774
  %v7350 = vunpack.c.h.b16 %v6774
  %v7351 = vunpack.c.l.b16 %v6775
  %v7352 = vunpack.c.l.b16 %v6776
  %v7353 = vunpack.c.h.b16 %v6776
  %v7354 = vunpack.c.l.b16 %v6777
  %v7355 = vunpack.c.h.b16 %v6777
  %v7356 = vunpack.c.l.b16 %v6778
  %v7357 = vunpack.c.h.b16 %v6778
  %v7358 = vunpack.c.l.b16 %v6779
  %v7359 = vunpack.c.l.b16 %v6780
  %v7360 = vunpack.c.h.b16 %v6780
  %v7361 = vunpack.c.l.b16 %v6781
  %v7362 = vunpack.c.h.b16 %v6781
  %v7363 = vunpack.c.l.b16 %v6782
  %v7364 = vunpack.c.h.b16 %v6782
  %v7365 = vunpack.c.l.b16 %v6783
  %v7366 = vunpack.c.l.b16 %v6784
  %v7367 = vunpack.c.h.b16 %v6784
  %v7368 = vunpack.c.l.b16 %v6785
  %v7369 = vunpack.c.h.b16 %v6785
  %v7370 = vunpack.c.l.b16 %v6786
  %v7371 = vunpack.c.h.b16 %v6786
  %v7372 = vunpack.c.l.b16 %v6787
  %v7373 = vunpack.c.l.b16 %v6788
  %v7374 = vunpack.c.h.b16 %v6788
  %v7375 = vunpack.c.l.b16 %v6789
  %v7376 = vunpack.c.h.b16 %v6789
  %v7377 = vunpack.c.l.b16 %v6790
  %v7378 = vunpack.c.h.b16 %v6790
  %v7379 = vunpack.c.l.b16 %v6791
  %v7380 = vunpack.c.l.b16 %v6792
  %v7381 = vunpack.c.h.b16 %v6792
  %v7382 = vunpack.c.l.b16 %v6793
  %v7383 = vunpack.c.h.b16 %v6793
  %v7384 = vunpack.c.l.b16 %v6794
  %v7385 = vunpack.c.h.b16 %v6794
  %v7386 = vunpack.c.l.b16 %v6795
  %v7387 = vunpack.c.l.b16 %v6796
  %v7388 = vunpack.c.h.b16 %v6796
  %v7389 = vunpack.c.l.b16 %v6797
  %v7390 = vunpack.c.h.b16 %v6797
  %v7391 = vunpack.c.l.b16 %v6798
  %v7392 = vunpack.c.h.b16 %v6798
  %v7393 = vunpack.c.l.b16 %v6799
  %v7394 = vunpack.c.l.b16 %v6800
  %v7395 = vunpack.c.h.b16 %v6800
  %v7396 = vunpack.c.l.b16 %v6801
  %v7397 = vunpack.c.h.b16 %v6801
  %v7398 = vunpack.c.l.b16 %v6802
  %v7399 = vunpack.c.h.b16 %v6802
  %v7400 = vunpack.c.l.b16 %v6803
  %v7401 = vunpack.c.l.b16 %v6804
  %v7402 = vunpack.c.h.b16 %v6804
  %v7403 = vunpack.c.l.b16 %v6805
  %v7404 = vunpack.c.h.b16 %v6805
  %v7405 = vunpack.c.l.b16 %v6806
  %v7406 = vunpack.c.h.b16 %v6806
  %v7407 = vunpack.c.l.b16 %v6807
  %v7408 = vunpack.c.l.b16 %v6808
  %v7409 = vunpack.c.h.b16 %v6808
  %v7410 = vunpack.c.l.b16 %v6809
  %v7411 = vunpack.c.h.b16 %v6809
  %v7412 = vunpack.c.l.b16 %v6810
  %v7413 = vunpack.c.h.b16 %v6810
  %v7414 = vunpack.c.l.b16 %v6811
  %v7415 = vunpack.c.l.b16 %v6812
  %v7416 = vunpack.c.h.b16 %v6812
  %v7417 = vunpack.c.l.b16 %v6813
  %v7418 = vunpack.c.h.b16 %v6813
  %v7419 = vunpack.c.l.b16 %v6814
  %v7420 = vunpack.c.h.b16 %v6814
  %v7421 = vunpack.c.l.b16 %v6815
  %v7422 = vunpack.c.l.b16 %v6816
  %v7423 = vunpack.c.h.b16 %v6816
  %v7424 = vunpack.c.l.b16 %v6817
  %v7425 = vunpack.c.h.b16 %v6817
  %v7426 = vunpack.c.l.b16 %v6818
  %v7427 = vunpack.c.h.b16 %v6818
  %v7428 = vunpack.c.l.b16 %v6819
  %v7429 = vunpack.c.l.b16 %v6820
  %v7430 = vunpack.c.h.b16 %v6820
  %v7431 = vunpack.c.l.b16 %v6821
  %v7432 = vunpack.c.h.b16 %v6821
  %v7433 = vunpack.c.l.b16 %v6822
  %v7434 = vunpack.c.h.b16 %v6822
  %v7435 = vunpack.c.l.b16 %v6823
  %v7436 = vunpack.c.l.b16 %v6824
  %v7437 = vunpack.c.h.b16 %v6824
  %v7438 = vunpack.c.l.b16 %v6825
  %v7439 = vunpack.c.h.b16 %v6825
  %v7440 = vunpack.c.l.b16 %v6826
  %v7441 = vunpack.c.h.b16 %v6826
  %v7442 = vunpack.c.l.b16 %v6827
  %v7443 = vunpack.c.l.b16 %v6828
  %v7444 = vunpack.c.h.b16 %v6828
  %v7445 = vunpack.c.l.b16 %v6829
  %v7446 = vunpack.c.h.b16 %v6829
  %v7447 = vunpack.c.l.b16 %v6830
  %v7448 = vunpack.c.h.b16 %v6830
  %v7449 = vunpack.c.l.b16 %v6831
  %v7450 = vunpack.c.l.b16 %v6832
  %v7451 = vunpack.c.h.b16 %v6832
  %v7452 = vunpack.c.l.b16 %v6833
  %v7453 = vunpack.c.h.b16 %v6833
  %v7454 = vunpack.c.l.b16 %v6834
  %v7455 = vunpack.c.h.b16 %v6834
  %v7456 = vunpack.c.l.b16 %v6835
  %v7457 = vunpack.c.l.b16 %v6836
  %v7458 = vunpack.c.h.b16 %v6836
  %v7459 = vunpack.c.l.b16 %v6837
  %v7460 = vunpack.c.h.b16 %v6837
  %v7461 = vunpack.c.l.b16 %v6838
  %v7462 = vunpack.c.h.b16 %v6838
  %v7463 = vunpack.c.l.b16 %v6839
  %v7464 = vunpack.c.l.b16 %v6840
  %v7465 = vunpack.c.h.b16 %v6840
  %v7466 = vunpack.c.l.b16 %v6841
  %v7467 = vunpack.c.h.b16 %v6841
  %v7468 = vunpack.c.l.b16 %v6842
  %v7469 = vunpack.c.h.b16 %v6842
  %v7470 = vunpack.c.l.b16 %v6843
  %v7471 = vunpack.c.l.b16 %v6844
  %v7472 = vunpack.c.h.b16 %v6844
  %v7473 = vunpack.c.l.b16 %v6845
  %v7474 = vunpack.c.h.b16 %v6845
  %v7475 = vunpack.c.l.b16 %v6846
  %v7476 = vunpack.c.h.b16 %v6846
  %v7477 = vunpack.c.l.b16 %v6847
  %v7478 = vunpack.c.l.b16 %v6848
  %v7479 = vunpack.c.h.b16 %v6848
  %v7480 = vunpack.c.l.b16 %v6849
  %v7481 = vunpack.c.h.b16 %v6849
  %v7482 = vunpack.c.l.b16 %v6850
  %v7483 = vunpack.c.h.b16 %v6850
  %v7484 = vunpack.c.l.b16 %v6851
  %v7485 = vunpack.c.l.b16 %v6852
  %v7486 = vunpack.c.h.b16 %v6852
  %v7487 = vunpack.c.l.b16 %v6853
  %v7488 = vunpack.c.h.b16 %v6853
  %v7489 = vunpack.c.l.b16 %v6854
  %v7490 = vunpack.c.h.b16 %v6854
  %v7491 = vunpack.c.l.b16 %v6855
  %v7492 = vunpack.c.l.b16 %v6856
  %v7493 = vunpack.c.h.b16 %v6856
  %v7494 = vunpack.c.l.b16 %v6857
  %v7495 = vunpack.c.h.b16 %v6857
  %v7496 = vunpack.c.l.b16 %v6858
  %v7497 = vunpack.c.h.b16 %v6858
  %v7498 = vunpack.c.l.b16 %v6859
  %v7499 = vunpack.c.l.b16 %v6860
  %v7500 = vunpack.c.h.b16 %v6860
  %v7501 = vunpack.c.l.b16 %v6861
  %v7502 = vunpack.c.h.b16 %v6861
  %v7503 = vunpack.c.l.b16 %v6862
  %v7504 = vunpack.c.h.b16 %v6862
  %v7505 = vunpack.c.l.b16 %v6863
  %v7506 = vunpack.c.l.b16 %v6864
  %v7507 = vunpack.c.h.b16 %v6864
  %v7508 = vunpack.c.l.b16 %v6865
  %v7509 = vunpack.c.h.b16 %v6865
  %v7510 = vunpack.c.l.b16 %v6866
  %v7511 = vunpack.c.h.b16 %v6866
  %v7512 = vunpack.c.l.b16 %v6867
  %v7513 = vunpack.c.l.b16 %v6868
  %v7514 = vunpack.c.h.b16 %v6868
  %v7515 = vunpack.c.l.b16 %v6869
  %v7516 = vunpack.c.h.b16 %v6869
  %v7517 = vunpack.c.l.b16 %v6870
  %v7518 = vunpack.c.h.b16 %v6870
  %v7519 = vunpack.c.l.b16 %v6871
  %v7520 = vunpack.c.l.b16 %v6872
  %v7521 = vunpack.c.h.b16 %v6872
  %v7522 = vunpack.c.l.b16 %v6873
  %v7523 = vunpack.c.h.b16 %v6873
  %v7524 = vunpack.c.l.b16 %v6874
  %v7525 = vunpack.c.h.b16 %v6874
  %v7526 = vunpack.c.l.b16 %v6875
  %v7527 = vunpack.c.l.b16 %v6876
  %v7528 = vunpack.c.h.b16 %v6876
  %v7529 = vunpack.c.l.b16 %v6877
  %v7530 = vunpack.c.h.b16 %v6877
  %v7531 = vunpack.c.l.b16 %v6878
  %v7532 = vunpack.c.h.b16 %v6878
  %v7533 = vunpack.c.l.b16 %v6879
  %v7534 = vunpack.c.l.b16 %v6880
  %v7535 = vunpack.c.h.b16 %v6880
  %v7536 = vunpack.c.l.b16 %v6881
  %v7537 = vunpack.c.h.b16 %v6881
  %v7538 = vunpack.c.l.b16 %v6882
  %v7539 = vunpack.c.h.b16 %v6882
  %v7540 = vunpack.c.l.b16 %v6883
  %v7541 = vunpack.c.l.b16 %v6884
  %v7542 = vunpack.c.h.b16 %v6884
  %v7543 = vunpack.c.l.b16 %v6885
  %v7544 = vunpack.c.h.b16 %v6885
  %v7545 = vunpack.c.l.b16 %v6886
  %v7546 = vunpack.c.h.b16 %v6886
  %v7547 = vunpack.c.l.b16 %v6887
  %v7548 = vunpack.c.l.b16 %v6888
  %v7549 = vunpack.c.h.b16 %v6888
  %v7550 = vunpack.c.l.b16 %v6889
  %v7551 = vunpack.c.h.b16 %v6889
  %v7552 = vunpack.c.l.b16 %v6890
  %v7553 = vunpack.c.h.b16 %v6890
  %v7554 = vunpack.c.l.b16 %v6891
  %v7555 = vunpack.c.l.b16 %v6892
  %v7556 = vunpack.c.h.b16 %v6892
  %v7557 = vunpack.c.l.b16 %v6893
  %v7558 = vunpack.c.h.b16 %v6893
  %v7559 = vunpack.c.l.b16 %v6894
  %v7560 = vunpack.c.h.b16 %v6894
  %v7561 = vunpack.c.l.b16 %v6895
  %v7562 = vunpack.c.l.b16 %v6896
  %v7563 = vunpack.c.h.b16 %v6896
  %v7564 = vunpack.c.l.b16 %v6897
  %v7565 = vunpack.c.h.b16 %v6897
  %v7566 = vunpack.c.l.b16 %v6898
  %v7567 = vunpack.c.h.b16 %v6898
  %v7568 = vunpack.c.l.b16 %v6899
  %v7569 = vunpack.c.l.b16 %v6900
  %v7570 = vunpack.c.h.b16 %v6900
  %v7571 = vunpack.c.l.b16 %v6901
  %v7572 = vunpack.c.h.b16 %v6901
  %v7573 = vunpack.c.l.b16 %v6902
  %v7574 = vunpack.c.h.b16 %v6902
  %v7575 = vunpack.c.l.b16 %v6903
  %v7576 = vunpack.c.l.b16 %v6904
  %v7577 = vunpack.c.h.b16 %v6904
  %v7578 = vunpack.c.l.b16 %v6905
  %v7579 = vunpack.c.h.b16 %v6905
  %v7580 = vunpack.c.l.b16 %v6906
  %v7581 = vunpack.c.h.b16 %v6906
  %v7582 = vunpack.c.l.b16 %v6907
  %v7583 = vunpack.c.l.b16 %v6908
  %v7584 = vunpack.c.h.b16 %v6908
  %v7585 = vunpack.c.l.b16 %v6909
  %v7586 = vunpack.c.h.b16 %v6909
  %v7587 = vunpack.c.l.b16 %v6910
  %v7588 = vunpack.c.h.b16 %v6910
  %v7589 = vunpack.c.l.b16 %v6911
  %v7590 = vunpack.c.l.b16 %v6912
  %v7591 = vunpack.c.h.b16 %v6912
  %v7592 = vunpack.c.l.b16 %v6913
  %v7593 = vunpack.c.h.b16 %v6913
  %v7594 = vunpack.c.l.b16 %v6914
  %v7595 = vunpack.c.h.b16 %v6914
  %v7596 = vunpack.c.l.b16 %v6915
  %v7597 = vunpack.c.l.b16 %v6916
  %v7598 = vunpack.c.h.b16 %v6916
  %v7599 = vunpack.c.l.b16 %v6917
  %v7600 = vunpack.c.h.b16 %v6917
  %v7601 = vunpack.c.l.b16 %v6918
  %v7602 = vunpack.c.h.b16 %v6918
  %v7603 = vunpack.c.l.b16 %v6919
  %v7604 = vunpack.c.l.b16 %v6920
  %v7605 = vunpack.c.h.b16 %v6920
  %v7606 = vunpack.c.l.b16 %v6921
  %v7607 = vunpack.c.h.b16 %v6921
  %v7608 = vunpack.c.l.b16 %v6922
  %v7609 = vunpack.c.h.b16 %v6922
  %v7610 = vunpack.c.l.b16 %v6923
  %v7611 = vunpack.c.l.b16 %v6924
  %v7612 = vunpack.c.h.b16 %v6924
  %v7613 = vunpack.c.l.b16 %v6925
  %v7614 = vunpack.c.h.b16 %v6925
  %v7615 = vunpack.c.l.b16 %v6926
  %v7616 = vunpack.c.h.b16 %v6926
  %v7617 = vunpack.c.l.b16 %v6927
  %v7618 = vunpack.c.l.b16 %v6928
  %v7619 = vunpack.c.h.b16 %v6928
  %v7620 = vunpack.c.l.b16 %v6929
  %v7621 = vunpack.c.h.b16 %v6929
  %v7622 = vunpack.c.l.b16 %v6930
  %v7623 = vunpack.c.h.b16 %v6930
  %v7624 = vunpack.c.l.b16 %v6931
  %v7625 = vunpack.c.l.b16 %v6932
  %v7626 = vunpack.c.h.b16 %v6932
  %v7627 = vunpack.c.l.b16 %v6933
  %v7628 = vunpack.c.h.b16 %v6933
  %v7629 = vunpack.c.l.b16 %v6934
  %v7630 = vunpack.c.h.b16 %v6934
  %v7631 = vunpack.c.l.b16 %v6935
  %v7632 = vunpack.c.l.b16 %v6936
  %v7633 = vunpack.c.h.b16 %v6936
  %v7634 = vunpack.c.l.b16 %v6937
  %v7635 = vunpack.c.h.b16 %v6937
  %v7636 = vunpack.c.l.b16 %v6938
  %v7637 = vunpack.c.h.b16 %v6938
  %v7638 = vunpack.c.l.b16 %v6939
  %v7639 = vunpack.c.l.b16 %v6940
  %v7640 = vunpack.c.h.b16 %v6940
  %v7641 = vunpack.c.l.b16 %v6941
  %v7642 = vunpack.c.h.b16 %v6941
  %v7643 = vunpack.c.l.b16 %v6942
  %v7644 = vunpack.c.h.b16 %v6942
  %v7645 = vunpack.c.l.b16 %v6943
  %v7646 = vunpack.c.l.b16 %v6944
  %v7647 = vunpack.c.h.b16 %v6944
  %v7648 = vunpack.c.l.b16 %v6945
  %v7649 = vunpack.c.h.b16 %v6945
  %v7650 = vunpack.c.l.b16 %v6946
  %v7651 = vunpack.c.h.b16 %v6946
  %v7652 = vunpack.c.l.b16 %v6947
  %v7653 = vunpack.c.l.b16 %v6948
  %v7654 = vunpack.c.h.b16 %v6948
  %v7655 = vunpack.c.l.b16 %v6949
  %v7656 = vunpack.c.h.b16 %v6949
  %v7657 = vunpack.c.l.b16 %v6950
  %v7658 = vunpack.c.h.b16 %v6950
  %v7659 = vunpack.c.l.b16 %v6951
  %v7660 = vunpack.c.l.b16 %v6952
  %v7661 = vunpack.c.h.b16 %v6952
  %v7662 = vunpack.c.l.b16 %v6953
  %v7663 = vunpack.c.h.b16 %v6953
  %v7664 = vunpack.c.l.b16 %v6954
  %v7665 = vunpack.c.h.b16 %v6954
  %v7666 = vunpack.c.l.b16 %v6955
  %v7667 = vunpack.c.l.b16 %v6956
  %v7668 = vunpack.c.h.b16 %v6956
  %v7669 = vunpack.c.l.b16 %v6957
  %v7670 = vunpack.c.h.b16 %v6957
  %v7671 = vunpack.c.l.b16 %v6958
  %v7672 = vunpack.c.h.b16 %v6958
  %v7673 = vunpack.c.l.b16 %v6959
  %v7674 = vunpack.c.l.b16 %v6960
  %v7675 = vunpack.c.h.b16 %v6960
  %v7676 = vunpack.c.l.b16 %v6961
  %v7677 = vunpack.c.h.b16 %v6961
  %v7678 = vunpack.c.l.b16 %v6962
  %v7679 = vunpack.c.h.b16 %v6962
  %v7680 = vunpack.c.l.b16 %v6963
  %v7681 = vunpack.c.l.b16 %v6964
  %v7682 = vunpack.c.h.b16 %v6964
  %v7683 = vunpack.c.l.b16 %v6965
  %v7684 = vunpack.c.h.b16 %v6965
  %v7685 = vunpack.c.l.b16 %v6966
  %v7686 = vunpack.c.h.b16 %v6966
  %v7687 = vunpack.c.l.b16 %v6967
  %v7688 = vunpack.c.l.b16 %v6968
  %v7689 = vunpack.c.h.b16 %v6968
  %v7690 = vunpack.c.l.b16 %v6969
  %v7691 = vunpack.c.h.b16 %v6969
  %v7692 = vunpack.c.l.b16 %v6970
  %v7693 = vunpack.c.h.b16 %v6970
  %v7694 = vunpack.c.l.b16 %v6971
  %v7695 = vunpack.c.l.b16 %v6972
  %v7696 = vunpack.c.h.b16 %v6972
  %v7697 = vunpack.c.l.b16 %v6973
  %v7698 = vunpack.c.h.b16 %v6973
  %v7699 = vunpack.c.l.b16 %v6974
  %v7700 = vunpack.c.h.b16 %v6974
  %v7701 = vunpack.c.l.b16 %v6975
  %v7702 = vunpack.c.l.b16 %v6976
  %v7703 = vunpack.c.h.b16 %v6976
  %v7704 = vunpack.c.l.b16 %v6977
  %v7705 = vunpack.c.h.b16 %v6977
  %v7706 = vunpack.c.l.b16 %v6978
  %v7707 = vunpack.c.h.b16 %v6978
  %v7708 = vunpack.c.l.b16 %v6979
  %v7709 = vunpack.c.l.b16 %v6980
  %v7710 = vunpack.c.h.b16 %v6980
  %v7711 = vunpack.c.l.b16 %v6981
  %v7712 = vunpack.c.h.b16 %v6981
  %v7713 = vunpack.c.l.b16 %v6982
  %v7714 = vunpack.c.h.b16 %v6982
  %v7715 = vunpack.c.l.b16 %v6983
  %v7716 = vunpack.c.l.b16 %v6984
  %v7717 = vunpack.c.h.b16 %v6984
  %v7718 = vunpack.c.l.b16 %v6985
  %v7719 = vunpack.c.h.b16 %v6985
  %v7720 = vunpack.c.l.b16 %v6986
  %v7721 = vunpack.c.h.b16 %v6986
  %v7722 = vunpack.c.l.b16 %v6987
  %v7723 = vunpack.c.l.b16 %v6988
  %v7724 = vunpack.c.h.b16 %v6988
  %v7725 = vunpack.c.l.b16 %v6989
  %v7726 = vunpack.c.h.b16 %v6989
  %v7727 = vunpack.c.l.b16 %v6990
  %v7728 = vunpack.c.h.b16 %v6990
  %v7729 = vunpack.c.l.b16 %v6991
  %v7730 = vunpack.c.l.b16 %v6992
  %v7731 = vunpack.c.h.b16 %v6992
  %v7732 = vunpack.c.l.b16 %v6993
  %v7733 = vunpack.c.h.b16 %v6993
  %v7734 = vunpack.c.l.b16 %v6994
  %v7735 = vunpack.c.h.b16 %v6994
  %v7736 = vunpack.c.l.b16 %v6995
  %v7737 = vpack.c.b16 %v7296, %v7289
  %v7738 = vpack.c.b16 %v7297, %v7290
  %v7739 = vpack.c.b16 %v7298, %v7291
  %v7740 = vpack.c.b16 %v7299, %v7292
  %v7741 = vpack.c.b16 %v7300, %v7293
  %v7742 = vpack.c.b16 %v7301, %v7294
  %v7743 = vpack.c.b16 %v7302, %v7295
  %v7744 = vpack.c.b16 %v7310, %v7303
  %v7745 = vpack.c.b16 %v7311, %v7304
  %v7746 = vpack.c.b16 %v7312, %v7305
  %v7747 = vpack.c.b16 %v7313, %v7306
  %v7748 = vpack.c.b16 %v7314, %v7307
  %v7749 = vpack.c.b16 %v7315, %v7308
  %v7750 = vpack.c.b16 %v7316, %v7309
  %v7751 = vpack.c.b16 %v7324, %v7317
  %v7752 = vpack.c.b16 %v7325, %v7318
  %v7753 = vpack.c.b16 %v7326, %v7319
  %v7754 = vpack.c.b16 %v7327, %v7320
  %v7755 = vpack.c.b16 %v7328, %v7321
  %v7756 = vpack.c.b16 %v7329, %v7322
  %v7757 = vpack.c.b16 %v7330, %v7323
  %v7758 = vpack.c.b16 %v7338, %v7331
  %v7759 = vpack.c.b16 %v7339, %v7332
  %v7760 = vpack.c.b16 %v7340, %v7333
  %v7761 = vpack.c.b16 %v7341, %v7334
  %v7762 = vpack.c.b16 %v7342, %v7335
  %v7763 = vpack.c.b16 %v7343, %v7336
  %v7764 = vpack.c.b16 %v7344, %v7337
  %v7765 = vpack.c.b16 %v7352, %v7345
  %v7766 = vpack.c.b16 %v7353, %v7346
  %v7767 = vpack.c.b16 %v7354, %v7347
  %v7768 = vpack.c.b16 %v7355, %v7348
  %v7769 = vpack.c.b16 %v7356, %v7349
  %v7770 = vpack.c.b16 %v7357, %v7350
  %v7771 = vpack.c.b16 %v7358, %v7351
  %v7772 = vpack.c.b16 %v7366, %v7359
  %v7773 = vpack.c.b16 %v7367, %v7360
  %v7774 = vpack.c.b16 %v7368, %v7361
  %v7775 = vpack.c.b16 %v7369, %v7362
  %v7776 = vpack.c.b16 %v7370, %v7363
  %v7777 = vpack.c.b16 %v7371, %v7364
  %v7778 = vpack.c.b16 %v7372, %v7365
  %v7779 = vpack.c.b16 %v7380, %v7373
  %v7780 = vpack.c.b16 %v7381, %v7374
  %v7781 = vpack.c.b16 %v7382, %v7375
  %v7782 = vpack.c.b16 %v7383, %v7376
  %v7783 = vpack.c.b16 %v7384, %v7377
  %v7784 = vpack.c.b16 %v7385, %v7378
  %v7785 = vpack.c.b16 %v7386, %v7379
  %v7786 = vpack.c.b16 %v7394, %v7387
  %v7787 = vpack.c.b16 %v7395, %v7388
  %v7788 = vpack.c.b16 %v7396, %v7389
  %v7789 = vpack.c.b16 %v7397, %v7390
  %v7790 = vpack.c.b16 %v7398, %v7391
  %v7791 = vpack.c.b16 %v7399, %v7392
  %v7792 = vpack.c.b16 %v7400, %v7393
  %v7793 = vpack.c.b16 %v7408, %v7401
  %v7794 = vpack.c.b16 %v7409, %v7402
  %v7795 = vpack.c.b16 %v7410, %v7403
  %v7796 = vpack.c.b16 %v7411, %v7404
  %v7797 = vpack.c.b16 %v7412, %v7405
  %v7798 = vpack.c.b16 %v7413, %v7406
  %v7799 = vpack.c.b16 %v7414, %v7407
  %v7800 = vpack.c.b16 %v7422, %v7415
  %v7801 = vpack.c.b16 %v7423, %v7416
  %v7802 = vpack.c.b16 %v7424, %v7417
  %v7803 = vpack.c.b16 %v7425, %v7418
  %v7804 = vpack.c.b16 %v7426, %v7419
  %v7805 = vpack.c.b16 %v7427, %v7420
  %v7806 = vpack.c.b16 %v7428, %v7421
  %v7807 = vpack.c.b16 %v7436, %v7429
  %v7808 = vpack.c.b16 %v7437, %v7430
  %v7809 = vpack.c.b16 %v7438, %v7431
  %v7810 = vpack.c.b16 %v7439, %v7432
  %v7811 = vpack.c.b16 %v7440, %v7433
  %v7812 = vpack.c.b16 %v7441, %v7434
  %v7813 = vpack.c.b16 %v7442, %v7435
  %v7814 = vpack.c.b16 %v7450, %v7443
  %v7815 = vpack.c.b16 %v7451, %v7444
  %v7816 = vpack.c.b16 %v7452, %v7445
  %v7817 = vpack.c.b16 %v7453, %v7446
  %v7818 = vpack.c.b16 %v7454, %v7447
  %v7819 = vpack.c.b16 %v7455, %v7448
  %v7820 = vpack.c.b16 %v7456, %v7449
  %v7821 = vpack.c.b16 %v7464, %v7457
  %v7822 = vpack.c.b16 %v7465, %v7458
  %v7823 = vpack.c.b16 %v7466, %v7459
  %v7824 = vpack.c.b16 %v7467, %v7460
  %v7825 = vpack.c.b16 %v7468, %v7461
  %v7826 = vpack.c.b16 %v7469, %v7462
  %v7827 = vpack.c.b16 %v7470, %v7463
  %v7828 = vpack.c.b16 %v7478, %v7471
  %v7829 = vpack.c.b16 %v7479, %v7472
  %v7830 = vpack.c.b16 %v7480, %v7473
  %v7831 = vpack.c.b16 %v7481, %v7474
  %v7832 = vpack.c.b16 %v7482, %v7475
  %v7833 = vpack.c.b16 %v7483, %v7476
  %v7834 = vpack.c.b16 %v7484, %v7477
  %v7835 = vpack.c.b16 %v7492, %v7485
  %v7836 = vpack.c.b16 %v7493, %v7486
  %v7837 = vpack.c.b16 %v7494, %v7487
  %v7838 = vpack.c.b16 %v7495, %v7488
  %v7839 = vpack.c.b16 %v7496, %v7489
  %v7840 = vpack.c.b16 %v7497, %v7490
  %v7841 = vpack.c.b16 %v7498, %v7491
  %v7842 = vpack.c.b16 %v7506, %v7499
  %v7843 = vpack.c.b16 %v7507, %v7500
  %v7844 = vpack.c.b16 %v7508, %v7501
  %v7845 = vpack.c.b16 %v7509, %v7502
  %v7846 = vpack.c.b16 %v7510, %v7503
  %v7847 = vpack.c.b16 %v7511, %v7504
  %v7848 = vpack.c.b16 %v7512, %v7505
  %v7849 = vpack.c.b16 %v7520, %v7513
  %v7850 = vpack.c.b16 %v7521, %v7514
  %v7851 = vpack.c.b16 %v7522, %v7515
  %v7852 = vpack.c.b16 %v7523, %v7516
  %v7853 = vpack.c.b16 %v7524, %v7517
  %v7854 = vpack.c.b16 %v7525, %v7518
  %v7855 = vpack.c.b16 %v7526, %v7519
  %v7856 = vpack.c.b16 %v7534, %v7527
  %v7857 = vpack.c.b16 %v7535, %v7528
  %v7858 = vpack.c.b16 %v7536, %v7529
  %v7859 = vpack.c.b16 %v7537, %v7530
  %v7860 = vpack.c.b16 %v7538, %v7531
  %v7861 = vpack.c.b16 %v7539, %v7532
  %v7862 = vpack.c.b16 %v7540, %v7533
  %v7863 = vpack.c.b16 %v7548, %v7541
  %v7864 = vpack.c.b16 %v7549, %v7542
  %v7865 = vpack.c.b16 %v7550, %v7543
  %v7866 = vpack.c.b16 %v7551, %v7544
  %v7867 = vpack.c.b16 %v7552, %v7545
  %v7868 = vpack.c.b16 %v7553, %v7546
  %v7869 = vpack.c.b16 %v7554, %v7547
  %v7870 = vpack.c.b16 %v7562, %v7555
  %v7871 = vpack.c.b16 %v7563, %v7556
  %v7872 = vpack.c.b16 %v7564, %v7557
  %v7873 = vpack.c.b16 %v7565, %v7558
  %v7874 = vpack.c.b16 %v7566, %v7559
  %v7875 = vpack.c.b16 %v7567, %v7560
  %v7876 = vpack.c.b16 %v7568, %v7561
  %v7877 = vpack.c.b16 %v7576, %v7569
  %v7878 = vpack.c.b16 %v7577, %v7570
  %v7879 = vpack.c.b16 %v7578, %v7571
  %v7880 = vpack.c.b16 %v7579, %v7572
  %v7881 = vpack.c.b16 %v7580, %v7573
  %v7882 = vpack.c.b16 %v7581, %v7574
  %v7883 = vpack.c.b16 %v7582, %v7575
  %v7884 = vpack.c.b16 %v7590, %v7583
  %v7885 = vpack.c.b16 %v7591, %v7584
  %v7886 = vpack.c.b16 %v7592, %v7585
  %v7887 = vpack.c.b16 %v7593, %v7586
  %v7888 = vpack.c.b16 %v7594, %v7587
  %v7889 = vpack.c.b16 %v7595, %v7588
  %v7890 = vpack.c.b16 %v7596, %v7589
  %v7891 = vpack.c.b16 %v7604, %v7597
  %v7892 = vpack.c.b16 %v7605, %v7598
  %v7893 = vpack.c.b16 %v7606, %v7599
  %v7894 = vpack.c.b16 %v7607, %v7600
  %v7895 = vpack.c.b16 %v7608, %v7601
  %v7896 = vpack.c.b16 %v7609, %v7602
  %v7897 = vpack.c.b16 %v7610, %v7603
  %v7898 = vpack.c.b16 %v7618, %v7611
  %v7899 = vpack.c.b16 %v7619, %v7612
  %v7900 = vpack.c.b16 %v7620, %v7613
  %v7901 = vpack.c.b16 %v7621, %v7614
  %v7902 = vpack.c.b16 %v7622, %v7615
  %v7903 = vpack.c.b16 %v7623, %v7616
  %v7904 = vpack.c.b16 %v7624, %v7617
  %v7905 = vpack.c.b16 %v7632, %v7625
  %v7906 = vpack.c.b16 %v7633, %v7626
  %v7907 = vpack.c.b16 %v7634, %v7627
  %v7908 = vpack.c.b16 %v7635, %v7628
  %v7909 = vpack.c.b16 %v7636, %v7629
  %v7910 = vpack.c.b16 %v7637, %v7630
  %v7911 = vpack.c.b16 %v7638, %v7631
  %v7912 = vpack.c.b16 %v7646, %v7639
  %v7913 = vpack.c.b16 %v7647, %v7640
  %v7914 = vpack.c.b16 %v7648, %v7641
  %v7915 = vpack.c.b16 %v7649, %v7642
  %v7916 = vpack.c.b16 %v7650, %v7643
  %v7917 = vpack.c.b16 %v7651, %v7644
  %v7918 = vpack.c.b16 %v7652, %v7645
  %v7919 = vpack.c.b16 %v7660, %v7653
  %v7920 = vpack.c.b16 %v7661, %v7654
  %v7921 = vpack.c.b16 %v7662, %v7655
  %v7922 = vpack.c.b16 %v7663, %v7656
  %v7923 = vpack.c.b16 %v7664, %v7657
  %v7924 = vpack.c.b16 %v7665, %v7658
  %v7925 = vpack.c.b16 %v7666, %v7659
  %v7926 = vpack.c.b16 %v7674, %v7667
  %v7927 = vpack.c.b16 %v7675, %v7668
  %v7928 = vpack.c.b16 %v7676, %v7669
  %v7929 = vpack.c.b16 %v7677, %v7670
  %v7930 = vpack.c.b16 %v7678, %v7671
  %v7931 = vpack.c.b16 %v7679, %v7672
  %v7932 = vpack.c.b16 %v7680, %v7673
  %v7933 = vpack.c.b16 %v7688, %v7681
  %v7934 = vpack.c.b16 %v7689, %v7682
  %v7935 = vpack.c.b16 %v7690, %v7683
  %v7936 = vpack.c.b16 %v7691, %v7684
  %v7937 = vpack.c.b16 %v7692, %v7685
  %v7938 = vpack.c.b16 %v7693, %v7686
  %v7939 = vpack.c.b16 %v7694, %v7687
  %v7940 = vpack.c.b16 %v7702, %v7695
  %v7941 = vpack.c.b16 %v7703, %v7696
  %v7942 = vpack.c.b16 %v7704, %v7697
  %v7943 = vpack.c.b16 %v7705, %v7698
  %v7944 = vpack.c.b16 %v7706, %v7699
  %v7945 = vpack.c.b16 %v7707, %v7700
  %v7946 = vpack.c.b16 %v7708, %v7701
  %v7947 = vpack.c.b16 %v7716, %v7709
  %v7948 = vpack.c.b16 %v7717, %v7710
  %v7949 = vpack.c.b16 %v7718, %v7711
  %v7950 = vpack.c.b16 %v7719, %v7712
  %v7951 = vpack.c.b16 %v7720, %v7713
  %v7952 = vpack.c.b16 %v7721, %v7714
  %v7953 = vpack.c.b16 %v7722, %v7715
  %v7954 = vpack.c.b16 %v7730, %v7723
  %v7955 = vpack.c.b16 %v7731, %v7724
  %v7956 = vpack.c.b16 %v7732, %v7725
  %v7957 = vpack.c.b16 %v7733, %v7726
  %v7958 = vpack.c.b16 %v7734, %v7727
  %v7959 = vpack.c.b16 %v7735, %v7728
  %v7960 = vpack.c.b16 %v7736, %v7729
  %8185 = vmatprep.subr.bf16.mxu0 %v7738
  %8186 = vmatpush1.bf16.msra.mxu0 %v7737
  %8187 = vmatprep.subr.bf16.mxu0 %v7745
  %8188 = vmatpush1.bf16.msra.mxu0 %v7744
  %8189 = vmatprep.subr.bf16.mxu0 %v7752
  %8190 = vmatpush1.bf16.msra.mxu0 %v7751
  %8191 = vmatprep.subr.bf16.mxu0 %v7759
  %8192 = vmatpush1.bf16.msra.mxu0 %v7758
  %8193 = vmatprep.subr.bf16.mxu0 %v7766
  %8194 = vmatpush1.bf16.msra.mxu0 %v7765
  %8195 = vmatprep.subr.bf16.mxu0 %v7773
  %8196 = vmatpush1.bf16.msra.mxu0 %v7772
  %8197 = vmatprep.subr.bf16.mxu0 %v7780
  %8198 = vmatpush1.bf16.msra.mxu0 %v7779
  %8199 = vmatprep.subr.bf16.mxu0 %v7787
  %8200 = vmatpush1.bf16.msra.mxu0 %v7786
  %8201 = vmatprep.subr.bf16.mxu0 %v7794
  %8202 = vmatpush1.bf16.msra.mxu0 %v7793
  %8203 = vmatprep.subr.bf16.mxu0 %v7801
  %8204 = vmatpush1.bf16.msra.mxu0 %v7800
  %8205 = vmatprep.subr.bf16.mxu0 %v7808
  %8206 = vmatpush1.bf16.msra.mxu0 %v7807
  %8207 = vmatprep.subr.bf16.mxu0 %v7815
  %8208 = vmatpush1.bf16.msra.mxu0 %v7814
  %8209 = vmatprep.subr.bf16.mxu0 %v7822
  %8210 = vmatpush1.bf16.msra.mxu0 %v7821
  %8211 = vmatprep.subr.bf16.mxu0 %v7829
  %8212 = vmatpush1.bf16.msra.mxu0 %v7828
  %8213 = vmatprep.subr.bf16.mxu0 %v7836
  %8214 = vmatpush1.bf16.msra.mxu0 %v7835
  %8215 = vmatprep.subr.bf16.mxu0 %v7843
  %8216 = vmatpush1.bf16.msra.mxu0 %v7842
  %8217 = vmatprep.mubr.bf16.mxu0 %v6717
  %8218 = vmatmul.mubr.bf16.gmra.mrb[0].mxu0 %v6716
  %v8219 = vpop.f32.mrb[0].mxu0
  %v8220 = vadd.f32 %v7001, %v8219
  %v8221 = vpop.f32.mrb[0].mxu0
  %v8222 = vadd.f32 %v7005, %v8221
  %v8223 = vpop.f32.mrb[0].mxu0
  %v8224 = vadd.f32 %v7001, %v8223
  %v8225 = vpop.f32.mrb[0].mxu0
  %v8226 = vadd.f32 %v7005, %v8225
  %8227 = vmatprep.mubr.bf16.mxu0 %v6721
  %8228 = vmatmul.mubr.bf16.gmra.mrb[0].mxu0 %v6720
  %v8229 = vpop.f32.mrb[0].mxu0
  %v8230 = vadd.f32 %v7001, %v8229
  %v8231 = vpop.f32.mrb[0].mxu0
  %v8232 = vadd.f32 %v7005, %v8231
  %v8233 = vpop.f32.mrb[0].mxu0
  %v8234 = vadd.f32 %v7001, %v8233
  %v8235 = vpop.f32.mrb[0].mxu0
  %v8236 = vadd.f32 %v7005, %v8235
  %8237 = vmatprep.mubr.bf16.mxu0 %v6725
  %8238 = vmatmul.mubr.bf16.gmra.mrb[0].mxu0 %v6724
  %v8239 = vpop.f32.mrb[0].mxu0
  %v8240 = vadd.f32 %v7001, %v8239
  %v8241 = vpop.f32.mrb[0].mxu0
  %v8242 = vadd.f32 %v7005, %v8241
  %v8243 = vpop.f32.mrb[0].mxu0
  %v8244 = vadd.f32 %v7001, %v8243
  %v8245 = vpop.f32.mrb[0].mxu0
  %v8246 = vadd.f32 %v7005, %v8245
  %8247 = vmatprep.mubr.bf16.mxu0 %v6729
  %8248 = vmatmul.mubr.bf16.gmra.mrb[0].mxu0 %v6728
  %v8249 = vpop.f32.mrb[0].mxu0
  %v8250 = vadd.f32 %v7001, %v8249
  %v8251 = vpop.f32.mrb[0].mxu0
  %v8252 = vadd.f32 %v7005, %v8251
  %v8253 = vpop.f32.mrb[0].mxu0
  %v8254 = vadd.f32 %v7001, %v8253
  %v8255 = vpop.f32.mrb[0].mxu0
  %v8256 = vadd.f32 %v7005, %v8255
  %8257 = vmatprep.mubr.bf16.mxu0 %v6733
  %8258 = vmatmul.mubr.bf16.gmra.mrb[0].mxu0 %v6732
  %v8259 = vpop.f32.mrb[0].mxu0
  %v8260 = vadd.f32 %v7001, %v8259
  %v8261 = vpop.f32.mrb[0].mxu0
  %v8262 = vadd.f32 %v7005, %v8261
  %v8263 = vpop.f32.mrb[0].mxu0
  %v8264 = vadd.f32 %v7001, %v8263
  %v8265 = vpop.f32.mrb[0].mxu0
  %v8266 = vadd.f32 %v7005, %v8265
  %8267 = vmatprep.mubr.bf16.mxu0 %v6737
  %8268 = vmatmul.mubr.bf16.gmra.mrb[0].mxu0 %v6736
  %v8269 = vpop.f32.mrb[0].mxu0
  %v8270 = vadd.f32 %v7001, %v8269
  %v8271 = vpop.f32.mrb[0].mxu0
  %v8272 = vadd.f32 %v7005, %v8271
  %v8273 = vpop.f32.mrb[0].mxu0
  %v8274 = vpop.f32.mrb[0].mxu0
  %8275 = vdwg.mxu0
  %8276 = vmatprep.subr.bf16.mxu0 %v7850
  %8277 = vmatpush1.bf16.msra.mxu0 %v7849
  %8278 = vmatprep.subr.bf16.mxu0 %v7857
  %8279 = vmatpush1.bf16.msra.mxu0 %v7856
  %8280 = vmatprep.subr.bf16.mxu0 %v7864
  %8281 = vmatpush1.bf16.msra.mxu0 %v7863
  %8282 = vmatprep.subr.bf16.mxu0 %v7871
  %8283 = vmatpush1.bf16.msra.mxu0 %v7870
  %8284 = vmatprep.subr.bf16.mxu0 %v7878
  %8285 = vmatpush1.bf16.msra.mxu0 %v7877
  %8286 = vmatprep.subr.bf16.mxu0 %v7885
  %8287 = vmatpush1.bf16.msra.mxu0 %v7884
  %8288 = vmatprep.subr.bf16.mxu0 %v7892
  %8289 = vmatpush1.bf16.msra.mxu0 %v7891
  %8290 = vmatprep.subr.bf16.mxu0 %v7899
  %8291 = vmatpush1.bf16.msra.mxu0 %v7898
  %8292 = vmatprep.subr.bf16.mxu0 %v7906
  %8293 = vmatpush1.bf16.msra.mxu0 %v7905
  %8294 = vmatprep.subr.bf16.mxu0 %v7913
  %8295 = vmatpush1.bf16.msra.mxu0 %v7912
  %8296 = vmatprep.subr.bf16.mxu0 %v7920
  %8297 = vmatpush1.bf16.msra.mxu0 %v7919
  %8298 = vmatprep.subr.bf16.mxu0 %v7927
  %8299 = vmatpush1.bf16.msra.mxu0 %v7926
  %8300 = vmatprep.subr.bf16.mxu0 %v7934
  %8301 = vmatpush1.bf16.msra.mxu0 %v7933
  %8302 = vmatprep.subr.bf16.mxu0 %v7941
  %8303 = vmatpush1.bf16.msra.mxu0 %v7940
  %8304 = vmatprep.subr.bf16.mxu0 %v7948
  %8305 = vmatpush1.bf16.msra.mxu0 %v7947
  %8306 = vmatprep.subr.bf16.mxu0 %v7955
  %8307 = vmatpush1.bf16.msra.mxu0 %v7954
  %8308 = vmatprep.mubr.bf16.mxu0 %v6719
  %8309 = vmatmul.mubr.bf16.gmra.mrb[0].mxu0 %v6718
  %v8310 = vpop.f32.mrb[0].mxu0
  %v8311 = vadd.f32 %v8220, %v8310
  %v8312 = vpop.f32.mrb[0].mxu0
  %v8313 = vadd.f32 %v8222, %v8312
  %v8314 = vpop.f32.mrb[0].mxu0
  %v8315 = vadd.f32 %v8224, %v8314
  %v8316 = vpop.f32.mrb[0].mxu0
  %v8317 = vadd.f32 %v8226, %v8316
  %8318 = vmatprep.mubr.bf16.mxu0 %v6723
  %8319 = vmatmul.mubr.bf16.gmra.mrb[0].mxu0 %v6722
  %v8320 = vpop.f32.mrb[0].mxu0
  %v8321 = vadd.f32 %v8230, %v8320
  %v8322 = vpop.f32.mrb[0].mxu0
  %v8323 = vadd.f32 %v8232, %v8322
  %v8324 = vpop.f32.mrb[0].mxu0
  %v8325 = vadd.f32 %v8234, %v8324
  %v8326 = vpop.f32.mrb[0].mxu0
  %v8327 = vadd.f32 %v8236, %v8326
  %8328 = vmatprep.mubr.bf16.mxu0 %v6727
  %8329 = vmatmul.mubr.bf16.gmra.mrb[0].mxu0 %v6726
  %v8330 = vpop.f32.mrb[0].mxu0
  %v8331 = vadd.f32 %v8240, %v8330
  %v8332 = vpop.f32.mrb[0].mxu0
  %v8333 = vadd.f32 %v8242, %v8332
  %v8334 = vpop.f32.mrb[0].mxu0
  %v8335 = vadd.f32 %v8244, %v8334
  %v8336 = vpop.f32.mrb[0].mxu0
  %v8337 = vadd.f32 %v8246, %v8336
  %8338 = vmatprep.mubr.bf16.mxu0 %v6731
  %8339 = vmatmul.mubr.bf16.gmra.mrb[0].mxu0 %v6730
  %v8340 = vpop.f32.mrb[0].mxu0
  %v8341 = vadd.f32 %v8250, %v8340
  %v8342 = vpop.f32.mrb[0].mxu0
  %v8343 = vadd.f32 %v8252, %v8342
  %v8344 = vpop.f32.mrb[0].mxu0
  %v8345 = vadd.f32 %v8254, %v8344
  %v8346 = vpop.f32.mrb[0].mxu0
  %v8347 = vadd.f32 %v8256, %v8346
  %8348 = vmatprep.mubr.bf16.mxu0 %v6735
  %8349 = vmatmul.mubr.bf16.gmra.mrb[0].mxu0 %v6734
  %v8350 = vpop.f32.mrb[0].mxu0
  %v8351 = vadd.f32 %v8260, %v8350
  %v8352 = vpop.f32.mrb[0].mxu0
  %v8353 = vadd.f32 %v8262, %v8352
  %v8354 = vpop.f32.mrb[0].mxu0
  %v8355 = vadd.f32 %v8264, %v8354
  %v8356 = vpop.f32.mrb[0].mxu0
  %v8357 = vadd.f32 %v8266, %v8356
  %8358 = vmatprep.mubr.bf16.mxu0 %v6739
  %8359 = vmatmul.mubr.bf16.gmra.mrb[0].mxu0 %v6738
  %v8360 = vpop.f32.mrb[0].mxu0
  %v8361 = vadd.f32 %v8270, %v8360
  %v8362 = vpop.f32.mrb[0].mxu0
  %v8363 = vadd.f32 %v8272, %v8362
  %v8364 = vpop.f32.mrb[0].mxu0
  %v8365 = vpop.f32.mrb[0].mxu0
  %8366 = vdwg.mxu0
  %8367 = vmatprep.subr.bf16.mxu0 %v7740
  %8368 = vmatpush1.bf16.msra.mxu0 %v7739
  %8369 = vmatprep.subr.bf16.mxu0 %v7747
  %8370 = vmatpush1.bf16.msra.mxu0 %v7746
  %8371 = vmatprep.subr.bf16.mxu0 %v7754
  %8372 = vmatpush1.bf16.msra.mxu0 %v7753
  %8373 = vmatprep.subr.bf16.mxu0 %v7761
  %8374 = vmatpush1.bf16.msra.mxu0 %v7760
  %8375 = vmatprep.subr.bf16.mxu0 %v7768
  %8376 = vmatpush1.bf16.msra.mxu0 %v7767
  %8377 = vmatprep.subr.bf16.mxu0 %v7775
  %8378 = vmatpush1.bf16.msra.mxu0 %v7774
  %8379 = vmatprep.subr.bf16.mxu0 %v7782
  %8380 = vmatpush1.bf16.msra.mxu0 %v7781
  %8381 = vmatprep.subr.bf16.mxu0 %v7789
  %8382 = vmatpush1.bf16.msra.mxu0 %v7788
  %8383 = vmatprep.subr.bf16.mxu0 %v7796
  %8384 = vmatpush1.bf16.msra.mxu0 %v7795
  %8385 = vmatprep.subr.bf16.mxu0 %v7803
  %8386 = vmatpush1.bf16.msra.mxu0 %v7802
  %8387 = vmatprep.subr.bf16.mxu0 %v7810
  %8388 = vmatpush1.bf16.msra.mxu0 %v7809
  %8389 = vmatprep.subr.bf16.mxu0 %v7817
  %8390 = vmatpush1.bf16.msra.mxu0 %v7816
  %8391 = vmatprep.subr.bf16.mxu0 %v7824
  %8392 = vmatpush1.bf16.msra.mxu0 %v7823
  %8393 = vmatprep.subr.bf16.mxu0 %v7831
  %8394 = vmatpush1.bf16.msra.mxu0 %v7830
  %8395 = vmatprep.subr.bf16.mxu0 %v7838
  %8396 = vmatpush1.bf16.msra.mxu0 %v7837
  %8397 = vmatprep.subr.bf16.mxu0 %v7845
  %8398 = vmatpush1.bf16.msra.mxu0 %v7844
  %8399 = vmatprep.mubr.bf16.mxu0 %v6717
  %8400 = vmatmul.mubr.bf16.gmra.mrb[0].mxu0 %v6716
  %v8401 = vpop.f32.mrb[0].mxu0
  %v8402 = vadd.f32 %v7009, %v8401
  %v8403 = vpop.f32.mrb[0].mxu0
  %v8404 = vadd.f32 %v7013, %v8403
  %v8405 = vpop.f32.mrb[0].mxu0
  %v8406 = vadd.f32 %v7009, %v8405
  %v8407 = vpop.f32.mrb[0].mxu0
  %v8408 = vadd.f32 %v7013, %v8407
  %8409 = vmatprep.mubr.bf16.mxu0 %v6721
  %8410 = vmatmul.mubr.bf16.gmra.mrb[0].mxu0 %v6720
  %v8411 = vpop.f32.mrb[0].mxu0
  %v8412 = vadd.f32 %v7009, %v8411
  %v8413 = vpop.f32.mrb[0].mxu0
  %v8414 = vadd.f32 %v7013, %v8413
  %v8415 = vpop.f32.mrb[0].mxu0
  %v8416 = vadd.f32 %v7009, %v8415
  %v8417 = vpop.f32.mrb[0].mxu0
  %v8418 = vadd.f32 %v7013, %v8417
  %8419 = vmatprep.mubr.bf16.mxu0 %v6725
  %8420 = vmatmul.mubr.bf16.gmra.mrb[0].mxu0 %v6724
  %v8421 = vpop.f32.mrb[0].mxu0
  %v8422 = vadd.f32 %v7009, %v8421
  %v8423 = vpop.f32.mrb[0].mxu0
  %v8424 = vadd.f32 %v7013, %v8423
  %v8425 = vpop.f32.mrb[0].mxu0
  %v8426 = vadd.f32 %v7009, %v8425
  %v8427 = vpop.f32.mrb[0].mxu0
  %v8428 = vadd.f32 %v7013, %v8427
  %8429 = vmatprep.mubr.bf16.mxu0 %v6729
  %8430 = vmatmul.mubr.bf16.gmra.mrb[0].mxu0 %v6728
  %v8431 = vpop.f32.mrb[0].mxu0
  %v8432 = vadd.f32 %v7009, %v8431
  %v8433 = vpop.f32.mrb[0].mxu0
  %v8434 = vadd.f32 %v7013, %v8433
  %v8435 = vpop.f32.mrb[0].mxu0
  %v8436 = vadd.f32 %v7009, %v8435
  %v8437 = vpop.f32.mrb[0].mxu0
  %v8438 = vadd.f32 %v7013, %v8437
  %8439 = vmatprep.mubr.bf16.mxu0 %v6733
  %8440 = vmatmul.mubr.bf16.gmra.mrb[0].mxu0 %v6732
  %v8441 = vpop.f32.mrb[0].mxu0
  %v8442 = vadd.f32 %v7009, %v8441
  %v8443 = vpop.f32.mrb[0].mxu0
  %v8444 = vadd.f32 %v7013, %v8443
  %v8445 = vpop.f32.mrb[0].mxu0
  %v8446 = vadd.f32 %v7009, %v8445
  %v8447 = vpop.f32.mrb[0].mxu0
  %v8448 = vadd.f32 %v7013, %v8447
  %8449 = vmatprep.mubr.bf16.mxu0 %v6737
  %8450 = vmatmul.mubr.bf16.gmra.mrb[0].mxu0 %v6736
  %v8451 = vpop.f32.mrb[0].mxu0
  %v8452 = vadd.f32 %v7009, %v8451
  %v8453 = vpop.f32.mrb[0].mxu0
  %v8454 = vadd.f32 %v7013, %v8453
  %v8455 = vpop.f32.mrb[0].mxu0
  %v8456 = vpop.f32.mrb[0].mxu0
  %8457 = vdwg.mxu0
  %8458 = vmatprep.subr.bf16.mxu0 %v7852
  %8459 = vmatpush1.bf16.msra.mxu0 %v7851
  %8460 = vmatprep.subr.bf16.mxu0 %v7859
  %8461 = vmatpush1.bf16.msra.mxu0 %v7858
  %8462 = vmatprep.subr.bf16.mxu0 %v7866
  %8463 = vmatpush1.bf16.msra.mxu0 %v7865
  %8464 = vmatprep.subr.bf16.mxu0 %v7873
  %8465 = vmatpush1.bf16.msra.mxu0 %v7872
  %8466 = vmatprep.subr.bf16.mxu0 %v7880
  %8467 = vmatpush1.bf16.msra.mxu0 %v7879
  %8468 = vmatprep.subr.bf16.mxu0 %v7887
  %8469 = vmatpush1.bf16.msra.mxu0 %v7886
  %8470 = vmatprep.subr.bf16.mxu0 %v7894
  %8471 = vmatpush1.bf16.msra.mxu0 %v7893
  %8472 = vmatprep.subr.bf16.mxu0 %v7901
  %8473 = vmatpush1.bf16.msra.mxu0 %v7900
  %8474 = vmatprep.subr.bf16.mxu0 %v7908
  %8475 = vmatpush1.bf16.msra.mxu0 %v7907
  %8476 = vmatprep.subr.bf16.mxu0 %v7915
  %8477 = vmatpush1.bf16.msra.mxu0 %v7914
  %8478 = vmatprep.subr.bf16.mxu0 %v7922
  %8479 = vmatpush1.bf16.msra.mxu0 %v7921
  %8480 = vmatprep.subr.bf16.mxu0 %v7929
  %8481 = vmatpush1.bf16.msra.mxu0 %v7928
  %8482 = vmatprep.subr.bf16.mxu0 %v7936
  %8483 = vmatpush1.bf16.msra.mxu0 %v7935
  %8484 = vmatprep.subr.bf16.mxu0 %v7943
  %8485 = vmatpush1.bf16.msra.mxu0 %v7942
  %8486 = vmatprep.subr.bf16.mxu0 %v7950
  %8487 = vmatpush1.bf16.msra.mxu0 %v7949
  %8488 = vmatprep.subr.bf16.mxu0 %v7957
  %8489 = vmatpush1.bf16.msra.mxu0 %v7956
  %8490 = vmatprep.mubr.bf16.mxu0 %v6719
  %8491 = vmatmul.mubr.bf16.gmra.mrb[0].mxu0 %v6718
  %v8492 = vpop.f32.mrb[0].mxu0
  %v8493 = vadd.f32 %v8402, %v8492
  %v8494 = vpop.f32.mrb[0].mxu0
  %v8495 = vadd.f32 %v8404, %v8494
  %v8496 = vpop.f32.mrb[0].mxu0
  %v8497 = vadd.f32 %v8406, %v8496
  %v8498 = vpop.f32.mrb[0].mxu0
  %v8499 = vadd.f32 %v8408, %v8498
  %8500 = vmatprep.mubr.bf16.mxu0 %v6723
  %8501 = vmatmul.mubr.bf16.gmra.mrb[0].mxu0 %v6722
  %v8502 = vpop.f32.mrb[0].mxu0
  %v8503 = vadd.f32 %v8412, %v8502
  %v8504 = vpop.f32.mrb[0].mxu0
  %v8505 = vadd.f32 %v8414, %v8504
  %v8506 = vpop.f32.mrb[0].mxu0
  %v8507 = vadd.f32 %v8416, %v8506
  %v8508 = vpop.f32.mrb[0].mxu0
  %v8509 = vadd.f32 %v8418, %v8508
  %8510 = vmatprep.mubr.bf16.mxu0 %v6727
  %8511 = vmatmul.mubr.bf16.gmra.mrb[0].mxu0 %v6726
  %v8512 = vpop.f32.mrb[0].mxu0
  %v8513 = vadd.f32 %v8422, %v8512
  %v8514 = vpop.f32.mrb[0].mxu0
  %v8515 = vadd.f32 %v8424, %v8514
  %v8516 = vpop.f32.mrb[0].mxu0
  %v8517 = vadd.f32 %v8426, %v8516
  %v8518 = vpop.f32.mrb[0].mxu0
  %v8519 = vadd.f32 %v8428, %v8518
  %8520 = vmatprep.mubr.bf16.mxu0 %v6731
  %8521 = vmatmul.mubr.bf16.gmra.mrb[0].mxu0 %v6730
  %v8522 = vpop.f32.mrb[0].mxu0
  %v8523 = vadd.f32 %v8432, %v8522
  %v8524 = vpop.f32.mrb[0].mxu0
  %v8525 = vadd.f32 %v8434, %v8524
  %v8526 = vpop.f32.mrb[0].mxu0
  %v8527 = vadd.f32 %v8436, %v8526
  %v8528 = vpop.f32.mrb[0].mxu0
  %v8529 = vadd.f32 %v8438, %v8528
  %8530 = vmatprep.mubr.bf16.mxu0 %v6735
  %8531 = vmatmul.mubr.bf16.gmra.mrb[0].mxu0 %v6734
  %v8532 = vpop.f32.mrb[0].mxu0
  %v8533 = vadd.f32 %v8442, %v8532
  %v8534 = vpop.f32.mrb[0].mxu0
  %v8535 = vadd.f32 %v8444, %v8534
  %v8536 = vpop.f32.mrb[0].mxu0
  %v8537 = vadd.f32 %v8446, %v8536
  %v8538 = vpop.f32.mrb[0].mxu0
  %v8539 = vadd.f32 %v8448, %v8538
  %8540 = vmatprep.mubr.bf16.mxu0 %v6739
  %8541 = vmatmul.mubr.bf16.gmra.mrb[0].mxu0 %v6738
  %v8542 = vpop.f32.mrb[0].mxu0
  %v8543 = vadd.f32 %v8452, %v8542
  %v8544 = vpop.f32.mrb[0].mxu0
  %v8545 = vadd.f32 %v8454, %v8544
  %v8546 = vpop.f32.mrb[0].mxu0
  %v8547 = vpop.f32.mrb[0].mxu0
  %8548 = vdwg.mxu0
  %8549 = vmatprep.subr.bf16.mxu0 %v7742
  %8550 = vmatpush1.bf16.msra.mxu0 %v7741
  %8551 = vmatprep.subr.bf16.mxu0 %v7749
  %8552 = vmatpush1.bf16.msra.mxu0 %v7748
  %8553 = vmatprep.subr.bf16.mxu0 %v7756
  %8554 = vmatpush1.bf16.msra.mxu0 %v7755
  %8555 = vmatprep.subr.bf16.mxu0 %v7763
  %8556 = vmatpush1.bf16.msra.mxu0 %v7762
  %8557 = vmatprep.subr.bf16.mxu0 %v7770
  %8558 = vmatpush1.bf16.msra.mxu0 %v7769
  %8559 = vmatprep.subr.bf16.mxu0 %v7777
  %8560 = vmatpush1.bf16.msra.mxu0 %v7776
  %8561 = vmatprep.subr.bf16.mxu0 %v7784
  %8562 = vmatpush1.bf16.msra.mxu0 %v7783
  %8563 = vmatprep.subr.bf16.mxu0 %v7791
  %8564 = vmatpush1.bf16.msra.mxu0 %v7790
  %8565 = vmatprep.subr.bf16.mxu0 %v7798
  %8566 = vmatpush1.bf16.msra.mxu0 %v7797
  %8567 = vmatprep.subr.bf16.mxu0 %v7805
  %8568 = vmatpush1.bf16.msra.mxu0 %v7804
  %8569 = vmatprep.subr.bf16.mxu0 %v7812
  %8570 = vmatpush1.bf16.msra.mxu0 %v7811
  %8571 = vmatprep.subr.bf16.mxu0 %v7819
  %8572 = vmatpush1.bf16.msra.mxu0 %v7818
  %8573 = vmatprep.subr.bf16.mxu0 %v7826
  %8574 = vmatpush1.bf16.msra.mxu0 %v7825
  %8575 = vmatprep.subr.bf16.mxu0 %v7833
  %8576 = vmatpush1.bf16.msra.mxu0 %v7832
  %8577 = vmatprep.subr.bf16.mxu0 %v7840
  %8578 = vmatpush1.bf16.msra.mxu0 %v7839
  %8579 = vmatprep.subr.bf16.mxu0 %v7847
  %8580 = vmatpush1.bf16.msra.mxu0 %v7846
  %8581 = vmatprep.mubr.bf16.mxu0 %v6717
  %8582 = vmatmul.mubr.bf16.gmra.mrb[0].mxu0 %v6716
  %v8583 = vpop.f32.mrb[0].mxu0
  %v8584 = vadd.f32 %v7017, %v8583
  %v8585 = vpop.f32.mrb[0].mxu0
  %v8586 = vadd.f32 %v7021, %v8585
  %v8587 = vpop.f32.mrb[0].mxu0
  %v8588 = vadd.f32 %v7017, %v8587
  %v8589 = vpop.f32.mrb[0].mxu0
  %v8590 = vadd.f32 %v7021, %v8589
  %8591 = vmatprep.mubr.bf16.mxu0 %v6721
  %8592 = vmatmul.mubr.bf16.gmra.mrb[0].mxu0 %v6720
  %v8593 = vpop.f32.mrb[0].mxu0
  %v8594 = vadd.f32 %v7017, %v8593
  %v8595 = vpop.f32.mrb[0].mxu0
  %v8596 = vadd.f32 %v7021, %v8595
  %v8597 = vpop.f32.mrb[0].mxu0
  %v8598 = vadd.f32 %v7017, %v8597
  %v8599 = vpop.f32.mrb[0].mxu0
  %v8600 = vadd.f32 %v7021, %v8599
  %8601 = vmatprep.mubr.bf16.mxu0 %v6725
  %8602 = vmatmul.mubr.bf16.gmra.mrb[0].mxu0 %v6724
  %v8603 = vpop.f32.mrb[0].mxu0
  %v8604 = vadd.f32 %v7017, %v8603
  %v8605 = vpop.f32.mrb[0].mxu0
  %v8606 = vadd.f32 %v7021, %v8605
  %v8607 = vpop.f32.mrb[0].mxu0
  %v8608 = vadd.f32 %v7017, %v8607
  %v8609 = vpop.f32.mrb[0].mxu0
  %v8610 = vadd.f32 %v7021, %v8609
  %8611 = vmatprep.mubr.bf16.mxu0 %v6729
  %8612 = vmatmul.mubr.bf16.gmra.mrb[0].mxu0 %v6728
  %v8613 = vpop.f32.mrb[0].mxu0
  %v8614 = vadd.f32 %v7017, %v8613
  %v8615 = vpop.f32.mrb[0].mxu0
  %v8616 = vadd.f32 %v7021, %v8615
  %v8617 = vpop.f32.mrb[0].mxu0
  %v8618 = vadd.f32 %v7017, %v8617
  %v8619 = vpop.f32.mrb[0].mxu0
  %v8620 = vadd.f32 %v7021, %v8619
  %8621 = vmatprep.mubr.bf16.mxu0 %v6733
  %8622 = vmatmul.mubr.bf16.gmra.mrb[0].mxu0 %v6732
  %v8623 = vpop.f32.mrb[0].mxu0
  %v8624 = vadd.f32 %v7017, %v8623
  %v8625 = vpop.f32.mrb[0].mxu0
  %v8626 = vadd.f32 %v7021, %v8625
  %v8627 = vpop.f32.mrb[0].mxu0
  %v8628 = vadd.f32 %v7017, %v8627
  %v8629 = vpop.f32.mrb[0].mxu0
  %v8630 = vadd.f32 %v7021, %v8629
  %8631 = vmatprep.mubr.bf16.mxu0 %v6737
  %8632 = vmatmul.mubr.bf16.gmra.mrb[0].mxu0 %v6736
  %v8633 = vpop.f32.mrb[0].mxu0
  %v8634 = vadd.f32 %v7017, %v8633
  %v8635 = vpop.f32.mrb[0].mxu0
  %v8636 = vadd.f32 %v7021, %v8635
  %v8637 = vpop.f32.mrb[0].mxu0
  %v8638 = vpop.f32.mrb[0].mxu0
  %8639 = vdwg.mxu0
  %8640 = vmatprep.subr.bf16.mxu0 %v7854
  %8641 = vmatpush1.bf16.msra.mxu0 %v7853
  %8642 = vmatprep.subr.bf16.mxu0 %v7861
  %8643 = vmatpush1.bf16.msra.mxu0 %v7860
  %8644 = vmatprep.subr.bf16.mxu0 %v7868
  %8645 = vmatpush1.bf16.msra.mxu0 %v7867
  %8646 = vmatprep.subr.bf16.mxu0 %v7875
  %8647 = vmatpush1.bf16.msra.mxu0 %v7874
  %8648 = vmatprep.subr.bf16.mxu0 %v7882
  %8649 = vmatpush1.bf16.msra.mxu0 %v7881
  %8650 = vmatprep.subr.bf16.mxu0 %v7889
  %8651 = vmatpush1.bf16.msra.mxu0 %v7888
  %8652 = vmatprep.subr.bf16.mxu0 %v7896
  %8653 = vmatpush1.bf16.msra.mxu0 %v7895
  %8654 = vmatprep.subr.bf16.mxu0 %v7903
  %8655 = vmatpush1.bf16.msra.mxu0 %v7902
  %8656 = vmatprep.subr.bf16.mxu0 %v7910
  %8657 = vmatpush1.bf16.msra.mxu0 %v7909
  %8658 = vmatprep.subr.bf16.mxu0 %v7917
  %8659 = vmatpush1.bf16.msra.mxu0 %v7916
  %8660 = vmatprep.subr.bf16.mxu0 %v7924
  %8661 = vmatpush1.bf16.msra.mxu0 %v7923
  %8662 = vmatprep.subr.bf16.mxu0 %v7931
  %8663 = vmatpush1.bf16.msra.mxu0 %v7930
  %8664 = vmatprep.subr.bf16.mxu0 %v7938
  %8665 = vmatpush1.bf16.msra.mxu0 %v7937
  %8666 = vmatprep.subr.bf16.mxu0 %v7945
  %8667 = vmatpush1.bf16.msra.mxu0 %v7944
  %8668 = vmatprep.subr.bf16.mxu0 %v7952
  %8669 = vmatpush1.bf16.msra.mxu0 %v7951
  %8670 = vmatprep.subr.bf16.mxu0 %v7959
  %8671 = vmatpush1.bf16.msra.mxu0 %v7958
  %8672 = vmatprep.mubr.bf16.mxu0 %v6719
  %8673 = vmatmul.mubr.bf16.gmra.mrb[0].mxu0 %v6718
  %v8674 = vpop.f32.mrb[0].mxu0
  %v8675 = vadd.f32 %v8584, %v8674
  %v8676 = vpop.f32.mrb[0].mxu0
  %v8677 = vadd.f32 %v8586, %v8676
  %v8678 = vpop.f32.mrb[0].mxu0
  %v8679 = vadd.f32 %v8588, %v8678
  %v8680 = vpop.f32.mrb[0].mxu0
  %v8681 = vadd.f32 %v8590, %v8680
  %8682 = vmatprep.mubr.bf16.mxu0 %v6723
  %8683 = vmatmul.mubr.bf16.gmra.mrb[0].mxu0 %v6722
  %v8684 = vpop.f32.mrb[0].mxu0
  %v8685 = vadd.f32 %v8594, %v8684
  %v8686 = vpop.f32.mrb[0].mxu0
  %v8687 = vadd.f32 %v8596, %v8686
  %v8688 = vpop.f32.mrb[0].mxu0
  %v8689 = vadd.f32 %v8598, %v8688
  %v8690 = vpop.f32.mrb[0].mxu0
  %v8691 = vadd.f32 %v8600, %v8690
  %8692 = vmatprep.mubr.bf16.mxu0 %v6727
  %8693 = vmatmul.mubr.bf16.gmra.mrb[0].mxu0 %v6726
  %v8694 = vpop.f32.mrb[0].mxu0
  %v8695 = vadd.f32 %v8604, %v8694
  %v8696 = vpop.f32.mrb[0].mxu0
  %v8697 = vadd.f32 %v8606, %v8696
  %v8698 = vpop.f32.mrb[0].mxu0
  %v8699 = vadd.f32 %v8608, %v8698
  %v8700 = vpop.f32.mrb[0].mxu0
  %v8701 = vadd.f32 %v8610, %v8700
  %8702 = vmatprep.mubr.bf16.mxu0 %v6731
  %8703 = vmatmul.mubr.bf16.gmra.mrb[0].mxu0 %v6730
  %v8704 = vpop.f32.mrb[0].mxu0
  %v8705 = vadd.f32 %v8614, %v8704
  %v8706 = vpop.f32.mrb[0].mxu0
  %v8707 = vadd.f32 %v8616, %v8706
  %v8708 = vpop.f32.mrb[0].mxu0
  %v8709 = vadd.f32 %v8618, %v8708
  %v8710 = vpop.f32.mrb[0].mxu0
  %v8711 = vadd.f32 %v8620, %v8710
  %8712 = vmatprep.mubr.bf16.mxu0 %v6735
  %8713 = vmatmul.mubr.bf16.gmra.mrb[0].mxu0 %v6734
  %v8714 = vpop.f32.mrb[0].mxu0
  %v8715 = vadd.f32 %v8624, %v8714
  %v8716 = vpop.f32.mrb[0].mxu0
  %v8717 = vadd.f32 %v8626, %v8716
  %v8718 = vpop.f32.mrb[0].mxu0
  %v8719 = vadd.f32 %v8628, %v8718
  %v8720 = vpop.f32.mrb[0].mxu0
  %v8721 = vadd.f32 %v8630, %v8720
  %8722 = vmatprep.mubr.bf16.mxu0 %v6739
  %8723 = vmatmul.mubr.bf16.gmra.mrb[0].mxu0 %v6738
  %v8724 = vpop.f32.mrb[0].mxu0
  %v8725 = vadd.f32 %v8634, %v8724
  %v8726 = vpop.f32.mrb[0].mxu0
  %v8727 = vadd.f32 %v8636, %v8726
  %v8728 = vpop.f32.mrb[0].mxu0
  %v8729 = vpop.f32.mrb[0].mxu0
  %8730 = vdwg.mxu0
  %8731 = vmatprep.subr.bf16.mxu0 0
  %8732 = vmatpush1.bf16.msra.mxu0 %v7743
  %8733 = vmatprep.subr.bf16.mxu0 0
  %8734 = vmatpush1.bf16.msra.mxu0 %v7750
  %8735 = vmatprep.subr.bf16.mxu0 0
  %8736 = vmatpush1.bf16.msra.mxu0 %v7757
  %8737 = vmatprep.subr.bf16.mxu0 0
  %8738 = vmatpush1.bf16.msra.mxu0 %v7764
  %8739 = vmatprep.subr.bf16.mxu0 0
  %8740 = vmatpush1.bf16.msra.mxu0 %v7771
  %8741 = vmatprep.subr.bf16.mxu0 0
  %8742 = vmatpush1.bf16.msra.mxu0 %v7778
  %8743 = vmatprep.subr.bf16.mxu0 0
  %8744 = vmatpush1.bf16.msra.mxu0 %v7785
  %8745 = vmatprep.subr.bf16.mxu0 0
  %8746 = vmatpush1.bf16.msra.mxu0 %v7792
  %8747 = vmatprep.subr.bf16.mxu0 0
  %8748 = vmatpush1.bf16.msra.mxu0 %v7799
  %8749 = vmatprep.subr.bf16.mxu0 0
  %8750 = vmatpush1.bf16.msra.mxu0 %v7806
  %8751 = vmatprep.subr.bf16.mxu0 0
  %8752 = vmatpush1.bf16.msra.mxu0 %v7813
  %8753 = vmatprep.subr.bf16.mxu0 0
  %8754 = vmatpush1.bf16.msra.mxu0 %v7820
  %8755 = vmatprep.subr.bf16.mxu0 0
  %8756 = vmatpush1.bf16.msra.mxu0 %v7827
  %8757 = vmatprep.subr.bf16.mxu0 0
  %8758 = vmatpush1.bf16.msra.mxu0 %v7834
  %8759 = vmatprep.subr.bf16.mxu0 0
  %8760 = vmatpush1.bf16.msra.mxu0 %v7841
  %8761 = vmatprep.subr.bf16.mxu0 0
  %8762 = vmatpush1.bf16.msra.mxu0 %v7848
  %8763 = vmatprep.mubr.bf16.mxu0 %v6717
  %8764 = vmatmul.mubr.bf16.gmra.mrb[0].mxu0 %v6716
  %v8765 = vpop.f32.mrb[0].mxu0
  %v8766 = vadd.f32 %v7025, %v8765
  %v8767 = vpop.f32.mrb[0].mxu0
  %v8768 = vpop.f32.mrb[0].mxu0
  %v8769 = vadd.f32 %v7025, %v8768
  %v8770 = vpop.f32.mrb[0].mxu0
  %8771 = vmatprep.mubr.bf16.mxu0 %v6721
  %8772 = vmatmul.mubr.bf16.gmra.mrb[0].mxu0 %v6720
  %v8773 = vpop.f32.mrb[0].mxu0
  %v8774 = vadd.f32 %v7025, %v8773
  %v8775 = vpop.f32.mrb[0].mxu0
  %v8776 = vpop.f32.mrb[0].mxu0
  %v8777 = vadd.f32 %v7025, %v8776
  %v8778 = vpop.f32.mrb[0].mxu0
  %8779 = vmatprep.mubr.bf16.mxu0 %v6725
  %8780 = vmatmul.mubr.bf16.gmra.mrb[0].mxu0 %v6724
  %v8781 = vpop.f32.mrb[0].mxu0
  %v8782 = vadd.f32 %v7025, %v8781
  %v8783 = vpop.f32.mrb[0].mxu0
  %v8784 = vpop.f32.mrb[0].mxu0
  %v8785 = vadd.f32 %v7025, %v8784
  %v8786 = vpop.f32.mrb[0].mxu0
  %8787 = vmatprep.mubr.bf16.mxu0 %v6729
  %8788 = vmatmul.mubr.bf16.gmra.mrb[0].mxu0 %v6728
  %v8789 = vpop.f32.mrb[0].mxu0
  %v8790 = vadd.f32 %v7025, %v8789
  %v8791 = vpop.f32.mrb[0].mxu0
  %v8792 = vpop.f32.mrb[0].mxu0
  %v8793 = vadd.f32 %v7025, %v8792
  %v8794 = vpop.f32.mrb[0].mxu0
  %8795 = vmatprep.mubr.bf16.mxu0 %v6733
  %8796 = vmatmul.mubr.bf16.gmra.mrb[0].mxu0 %v6732
  %v8797 = vpop.f32.mrb[0].mxu0
  %v8798 = vadd.f32 %v7025, %v8797
  %v8799 = vpop.f32.mrb[0].mxu0
  %v8800 = vpop.f32.mrb[0].mxu0
  %v8801 = vadd.f32 %v7025, %v8800
  %v8802 = vpop.f32.mrb[0].mxu0
  %8803 = vmatprep.mubr.bf16.mxu0 %v6737
  %8804 = vmatmul.mubr.bf16.gmra.mrb[0].mxu0 %v6736
  %v8805 = vpop.f32.mrb[0].mxu0
  %v8806 = vadd.f32 %v7025, %v8805
  %v8807 = vpop.f32.mrb[0].mxu0
  %v8808 = vpop.f32.mrb[0].mxu0
  %v8809 = vpop.f32.mrb[0].mxu0
  %8810 = vdwg.mxu0
  %8811 = vmatprep.subr.bf16.mxu0 0
  %8812 = vmatpush1.bf16.msra.mxu0 %v7855
  %8813 = vmatprep.subr.bf16.mxu0 0
  %8814 = vmatpush1.bf16.msra.mxu0 %v7862
  %8815 = vmatprep.subr.bf16.mxu0 0
  %8816 = vmatpush1.bf16.msra.mxu0 %v7869
  %8817 = vmatprep.subr.bf16.mxu0 0
  %8818 = vmatpush1.bf16.msra.mxu0 %v7876
  %8819 = vmatprep.subr.bf16.mxu0 0
  %8820 = vmatpush1.bf16.msra.mxu0 %v7883
  %8821 = vmatprep.subr.bf16.mxu0 0
  %8822 = vmatpush1.bf16.msra.mxu0 %v7890
  %8823 = vmatprep.subr.bf16.mxu0 0
  %8824 = vmatpush1.bf16.msra.mxu0 %v7897
  %8825 = vmatprep.subr.bf16.mxu0 0
  %8826 = vmatpush1.bf16.msra.mxu0 %v7904
  %8827 = vmatprep.subr.bf16.mxu0 0
  %8828 = vmatpush1.bf16.msra.mxu0 %v7911
  %8829 = vmatprep.subr.bf16.mxu0 0
  %8830 = vmatpush1.bf16.msra.mxu0 %v7918
  %8831 = vmatprep.subr.bf16.mxu0 0
  %8832 = vmatpush1.bf16.msra.mxu0 %v7925
  %8833 = vmatprep.subr.bf16.mxu0 0
  %8834 = vmatpush1.bf16.msra.mxu0 %v7932
  %8835 = vmatprep.subr.bf16.mxu0 0
  %8836 = vmatpush1.bf16.msra.mxu0 %v7939
  %8837 = vmatprep.subr.bf16.mxu0 0
  %8838 = vmatpush1.bf16.msra.mxu0 %v7946
  %8839 = vmatprep.subr.bf16.mxu0 0
  %8840 = vmatpush1.bf16.msra.mxu0 %v7953
  %8841 = vmatprep.subr.bf16.mxu0 0
  %8842 = vmatpush1.bf16.msra.mxu0 %v7960
  %8843 = vmatprep.mubr.bf16.mxu0 %v6719
  %8844 = vmatmul.mubr.bf16.gmra.mrb[0].mxu0 %v6718
  %v8845 = vpop.f32.mrb[0].mxu0
  %v8846 = vadd.f32 %v8766, %v8845
  %v8847 = vpop.f32.mrb[0].mxu0
  %v8848 = vpop.f32.mrb[0].mxu0
  %v8849 = vadd.f32 %v8769, %v8848
  %v8850 = vpop.f32.mrb[0].mxu0
  %8851 = vmatprep.mubr.bf16.mxu0 %v6723
  %8852 = vmatmul.mubr.bf16.gmra.mrb[0].mxu0 %v6722
  %v8853 = vpop.f32.mrb[0].mxu0
  %v8854 = vadd.f32 %v8774, %v8853
  %v8855 = vpop.f32.mrb[0].mxu0
  %v8856 = vpop.f32.mrb[0].mxu0
  %v8857 = vadd.f32 %v8777, %v8856
  %v8858 = vpop.f32.mrb[0].mxu0
  %8859 = vmatprep.mubr.bf16.mxu0 %v6727
  %8860 = vmatmul.mubr.bf16.gmra.mrb[0].mxu0 %v6726
  %v8861 = vpop.f32.mrb[0].mxu0
  %v8862 = vadd.f32 %v8782, %v8861
  %v8863 = vpop.f32.mrb[0].mxu0
  %v8864 = vpop.f32.mrb[0].mxu0
  %v8865 = vadd.f32 %v8785, %v8864
  %v8866 = vpop.f32.mrb[0].mxu0
  %8867 = vmatprep.mubr.bf16.mxu0 %v6731
  %8868 = vmatmul.mubr.bf16.gmra.mrb[0].mxu0 %v6730
  %v8869 = vpop.f32.mrb[0].mxu0
  %v8870 = vadd.f32 %v8790, %v8869
  %v8871 = vpop.f32.mrb[0].mxu0
  %v8872 = vpop.f32.mrb[0].mxu0
  %v8873 = vadd.f32 %v8793, %v8872
  %v8874 = vpop.f32.mrb[0].mxu0
  %8875 = vmatprep.mubr.bf16.mxu0 %v6735
  %8876 = vmatmul.mubr.bf16.gmra.mrb[0].mxu0 %v6734
  %v8877 = vpop.f32.mrb[0].mxu0
  %v8878 = vadd.f32 %v8798, %v8877
  %v8879 = vpop.f32.mrb[0].mxu0
  %v8880 = vpop.f32.mrb[0].mxu0
  %v8881 = vadd.f32 %v8801, %v8880
  %v8882 = vpop.f32.mrb[0].mxu0
  %8883 = vmatprep.mubr.bf16.mxu0 %v6739
  %8884 = vmatmul.mubr.bf16.gmra.mrb[0].mxu0 %v6738
  %v8885 = vpop.f32.mrb[0].mxu0
  %v8886 = vadd.f32 %v8806, %v8885
  %v8887 = vpop.f32.mrb[0].mxu0
  %v8888 = vpop.f32.mrb[0].mxu0
  %v8889 = vpop.f32.mrb[0].mxu0
  %8890 = vdwg.mxu0
  %v8891 = vmax.f32 %v8311, 0.0
  %v8892 = vmax.f32 %v8313, 0.0
  %v8893 = vmax.f32 %v8493, 0.0
  %v8894 = vmax.f32 %v8495, 0.0
  %v8895 = vmax.f32 %v8675, 0.0
  %v8896 = vmax.f32 %v8677, 0.0
  %v8897 = vmax.f32 %v8846, 0.0
  %v8898 = vmax.f32 %v8315, 0.0
  %v8899 = vmax.f32 %v8317, 0.0
  %v8900 = vmax.f32 %v8497, 0.0
  %v8901 = vmax.f32 %v8499, 0.0
  %v8902 = vmax.f32 %v8679, 0.0
  %v8903 = vmax.f32 %v8681, 0.0
  %v8904 = vmax.f32 %v8849, 0.0
  %v8905 = vmax.f32 %v8321, 0.0
  %v8906 = vmax.f32 %v8323, 0.0
  %v8907 = vmax.f32 %v8503, 0.0
  %v8908 = vmax.f32 %v8505, 0.0
  %v8909 = vmax.f32 %v8685, 0.0
  %v8910 = vmax.f32 %v8687, 0.0
  %v8911 = vmax.f32 %v8854, 0.0
  %v8912 = vmax.f32 %v8325, 0.0
  %v8913 = vmax.f32 %v8327, 0.0
  %v8914 = vmax.f32 %v8507, 0.0
  %v8915 = vmax.f32 %v8509, 0.0
  %v8916 = vmax.f32 %v8689, 0.0
  %v8917 = vmax.f32 %v8691, 0.0
  %v8918 = vmax.f32 %v8857, 0.0
  %v8919 = vmax.f32 %v8331, 0.0
  %v8920 = vmax.f32 %v8333, 0.0
  %v8921 = vmax.f32 %v8513, 0.0
  %v8922 = vmax.f32 %v8515, 0.0
  %v8923 = vmax.f32 %v8695, 0.0
  %v8924 = vmax.f32 %v8697, 0.0
  %v8925 = vmax.f32 %v8862, 0.0
  %v8926 = vmax.f32 %v8335, 0.0
  %v8927 = vmax.f32 %v8337, 0.0
  %v8928 = vmax.f32 %v8517, 0.0
  %v8929 = vmax.f32 %v8519, 0.0
  %v8930 = vmax.f32 %v8699, 0.0
  %v8931 = vmax.f32 %v8701, 0.0
  %v8932 = vmax.f32 %v8865, 0.0
  %v8933 = vmax.f32 %v8341, 0.0
  %v8934 = vmax.f32 %v8343, 0.0
  %v8935 = vmax.f32 %v8523, 0.0
  %v8936 = vmax.f32 %v8525, 0.0
  %v8937 = vmax.f32 %v8705, 0.0
  %v8938 = vmax.f32 %v8707, 0.0
  %v8939 = vmax.f32 %v8870, 0.0
  %v8940 = vmax.f32 %v8345, 0.0
  %v8941 = vmax.f32 %v8347, 0.0
  %v8942 = vmax.f32 %v8527, 0.0
  %v8943 = vmax.f32 %v8529, 0.0
  %v8944 = vmax.f32 %v8709, 0.0
  %v8945 = vmax.f32 %v8711, 0.0
  %v8946 = vmax.f32 %v8873, 0.0
  %v8947 = vmax.f32 %v8351, 0.0
  %v8948 = vmax.f32 %v8353, 0.0
  %v8949 = vmax.f32 %v8533, 0.0
  %v8950 = vmax.f32 %v8535, 0.0
  %v8951 = vmax.f32 %v8715, 0.0
  %v8952 = vmax.f32 %v8717, 0.0
  %v8953 = vmax.f32 %v8878, 0.0
  %v8954 = vmax.f32 %v8355, 0.0
  %v8955 = vmax.f32 %v8357, 0.0
  %v8956 = vmax.f32 %v8537, 0.0
  %v8957 = vmax.f32 %v8539, 0.0
  %v8958 = vmax.f32 %v8719, 0.0
  %v8959 = vmax.f32 %v8721, 0.0
  %v8960 = vmax.f32 %v8881, 0.0
  %v8961 = vmax.f32 %v8361, 0.0
  %v8962 = vmax.f32 %v8363, 0.0
  %v8963 = vmax.f32 %v8543, 0.0
  %v8964 = vmax.f32 %v8545, 0.0
  %v8965 = vmax.f32 %v8725, 0.0
  %v8966 = vmax.f32 %v8727, 0.0
  %v8967 = vmax.f32 %v8886, 0.0
  %v8968 = vand.u32 2147483647, %v8311
  %v8969 = vand.u32 2147483647, %v8313
  %v8970 = vand.u32 2147483647, %v8493
  %v8971 = vand.u32 2147483647, %v8495
  %v8972 = vand.u32 2147483647, %v8675
  %v8973 = vand.u32 2147483647, %v8677
  %v8974 = vand.u32 2147483647, %v8846
  %v8975 = vand.u32 2147483647, %v8315
  %v8976 = vand.u32 2147483647, %v8317
  %v8977 = vand.u32 2147483647, %v8497
  %v8978 = vand.u32 2147483647, %v8499
  %v8979 = vand.u32 2147483647, %v8679
  %v8980 = vand.u32 2147483647, %v8681
  %v8981 = vand.u32 2147483647, %v8849
  %v8982 = vand.u32 2147483647, %v8321
  %v8983 = vand.u32 2147483647, %v8323
  %v8984 = vand.u32 2147483647, %v8503
  %v8985 = vand.u32 2147483647, %v8505
  %v8986 = vand.u32 2147483647, %v8685
  %v8987 = vand.u32 2147483647, %v8687
  %v8988 = vand.u32 2147483647, %v8854
  %v8989 = vand.u32 2147483647, %v8325
  %v8990 = vand.u32 2147483647, %v8327
  %v8991 = vand.u32 2147483647, %v8507
  %v8992 = vand.u32 2147483647, %v8509
  %v8993 = vand.u32 2147483647, %v8689
  %v8994 = vand.u32 2147483647, %v8691
  %v8995 = vand.u32 2147483647, %v8857
  %v8996 = vand.u32 2147483647, %v8331
  %v8997 = vand.u32 2147483647, %v8333
  %v8998 = vand.u32 2147483647, %v8513
  %v8999 = vand.u32 2147483647, %v8515
  %v9000 = vand.u32 2147483647, %v8695
  %v9001 = vand.u32 2147483647, %v8697
  %v9002 = vand.u32 2147483647, %v8862
  %v9003 = vand.u32 2147483647, %v8335
  %v9004 = vand.u32 2147483647, %v8337
  %v9005 = vand.u32 2147483647, %v8517
  %v9006 = vand.u32 2147483647, %v8519
  %v9007 = vand.u32 2147483647, %v8699
  %v9008 = vand.u32 2147483647, %v8701
  %v9009 = vand.u32 2147483647, %v8865
  %v9010 = vand.u32 2147483647, %v8341
  %v9011 = vand.u32 2147483647, %v8343
  %v9012 = vand.u32 2147483647, %v8523
  %v9013 = vand.u32 2147483647, %v8525
  %v9014 = vand.u32 2147483647, %v8705
  %v9015 = vand.u32 2147483647, %v8707
  %v9016 = vand.u32 2147483647, %v8870
  %v9017 = vand.u32 2147483647, %v8345
  %v9018 = vand.u32 2147483647, %v8347
  %v9019 = vand.u32 2147483647, %v8527
  %v9020 = vand.u32 2147483647, %v8529
  %v9021 = vand.u32 2147483647, %v8709
  %v9022 = vand.u32 2147483647, %v8711
  %v9023 = vand.u32 2147483647, %v8873
  %v9024 = vand.u32 2147483647, %v8351
  %v9025 = vand.u32 2147483647, %v8353
  %v9026 = vand.u32 2147483647, %v8533
  %v9027 = vand.u32 2147483647, %v8535
  %v9028 = vand.u32 2147483647, %v8715
  %v9029 = vand.u32 2147483647, %v8717
  %v9030 = vand.u32 2147483647, %v8878
  %v9031 = vand.u32 2147483647, %v8355
  %v9032 = vand.u32 2147483647, %v8357
  %v9033 = vand.u32 2147483647, %v8537
  %v9034 = vand.u32 2147483647, %v8539
  %v9035 = vand.u32 2147483647, %v8719
  %v9036 = vand.u32 2147483647, %v8721
  %v9037 = vand.u32 2147483647, %v8881
  %v9038 = vand.u32 2147483647, %v8361
  %v9039 = vand.u32 2147483647, %v8363
  %v9040 = vand.u32 2147483647, %v8543
  %v9041 = vand.u32 2147483647, %v8545
  %v9042 = vand.u32 2147483647, %v8725
  %v9043 = vand.u32 2147483647, %v8727
  %v9044 = vand.u32 2147483647, %v8886
  %v9045 = vsub.f32 0.0, %v8968
  %v9046 = vsub.f32 0.0, %v8969
  %v9047 = vsub.f32 0.0, %v8970
  %v9048 = vsub.f32 0.0, %v8971
  %v9049 = vsub.f32 0.0, %v8972
  %v9050 = vsub.f32 0.0, %v8973
  %v9051 = vsub.f32 0.0, %v8974
  %v9052 = vsub.f32 0.0, %v8975
  %v9053 = vsub.f32 0.0, %v8976
  %v9054 = vsub.f32 0.0, %v8977
  %v9055 = vsub.f32 0.0, %v8978
  %v9056 = vsub.f32 0.0, %v8979
  %v9057 = vsub.f32 0.0, %v8980
  %v9058 = vsub.f32 0.0, %v8981
  %v9059 = vsub.f32 0.0, %v8982
  %v9060 = vsub.f32 0.0, %v8983
  %v9061 = vsub.f32 0.0, %v8984
  %v9062 = vsub.f32 0.0, %v8985
  %v9063 = vsub.f32 0.0, %v8986
  %v9064 = vsub.f32 0.0, %v8987
  %v9065 = vsub.f32 0.0, %v8988
  %v9066 = vsub.f32 0.0, %v8989
  %v9067 = vsub.f32 0.0, %v8990
  %v9068 = vsub.f32 0.0, %v8991
  %v9069 = vsub.f32 0.0, %v8992
  %v9070 = vsub.f32 0.0, %v8993
  %v9071 = vsub.f32 0.0, %v8994
  %v9072 = vsub.f32 0.0, %v8995
  %v9073 = vsub.f32 0.0, %v8996
  %v9074 = vsub.f32 0.0, %v8997
  %v9075 = vsub.f32 0.0, %v8998
  %v9076 = vsub.f32 0.0, %v8999
  %v9077 = vsub.f32 0.0, %v9000
  %v9078 = vsub.f32 0.0, %v9001
  %v9079 = vsub.f32 0.0, %v9002
  %v9080 = vsub.f32 0.0, %v9003
  %v9081 = vsub.f32 0.0, %v9004
  %v9082 = vsub.f32 0.0, %v9005
  %v9083 = vsub.f32 0.0, %v9006
  %v9084 = vsub.f32 0.0, %v9007
  %v9085 = vsub.f32 0.0, %v9008
  %v9086 = vsub.f32 0.0, %v9009
  %v9087 = vsub.f32 0.0, %v9010
  %v9088 = vsub.f32 0.0, %v9011
  %v9089 = vsub.f32 0.0, %v9012
  %v9090 = vsub.f32 0.0, %v9013
  %v9091 = vsub.f32 0.0, %v9014
  %v9092 = vsub.f32 0.0, %v9015
  %v9093 = vsub.f32 0.0, %v9016
  %v9094 = vsub.f32 0.0, %v9017
  %v9095 = vsub.f32 0.0, %v9018
  %v9096 = vsub.f32 0.0, %v9019
  %v9097 = vsub.f32 0.0, %v9020
  %v9098 = vsub.f32 0.0, %v9021
  %v9099 = vsub.f32 0.0, %v9022
  %v9100 = vsub.f32 0.0, %v9023
  %v9101 = vsub.f32 0.0, %v9024
  %v9102 = vsub.f32 0.0, %v9025
  %v9103 = vsub.f32 0.0, %v9026
  %v9104 = vsub.f32 0.0, %v9027
  %v9105 = vsub.f32 0.0, %v9028
  %v9106 = vsub.f32 0.0, %v9029
  %v9107 = vsub.f32 0.0, %v9030
  %v9108 = vsub.f32 0.0, %v9031
  %v9109 = vsub.f32 0.0, %v9032
  %v9110 = vsub.f32 0.0, %v9033
  %v9111 = vsub.f32 0.0, %v9034
  %v9112 = vsub.f32 0.0, %v9035
  %v9113 = vsub.f32 0.0, %v9036
  %v9114 = vsub.f32 0.0, %v9037
  %v9115 = vsub.f32 0.0, %v9038
  %v9116 = vsub.f32 0.0, %v9039
  %v9117 = vsub.f32 0.0, %v9040
  %v9118 = vsub.f32 0.0, %v9041
  %v9119 = vsub.f32 0.0, %v9042
  %v9120 = vsub.f32 0.0, %v9043
  %v9121 = vsub.f32 0.0, %v9044
  %v9122 = vmul.f32 %v9045, 1.442695
  %v9123 = vpow.pop %v9122
  %v9124 = vmul.f32 %v9046, 1.442695
  %v9125 = vpow.pop %v9124
  %v9126 = vmul.f32 %v9047, 1.442695
  %v9127 = vpow.pop %v9126
  %v9128 = vmul.f32 %v9048, 1.442695
  %v9129 = vpow.pop %v9128
  %v9130 = vmul.f32 %v9049, 1.442695
  %v9131 = vpow.pop %v9130
  %v9132 = vmul.f32 %v9050, 1.442695
  %v9133 = vpow.pop %v9132
  %v9134 = vmul.f32 %v9051, 1.442695
  %v9135 = vpow.pop %v9134
  %v9136 = vmul.f32 %v9052, 1.442695
  %v9137 = vpow.pop %v9136
  %v9138 = vmul.f32 %v9053, 1.442695
  %v9139 = vpow.pop %v9138
  %v9140 = vmul.f32 %v9054, 1.442695
  %v9141 = vpow.pop %v9140
  %v9142 = vmul.f32 %v9055, 1.442695
  %v9143 = vpow.pop %v9142
  %v9144 = vmul.f32 %v9056, 1.442695
  %v9145 = vpow.pop %v9144
  %v9146 = vmul.f32 %v9057, 1.442695
  %v9147 = vpow.pop %v9146
  %v9148 = vmul.f32 %v9058, 1.442695
  %v9149 = vpow.pop %v9148
  %v9150 = vmul.f32 %v9059, 1.442695
  %v9151 = vpow.pop %v9150
  %v9152 = vmul.f32 %v9060, 1.442695
  %v9153 = vpow.pop %v9152
  %v9154 = vmul.f32 %v9061, 1.442695
  %v9155 = vpow.pop %v9154
  %v9156 = vmul.f32 %v9062, 1.442695
  %v9157 = vpow.pop %v9156
  %v9158 = vmul.f32 %v9063, 1.442695
  %v9159 = vpow.pop %v9158
  %v9160 = vmul.f32 %v9064, 1.442695
  %v9161 = vpow.pop %v9160
  %v9162 = vmul.f32 %v9065, 1.442695
  %v9163 = vpow.pop %v9162
  %v9164 = vmul.f32 %v9066, 1.442695
  %v9165 = vpow.pop %v9164
  %v9166 = vmul.f32 %v9067, 1.442695
  %v9167 = vpow.pop %v9166
  %v9168 = vmul.f32 %v9068, 1.442695
  %v9169 = vpow.pop %v9168
  %v9170 = vmul.f32 %v9069, 1.442695
  %v9171 = vpow.pop %v9170
  %v9172 = vmul.f32 %v9070, 1.442695
  %v9173 = vpow.pop %v9172
  %v9174 = vmul.f32 %v9071, 1.442695
  %v9175 = vpow.pop %v9174
  %v9176 = vmul.f32 %v9072, 1.442695
  %v9177 = vpow.pop %v9176
  %v9178 = vmul.f32 %v9073, 1.442695
  %v9179 = vpow.pop %v9178
  %v9180 = vmul.f32 %v9074, 1.442695
  %v9181 = vpow.pop %v9180
  %v9182 = vmul.f32 %v9075, 1.442695
  %v9183 = vpow.pop %v9182
  %v9184 = vmul.f32 %v9076, 1.442695
  %v9185 = vpow.pop %v9184
  %v9186 = vmul.f32 %v9077, 1.442695
  %v9187 = vpow.pop %v9186
  %v9188 = vmul.f32 %v9078, 1.442695
  %v9189 = vpow.pop %v9188
  %v9190 = vmul.f32 %v9079, 1.442695
  %v9191 = vpow.pop %v9190
  %v9192 = vmul.f32 %v9080, 1.442695
  %v9193 = vpow.pop %v9192
  %v9194 = vmul.f32 %v9081, 1.442695
  %v9195 = vpow.pop %v9194
  %v9196 = vmul.f32 %v9082, 1.442695
  %v9197 = vpow.pop %v9196
  %v9198 = vmul.f32 %v9083, 1.442695
  %v9199 = vpow.pop %v9198
  %v9200 = vmul.f32 %v9084, 1.442695
  %v9201 = vpow.pop %v9200
  %v9202 = vmul.f32 %v9085, 1.442695
  %v9203 = vpow.pop %v9202
  %v9204 = vmul.f32 %v9086, 1.442695
  %v9205 = vpow.pop %v9204
  %v9206 = vmul.f32 %v9087, 1.442695
  %v9207 = vpow.pop %v9206
  %v9208 = vmul.f32 %v9088, 1.442695
  %v9209 = vpow.pop %v9208
  %v9210 = vmul.f32 %v9089, 1.442695
  %v9211 = vpow.pop %v9210
  %v9212 = vmul.f32 %v9090, 1.442695
  %v9213 = vpow.pop %v9212
  %v9214 = vmul.f32 %v9091, 1.442695
  %v9215 = vpow.pop %v9214
  %v9216 = vmul.f32 %v9092, 1.442695
  %v9217 = vpow.pop %v9216
  %v9218 = vmul.f32 %v9093, 1.442695
  %v9219 = vpow.pop %v9218
  %v9220 = vmul.f32 %v9094, 1.442695
  %v9221 = vpow.pop %v9220
  %v9222 = vmul.f32 %v9095, 1.442695
  %v9223 = vpow.pop %v9222
  %v9224 = vmul.f32 %v9096, 1.442695
  %v9225 = vpow.pop %v9224
  %v9226 = vmul.f32 %v9097, 1.442695
  %v9227 = vpow.pop %v9226
  %v9228 = vmul.f32 %v9098, 1.442695
  %v9229 = vpow.pop %v9228
  %v9230 = vmul.f32 %v9099, 1.442695
  %v9231 = vpow.pop %v9230
  %v9232 = vmul.f32 %v9100, 1.442695
  %v9233 = vpow.pop %v9232
  %v9234 = vmul.f32 %v9101, 1.442695
  %v9235 = vpow.pop %v9234
  %v9236 = vmul.f32 %v9102, 1.442695
  %v9237 = vpow.pop %v9236
  %v9238 = vmul.f32 %v9103, 1.442695
  %v9239 = vpow.pop %v9238
  %v9240 = vmul.f32 %v9104, 1.442695
  %v9241 = vpow.pop %v9240
  %v9242 = vmul.f32 %v9105, 1.442695
  %v9243 = vpow.pop %v9242
  %v9244 = vmul.f32 %v9106, 1.442695
  %v9245 = vpow.pop %v9244
  %v9246 = vmul.f32 %v9107, 1.442695
  %v9247 = vpow.pop %v9246
  %v9248 = vmul.f32 %v9108, 1.442695
  %v9249 = vpow.pop %v9248
  %v9250 = vmul.f32 %v9109, 1.442695
  %v9251 = vpow.pop %v9250
  %v9252 = vmul.f32 %v9110, 1.442695
  %v9253 = vpow.pop %v9252
  %v9254 = vmul.f32 %v9111, 1.442695
  %v9255 = vpow.pop %v9254
  %v9256 = vmul.f32 %v9112, 1.442695
  %v9257 = vpow.pop %v9256
  %v9258 = vmul.f32 %v9113, 1.442695
  %v9259 = vpow.pop %v9258
  %v9260 = vmul.f32 %v9114, 1.442695
  %v9261 = vpow.pop %v9260
  %v9262 = vmul.f32 %v9115, 1.442695
  %v9263 = vpow.pop %v9262
  %v9264 = vmul.f32 %v9116, 1.442695
  %v9265 = vpow.pop %v9264
  %v9266 = vmul.f32 %v9117, 1.442695
  %v9267 = vpow.pop %v9266
  %v9268 = vmul.f32 %v9118, 1.442695
  %v9269 = vpow.pop %v9268
  %v9270 = vmul.f32 %v9119, 1.442695
  %v9271 = vpow.pop %v9270
  %v9272 = vmul.f32 %v9120, 1.442695
  %v9273 = vpow.pop %v9272
  %v9274 = vmul.f32 %v9121, 1.442695
  %v9275 = vpow.pop %v9274
  %v9276 = vadd.f32 %v9123, 1.0
  %v9277 = vadd.f32 %v9125, 1.0
  %v9278 = vadd.f32 %v9127, 1.0
  %v9279 = vadd.f32 %v9129, 1.0
  %v9280 = vadd.f32 %v9131, 1.0
  %v9281 = vadd.f32 %v9133, 1.0
  %v9282 = vadd.f32 %v9135, 1.0
  %v9283 = vadd.f32 %v9137, 1.0
  %v9284 = vadd.f32 %v9139, 1.0
  %v9285 = vadd.f32 %v9141, 1.0
  %v9286 = vadd.f32 %v9143, 1.0
  %v9287 = vadd.f32 %v9145, 1.0
  %v9288 = vadd.f32 %v9147, 1.0
  %v9289 = vadd.f32 %v9149, 1.0
  %v9290 = vadd.f32 %v9151, 1.0
  %v9291 = vadd.f32 %v9153, 1.0
  %v9292 = vadd.f32 %v9155, 1.0
  %v9293 = vadd.f32 %v9157, 1.0
  %v9294 = vadd.f32 %v9159, 1.0
  %v9295 = vadd.f32 %v9161, 1.0
  %v9296 = vadd.f32 %v9163, 1.0
  %v9297 = vadd.f32 %v9165, 1.0
  %v9298 = vadd.f32 %v9167, 1.0
  %v9299 = vadd.f32 %v9169, 1.0
  %v9300 = vadd.f32 %v9171, 1.0
  %v9301 = vadd.f32 %v9173, 1.0
  %v9302 = vadd.f32 %v9175, 1.0
  %v9303 = vadd.f32 %v9177, 1.0
  %v9304 = vadd.f32 %v9179, 1.0
  %v9305 = vadd.f32 %v9181, 1.0
  %v9306 = vadd.f32 %v9183, 1.0
  %v9307 = vadd.f32 %v9185, 1.0
  %v9308 = vadd.f32 %v9187, 1.0
  %v9309 = vadd.f32 %v9189, 1.0
  %v9310 = vadd.f32 %v9191, 1.0
  %v9311 = vadd.f32 %v9193, 1.0
  %v9312 = vadd.f32 %v9195, 1.0
  %v9313 = vadd.f32 %v9197, 1.0
  %v9314 = vadd.f32 %v9199, 1.0
  %v9315 = vadd.f32 %v9201, 1.0
  %v9316 = vadd.f32 %v9203, 1.0
  %v9317 = vadd.f32 %v9205, 1.0
  %v9318 = vadd.f32 %v9207, 1.0
  %v9319 = vadd.f32 %v9209, 1.0
  %v9320 = vadd.f32 %v9211, 1.0
  %v9321 = vadd.f32 %v9213, 1.0
  %v9322 = vadd.f32 %v9215, 1.0
  %v9323 = vadd.f32 %v9217, 1.0
  %v9324 = vadd.f32 %v9219, 1.0
  %v9325 = vadd.f32 %v9221, 1.0
  %v9326 = vadd.f32 %v9223, 1.0
  %v9327 = vadd.f32 %v9225, 1.0
  %v9328 = vadd.f32 %v9227, 1.0
  %v9329 = vadd.f32 %v9229, 1.0
  %v9330 = vadd.f32 %v9231, 1.0
  %v9331 = vadd.f32 %v9233, 1.0
  %v9332 = vadd.f32 %v9235, 1.0
  %v9333 = vadd.f32 %v9237, 1.0
  %v9334 = vadd.f32 %v9239, 1.0
  %v9335 = vadd.f32 %v9241, 1.0
  %v9336 = vadd.f32 %v9243, 1.0
  %v9337 = vadd.f32 %v9245, 1.0
  %v9338 = vadd.f32 %v9247, 1.0
  %v9339 = vadd.f32 %v9249, 1.0
  %v9340 = vadd.f32 %v9251, 1.0
  %v9341 = vadd.f32 %v9253, 1.0
  %v9342 = vadd.f32 %v9255, 1.0
  %v9343 = vadd.f32 %v9257, 1.0
  %v9344 = vadd.f32 %v9259, 1.0
  %v9345 = vadd.f32 %v9261, 1.0
  %v9346 = vadd.f32 %v9263, 1.0
  %v9347 = vadd.f32 %v9265, 1.0
  %v9348 = vadd.f32 %v9267, 1.0
  %v9349 = vadd.f32 %v9269, 1.0
  %v9350 = vadd.f32 %v9271, 1.0
  %v9351 = vadd.f32 %v9273, 1.0
  %v9352 = vadd.f32 %v9275, 1.0
  %v9353 = vlog2.pop %v9276
  %v9354 = vmul.f32 %v9353, 0.6931472
  %v9355 = vlog2.pop %v9277
  %v9356 = vmul.f32 %v9355, 0.6931472
  %v9357 = vlog2.pop %v9278
  %v9358 = vmul.f32 %v9357, 0.6931472
  %v9359 = vlog2.pop %v9279
  %v9360 = vmul.f32 %v9359, 0.6931472
  %v9361 = vlog2.pop %v9280
  %v9362 = vmul.f32 %v9361, 0.6931472
  %v9363 = vlog2.pop %v9281
  %v9364 = vmul.f32 %v9363, 0.6931472
  %v9365 = vlog2.pop %v9282
  %v9366 = vmul.f32 %v9365, 0.6931472
  %v9367 = vlog2.pop %v9283
  %v9368 = vmul.f32 %v9367, 0.6931472
  %v9369 = vlog2.pop %v9284
  %v9370 = vmul.f32 %v9369, 0.6931472
  %v9371 = vlog2.pop %v9285
  %v9372 = vmul.f32 %v9371, 0.6931472
  %v9373 = vlog2.pop %v9286
  %v9374 = vmul.f32 %v9373, 0.6931472
  %v9375 = vlog2.pop %v9287
  %v9376 = vmul.f32 %v9375, 0.6931472
  %v9377 = vlog2.pop %v9288
  %v9378 = vmul.f32 %v9377, 0.6931472
  %v9379 = vlog2.pop %v9289
  %v9380 = vmul.f32 %v9379, 0.6931472
  %v9381 = vlog2.pop %v9290
  %v9382 = vmul.f32 %v9381, 0.6931472
  %v9383 = vlog2.pop %v9291
  %v9384 = vmul.f32 %v9383, 0.6931472
  %v9385 = vlog2.pop %v9292
  %v9386 = vmul.f32 %v9385, 0.6931472
  %v9387 = vlog2.pop %v9293
  %v9388 = vmul.f32 %v9387, 0.6931472
  %v9389 = vlog2.pop %v9294
  %v9390 = vmul.f32 %v9389, 0.6931472
  %v9391 = vlog2.pop %v9295
  %v9392 = vmul.f32 %v9391, 0.6931472
  %v9393 = vlog2.pop %v9296
  %v9394 = vmul.f32 %v9393, 0.6931472
  %v9395 = vlog2.pop %v9297
  %v9396 = vmul.f32 %v9395, 0.6931472
  %v9397 = vlog2.pop %v9298
  %v9398 = vmul.f32 %v9397, 0.6931472
  %v9399 = vlog2.pop %v9299
  %v9400 = vmul.f32 %v9399, 0.6931472
  %v9401 = vlog2.pop %v9300
  %v9402 = vmul.f32 %v9401, 0.6931472
  %v9403 = vlog2.pop %v9301
  %v9404 = vmul.f32 %v9403, 0.6931472
  %v9405 = vlog2.pop %v9302
  %v9406 = vmul.f32 %v9405, 0.6931472
  %v9407 = vlog2.pop %v9303
  %v9408 = vmul.f32 %v9407, 0.6931472
  %v9409 = vlog2.pop %v9304
  %v9410 = vmul.f32 %v9409, 0.6931472
  %v9411 = vlog2.pop %v9305
  %v9412 = vmul.f32 %v9411, 0.6931472
  %v9413 = vlog2.pop %v9306
  %v9414 = vmul.f32 %v9413, 0.6931472
  %v9415 = vlog2.pop %v9307
  %v9416 = vmul.f32 %v9415, 0.6931472
  %v9417 = vlog2.pop %v9308
  %v9418 = vmul.f32 %v9417, 0.6931472
  %v9419 = vlog2.pop %v9309
  %v9420 = vmul.f32 %v9419, 0.6931472
  %v9421 = vlog2.pop %v9310
  %v9422 = vmul.f32 %v9421, 0.6931472
  %v9423 = vlog2.pop %v9311
  %v9424 = vmul.f32 %v9423, 0.6931472
  %v9425 = vlog2.pop %v9312
  %v9426 = vmul.f32 %v9425, 0.6931472
  %v9427 = vlog2.pop %v9313
  %v9428 = vmul.f32 %v9427, 0.6931472
  %v9429 = vlog2.pop %v9314
  %v9430 = vmul.f32 %v9429, 0.6931472
  %v9431 = vlog2.pop %v9315
  %v9432 = vmul.f32 %v9431, 0.6931472
  %v9433 = vlog2.pop %v9316
  %v9434 = vmul.f32 %v9433, 0.6931472
  %v9435 = vlog2.pop %v9317
  %v9436 = vmul.f32 %v9435, 0.6931472
  %v9437 = vlog2.pop %v9318
  %v9438 = vmul.f32 %v9437, 0.6931472
  %v9439 = vlog2.pop %v9319
  %v9440 = vmul.f32 %v9439, 0.6931472
  %v9441 = vlog2.pop %v9320
  %v9442 = vmul.f32 %v9441, 0.6931472
  %v9443 = vlog2.pop %v9321
  %v9444 = vmul.f32 %v9443, 0.6931472
  %v9445 = vlog2.pop %v9322
  %v9446 = vmul.f32 %v9445, 0.6931472
  %v9447 = vlog2.pop %v9323
  %v9448 = vmul.f32 %v9447, 0.6931472
  %v9449 = vlog2.pop %v9324
  %v9450 = vmul.f32 %v9449, 0.6931472
  %v9451 = vlog2.pop %v9325
  %v9452 = vmul.f32 %v9451, 0.6931472
  %v9453 = vlog2.pop %v9326
  %v9454 = vmul.f32 %v9453, 0.6931472
  %v9455 = vlog2.pop %v9327
  %v9456 = vmul.f32 %v9455, 0.6931472
  %v9457 = vlog2.pop %v9328
  %v9458 = vmul.f32 %v9457, 0.6931472
  %v9459 = vlog2.pop %v9329
  %v9460 = vmul.f32 %v9459, 0.6931472
  %v9461 = vlog2.pop %v9330
  %v9462 = vmul.f32 %v9461, 0.6931472
  %v9463 = vlog2.pop %v9331
  %v9464 = vmul.f32 %v9463, 0.6931472
  %v9465 = vlog2.pop %v9332
  %v9466 = vmul.f32 %v9465, 0.6931472
  %v9467 = vlog2.pop %v9333
  %v9468 = vmul.f32 %v9467, 0.6931472
  %v9469 = vlog2.pop %v9334
  %v9470 = vmul.f32 %v9469, 0.6931472
  %v9471 = vlog2.pop %v9335
  %v9472 = vmul.f32 %v9471, 0.6931472
  %v9473 = vlog2.pop %v9336
  %v9474 = vmul.f32 %v9473, 0.6931472
  %v9475 = vlog2.pop %v9337
  %v9476 = vmul.f32 %v9475, 0.6931472
  %v9477 = vlog2.pop %v9338
  %v9478 = vmul.f32 %v9477, 0.6931472
  %v9479 = vlog2.pop %v9339
  %v9480 = vmul.f32 %v9479, 0.6931472
  %v9481 = vlog2.pop %v9340
  %v9482 = vmul.f32 %v9481, 0.6931472
  %v9483 = vlog2.pop %v9341
  %v9484 = vmul.f32 %v9483, 0.6931472
  %v9485 = vlog2.pop %v9342
  %v9486 = vmul.f32 %v9485, 0.6931472
  %v9487 = vlog2.pop %v9343
  %v9488 = vmul.f32 %v9487, 0.6931472
  %v9489 = vlog2.pop %v9344
  %v9490 = vmul.f32 %v9489, 0.6931472
  %v9491 = vlog2.pop %v9345
  %v9492 = vmul.f32 %v9491, 0.6931472
  %v9493 = vlog2.pop %v9346
  %v9494 = vmul.f32 %v9493, 0.6931472
  %v9495 = vlog2.pop %v9347
  %v9496 = vmul.f32 %v9495, 0.6931472
  %v9497 = vlog2.pop %v9348
  %v9498 = vmul.f32 %v9497, 0.6931472
  %v9499 = vlog2.pop %v9349
  %v9500 = vmul.f32 %v9499, 0.6931472
  %v9501 = vlog2.pop %v9350
  %v9502 = vmul.f32 %v9501, 0.6931472
  %v9503 = vlog2.pop %v9351
  %v9504 = vmul.f32 %v9503, 0.6931472
  %v9505 = vlog2.pop %v9352
  %v9506 = vmul.f32 %v9505, 0.6931472
  %v9507 = vadd.f32 %v8891, %v9354
  %v9508 = vadd.f32 %v8892, %v9356
  %v9509 = vadd.f32 %v8893, %v9358
  %v9510 = vadd.f32 %v8894, %v9360
  %v9511 = vadd.f32 %v8895, %v9362
  %v9512 = vadd.f32 %v8896, %v9364
  %v9513 = vadd.f32 %v8897, %v9366
  %v9514 = vadd.f32 %v8898, %v9368
  %v9515 = vadd.f32 %v8899, %v9370
  %v9516 = vadd.f32 %v8900, %v9372
  %v9517 = vadd.f32 %v8901, %v9374
  %v9518 = vadd.f32 %v8902, %v9376
  %v9519 = vadd.f32 %v8903, %v9378
  %v9520 = vadd.f32 %v8904, %v9380
  %v9521 = vadd.f32 %v8905, %v9382
  %v9522 = vadd.f32 %v8906, %v9384
  %v9523 = vadd.f32 %v8907, %v9386
  %v9524 = vadd.f32 %v8908, %v9388
  %v9525 = vadd.f32 %v8909, %v9390
  %v9526 = vadd.f32 %v8910, %v9392
  %v9527 = vadd.f32 %v8911, %v9394
  %v9528 = vadd.f32 %v8912, %v9396
  %v9529 = vadd.f32 %v8913, %v9398
  %v9530 = vadd.f32 %v8914, %v9400
  %v9531 = vadd.f32 %v8915, %v9402
  %v9532 = vadd.f32 %v8916, %v9404
  %v9533 = vadd.f32 %v8917, %v9406
  %v9534 = vadd.f32 %v8918, %v9408
  %v9535 = vadd.f32 %v8919, %v9410
  %v9536 = vadd.f32 %v8920, %v9412
  %v9537 = vadd.f32 %v8921, %v9414
  %v9538 = vadd.f32 %v8922, %v9416
  %v9539 = vadd.f32 %v8923, %v9418
  %v9540 = vadd.f32 %v8924, %v9420
  %v9541 = vadd.f32 %v8925, %v9422
  %v9542 = vadd.f32 %v8926, %v9424
  %v9543 = vadd.f32 %v8927, %v9426
  %v9544 = vadd.f32 %v8928, %v9428
  %v9545 = vadd.f32 %v8929, %v9430
  %v9546 = vadd.f32 %v8930, %v9432
  %v9547 = vadd.f32 %v8931, %v9434
  %v9548 = vadd.f32 %v8932, %v9436
  %v9549 = vadd.f32 %v8933, %v9438
  %v9550 = vadd.f32 %v8934, %v9440
  %v9551 = vadd.f32 %v8935, %v9442
  %v9552 = vadd.f32 %v8936, %v9444
  %v9553 = vadd.f32 %v8937, %v9446
  %v9554 = vadd.f32 %v8938, %v9448
  %v9555 = vadd.f32 %v8939, %v9450
  %v9556 = vadd.f32 %v8940, %v9452
  %v9557 = vadd.f32 %v8941, %v9454
  %v9558 = vadd.f32 %v8942, %v9456
  %v9559 = vadd.f32 %v8943, %v9458
  %v9560 = vadd.f32 %v8944, %v9460
  %v9561 = vadd.f32 %v8945, %v9462
  %v9562 = vadd.f32 %v8946, %v9464
  %v9563 = vadd.f32 %v8947, %v9466
  %v9564 = vadd.f32 %v8948, %v9468
  %v9565 = vadd.f32 %v8949, %v9470
  %v9566 = vadd.f32 %v8950, %v9472
  %v9567 = vadd.f32 %v8951, %v9474
  %v9568 = vadd.f32 %v8952, %v9476
  %v9569 = vadd.f32 %v8953, %v9478
  %v9570 = vadd.f32 %v8954, %v9480
  %v9571 = vadd.f32 %v8955, %v9482
  %v9572 = vadd.f32 %v8956, %v9484
  %v9573 = vadd.f32 %v8957, %v9486
  %v9574 = vadd.f32 %v8958, %v9488
  %v9575 = vadd.f32 %v8959, %v9490
  %v9576 = vadd.f32 %v8960, %v9492
  %v9577 = vadd.f32 %v8961, %v9494
  %v9578 = vadd.f32 %v8962, %v9496
  %v9579 = vadd.f32 %v8963, %v9498
  %v9580 = vadd.f32 %v8964, %v9500
  %v9581 = vadd.f32 %v8965, %v9502
  %v9582 = vadd.f32 %v8966, %v9504
  %v9583 = vadd.f32 %v8967, %v9506
  %v9584 = vunpack.c.l.bf16 %v83
  %v9585 = vunpack.c.h.bf16 %v83
  %v9586 = vunpack.c.l.bf16 %v84
  %v9587 = vunpack.c.h.bf16 %v84
  %v9588 = vunpack.c.l.bf16 %v85
  %v9589 = vunpack.c.h.bf16 %v85
  %v9590 = vunpack.c.l.bf16 %v86
  %v9591 = vunpack.c.l.bf16 %v87
  %v9592 = vunpack.c.h.bf16 %v87
  %v9593 = vunpack.c.l.bf16 %v88
  %v9594 = vunpack.c.h.bf16 %v88
  %v9595 = vunpack.c.l.bf16 %v89
  %v9596 = vunpack.c.h.bf16 %v89
  %v9597 = vunpack.c.l.bf16 %v90
  %v9598 = vunpack.c.l.bf16 %v91
  %v9599 = vunpack.c.h.bf16 %v91
  %v9600 = vunpack.c.l.bf16 %v92
  %v9601 = vunpack.c.h.bf16 %v92
  %v9602 = vunpack.c.l.bf16 %v93
  %v9603 = vunpack.c.h.bf16 %v93
  %v9604 = vunpack.c.l.bf16 %v94
  %v9605 = vunpack.c.l.bf16 %v95
  %v9606 = vunpack.c.h.bf16 %v95
  %v9607 = vunpack.c.l.bf16 %v96
  %v9608 = vunpack.c.h.bf16 %v96
  %v9609 = vunpack.c.l.bf16 %v97
  %v9610 = vunpack.c.h.bf16 %v97
  %v9611 = vunpack.c.l.bf16 %v98
  %v9612 = vunpack.c.l.bf16 %v99
  %v9613 = vunpack.c.h.bf16 %v99
  %v9614 = vunpack.c.l.bf16 %v100
  %v9615 = vunpack.c.h.bf16 %v100
  %v9616 = vunpack.c.l.bf16 %v101
  %v9617 = vunpack.c.h.bf16 %v101
  %v9618 = vunpack.c.l.bf16 %v102
  %v9619 = vunpack.c.l.bf16 %v103
  %v9620 = vunpack.c.h.bf16 %v103
  %v9621 = vunpack.c.l.bf16 %v104
  %v9622 = vunpack.c.h.bf16 %v104
  %v9623 = vunpack.c.l.bf16 %v105
  %v9624 = vunpack.c.h.bf16 %v105
  %v9625 = vunpack.c.l.bf16 %v106
  %v9626 = vunpack.c.l.bf16 %v107
  %v9627 = vunpack.c.h.bf16 %v107
  %v9628 = vunpack.c.l.bf16 %v108
  %v9629 = vunpack.c.h.bf16 %v108
  %v9630 = vunpack.c.l.bf16 %v109
  %v9631 = vunpack.c.h.bf16 %v109
  %v9632 = vunpack.c.l.bf16 %v110
  %v9633 = vunpack.c.l.bf16 %v111
  %v9634 = vunpack.c.h.bf16 %v111
  %v9635 = vunpack.c.l.bf16 %v112
  %v9636 = vunpack.c.h.bf16 %v112
  %v9637 = vunpack.c.l.bf16 %v113
  %v9638 = vunpack.c.h.bf16 %v113
  %v9639 = vunpack.c.l.bf16 %v114
  %v9640 = vunpack.c.l.bf16 %v115
  %v9641 = vunpack.c.h.bf16 %v115
  %v9642 = vunpack.c.l.bf16 %v116
  %v9643 = vunpack.c.h.bf16 %v116
  %v9644 = vunpack.c.l.bf16 %v117
  %v9645 = vunpack.c.h.bf16 %v117
  %v9646 = vunpack.c.l.bf16 %v118
  %v9647 = vunpack.c.l.bf16 %v119
  %v9648 = vunpack.c.h.bf16 %v119
  %v9649 = vunpack.c.l.bf16 %v120
  %v9650 = vunpack.c.h.bf16 %v120
  %v9651 = vunpack.c.l.bf16 %v121
  %v9652 = vunpack.c.h.bf16 %v121
  %v9653 = vunpack.c.l.bf16 %v122
  %v9654 = vunpack.c.l.bf16 %v123
  %v9655 = vunpack.c.h.bf16 %v123
  %v9656 = vunpack.c.l.bf16 %v124
  %v9657 = vunpack.c.h.bf16 %v124
  %v9658 = vunpack.c.l.bf16 %v125
  %v9659 = vunpack.c.h.bf16 %v125
  %v9660 = vunpack.c.l.bf16 %v126
  %v9661 = vmul.f32 %v9584, %v8311
  %v9662 = vmul.f32 %v9585, %v8313
  %v9663 = vmul.f32 %v9586, %v8493
  %v9664 = vmul.f32 %v9587, %v8495
  %v9665 = vmul.f32 %v9588, %v8675
  %v9666 = vmul.f32 %v9589, %v8677
  %v9667 = vmul.f32 %v9590, %v8846
  %v9668 = vmul.f32 %v9591, %v8315
  %v9669 = vmul.f32 %v9592, %v8317
  %v9670 = vmul.f32 %v9593, %v8497
  %v9671 = vmul.f32 %v9594, %v8499
  %v9672 = vmul.f32 %v9595, %v8679
  %v9673 = vmul.f32 %v9596, %v8681
  %v9674 = vmul.f32 %v9597, %v8849
  %v9675 = vmul.f32 %v9598, %v8321
  %v9676 = vmul.f32 %v9599, %v8323
  %v9677 = vmul.f32 %v9600, %v8503
  %v9678 = vmul.f32 %v9601, %v8505
  %v9679 = vmul.f32 %v9602, %v8685
  %v9680 = vmul.f32 %v9603, %v8687
  %v9681 = vmul.f32 %v9604, %v8854
  %v9682 = vmul.f32 %v9605, %v8325
  %v9683 = vmul.f32 %v9606, %v8327
  %v9684 = vmul.f32 %v9607, %v8507
  %v9685 = vmul.f32 %v9608, %v8509
  %v9686 = vmul.f32 %v9609, %v8689
  %v9687 = vmul.f32 %v9610, %v8691
  %v9688 = vmul.f32 %v9611, %v8857
  %v9689 = vmul.f32 %v9612, %v8331
  %v9690 = vmul.f32 %v9613, %v8333
  %v9691 = vmul.f32 %v9614, %v8513
  %v9692 = vmul.f32 %v9615, %v8515
  %v9693 = vmul.f32 %v9616, %v8695
  %v9694 = vmul.f32 %v9617, %v8697
  %v9695 = vmul.f32 %v9618, %v8862
  %v9696 = vmul.f32 %v9619, %v8335
  %v9697 = vmul.f32 %v9620, %v8337
  %v9698 = vmul.f32 %v9621, %v8517
  %v9699 = vmul.f32 %v9622, %v8519
  %v9700 = vmul.f32 %v9623, %v8699
  %v9701 = vmul.f32 %v9624, %v8701
  %v9702 = vmul.f32 %v9625, %v8865
  %v9703 = vmul.f32 %v9626, %v8341
  %v9704 = vmul.f32 %v9627, %v8343
  %v9705 = vmul.f32 %v9628, %v8523
  %v9706 = vmul.f32 %v9629, %v8525
  %v9707 = vmul.f32 %v9630, %v8705
  %v9708 = vmul.f32 %v9631, %v8707
  %v9709 = vmul.f32 %v9632, %v8870
  %v9710 = vmul.f32 %v9633, %v8345
  %v9711 = vmul.f32 %v9634, %v8347
  %v9712 = vmul.f32 %v9635, %v8527
  %v9713 = vmul.f32 %v9636, %v8529
  %v9714 = vmul.f32 %v9637, %v8709
  %v9715 = vmul.f32 %v9638, %v8711
  %v9716 = vmul.f32 %v9639, %v8873
  %v9717 = vmul.f32 %v9640, %v8351
  %v9718 = vmul.f32 %v9641, %v8353
  %v9719 = vmul.f32 %v9642, %v8533
  %v9720 = vmul.f32 %v9643, %v8535
  %v9721 = vmul.f32 %v9644, %v8715
  %v9722 = vmul.f32 %v9645, %v8717
  %v9723 = vmul.f32 %v9646, %v8878
  %v9724 = vmul.f32 %v9647, %v8355
  %v9725 = vmul.f32 %v9648, %v8357
  %v9726 = vmul.f32 %v9649, %v8537
  %v9727 = vmul.f32 %v9650, %v8539
  %v9728 = vmul.f32 %v9651, %v8719
  %v9729 = vmul.f32 %v9652, %v8721
  %v9730 = vmul.f32 %v9653, %v8881
  %v9731 = vmul.f32 %v9654, %v8361
  %v9732 = vmul.f32 %v9655, %v8363
  %v9733 = vmul.f32 %v9656, %v8543
  %v9734 = vmul.f32 %v9657, %v8545
  %v9735 = vmul.f32 %v9658, %v8725
  %v9736 = vmul.f32 %v9659, %v8727
  %v9737 = vmul.f32 %v9660, %v8886
  %v9738 = vsub.f32 %v9661, %v9507
  %v9739 = vsub.f32 %v9662, %v9508
  %v9740 = vsub.f32 %v9663, %v9509
  %v9741 = vsub.f32 %v9664, %v9510
  %v9742 = vsub.f32 %v9665, %v9511
  %v9743 = vsub.f32 %v9666, %v9512
  %v9744 = vsub.f32 %v9667, %v9513
  %v9745 = vsub.f32 %v9668, %v9514
  %v9746 = vsub.f32 %v9669, %v9515
  %v9747 = vsub.f32 %v9670, %v9516
  %v9748 = vsub.f32 %v9671, %v9517
  %v9749 = vsub.f32 %v9672, %v9518
  %v9750 = vsub.f32 %v9673, %v9519
  %v9751 = vsub.f32 %v9674, %v9520
  %v9752 = vsub.f32 %v9675, %v9521
  %v9753 = vsub.f32 %v9676, %v9522
  %v9754 = vsub.f32 %v9677, %v9523
  %v9755 = vsub.f32 %v9678, %v9524
  %v9756 = vsub.f32 %v9679, %v9525
  %v9757 = vsub.f32 %v9680, %v9526
  %v9758 = vsub.f32 %v9681, %v9527
  %v9759 = vsub.f32 %v9682, %v9528
  %v9760 = vsub.f32 %v9683, %v9529
  %v9761 = vsub.f32 %v9684, %v9530
  %v9762 = vsub.f32 %v9685, %v9531
  %v9763 = vsub.f32 %v9686, %v9532
  %v9764 = vsub.f32 %v9687, %v9533
  %v9765 = vsub.f32 %v9688, %v9534
  %v9766 = vsub.f32 %v9689, %v9535
  %v9767 = vsub.f32 %v9690, %v9536
  %v9768 = vsub.f32 %v9691, %v9537
  %v9769 = vsub.f32 %v9692, %v9538
  %v9770 = vsub.f32 %v9693, %v9539
  %v9771 = vsub.f32 %v9694, %v9540
  %v9772 = vsub.f32 %v9695, %v9541
  %v9773 = vsub.f32 %v9696, %v9542
  %v9774 = vsub.f32 %v9697, %v9543
  %v9775 = vsub.f32 %v9698, %v9544
  %v9776 = vsub.f32 %v9699, %v9545
  %v9777 = vsub.f32 %v9700, %v9546
  %v9778 = vsub.f32 %v9701, %v9547
  %v9779 = vsub.f32 %v9702, %v9548
  %v9780 = vsub.f32 %v9703, %v9549
  %v9781 = vsub.f32 %v9704, %v9550
  %v9782 = vsub.f32 %v9705, %v9551
  %v9783 = vsub.f32 %v9706, %v9552
  %v9784 = vsub.f32 %v9707, %v9553
  %v9785 = vsub.f32 %v9708, %v9554
  %v9786 = vsub.f32 %v9709, %v9555
  %v9787 = vsub.f32 %v9710, %v9556
  %v9788 = vsub.f32 %v9711, %v9557
  %v9789 = vsub.f32 %v9712, %v9558
  %v9790 = vsub.f32 %v9713, %v9559
  %v9791 = vsub.f32 %v9714, %v9560
  %v9792 = vsub.f32 %v9715, %v9561
  %v9793 = vsub.f32 %v9716, %v9562
  %v9794 = vsub.f32 %v9717, %v9563
  %v9795 = vsub.f32 %v9718, %v9564
  %v9796 = vsub.f32 %v9719, %v9565
  %v9797 = vsub.f32 %v9720, %v9566
  %v9798 = vsub.f32 %v9721, %v9567
  %v9799 = vsub.f32 %v9722, %v9568
  %v9800 = vsub.f32 %v9723, %v9569
  %v9801 = vsub.f32 %v9724, %v9570
  %v9802 = vsub.f32 %v9725, %v9571
  %v9803 = vsub.f32 %v9726, %v9572
  %v9804 = vsub.f32 %v9727, %v9573
  %v9805 = vsub.f32 %v9728, %v9574
  %v9806 = vsub.f32 %v9729, %v9575
  %v9807 = vsub.f32 %v9730, %v9576
  %v9808 = vsub.f32 %v9731, %v9577
  %v9809 = vsub.f32 %v9732, %v9578
  %v9810 = vsub.f32 %v9733, %v9579
  %v9811 = vsub.f32 %v9734, %v9580
  %v9812 = vsub.f32 %v9735, %v9581
  %v9813 = vsub.f32 %v9736, %v9582
  %v9814 = vsub.f32 %v9737, %v9583
  %v9815 = vadd.f32 %v9738, %v9739
  %v9816 = vadd.f32 %v9815, %v9740
  %v9817 = vadd.f32 %v9816, %v9741
  %v9818 = vadd.f32 %v9817, %v9742
  %v9819 = vadd.f32 %v9818, %v9743
  %v9820 = vsel %vm1786, %v9744, 0.0
  %v9821 = vadd.f32 %v9819, %v9820
  %9822 = vadd.xlane.f32.xlu0 %v9821
  %v9823 = vpop.xlane.xlu0 %9822
  %v9824 = vadd.f32 %v9745, %v9746
  %v9825 = vadd.f32 %v9824, %v9747
  %v9826 = vadd.f32 %v9825, %v9748
  %v9827 = vadd.f32 %v9826, %v9749
  %v9828 = vadd.f32 %v9827, %v9750
  %v9829 = vsel %vm1786, %v9751, 0.0
  %v9830 = vadd.f32 %v9828, %v9829
  %9831 = vadd.xlane.f32.xlu0 %v9830
  %v9832 = vpop.xlane.xlu0 %9831
  %v9833 = vadd.f32 %v9752, %v9753
  %v9834 = vadd.f32 %v9833, %v9754
  %v9835 = vadd.f32 %v9834, %v9755
  %v9836 = vadd.f32 %v9835, %v9756
  %v9837 = vadd.f32 %v9836, %v9757
  %v9838 = vsel %vm1786, %v9758, 0.0
  %v9839 = vadd.f32 %v9837, %v9838
  %9840 = vadd.xlane.f32.xlu0 %v9839
  %v9841 = vpop.xlane.xlu0 %9840
  %v9842 = vadd.f32 %v9759, %v9760
  %v9843 = vadd.f32 %v9842, %v9761
  %v9844 = vadd.f32 %v9843, %v9762
  %v9845 = vadd.f32 %v9844, %v9763
  %v9846 = vadd.f32 %v9845, %v9764
  %v9847 = vsel %vm1786, %v9765, 0.0
  %v9848 = vadd.f32 %v9846, %v9847
  %9849 = vadd.xlane.f32.xlu0 %v9848
  %v9850 = vpop.xlane.xlu0 %9849
  %v9851 = vadd.f32 %v9766, %v9767
  %v9852 = vadd.f32 %v9851, %v9768
  %v9853 = vadd.f32 %v9852, %v9769
  %v9854 = vadd.f32 %v9853, %v9770
  %v9855 = vadd.f32 %v9854, %v9771
  %v9856 = vsel %vm1786, %v9772, 0.0
  %v9857 = vadd.f32 %v9855, %v9856
  %9858 = vadd.xlane.f32.xlu0 %v9857
  %v9859 = vpop.xlane.xlu0 %9858
  %v9860 = vadd.f32 %v9773, %v9774
  %v9861 = vadd.f32 %v9860, %v9775
  %v9862 = vadd.f32 %v9861, %v9776
  %v9863 = vadd.f32 %v9862, %v9777
  %v9864 = vadd.f32 %v9863, %v9778
  %v9865 = vsel %vm1786, %v9779, 0.0
  %v9866 = vadd.f32 %v9864, %v9865
  %9867 = vadd.xlane.f32.xlu0 %v9866
  %v9868 = vpop.xlane.xlu0 %9867
  %v9869 = vadd.f32 %v9780, %v9781
  %v9870 = vadd.f32 %v9869, %v9782
  %v9871 = vadd.f32 %v9870, %v9783
  %v9872 = vadd.f32 %v9871, %v9784
  %v9873 = vadd.f32 %v9872, %v9785
  %v9874 = vsel %vm1786, %v9786, 0.0
  %v9875 = vadd.f32 %v9873, %v9874
  %9876 = vadd.xlane.f32.xlu0 %v9875
  %v9877 = vpop.xlane.xlu0 %9876
  %v9878 = vadd.f32 %v9787, %v9788
  %v9879 = vadd.f32 %v9878, %v9789
  %v9880 = vadd.f32 %v9879, %v9790
  %v9881 = vadd.f32 %v9880, %v9791
  %v9882 = vadd.f32 %v9881, %v9792
  %v9883 = vsel %vm1786, %v9793, 0.0
  %v9884 = vadd.f32 %v9882, %v9883
  %9885 = vadd.xlane.f32.xlu0 %v9884
  %v9886 = vpop.xlane.xlu0 %9885
  %v9887 = vadd.f32 %v9794, %v9795
  %v9888 = vadd.f32 %v9887, %v9796
  %v9889 = vadd.f32 %v9888, %v9797
  %v9890 = vadd.f32 %v9889, %v9798
  %v9891 = vadd.f32 %v9890, %v9799
  %v9892 = vsel %vm1786, %v9800, 0.0
  %v9893 = vadd.f32 %v9891, %v9892
  %9894 = vadd.xlane.f32.xlu0 %v9893
  %v9895 = vpop.xlane.xlu0 %9894
  %v9896 = vadd.f32 %v9801, %v9802
  %v9897 = vadd.f32 %v9896, %v9803
  %v9898 = vadd.f32 %v9897, %v9804
  %v9899 = vadd.f32 %v9898, %v9805
  %v9900 = vadd.f32 %v9899, %v9806
  %v9901 = vsel %vm1786, %v9807, 0.0
  %v9902 = vadd.f32 %v9900, %v9901
  %9903 = vadd.xlane.f32.xlu0 %v9902
  %v9904 = vpop.xlane.xlu0 %9903
  %v9905 = vadd.f32 %v9808, %v9809
  %v9906 = vadd.f32 %v9905, %v9810
  %v9907 = vadd.f32 %v9906, %v9811
  %v9908 = vadd.f32 %v9907, %v9812
  %v9909 = vadd.f32 %v9908, %v9813
  %v9910 = vsel %vm1786, %v9814, 0.0
  %v9911 = vadd.f32 %v9909, %v9910
  %9912 = vadd.xlane.f32.xlu0 %v9911
  %v9913 = vpop.xlane.xlu0 %9912
  %v9914 = vadd.f32 %v4690, 1.0
  %v9915 = vadd.f32 %v4693, 1.0
  %v9916 = vadd.f32 %v4698, 1.0
  %v9917 = vadd.f32 %v4701, 1.0
  %v9918 = vadd.f32 %v4706, 1.0
  %v9919 = vadd.f32 %v4709, 1.0
  %v9920 = vadd.f32 %v4714, 1.0
  %v9921 = vadd.f32 %v4717, 1.0
  %v9922 = vadd.f32 %v4722, 1.0
  %v9923 = vadd.f32 %v4725, 1.0
  %v9924 = vadd.f32 %v4730, 1.0
  %v9925 = vmul.f32 %v4267, %v4267
  %v9926 = vmul.f32 %v4270, %v4270
  %v9927 = vmul.f32 %v4275, %v4275
  %v9928 = vmul.f32 %v4278, %v4278
  %v9929 = vmul.f32 %v4283, %v4283
  %v9930 = vmul.f32 %v4286, %v4286
  %v9931 = vmul.f32 %v4291, %v4291
  %v9932 = vmul.f32 %v4294, %v4294
  %v9933 = vmul.f32 %v4299, %v4299
  %v9934 = vmul.f32 %v4302, %v4302
  %v9935 = vmul.f32 %v4307, %v4307
  %v9936 = vsub.f32 %v9914, %v9925
  %v9937 = vsub.f32 %v9915, %v9926
  %v9938 = vsub.f32 %v9916, %v9927
  %v9939 = vsub.f32 %v9917, %v9928
  %v9940 = vsub.f32 %v9918, %v9929
  %v9941 = vsub.f32 %v9919, %v9930
  %v9942 = vsub.f32 %v9920, %v9931
  %v9943 = vsub.f32 %v9921, %v9932
  %v9944 = vsub.f32 %v9922, %v9933
  %v9945 = vsub.f32 %v9923, %v9934
  %v9946 = vsub.f32 %v9924, %v9935
  %v9947 = vmul.f32 %v4690, 1.442695
  %v9948 = vpow.pop %v9947
  %v9949 = vmul.f32 %v4693, 1.442695
  %v9950 = vpow.pop %v9949
  %v9951 = vmul.f32 %v4698, 1.442695
  %v9952 = vpow.pop %v9951
  %v9953 = vmul.f32 %v4701, 1.442695
  %v9954 = vpow.pop %v9953
  %v9955 = vmul.f32 %v4706, 1.442695
  %v9956 = vpow.pop %v9955
  %v9957 = vmul.f32 %v4709, 1.442695
  %v9958 = vpow.pop %v9957
  %v9959 = vmul.f32 %v4714, 1.442695
  %v9960 = vpow.pop %v9959
  %v9961 = vmul.f32 %v4717, 1.442695
  %v9962 = vpow.pop %v9961
  %v9963 = vmul.f32 %v4722, 1.442695
  %v9964 = vpow.pop %v9963
  %v9965 = vmul.f32 %v4725, 1.442695
  %v9966 = vpow.pop %v9965
  %v9967 = vmul.f32 %v4730, 1.442695
  %v9968 = vpow.pop %v9967
  %v9969 = vsub.f32 %v9936, %v9948
  %v9970 = vsub.f32 %v9937, %v9950
  %v9971 = vsub.f32 %v9938, %v9952
  %v9972 = vsub.f32 %v9939, %v9954
  %v9973 = vsub.f32 %v9940, %v9956
  %v9974 = vsub.f32 %v9941, %v9958
  %v9975 = vsub.f32 %v9942, %v9960
  %v9976 = vsub.f32 %v9943, %v9962
  %v9977 = vsub.f32 %v9944, %v9964
  %v9978 = vsub.f32 %v9945, %v9966
  %v9979 = vsub.f32 %v9946, %v9968
  %9980 = vadd.xlane.f32.xlu0 %v9969
  %v9981 = vpop.xlane.xlu0 %9980
  %9982 = vadd.xlane.f32.xlu0 %v9970
  %v9983 = vpop.xlane.xlu0 %9982
  %9984 = vadd.xlane.f32.xlu0 %v9971
  %v9985 = vpop.xlane.xlu0 %9984
  %9986 = vadd.xlane.f32.xlu0 %v9972
  %v9987 = vpop.xlane.xlu0 %9986
  %9988 = vadd.xlane.f32.xlu0 %v9973
  %v9989 = vpop.xlane.xlu0 %9988
  %9990 = vadd.xlane.f32.xlu0 %v9974
  %v9991 = vpop.xlane.xlu0 %9990
  %9992 = vadd.xlane.f32.xlu0 %v9975
  %v9993 = vpop.xlane.xlu0 %9992
  %9994 = vadd.xlane.f32.xlu0 %v9976
  %v9995 = vpop.xlane.xlu0 %9994
  %9996 = vadd.xlane.f32.xlu0 %v9977
  %v9997 = vpop.xlane.xlu0 %9996
  %9998 = vadd.xlane.f32.xlu0 %v9978
  %v9999 = vpop.xlane.xlu0 %9998
  %10000 = vadd.xlane.f32.xlu0 %v9979
  %v10001 = vpop.xlane.xlu0 %10000
  %v10002 = vmul.f32 %v9981, 0.5
  %v10003 = vmul.f32 %v9983, 0.5
  %v10004 = vmul.f32 %v9985, 0.5
  %v10005 = vmul.f32 %v9987, 0.5
  %v10006 = vmul.f32 %v9989, 0.5
  %v10007 = vmul.f32 %v9991, 0.5
  %v10008 = vmul.f32 %v9993, 0.5
  %v10009 = vmul.f32 %v9995, 0.5
  %v10010 = vmul.f32 %v9997, 0.5
  %v10011 = vmul.f32 %v9999, 0.5
  %v10012 = vmul.f32 %v10001, 0.5
  %v10013 = vadd.f32 %v9823, -2.3025851
  %v10014 = vadd.f32 %v9832, -2.3025851
  %v10015 = vadd.f32 %v9841, -2.3025851
  %v10016 = vadd.f32 %v9850, -2.3025851
  %v10017 = vadd.f32 %v9859, -2.3025851
  %v10018 = vadd.f32 %v9868, -2.3025851
  %v10019 = vadd.f32 %v9877, -2.3025851
  %v10020 = vadd.f32 %v9886, -2.3025851
  %v10021 = vadd.f32 %v9895, -2.3025851
  %v10022 = vadd.f32 %v9904, -2.3025851
  %v10023 = vadd.f32 %v9913, -2.3025851
  %v10024 = vadd.f32 %v10013, %v10002
  %v10025 = vadd.f32 %v10014, %v10003
  %v10026 = vadd.f32 %v10015, %v10004
  %v10027 = vadd.f32 %v10016, %v10005
  %v10028 = vadd.f32 %v10017, %v10006
  %v10029 = vadd.f32 %v10018, %v10007
  %v10030 = vadd.f32 %v10019, %v10008
  %v10031 = vadd.f32 %v10020, %v10009
  %v10032 = vadd.f32 %v10021, %v10010
  %v10033 = vadd.f32 %v10022, %v10011
  %v10034 = vadd.f32 %v10023, %v10012
  %10035 = vst [vmem:[%s25] sm:$0xff] %v10024
  %10036 = vst [vmem:[%s25 + $0x8] sm:$0xff] %v10025
  %10037 = vst [vmem:[%s25 + $0x10] sm:$0xff] %v10026
  %10038 = vst [vmem:[%s25 + $0x18] sm:$0xff] %v10027
  %10039 = vst [vmem:[%s25 + $0x20] sm:$0xff] %v10028
  %10040 = vst [vmem:[%s25 + $0x28] sm:$0xff] %v10029
  %10041 = vst [vmem:[%s25 + $0x30] sm:$0xff] %v10030
  %10042 = vst [vmem:[%s25 + $0x38] sm:$0xff] %v10031
  %10043 = vst [vmem:[%s25 + $0x40] sm:$0xff] %v10032
  %10044 = vst [vmem:[%s25 + $0x48] sm:$0xff] %v10033
  %10045 = vst [vmem:[%s25 + $0x50] sm:$0xff] %v10034
  %v10046 = vld [vmem:[%s19] sm:$0xff]
  %v10047 = vld [vmem:[%s19 + $0x8] sm:$0xff]
  %v10048 = vld [vmem:[%s19 + $0x10] sm:$0xff]
  %v10049 = vld [vmem:[%s19 + $0x18] sm:$0xff]
  %v10050 = vld [vmem:[%s19 + $0x20] sm:$0xff]
  %v10051 = vld [vmem:[%s19 + $0x28] sm:$0xff]
  %v10052 = vld [vmem:[%s19 + $0x30] sm:$0xff]
  %v10053 = vld [vmem:[%s19 + $0x38] sm:$0xff]
  %v10054 = vld [vmem:[%s19 + $0x40] sm:$0xff]
  %v10055 = vld [vmem:[%s19 + $0x48] sm:$0xff]
  %v10056 = vld [vmem:[%s19 + $0x50] sm:$0xff]
  %v10057 = vld [vmem:[%s19 + $0x58] sm:$0xff]
  %v10058 = vld [vmem:[%s19 + $0x60] sm:$0xff]
  %v10059 = vld [vmem:[%s19 + $0x68] sm:$0xff]
  %v10060 = vld [vmem:[%s19 + $0x70] sm:$0xff]
  %v10061 = vld [vmem:[%s19 + $0x78] sm:$0xff]
  %v10062 = vld [vmem:[%s19 + $0x80] sm:$0xff]
  %v10063 = vld [vmem:[%s19 + $0x88] sm:$0xff]
  %v10064 = vld [vmem:[%s19 + $0x90] sm:$0xff]
  %v10065 = vld [vmem:[%s19 + $0x98] sm:$0xff]
  %v10066 = vld [vmem:[%s19 + $0xa0] sm:$0xff]
  %v10067 = vld [vmem:[%s19 + $0xa8] sm:$0xff]
  %v10068 = vld [vmem:[%s19 + $0xb0] sm:$0xff]
  %v10069 = vld [vmem:[%s19 + $0xb8] sm:$0xff]
  %v10070 = vld [vmem:[%s19 + $0xc0] sm:$0xff]
  %v10071 = vld [vmem:[%s19 + $0xc8] sm:$0xff]
  %v10072 = vld [vmem:[%s19 + $0xd0] sm:$0xff]
  %v10073 = vld [vmem:[%s19 + $0xd8] sm:$0xff]
  %v10074 = vld [vmem:[%s19 + $0xe0] sm:$0xff]
  %v10075 = vld [vmem:[%s19 + $0xe8] sm:$0xff]
  %v10076 = vld [vmem:[%s19 + $0xf0] sm:$0xff]
  %v10077 = vld [vmem:[%s19 + $0xf8] sm:$0xff]
  %v10078 = vld [vmem:[%s19 + $0x100] sm:$0xff]
  %v10079 = vld [vmem:[%s19 + $0x108] sm:$0xff]
  %v10080 = vld [vmem:[%s19 + $0x110] sm:$0xff]
  %v10081 = vld [vmem:[%s19 + $0x118] sm:$0xff]
  %v10082 = vld [vmem:[%s19 + $0x120] sm:$0xff]
  %v10083 = vld [vmem:[%s19 + $0x128] sm:$0xff]
  %v10084 = vld [vmem:[%s19 + $0x130] sm:$0xff]
  %v10085 = vld [vmem:[%s19 + $0x138] sm:$0xff]
  %v10086 = vld [vmem:[%s19 + $0x140] sm:$0xff]
  %v10087 = vld [vmem:[%s19 + $0x148] sm:$0xff]
  %v10088 = vld [vmem:[%s19 + $0x150] sm:$0xff]
  %v10089 = vld [vmem:[%s19 + $0x158] sm:$0xff]
  %v10090 = vld [vmem:[%s19 + $0x160] sm:$0xff]
  %v10091 = vld [vmem:[%s19 + $0x168] sm:$0xff]
  %v10092 = vld [vmem:[%s19 + $0x170] sm:$0xff]
  %v10093 = vld [vmem:[%s19 + $0x178] sm:$0xff]
  %v10094 = vld [vmem:[%s19 + $0x180] sm:$0xff]
  %v10095 = vld [vmem:[%s19 + $0x188] sm:$0xff]
  %v10096 = vld [vmem:[%s19 + $0x190] sm:$0xff]
  %v10097 = vld [vmem:[%s19 + $0x198] sm:$0xff]
  %v10098 = vld [vmem:[%s19 + $0x1a0] sm:$0xff]
  %v10099 = vld [vmem:[%s19 + $0x1a8] sm:$0xff]
  %v10100 = vld [vmem:[%s19 + $0x1b0] sm:$0xff]
  %v10101 = vld [vmem:[%s19 + $0x1b8] sm:$0xff]
  %v10102 = vld [vmem:[%s19 + $0x1c0] sm:$0xff]
  %v10103 = vld [vmem:[%s19 + $0x1c8] sm:$0xff]
  %v10104 = vld [vmem:[%s19 + $0x1d0] sm:$0xff]
  %v10105 = vld [vmem:[%s19 + $0x1d8] sm:$0xff]
  %v10106 = vld [vmem:[%s19 + $0x1e0] sm:$0xff]
  %v10107 = vld [vmem:[%s19 + $0x1e8] sm:$0xff]
  %v10108 = vld [vmem:[%s19 + $0x1f0] sm:$0xff]
  %v10109 = vld [vmem:[%s19 + $0x1f8] sm:$0xff]
  %v10110 = vld [vmem:[%s19 + $0x200] sm:$0xff]
  %v10111 = vld [vmem:[%s19 + $0x208] sm:$0xff]
  %v10112 = vld [vmem:[%s19 + $0x210] sm:$0xff]
  %v10113 = vld [vmem:[%s19 + $0x218] sm:$0xff]
  %v10114 = vld [vmem:[%s19 + $0x220] sm:$0xff]
  %v10115 = vld [vmem:[%s19 + $0x228] sm:$0xff]
  %v10116 = vld [vmem:[%s19 + $0x230] sm:$0xff]
  %v10117 = vld [vmem:[%s19 + $0x238] sm:$0xff]
  %v10118 = vld [vmem:[%s19 + $0x240] sm:$0xff]
  %v10119 = vld [vmem:[%s19 + $0x248] sm:$0xff]
  %v10120 = vld [vmem:[%s19 + $0x250] sm:$0xff]
  %v10121 = vld [vmem:[%s19 + $0x258] sm:$0xff]
  %v10122 = vld [vmem:[%s19 + $0x260] sm:$0xff]
  %v10123 = vld [vmem:[%s19 + $0x268] sm:$0xff]
  %v10124 = vld [vmem:[%s19 + $0x270] sm:$0xff]
  %v10125 = vld [vmem:[%s19 + $0x278] sm:$0xff]
  %v10126 = vld [vmem:[%s19 + $0x280] sm:$0xff]
  %v10127 = vld [vmem:[%s19 + $0x288] sm:$0xff]
  %v10128 = vld [vmem:[%s19 + $0x290] sm:$0xff]
  %v10129 = vld [vmem:[%s19 + $0x298] sm:$0xff]
  %v10130 = vld [vmem:[%s19 + $0x2a0] sm:$0xff]
  %v10131 = vld [vmem:[%s19 + $0x2a8] sm:$0xff]
  %v10132 = vld [vmem:[%s19 + $0x2b0] sm:$0xff]
  %v10133 = vld [vmem:[%s19 + $0x2b8] sm:$0xff]
  %v10134 = vld [vmem:[%s19 + $0x2c0] sm:$0xff]
  %v10135 = vld [vmem:[%s19 + $0x2c8] sm:$0xff]
  %v10136 = vld [vmem:[%s19 + $0x2d0] sm:$0xff]
  %v10137 = vld [vmem:[%s19 + $0x2d8] sm:$0xff]
  %v10138 = vld [vmem:[%s19 + $0x2e0] sm:$0xff]
  %v10139 = vld [vmem:[%s19 + $0x2e8] sm:$0xff]
  %v10140 = vld [vmem:[%s19 + $0x2f0] sm:$0xff]
  %v10141 = vld [vmem:[%s19 + $0x2f8] sm:$0xff]
  %v10142 = vld [vmem:[%s19 + $0x300] sm:$0xff]
  %v10143 = vld [vmem:[%s19 + $0x308] sm:$0xff]
  %v10144 = vld [vmem:[%s19 + $0x310] sm:$0xff]
  %v10145 = vld [vmem:[%s19 + $0x318] sm:$0xff]
  %v10146 = vld [vmem:[%s19 + $0x320] sm:$0xff]
  %v10147 = vld [vmem:[%s19 + $0x328] sm:$0xff]
  %v10148 = vld [vmem:[%s19 + $0x330] sm:$0xff]
  %v10149 = vld [vmem:[%s19 + $0x338] sm:$0xff]
  %v10150 = vld [vmem:[%s19 + $0x340] sm:$0xff]
  %v10151 = vld [vmem:[%s19 + $0x348] sm:$0xff]
  %v10152 = vld [vmem:[%s19 + $0x350] sm:$0xff]
  %v10153 = vld [vmem:[%s19 + $0x358] sm:$0xff]
  %v10154 = vld [vmem:[%s19 + $0x360] sm:$0xff]
  %v10155 = vld [vmem:[%s19 + $0x368] sm:$0xff]
  %v10156 = vld [vmem:[%s19 + $0x370] sm:$0xff]
  %v10157 = vld [vmem:[%s19 + $0x378] sm:$0xff]
  %v10158 = vld [vmem:[%s19 + $0x380] sm:$0xff]
  %v10159 = vld [vmem:[%s19 + $0x388] sm:$0xff]
  %v10160 = vld [vmem:[%s19 + $0x390] sm:$0xff]
  %v10161 = vld [vmem:[%s19 + $0x398] sm:$0xff]
  %v10162 = vld [vmem:[%s19 + $0x3a0] sm:$0xff]
  %v10163 = vld [vmem:[%s19 + $0x3a8] sm:$0xff]
  %v10164 = vld [vmem:[%s19 + $0x3b0] sm:$0xff]
  %v10165 = vld [vmem:[%s19 + $0x3b8] sm:$0xff]
  %v10166 = vld [vmem:[%s19 + $0x3c0] sm:$0xff]
  %v10167 = vld [vmem:[%s19 + $0x3c8] sm:$0xff]
  %v10168 = vld [vmem:[%s19 + $0x3d0] sm:$0xff]
  %v10169 = vld [vmem:[%s19 + $0x3d8] sm:$0xff]
  %v10170 = vld [vmem:[%s19 + $0x3e0] sm:$0xff]
  %v10171 = vld [vmem:[%s19 + $0x3e8] sm:$0xff]
  %v10172 = vld [vmem:[%s19 + $0x3f0] sm:$0xff]
  %v10173 = vld [vmem:[%s19 + $0x3f8] sm:$0xff]
  %v10174 = vld [vmem:[%s19 + $0x400] sm:$0xff]
  %v10175 = vld [vmem:[%s19 + $0x408] sm:$0xff]
  %v10176 = vld [vmem:[%s19 + $0x410] sm:$0xff]
  %v10177 = vld [vmem:[%s19 + $0x418] sm:$0xff]
  %v10178 = vld [vmem:[%s19 + $0x420] sm:$0xff]
  %v10179 = vld [vmem:[%s19 + $0x428] sm:$0xff]
  %v10180 = vld [vmem:[%s19 + $0x430] sm:$0xff]
  %v10181 = vld [vmem:[%s19 + $0x438] sm:$0xff]
  %v10182 = vld [vmem:[%s19 + $0x440] sm:$0xff]
  %v10183 = vld [vmem:[%s19 + $0x448] sm:$0xff]
  %v10184 = vld [vmem:[%s19 + $0x450] sm:$0xff]
  %v10185 = vld [vmem:[%s19 + $0x458] sm:$0xff]
  %v10186 = vld [vmem:[%s19 + $0x460] sm:$0xff]
  %v10187 = vld [vmem:[%s19 + $0x468] sm:$0xff]
  %v10188 = vld [vmem:[%s19 + $0x470] sm:$0xff]
  %v10189 = vld [vmem:[%s19 + $0x478] sm:$0xff]
  %v10190 = vld [vmem:[%s19 + $0x480] sm:$0xff]
  %v10191 = vld [vmem:[%s19 + $0x488] sm:$0xff]
  %v10192 = vld [vmem:[%s19 + $0x490] sm:$0xff]
  %v10193 = vld [vmem:[%s19 + $0x498] sm:$0xff]
  %v10194 = vld [vmem:[%s19 + $0x4a0] sm:$0xff]
  %v10195 = vld [vmem:[%s19 + $0x4a8] sm:$0xff]
  %v10196 = vld [vmem:[%s19 + $0x4b0] sm:$0xff]
  %v10197 = vld [vmem:[%s19 + $0x4b8] sm:$0xff]
  %v10198 = vld [vmem:[%s19 + $0x4c0] sm:$0xff]
  %v10199 = vld [vmem:[%s19 + $0x4c8] sm:$0xff]
  %v10200 = vld [vmem:[%s19 + $0x4d0] sm:$0xff]
  %v10201 = vld [vmem:[%s19 + $0x4d8] sm:$0xff]
  %v10202 = vld [vmem:[%s19 + $0x4e0] sm:$0xff]
  %v10203 = vld [vmem:[%s19 + $0x4e8] sm:$0xff]
  %v10204 = vld [vmem:[%s19 + $0x4f0] sm:$0xff]
  %v10205 = vld [vmem:[%s19 + $0x4f8] sm:$0xff]
  %v10206 = vld [vmem:[%s19 + $0x500] sm:$0xff]
  %v10207 = vld [vmem:[%s19 + $0x508] sm:$0xff]
  %v10208 = vld [vmem:[%s19 + $0x510] sm:$0xff]
  %v10209 = vld [vmem:[%s19 + $0x518] sm:$0xff]
  %v10210 = vld [vmem:[%s19 + $0x520] sm:$0xff]
  %v10211 = vld [vmem:[%s19 + $0x528] sm:$0xff]
  %v10212 = vld [vmem:[%s19 + $0x530] sm:$0xff]
  %v10213 = vld [vmem:[%s19 + $0x538] sm:$0xff]
  %v10214 = vld [vmem:[%s19 + $0x540] sm:$0xff]
  %v10215 = vld [vmem:[%s19 + $0x548] sm:$0xff]
  %v10216 = vld [vmem:[%s19 + $0x550] sm:$0xff]
  %v10217 = vld [vmem:[%s19 + $0x558] sm:$0xff]
  %v10218 = vld [vmem:[%s19 + $0x560] sm:$0xff]
  %v10219 = vld [vmem:[%s19 + $0x568] sm:$0xff]
  %v10220 = vld [vmem:[%s19 + $0x570] sm:$0xff]
  %v10221 = vld [vmem:[%s19 + $0x578] sm:$0xff]
  %v10222 = vld [vmem:[%s19 + $0x580] sm:$0xff]
  %v10223 = vld [vmem:[%s19 + $0x588] sm:$0xff]
  %v10224 = vld [vmem:[%s19 + $0x590] sm:$0xff]
  %v10225 = vld [vmem:[%s19 + $0x598] sm:$0xff]
  %v10226 = vld [vmem:[%s19 + $0x5a0] sm:$0xff]
  %v10227 = vld [vmem:[%s19 + $0x5a8] sm:$0xff]
  %v10228 = vld [vmem:[%s19 + $0x5b0] sm:$0xff]
  %v10229 = vld [vmem:[%s19 + $0x5b8] sm:$0xff]
  %v10230 = vld [vmem:[%s19 + $0x5c0] sm:$0xff]
  %v10231 = vld [vmem:[%s19 + $0x5c8] sm:$0xff]
  %v10232 = vld [vmem:[%s19 + $0x5d0] sm:$0xff]
  %v10233 = vld [vmem:[%s19 + $0x5d8] sm:$0xff]
  %v10234 = vld [vmem:[%s19 + $0x5e0] sm:$0xff]
  %v10235 = vld [vmem:[%s19 + $0x5e8] sm:$0xff]
  %v10236 = vld [vmem:[%s19 + $0x5f0] sm:$0xff]
  %v10237 = vld [vmem:[%s19 + $0x5f8] sm:$0xff]
  %v10238 = vld [vmem:[%s19 + $0x600] sm:$0xff]
  %v10239 = vld [vmem:[%s19 + $0x608] sm:$0xff]
  %v10240 = vld [vmem:[%s19 + $0x610] sm:$0xff]
  %v10241 = vld [vmem:[%s19 + $0x618] sm:$0xff]
  %v10242 = vld [vmem:[%s20] sm:$0xf]
  %v10244 = vlaneseq
  %v10245 = vshrl.u32 %v10244, 7
  %v10246 = vsub.s32 0, %v10245
  %v10247 = vrot.slane %v10242, %v10246
  %v10248 = vlaneseq
  %v10249 = vshrl.u32 %v10248, 7
  %v10250 = vsub.s32 1, %v10249
  %v10251 = vrot.slane %v10242, %v10250
  %v10252 = vlaneseq
  %v10253 = vshrl.u32 %v10252, 7
  %v10254 = vsub.s32 2, %v10253
  %v10255 = vrot.slane %v10242, %v10254
  %v10256 = vlaneseq
  %v10257 = vshrl.u32 %v10256, 7
  %v10258 = vsub.s32 3, %v10257
  %v10259 = vrot.slane %v10242, %v10258
  %v10460 = vunpack.c.l.b16 %v10046
  %v10461 = vunpack.c.h.b16 %v10046
  %v10462 = vunpack.c.l.b16 %v10047
  %v10463 = vunpack.c.h.b16 %v10047
  %v10464 = vunpack.c.l.b16 %v10048
  %v10465 = vunpack.c.h.b16 %v10048
  %v10466 = vunpack.c.l.b16 %v10049
  %v10467 = vunpack.c.h.b16 %v10049
  %v10468 = vunpack.c.l.b16 %v10050
  %v10469 = vunpack.c.h.b16 %v10050
  %v10470 = vunpack.c.l.b16 %v10051
  %v10471 = vunpack.c.h.b16 %v10051
  %v10472 = vunpack.c.l.b16 %v10052
  %v10473 = vunpack.c.h.b16 %v10052
  %v10474 = vunpack.c.l.b16 %v10053
  %v10475 = vunpack.c.h.b16 %v10053
  %v10476 = vunpack.c.l.b16 %v10054
  %v10477 = vunpack.c.h.b16 %v10054
  %v10478 = vunpack.c.l.b16 %v10055
  %v10479 = vunpack.c.h.b16 %v10055
  %v10480 = vunpack.c.l.b16 %v10056
  %v10481 = vunpack.c.h.b16 %v10056
  %v10482 = vunpack.c.l.b16 %v10057
  %v10483 = vunpack.c.h.b16 %v10057
  %v10484 = vunpack.c.l.b16 %v10058
  %v10485 = vunpack.c.h.b16 %v10058
  %v10486 = vunpack.c.l.b16 %v10059
  %v10487 = vunpack.c.h.b16 %v10059
  %v10488 = vunpack.c.l.b16 %v10060
  %v10489 = vunpack.c.h.b16 %v10060
  %v10490 = vunpack.c.l.b16 %v10061
  %v10491 = vunpack.c.h.b16 %v10061
  %v10492 = vunpack.c.l.b16 %v10062
  %v10493 = vunpack.c.h.b16 %v10062
  %v10494 = vunpack.c.l.b16 %v10063
  %v10495 = vunpack.c.h.b16 %v10063
  %v10496 = vunpack.c.l.b16 %v10064
  %v10497 = vunpack.c.h.b16 %v10064
  %v10498 = vunpack.c.l.b16 %v10065
  %v10499 = vunpack.c.h.b16 %v10065
  %v10500 = vunpack.c.l.b16 %v10066
  %v10501 = vunpack.c.h.b16 %v10066
  %v10502 = vunpack.c.l.b16 %v10067
  %v10503 = vunpack.c.h.b16 %v10067
  %v10504 = vunpack.c.l.b16 %v10068
  %v10505 = vunpack.c.h.b16 %v10068
  %v10506 = vunpack.c.l.b16 %v10069
  %v10507 = vunpack.c.h.b16 %v10069
  %v10508 = vunpack.c.l.b16 %v10070
  %v10509 = vunpack.c.h.b16 %v10070
  %v10510 = vunpack.c.l.b16 %v10071
  %v10511 = vunpack.c.h.b16 %v10071
  %v10512 = vunpack.c.l.b16 %v10072
  %v10513 = vunpack.c.h.b16 %v10072
  %v10514 = vunpack.c.l.b16 %v10073
  %v10515 = vunpack.c.h.b16 %v10073
  %v10516 = vunpack.c.l.b16 %v10074
  %v10517 = vunpack.c.h.b16 %v10074
  %v10518 = vunpack.c.l.b16 %v10075
  %v10519 = vunpack.c.h.b16 %v10075
  %v10520 = vunpack.c.l.b16 %v10076
  %v10521 = vunpack.c.h.b16 %v10076
  %v10522 = vunpack.c.l.b16 %v10077
  %v10523 = vunpack.c.h.b16 %v10077
  %v10524 = vunpack.c.l.b16 %v10078
  %v10525 = vunpack.c.h.b16 %v10078
  %v10526 = vunpack.c.l.b16 %v10079
  %v10527 = vunpack.c.h.b16 %v10079
  %v10528 = vunpack.c.l.b16 %v10080
  %v10529 = vunpack.c.h.b16 %v10080
  %v10530 = vunpack.c.l.b16 %v10081
  %v10531 = vunpack.c.h.b16 %v10081
  %v10532 = vunpack.c.l.b16 %v10082
  %v10533 = vunpack.c.h.b16 %v10082
  %v10534 = vunpack.c.l.b16 %v10083
  %v10535 = vunpack.c.h.b16 %v10083
  %v10536 = vunpack.c.l.b16 %v10084
  %v10537 = vunpack.c.h.b16 %v10084
  %v10538 = vunpack.c.l.b16 %v10085
  %v10539 = vunpack.c.h.b16 %v10085
  %v10540 = vunpack.c.l.b16 %v10086
  %v10541 = vunpack.c.h.b16 %v10086
  %v10542 = vunpack.c.l.b16 %v10087
  %v10543 = vunpack.c.h.b16 %v10087
  %v10544 = vunpack.c.l.b16 %v10088
  %v10545 = vunpack.c.h.b16 %v10088
  %v10546 = vunpack.c.l.b16 %v10089
  %v10547 = vunpack.c.h.b16 %v10089
  %v10548 = vunpack.c.l.b16 %v10090
  %v10549 = vunpack.c.h.b16 %v10090
  %v10550 = vunpack.c.l.b16 %v10091
  %v10551 = vunpack.c.h.b16 %v10091
  %v10552 = vunpack.c.l.b16 %v10092
  %v10553 = vunpack.c.h.b16 %v10092
  %v10554 = vunpack.c.l.b16 %v10093
  %v10555 = vunpack.c.h.b16 %v10093
  %v10556 = vunpack.c.l.b16 %v10094
  %v10557 = vunpack.c.h.b16 %v10094
  %v10558 = vunpack.c.l.b16 %v10095
  %v10559 = vunpack.c.h.b16 %v10095
  %v10560 = vunpack.c.l.b16 %v10096
  %v10561 = vunpack.c.h.b16 %v10096
  %v10562 = vunpack.c.l.b16 %v10097
  %v10563 = vunpack.c.h.b16 %v10097
  %v10564 = vunpack.c.l.b16 %v10098
  %v10565 = vunpack.c.h.b16 %v10098
  %v10566 = vunpack.c.l.b16 %v10099
  %v10567 = vunpack.c.h.b16 %v10099
  %v10568 = vunpack.c.l.b16 %v10100
  %v10569 = vunpack.c.h.b16 %v10100
  %v10570 = vunpack.c.l.b16 %v10101
  %v10571 = vunpack.c.h.b16 %v10101
  %v10572 = vunpack.c.l.b16 %v10102
  %v10573 = vunpack.c.h.b16 %v10102
  %v10574 = vunpack.c.l.b16 %v10103
  %v10575 = vunpack.c.h.b16 %v10103
  %v10576 = vunpack.c.l.b16 %v10104
  %v10577 = vunpack.c.h.b16 %v10104
  %v10578 = vunpack.c.l.b16 %v10105
  %v10579 = vunpack.c.h.b16 %v10105
  %v10580 = vunpack.c.l.b16 %v10106
  %v10581 = vunpack.c.h.b16 %v10106
  %v10582 = vunpack.c.l.b16 %v10107
  %v10583 = vunpack.c.h.b16 %v10107
  %v10584 = vunpack.c.l.b16 %v10108
  %v10585 = vunpack.c.h.b16 %v10108
  %v10586 = vunpack.c.l.b16 %v10109
  %v10587 = vunpack.c.h.b16 %v10109
  %v10588 = vunpack.c.l.b16 %v10110
  %v10589 = vunpack.c.h.b16 %v10110
  %v10590 = vunpack.c.l.b16 %v10111
  %v10591 = vunpack.c.h.b16 %v10111
  %v10592 = vunpack.c.l.b16 %v10112
  %v10593 = vunpack.c.h.b16 %v10112
  %v10594 = vunpack.c.l.b16 %v10113
  %v10595 = vunpack.c.h.b16 %v10113
  %v10596 = vunpack.c.l.b16 %v10114
  %v10597 = vunpack.c.h.b16 %v10114
  %v10598 = vunpack.c.l.b16 %v10115
  %v10599 = vunpack.c.h.b16 %v10115
  %v10600 = vunpack.c.l.b16 %v10116
  %v10601 = vunpack.c.h.b16 %v10116
  %v10602 = vunpack.c.l.b16 %v10117
  %v10603 = vunpack.c.h.b16 %v10117
  %v10604 = vunpack.c.l.b16 %v10118
  %v10605 = vunpack.c.h.b16 %v10118
  %v10606 = vunpack.c.l.b16 %v10119
  %v10607 = vunpack.c.h.b16 %v10119
  %v10608 = vunpack.c.l.b16 %v10120
  %v10609 = vunpack.c.h.b16 %v10120
  %v10610 = vunpack.c.l.b16 %v10121
  %v10611 = vunpack.c.h.b16 %v10121
  %v10612 = vunpack.c.l.b16 %v10122
  %v10613 = vunpack.c.h.b16 %v10122
  %v10614 = vunpack.c.l.b16 %v10123
  %v10615 = vunpack.c.h.b16 %v10123
  %v10616 = vunpack.c.l.b16 %v10124
  %v10617 = vunpack.c.h.b16 %v10124
  %v10618 = vunpack.c.l.b16 %v10125
  %v10619 = vunpack.c.h.b16 %v10125
  %v10620 = vunpack.c.l.b16 %v10126
  %v10621 = vunpack.c.h.b16 %v10126
  %v10622 = vunpack.c.l.b16 %v10127
  %v10623 = vunpack.c.h.b16 %v10127
  %v10624 = vunpack.c.l.b16 %v10128
  %v10625 = vunpack.c.h.b16 %v10128
  %v10626 = vunpack.c.l.b16 %v10129
  %v10627 = vunpack.c.h.b16 %v10129
  %v10628 = vunpack.c.l.b16 %v10130
  %v10629 = vunpack.c.h.b16 %v10130
  %v10630 = vunpack.c.l.b16 %v10131
  %v10631 = vunpack.c.h.b16 %v10131
  %v10632 = vunpack.c.l.b16 %v10132
  %v10633 = vunpack.c.h.b16 %v10132
  %v10634 = vunpack.c.l.b16 %v10133
  %v10635 = vunpack.c.h.b16 %v10133
  %v10636 = vunpack.c.l.b16 %v10134
  %v10637 = vunpack.c.h.b16 %v10134
  %v10638 = vunpack.c.l.b16 %v10135
  %v10639 = vunpack.c.h.b16 %v10135
  %v10640 = vunpack.c.l.b16 %v10136
  %v10641 = vunpack.c.h.b16 %v10136
  %v10642 = vunpack.c.l.b16 %v10137
  %v10643 = vunpack.c.h.b16 %v10137
  %v10644 = vunpack.c.l.b16 %v10138
  %v10645 = vunpack.c.h.b16 %v10138
  %v10646 = vunpack.c.l.b16 %v10139
  %v10647 = vunpack.c.h.b16 %v10139
  %v10648 = vunpack.c.l.b16 %v10140
  %v10649 = vunpack.c.h.b16 %v10140
  %v10650 = vunpack.c.l.b16 %v10141
  %v10651 = vunpack.c.h.b16 %v10141
  %v10652 = vunpack.c.l.b16 %v10142
  %v10653 = vunpack.c.h.b16 %v10142
  %v10654 = vunpack.c.l.b16 %v10143
  %v10655 = vunpack.c.h.b16 %v10143
  %v10656 = vunpack.c.l.b16 %v10144
  %v10657 = vunpack.c.h.b16 %v10144
  %v10658 = vunpack.c.l.b16 %v10145
  %v10659 = vunpack.c.h.b16 %v10145
  %v10660 = vunpack.c.l.b16 %v10146
  %v10661 = vunpack.c.h.b16 %v10146
  %v10662 = vunpack.c.l.b16 %v10147
  %v10663 = vunpack.c.h.b16 %v10147
  %v10664 = vunpack.c.l.b16 %v10148
  %v10665 = vunpack.c.h.b16 %v10148
  %v10666 = vunpack.c.l.b16 %v10149
  %v10667 = vunpack.c.h.b16 %v10149
  %v10668 = vunpack.c.l.b16 %v10150
  %v10669 = vunpack.c.h.b16 %v10150
  %v10670 = vunpack.c.l.b16 %v10151
  %v10671 = vunpack.c.h.b16 %v10151
  %v10672 = vunpack.c.l.b16 %v10152
  %v10673 = vunpack.c.h.b16 %v10152
  %v10674 = vunpack.c.l.b16 %v10153
  %v10675 = vunpack.c.h.b16 %v10153
  %v10676 = vunpack.c.l.b16 %v10154
  %v10677 = vunpack.c.h.b16 %v10154
  %v10678 = vunpack.c.l.b16 %v10155
  %v10679 = vunpack.c.h.b16 %v10155
  %v10680 = vunpack.c.l.b16 %v10156
  %v10681 = vunpack.c.h.b16 %v10156
  %v10682 = vunpack.c.l.b16 %v10157
  %v10683 = vunpack.c.h.b16 %v10157
  %v10684 = vunpack.c.l.b16 %v10158
  %v10685 = vunpack.c.h.b16 %v10158
  %v10686 = vunpack.c.l.b16 %v10159
  %v10687 = vunpack.c.h.b16 %v10159
  %v10688 = vunpack.c.l.b16 %v10160
  %v10689 = vunpack.c.h.b16 %v10160
  %v10690 = vunpack.c.l.b16 %v10161
  %v10691 = vunpack.c.h.b16 %v10161
  %v10692 = vunpack.c.l.b16 %v10162
  %v10693 = vunpack.c.h.b16 %v10162
  %v10694 = vunpack.c.l.b16 %v10163
  %v10695 = vunpack.c.h.b16 %v10163
  %v10696 = vunpack.c.l.b16 %v10164
  %v10697 = vunpack.c.h.b16 %v10164
  %v10698 = vunpack.c.l.b16 %v10165
  %v10699 = vunpack.c.h.b16 %v10165
  %v10700 = vunpack.c.l.b16 %v10166
  %v10701 = vunpack.c.h.b16 %v10166
  %v10702 = vunpack.c.l.b16 %v10167
  %v10703 = vunpack.c.h.b16 %v10167
  %v10704 = vunpack.c.l.b16 %v10168
  %v10705 = vunpack.c.h.b16 %v10168
  %v10706 = vunpack.c.l.b16 %v10169
  %v10707 = vunpack.c.h.b16 %v10169
  %v10708 = vunpack.c.l.b16 %v10170
  %v10709 = vunpack.c.h.b16 %v10170
  %v10710 = vunpack.c.l.b16 %v10171
  %v10711 = vunpack.c.h.b16 %v10171
  %v10712 = vunpack.c.l.b16 %v10172
  %v10713 = vunpack.c.h.b16 %v10172
  %v10714 = vunpack.c.l.b16 %v10173
  %v10715 = vunpack.c.h.b16 %v10173
  %v10716 = vunpack.c.l.b16 %v10174
  %v10717 = vunpack.c.h.b16 %v10174
  %v10718 = vunpack.c.l.b16 %v10175
  %v10719 = vunpack.c.h.b16 %v10175
  %v10720 = vunpack.c.l.b16 %v10176
  %v10721 = vunpack.c.h.b16 %v10176
  %v10722 = vunpack.c.l.b16 %v10177
  %v10723 = vunpack.c.h.b16 %v10177
  %v10724 = vunpack.c.l.b16 %v10178
  %v10725 = vunpack.c.h.b16 %v10178
  %v10726 = vunpack.c.l.b16 %v10179
  %v10727 = vunpack.c.h.b16 %v10179
  %v10728 = vunpack.c.l.b16 %v10180
  %v10729 = vunpack.c.h.b16 %v10180
  %v10730 = vunpack.c.l.b16 %v10181
  %v10731 = vunpack.c.h.b16 %v10181
  %v10732 = vunpack.c.l.b16 %v10182
  %v10733 = vunpack.c.h.b16 %v10182
  %v10734 = vunpack.c.l.b16 %v10183
  %v10735 = vunpack.c.h.b16 %v10183
  %v10736 = vunpack.c.l.b16 %v10184
  %v10737 = vunpack.c.h.b16 %v10184
  %v10738 = vunpack.c.l.b16 %v10185
  %v10739 = vunpack.c.h.b16 %v10185
  %v10740 = vunpack.c.l.b16 %v10186
  %v10741 = vunpack.c.h.b16 %v10186
  %v10742 = vunpack.c.l.b16 %v10187
  %v10743 = vunpack.c.h.b16 %v10187
  %v10744 = vunpack.c.l.b16 %v10188
  %v10745 = vunpack.c.h.b16 %v10188
  %v10746 = vunpack.c.l.b16 %v10189
  %v10747 = vunpack.c.h.b16 %v10189
  %v10748 = vunpack.c.l.b16 %v10190
  %v10749 = vunpack.c.h.b16 %v10190
  %v10750 = vunpack.c.l.b16 %v10191
  %v10751 = vunpack.c.h.b16 %v10191
  %v10752 = vunpack.c.l.b16 %v10192
  %v10753 = vunpack.c.h.b16 %v10192
  %v10754 = vunpack.c.l.b16 %v10193
  %v10755 = vunpack.c.h.b16 %v10193
  %v10756 = vunpack.c.l.b16 %v10194
  %v10757 = vunpack.c.h.b16 %v10194
  %v10758 = vunpack.c.l.b16 %v10195
  %v10759 = vunpack.c.h.b16 %v10195
  %v10760 = vunpack.c.l.b16 %v10196
  %v10761 = vunpack.c.h.b16 %v10196
  %v10762 = vunpack.c.l.b16 %v10197
  %v10763 = vunpack.c.h.b16 %v10197
  %v10764 = vunpack.c.l.b16 %v10198
  %v10765 = vunpack.c.h.b16 %v10198
  %v10766 = vunpack.c.l.b16 %v10199
  %v10767 = vunpack.c.h.b16 %v10199
  %v10768 = vunpack.c.l.b16 %v10200
  %v10769 = vunpack.c.h.b16 %v10200
  %v10770 = vunpack.c.l.b16 %v10201
  %v10771 = vunpack.c.h.b16 %v10201
  %v10772 = vunpack.c.l.b16 %v10202
  %v10773 = vunpack.c.h.b16 %v10202
  %v10774 = vunpack.c.l.b16 %v10203
  %v10775 = vunpack.c.h.b16 %v10203
  %v10776 = vunpack.c.l.b16 %v10204
  %v10777 = vunpack.c.h.b16 %v10204
  %v10778 = vunpack.c.l.b16 %v10205
  %v10779 = vunpack.c.h.b16 %v10205
  %v10780 = vunpack.c.l.b16 %v10206
  %v10781 = vunpack.c.h.b16 %v10206
  %v10782 = vunpack.c.l.b16 %v10207
  %v10783 = vunpack.c.h.b16 %v10207
  %v10784 = vunpack.c.l.b16 %v10208
  %v10785 = vunpack.c.h.b16 %v10208
  %v10786 = vunpack.c.l.b16 %v10209
  %v10787 = vunpack.c.h.b16 %v10209
  %v10788 = vunpack.c.l.b16 %v10210
  %v10789 = vunpack.c.h.b16 %v10210
  %v10790 = vunpack.c.l.b16 %v10211
  %v10791 = vunpack.c.h.b16 %v10211
  %v10792 = vunpack.c.l.b16 %v10212
  %v10793 = vunpack.c.h.b16 %v10212
  %v10794 = vunpack.c.l.b16 %v10213
  %v10795 = vunpack.c.h.b16 %v10213
  %v10796 = vunpack.c.l.b16 %v10214
  %v10797 = vunpack.c.h.b16 %v10214
  %v10798 = vunpack.c.l.b16 %v10215
  %v10799 = vunpack.c.h.b16 %v10215
  %v10800 = vunpack.c.l.b16 %v10216
  %v10801 = vunpack.c.h.b16 %v10216
  %v10802 = vunpack.c.l.b16 %v10217
  %v10803 = vunpack.c.h.b16 %v10217
  %v10804 = vunpack.c.l.b16 %v10218
  %v10805 = vunpack.c.h.b16 %v10218
  %v10806 = vunpack.c.l.b16 %v10219
  %v10807 = vunpack.c.h.b16 %v10219
  %v10808 = vunpack.c.l.b16 %v10220
  %v10809 = vunpack.c.h.b16 %v10220
  %v10810 = vunpack.c.l.b16 %v10221
  %v10811 = vunpack.c.h.b16 %v10221
  %v10812 = vunpack.c.l.b16 %v10222
  %v10813 = vunpack.c.h.b16 %v10222
  %v10814 = vunpack.c.l.b16 %v10223
  %v10815 = vunpack.c.h.b16 %v10223
  %v10816 = vunpack.c.l.b16 %v10224
  %v10817 = vunpack.c.h.b16 %v10224
  %v10818 = vunpack.c.l.b16 %v10225
  %v10819 = vunpack.c.h.b16 %v10225
  %v10820 = vunpack.c.l.b16 %v10226
  %v10821 = vunpack.c.h.b16 %v10226
  %v10822 = vunpack.c.l.b16 %v10227
  %v10823 = vunpack.c.h.b16 %v10227
  %v10824 = vunpack.c.l.b16 %v10228
  %v10825 = vunpack.c.h.b16 %v10228
  %v10826 = vunpack.c.l.b16 %v10229
  %v10827 = vunpack.c.h.b16 %v10229
  %v10828 = vunpack.c.l.b16 %v10230
  %v10829 = vunpack.c.h.b16 %v10230
  %v10830 = vunpack.c.l.b16 %v10231
  %v10831 = vunpack.c.h.b16 %v10231
  %v10832 = vunpack.c.l.b16 %v10232
  %v10833 = vunpack.c.h.b16 %v10232
  %v10834 = vunpack.c.l.b16 %v10233
  %v10835 = vunpack.c.h.b16 %v10233
  %v10836 = vunpack.c.l.b16 %v10234
  %v10837 = vunpack.c.h.b16 %v10234
  %v10838 = vunpack.c.l.b16 %v10235
  %v10839 = vunpack.c.h.b16 %v10235
  %v10840 = vunpack.c.l.b16 %v10236
  %v10841 = vunpack.c.h.b16 %v10236
  %v10842 = vunpack.c.l.b16 %v10237
  %v10843 = vunpack.c.h.b16 %v10237
  %v10844 = vunpack.c.l.b16 %v10238
  %v10845 = vunpack.c.h.b16 %v10238
  %v10846 = vunpack.c.l.b16 %v10239
  %v10847 = vunpack.c.h.b16 %v10239
  %v10848 = vunpack.c.l.b16 %v10240
  %v10849 = vunpack.c.h.b16 %v10240
  %v10850 = vunpack.c.l.b16 %v10241
  %v10851 = vunpack.c.h.b16 %v10241
  %v10852 = vpack.c.b16 %v10464, %v10460
  %v10853 = vpack.c.b16 %v10465, %v10461
  %v10854 = vpack.c.b16 %v10466, %v10462
  %v10855 = vpack.c.b16 %v10467, %v10463
  %v10856 = vpack.c.b16 %v10472, %v10468
  %v10857 = vpack.c.b16 %v10473, %v10469
  %v10858 = vpack.c.b16 %v10474, %v10470
  %v10859 = vpack.c.b16 %v10475, %v10471
  %v10860 = vpack.c.b16 %v10480, %v10476
  %v10861 = vpack.c.b16 %v10481, %v10477
  %v10862 = vpack.c.b16 %v10482, %v10478
  %v10863 = vpack.c.b16 %v10483, %v10479
  %v10864 = vpack.c.b16 %v10488, %v10484
  %v10865 = vpack.c.b16 %v10489, %v10485
  %v10866 = vpack.c.b16 %v10490, %v10486
  %v10867 = vpack.c.b16 %v10491, %v10487
  %v10868 = vpack.c.b16 %v10496, %v10492
  %v10869 = vpack.c.b16 %v10497, %v10493
  %v10870 = vpack.c.b16 %v10498, %v10494
  %v10871 = vpack.c.b16 %v10499, %v10495
  %v10872 = vpack.c.b16 %v10504, %v10500
  %v10873 = vpack.c.b16 %v10505, %v10501
  %v10874 = vpack.c.b16 %v10506, %v10502
  %v10875 = vpack.c.b16 %v10507, %v10503
  %v10876 = vpack.c.b16 %v10512, %v10508
  %v10877 = vpack.c.b16 %v10513, %v10509
  %v10878 = vpack.c.b16 %v10514, %v10510
  %v10879 = vpack.c.b16 %v10515, %v10511
  %v10880 = vpack.c.b16 %v10520, %v10516
  %v10881 = vpack.c.b16 %v10521, %v10517
  %v10882 = vpack.c.b16 %v10522, %v10518
  %v10883 = vpack.c.b16 %v10523, %v10519
  %v10884 = vpack.c.b16 %v10528, %v10524
  %v10885 = vpack.c.b16 %v10529, %v10525
  %v10886 = vpack.c.b16 %v10530, %v10526
  %v10887 = vpack.c.b16 %v10531, %v10527
  %v10888 = vpack.c.b16 %v10536, %v10532
  %v10889 = vpack.c.b16 %v10537, %v10533
  %v10890 = vpack.c.b16 %v10538, %v10534
  %v10891 = vpack.c.b16 %v10539, %v10535
  %v10892 = vpack.c.b16 %v10544, %v10540
  %v10893 = vpack.c.b16 %v10545, %v10541
  %v10894 = vpack.c.b16 %v10546, %v10542
  %v10895 = vpack.c.b16 %v10547, %v10543
  %v10896 = vpack.c.b16 %v10552, %v10548
  %v10897 = vpack.c.b16 %v10553, %v10549
  %v10898 = vpack.c.b16 %v10554, %v10550
  %v10899 = vpack.c.b16 %v10555, %v10551
  %v10900 = vpack.c.b16 %v10560, %v10556
  %v10901 = vpack.c.b16 %v10561, %v10557
  %v10902 = vpack.c.b16 %v10562, %v10558
  %v10903 = vpack.c.b16 %v10563, %v10559
  %v10904 = vpack.c.b16 %v10568, %v10564
  %v10905 = vpack.c.b16 %v10569, %v10565
  %v10906 = vpack.c.b16 %v10570, %v10566
  %v10907 = vpack.c.b16 %v10571, %v10567
  %v10908 = vpack.c.b16 %v10576, %v10572
  %v10909 = vpack.c.b16 %v10577, %v10573
  %v10910 = vpack.c.b16 %v10578, %v10574
  %v10911 = vpack.c.b16 %v10579, %v10575
  %v10912 = vpack.c.b16 %v10584, %v10580
  %v10913 = vpack.c.b16 %v10585, %v10581
  %v10914 = vpack.c.b16 %v10586, %v10582
  %v10915 = vpack.c.b16 %v10587, %v10583
  %v10916 = vpack.c.b16 %v10592, %v10588
  %v10917 = vpack.c.b16 %v10593, %v10589
  %v10918 = vpack.c.b16 %v10594, %v10590
  %v10919 = vpack.c.b16 %v10595, %v10591
  %v10920 = vpack.c.b16 %v10600, %v10596
  %v10921 = vpack.c.b16 %v10601, %v10597
  %v10922 = vpack.c.b16 %v10602, %v10598
  %v10923 = vpack.c.b16 %v10603, %v10599
  %v10924 = vpack.c.b16 %v10608, %v10604
  %v10925 = vpack.c.b16 %v10609, %v10605
  %v10926 = vpack.c.b16 %v10610, %v10606
  %v10927 = vpack.c.b16 %v10611, %v10607
  %v10928 = vpack.c.b16 %v10616, %v10612
  %v10929 = vpack.c.b16 %v10617, %v10613
  %v10930 = vpack.c.b16 %v10618, %v10614
  %v10931 = vpack.c.b16 %v10619, %v10615
  %v10932 = vpack.c.b16 %v10624, %v10620
  %v10933 = vpack.c.b16 %v10625, %v10621
  %v10934 = vpack.c.b16 %v10626, %v10622
  %v10935 = vpack.c.b16 %v10627, %v10623
  %v10936 = vpack.c.b16 %v10632, %v10628
  %v10937 = vpack.c.b16 %v10633, %v10629
  %v10938 = vpack.c.b16 %v10634, %v10630
  %v10939 = vpack.c.b16 %v10635, %v10631
  %v10940 = vpack.c.b16 %v10640, %v10636
  %v10941 = vpack.c.b16 %v10641, %v10637
  %v10942 = vpack.c.b16 %v10642, %v10638
  %v10943 = vpack.c.b16 %v10643, %v10639
  %v10944 = vpack.c.b16 %v10648, %v10644
  %v10945 = vpack.c.b16 %v10649, %v10645
  %v10946 = vpack.c.b16 %v10650, %v10646
  %v10947 = vpack.c.b16 %v10651, %v10647
  %v10948 = vpack.c.b16 %v10656, %v10652
  %v10949 = vpack.c.b16 %v10657, %v10653
  %v10950 = vpack.c.b16 %v10658, %v10654
  %v10951 = vpack.c.b16 %v10659, %v10655
  %v10952 = vpack.c.b16 %v10664, %v10660
  %v10953 = vpack.c.b16 %v10665, %v10661
  %v10954 = vpack.c.b16 %v10666, %v10662
  %v10955 = vpack.c.b16 %v10667, %v10663
  %v10956 = vpack.c.b16 %v10672, %v10668
  %v10957 = vpack.c.b16 %v10673, %v10669
  %v10958 = vpack.c.b16 %v10674, %v10670
  %v10959 = vpack.c.b16 %v10675, %v10671
  %v10960 = vpack.c.b16 %v10680, %v10676
  %v10961 = vpack.c.b16 %v10681, %v10677
  %v10962 = vpack.c.b16 %v10682, %v10678
  %v10963 = vpack.c.b16 %v10683, %v10679
  %v10964 = vpack.c.b16 %v10688, %v10684
  %v10965 = vpack.c.b16 %v10689, %v10685
  %v10966 = vpack.c.b16 %v10690, %v10686
  %v10967 = vpack.c.b16 %v10691, %v10687
  %v10968 = vpack.c.b16 %v10696, %v10692
  %v10969 = vpack.c.b16 %v10697, %v10693
  %v10970 = vpack.c.b16 %v10698, %v10694
  %v10971 = vpack.c.b16 %v10699, %v10695
  %v10972 = vpack.c.b16 %v10704, %v10700
  %v10973 = vpack.c.b16 %v10705, %v10701
  %v10974 = vpack.c.b16 %v10706, %v10702
  %v10975 = vpack.c.b16 %v10707, %v10703
  %v10976 = vpack.c.b16 %v10712, %v10708
  %v10977 = vpack.c.b16 %v10713, %v10709
  %v10978 = vpack.c.b16 %v10714, %v10710
  %v10979 = vpack.c.b16 %v10715, %v10711
  %v10980 = vpack.c.b16 %v10720, %v10716
  %v10981 = vpack.c.b16 %v10721, %v10717
  %v10982 = vpack.c.b16 %v10722, %v10718
  %v10983 = vpack.c.b16 %v10723, %v10719
  %v10984 = vpack.c.b16 %v10728, %v10724
  %v10985 = vpack.c.b16 %v10729, %v10725
  %v10986 = vpack.c.b16 %v10730, %v10726
  %v10987 = vpack.c.b16 %v10731, %v10727
  %v10988 = vpack.c.b16 %v10736, %v10732
  %v10989 = vpack.c.b16 %v10737, %v10733
  %v10990 = vpack.c.b16 %v10738, %v10734
  %v10991 = vpack.c.b16 %v10739, %v10735
  %v10992 = vpack.c.b16 %v10744, %v10740
  %v10993 = vpack.c.b16 %v10745, %v10741
  %v10994 = vpack.c.b16 %v10746, %v10742
  %v10995 = vpack.c.b16 %v10747, %v10743
  %v10996 = vpack.c.b16 %v10752, %v10748
  %v10997 = vpack.c.b16 %v10753, %v10749
  %v10998 = vpack.c.b16 %v10754, %v10750
  %v10999 = vpack.c.b16 %v10755, %v10751
  %v11000 = vpack.c.b16 %v10760, %v10756
  %v11001 = vpack.c.b16 %v10761, %v10757
  %v11002 = vpack.c.b16 %v10762, %v10758
  %v11003 = vpack.c.b16 %v10763, %v10759
  %v11004 = vpack.c.b16 %v10768, %v10764
  %v11005 = vpack.c.b16 %v10769, %v10765
  %v11006 = vpack.c.b16 %v10770, %v10766
  %v11007 = vpack.c.b16 %v10771, %v10767
  %v11008 = vpack.c.b16 %v10776, %v10772
  %v11009 = vpack.c.b16 %v10777, %v10773
  %v11010 = vpack.c.b16 %v10778, %v10774
  %v11011 = vpack.c.b16 %v10779, %v10775
  %v11012 = vpack.c.b16 %v10784, %v10780
  %v11013 = vpack.c.b16 %v10785, %v10781
  %v11014 = vpack.c.b16 %v10786, %v10782
  %v11015 = vpack.c.b16 %v10787, %v10783
  %v11016 = vpack.c.b16 %v10792, %v10788
  %v11017 = vpack.c.b16 %v10793, %v10789
  %v11018 = vpack.c.b16 %v10794, %v10790
  %v11019 = vpack.c.b16 %v10795, %v10791
  %v11020 = vpack.c.b16 %v10800, %v10796
  %v11021 = vpack.c.b16 %v10801, %v10797
  %v11022 = vpack.c.b16 %v10802, %v10798
  %v11023 = vpack.c.b16 %v10803, %v10799
  %v11024 = vpack.c.b16 %v10808, %v10804
  %v11025 = vpack.c.b16 %v10809, %v10805
  %v11026 = vpack.c.b16 %v10810, %v10806
  %v11027 = vpack.c.b16 %v10811, %v10807
  %v11028 = vpack.c.b16 %v10816, %v10812
  %v11029 = vpack.c.b16 %v10817, %v10813
  %v11030 = vpack.c.b16 %v10818, %v10814
  %v11031 = vpack.c.b16 %v10819, %v10815
  %v11032 = vpack.c.b16 %v10824, %v10820
  %v11033 = vpack.c.b16 %v10825, %v10821
  %v11034 = vpack.c.b16 %v10826, %v10822
  %v11035 = vpack.c.b16 %v10827, %v10823
  %v11036 = vpack.c.b16 %v10832, %v10828
  %v11037 = vpack.c.b16 %v10833, %v10829
  %v11038 = vpack.c.b16 %v10834, %v10830
  %v11039 = vpack.c.b16 %v10835, %v10831
  %v11040 = vpack.c.b16 %v10840, %v10836
  %v11041 = vpack.c.b16 %v10841, %v10837
  %v11042 = vpack.c.b16 %v10842, %v10838
  %v11043 = vpack.c.b16 %v10843, %v10839
  %v11044 = vpack.c.b16 %v10848, %v10844
  %v11045 = vpack.c.b16 %v10849, %v10845
  %v11046 = vpack.c.b16 %v10850, %v10846
  %v11047 = vpack.c.b16 %v10851, %v10847
  %11244 = vmatprep.subr.bf16.mxu0 %v10853
  %11245 = vmatpush1.bf16.msra.mxu0 %v10852
  %11246 = vmatprep.subr.bf16.mxu0 %v10857
  %11247 = vmatpush1.bf16.msra.mxu0 %v10856
  %11248 = vmatprep.subr.bf16.mxu0 %v10861
  %11249 = vmatpush1.bf16.msra.mxu0 %v10860
  %11250 = vmatprep.subr.bf16.mxu0 %v10865
  %11251 = vmatpush1.bf16.msra.mxu0 %v10864
  %11252 = vmatprep.subr.bf16.mxu0 %v10869
  %11253 = vmatpush1.bf16.msra.mxu0 %v10868
  %11254 = vmatprep.subr.bf16.mxu0 %v10873
  %11255 = vmatpush1.bf16.msra.mxu0 %v10872
  %11256 = vmatprep.subr.bf16.mxu0 %v10877
  %11257 = vmatpush1.bf16.msra.mxu0 %v10876
  %11258 = vmatprep.subr.bf16.mxu0 %v10881
  %11259 = vmatpush1.bf16.msra.mxu0 %v10880
  %11260 = vmatprep.subr.bf16.mxu0 %v10885
  %11261 = vmatpush1.bf16.msra.mxu0 %v10884
  %11262 = vmatprep.subr.bf16.mxu0 %v10889
  %11263 = vmatpush1.bf16.msra.mxu0 %v10888
  %11264 = vmatprep.subr.bf16.mxu0 %v10893
  %11265 = vmatpush1.bf16.msra.mxu0 %v10892
  %11266 = vmatprep.subr.bf16.mxu0 %v10897
  %11267 = vmatpush1.bf16.msra.mxu0 %v10896
  %11268 = vmatprep.subr.bf16.mxu0 %v10901
  %11269 = vmatpush1.bf16.msra.mxu0 %v10900
  %11270 = vmatprep.subr.bf16.mxu0 %v10905
  %11271 = vmatpush1.bf16.msra.mxu0 %v10904
  %11272 = vmatprep.subr.bf16.mxu0 %v10909
  %11273 = vmatpush1.bf16.msra.mxu0 %v10908
  %11274 = vmatprep.subr.bf16.mxu0 %v10913
  %11275 = vmatpush1.bf16.msra.mxu0 %v10912
  %11276 = vmatprep.mubr.bf16.mxu0 %v729
  %11277 = vmatmul.mubr.bf16.gmra.mrb[0].mxu0 %v728
  %v11278 = vpop.f32.mrb[0].mxu0
  %v11279 = vadd.f32 %v10247, %v11278
  %v11280 = vpop.f32.mrb[0].mxu0
  %v11281 = vadd.f32 %v10251, %v11280
  %v11282 = vpop.f32.mrb[0].mxu0
  %v11283 = vadd.f32 %v10247, %v11282
  %v11284 = vpop.f32.mrb[0].mxu0
  %v11285 = vadd.f32 %v10251, %v11284
  %11286 = vdwg.mxu0
  %11287 = vmatprep.subr.bf16.mxu0 %v10917
  %11288 = vmatpush1.bf16.msra.mxu0 %v10916
  %11289 = vmatprep.subr.bf16.mxu0 %v10921
  %11290 = vmatpush1.bf16.msra.mxu0 %v10920
  %11291 = vmatprep.subr.bf16.mxu0 %v10925
  %11292 = vmatpush1.bf16.msra.mxu0 %v10924
  %11293 = vmatprep.subr.bf16.mxu0 %v10929
  %11294 = vmatpush1.bf16.msra.mxu0 %v10928
  %11295 = vmatprep.subr.bf16.mxu0 %v10933
  %11296 = vmatpush1.bf16.msra.mxu0 %v10932
  %11297 = vmatprep.subr.bf16.mxu0 %v10937
  %11298 = vmatpush1.bf16.msra.mxu0 %v10936
  %11299 = vmatprep.subr.bf16.mxu0 %v10941
  %11300 = vmatpush1.bf16.msra.mxu0 %v10940
  %11301 = vmatprep.subr.bf16.mxu0 %v10945
  %11302 = vmatpush1.bf16.msra.mxu0 %v10944
  %11303 = vmatprep.subr.bf16.mxu0 %v10949
  %11304 = vmatpush1.bf16.msra.mxu0 %v10948
  %11305 = vmatprep.subr.bf16.mxu0 %v10953
  %11306 = vmatpush1.bf16.msra.mxu0 %v10952
  %11307 = vmatprep.subr.bf16.mxu0 %v10957
  %11308 = vmatpush1.bf16.msra.mxu0 %v10956
  %11309 = vmatprep.subr.bf16.mxu0 %v10961
  %11310 = vmatpush1.bf16.msra.mxu0 %v10960
  %11311 = vmatprep.subr.bf16.mxu0 %v10965
  %11312 = vmatpush1.bf16.msra.mxu0 %v10964
  %11313 = vmatprep.subr.bf16.mxu0 %v10969
  %11314 = vmatpush1.bf16.msra.mxu0 %v10968
  %11315 = vmatprep.subr.bf16.mxu0 %v10973
  %11316 = vmatpush1.bf16.msra.mxu0 %v10972
  %11317 = vmatprep.subr.bf16.mxu0 %v10977
  %11318 = vmatpush1.bf16.msra.mxu0 %v10976
  %11319 = vmatprep.mubr.bf16.mxu0 %v731
  %11320 = vmatmul.mubr.bf16.gmra.mrb[0].mxu0 %v730
  %v11321 = vpop.f32.mrb[0].mxu0
  %v11322 = vadd.f32 %v11279, %v11321
  %v11323 = vpop.f32.mrb[0].mxu0
  %v11324 = vadd.f32 %v11281, %v11323
  %v11325 = vpop.f32.mrb[0].mxu0
  %v11326 = vadd.f32 %v11283, %v11325
  %v11327 = vpop.f32.mrb[0].mxu0
  %v11328 = vadd.f32 %v11285, %v11327
  %11329 = vdwg.mxu0
  %11330 = vmatprep.subr.bf16.mxu0 %v10981
  %11331 = vmatpush1.bf16.msra.mxu0 %v10980
  %11332 = vmatprep.subr.bf16.mxu0 %v10985
  %11333 = vmatpush1.bf16.msra.mxu0 %v10984
  %11334 = vmatprep.subr.bf16.mxu0 %v10989
  %11335 = vmatpush1.bf16.msra.mxu0 %v10988
  %11336 = vmatprep.subr.bf16.mxu0 %v10993
  %11337 = vmatpush1.bf16.msra.mxu0 %v10992
  %11338 = vmatprep.subr.bf16.mxu0 %v10997
  %11339 = vmatpush1.bf16.msra.mxu0 %v10996
  %11340 = vmatprep.subr.bf16.mxu0 %v11001
  %11341 = vmatpush1.bf16.msra.mxu0 %v11000
  %11342 = vmatprep.subr.bf16.mxu0 %v11005
  %11343 = vmatpush1.bf16.msra.mxu0 %v11004
  %11344 = vmatprep.subr.bf16.mxu0 %v11009
  %11345 = vmatpush1.bf16.msra.mxu0 %v11008
  %11346 = vmatprep.subr.bf16.mxu0 %v11013
  %11347 = vmatpush1.bf16.msra.mxu0 %v11012
  %11348 = vmatprep.subr.bf16.mxu0 %v11017
  %11349 = vmatpush1.bf16.msra.mxu0 %v11016
  %11350 = vmatprep.subr.bf16.mxu0 %v11021
  %11351 = vmatpush1.bf16.msra.mxu0 %v11020
  %11352 = vmatprep.subr.bf16.mxu0 %v11025
  %11353 = vmatpush1.bf16.msra.mxu0 %v11024
  %11354 = vmatprep.subr.bf16.mxu0 %v11029
  %11355 = vmatpush1.bf16.msra.mxu0 %v11028
  %11356 = vmatprep.subr.bf16.mxu0 %v11033
  %11357 = vmatpush1.bf16.msra.mxu0 %v11032
  %11358 = vmatprep.subr.bf16.mxu0 %v11037
  %11359 = vmatpush1.bf16.msra.mxu0 %v11036
  %11360 = vmatprep.subr.bf16.mxu0 %v11041
  %11361 = vmatpush1.bf16.msra.mxu0 %v11040
  %11362 = vmatprep.mubr.bf16.mxu0 %v733
  %11363 = vmatmul.mubr.bf16.gmra.mrb[0].mxu0 %v732
  %v11364 = vpop.f32.mrb[0].mxu0
  %v11365 = vadd.f32 %v11322, %v11364
  %v11366 = vpop.f32.mrb[0].mxu0
  %v11367 = vadd.f32 %v11324, %v11366
  %v11368 = vpop.f32.mrb[0].mxu0
  %v11369 = vadd.f32 %v11326, %v11368
  %v11370 = vpop.f32.mrb[0].mxu0
  %v11371 = vadd.f32 %v11328, %v11370
  %11372 = vdwg.mxu0
  %11373 = vmatprep.subr.bf16.mxu0 %v11045
  %11374 = vmatpush1.bf16.msra.mxu0 %v11044
  %11375 = vmatprep.subr.bf16.mxu0 0
  %11376 = vmatpush1.bf16.msra.mxu0 0
  %11377 = vmatprep.subr.bf16.mxu0 0
  %11378 = vmatpush1.bf16.msra.mxu0 0
  %11379 = vmatprep.subr.bf16.mxu0 0
  %11380 = vmatpush1.bf16.msra.mxu0 0
  %11381 = vmatprep.subr.bf16.mxu0 0
  %11382 = vmatpush1.bf16.msra.mxu0 0
  %11383 = vmatprep.subr.bf16.mxu0 0
  %11384 = vmatpush1.bf16.msra.mxu0 0
  %11385 = vmatprep.subr.bf16.mxu0 0
  %11386 = vmatpush1.bf16.msra.mxu0 0
  %11387 = vmatprep.subr.bf16.mxu0 0
  %11388 = vmatpush1.bf16.msra.mxu0 0
  %11389 = vmatprep.subr.bf16.mxu0 0
  %11390 = vmatpush1.bf16.msra.mxu0 0
  %11391 = vmatprep.subr.bf16.mxu0 0
  %11392 = vmatpush1.bf16.msra.mxu0 0
  %11393 = vmatprep.subr.bf16.mxu0 0
  %11394 = vmatpush1.bf16.msra.mxu0 0
  %11395 = vmatprep.subr.bf16.mxu0 0
  %11396 = vmatpush1.bf16.msra.mxu0 0
  %11397 = vmatprep.subr.bf16.mxu0 0
  %11398 = vmatpush1.bf16.msra.mxu0 0
  %11399 = vmatprep.subr.bf16.mxu0 0
  %11400 = vmatpush1.bf16.msra.mxu0 0
  %11401 = vmatprep.subr.bf16.mxu0 0
  %11402 = vmatpush1.bf16.msra.mxu0 0
  %11403 = vmatprep.subr.bf16.mxu0 0
  %11404 = vmatpush1.bf16.msra.mxu0 0
  %11405 = vmatprep.mubr.bf16.mxu0 0
  %11406 = vmatmul.mubr.bf16.gmra.mrb[0].mxu0 %v1788
  %v11407 = vpop.f32.mrb[0].mxu0
  %v11408 = vadd.f32 %v11365, %v11407
  %v11409 = vpop.f32.mrb[0].mxu0
  %v11410 = vadd.f32 %v11367, %v11409
  %v11411 = vpop.f32.mrb[0].mxu0
  %v11412 = vadd.f32 %v11369, %v11411
  %v11413 = vpop.f32.mrb[0].mxu0
  %v11414 = vadd.f32 %v11371, %v11413
  %11415 = vdwg.mxu0
  %11416 = vmatprep.subr.bf16.mxu0 %v10855
  %11417 = vmatpush1.bf16.msra.mxu0 %v10854
  %11418 = vmatprep.subr.bf16.mxu0 %v10859
  %11419 = vmatpush1.bf16.msra.mxu0 %v10858
  %11420 = vmatprep.subr.bf16.mxu0 %v10863
  %11421 = vmatpush1.bf16.msra.mxu0 %v10862
  %11422 = vmatprep.subr.bf16.mxu0 %v10867
  %11423 = vmatpush1.bf16.msra.mxu0 %v10866
  %11424 = vmatprep.subr.bf16.mxu0 %v10871
  %11425 = vmatpush1.bf16.msra.mxu0 %v10870
  %11426 = vmatprep.subr.bf16.mxu0 %v10875
  %11427 = vmatpush1.bf16.msra.mxu0 %v10874
  %11428 = vmatprep.subr.bf16.mxu0 %v10879
  %11429 = vmatpush1.bf16.msra.mxu0 %v10878
  %11430 = vmatprep.subr.bf16.mxu0 %v10883
  %11431 = vmatpush1.bf16.msra.mxu0 %v10882
  %11432 = vmatprep.subr.bf16.mxu0 %v10887
  %11433 = vmatpush1.bf16.msra.mxu0 %v10886
  %11434 = vmatprep.subr.bf16.mxu0 %v10891
  %11435 = vmatpush1.bf16.msra.mxu0 %v10890
  %11436 = vmatprep.subr.bf16.mxu0 %v10895
  %11437 = vmatpush1.bf16.msra.mxu0 %v10894
  %11438 = vmatprep.subr.bf16.mxu0 %v10899
  %11439 = vmatpush1.bf16.msra.mxu0 %v10898
  %11440 = vmatprep.subr.bf16.mxu0 %v10903
  %11441 = vmatpush1.bf16.msra.mxu0 %v10902
  %11442 = vmatprep.subr.bf16.mxu0 %v10907
  %11443 = vmatpush1.bf16.msra.mxu0 %v10906
  %11444 = vmatprep.subr.bf16.mxu0 %v10911
  %11445 = vmatpush1.bf16.msra.mxu0 %v10910
  %11446 = vmatprep.subr.bf16.mxu0 %v10915
  %11447 = vmatpush1.bf16.msra.mxu0 %v10914
  %11448 = vmatprep.mubr.bf16.mxu0 %v729
  %11449 = vmatmul.mubr.bf16.gmra.mrb[0].mxu0 %v728
  %v11450 = vpop.f32.mrb[0].mxu0
  %v11451 = vadd.f32 %v10255, %v11450
  %v11452 = vpop.f32.mrb[0].mxu0
  %v11453 = vadd.f32 %v10259, %v11452
  %v11454 = vpop.f32.mrb[0].mxu0
  %v11455 = vadd.f32 %v10255, %v11454
  %v11456 = vpop.f32.mrb[0].mxu0
  %v11457 = vadd.f32 %v10259, %v11456
  %11458 = vdwg.mxu0
  %11459 = vmatprep.subr.bf16.mxu0 %v10919
  %11460 = vmatpush1.bf16.msra.mxu0 %v10918
  %11461 = vmatprep.subr.bf16.mxu0 %v10923
  %11462 = vmatpush1.bf16.msra.mxu0 %v10922
  %11463 = vmatprep.subr.bf16.mxu0 %v10927
  %11464 = vmatpush1.bf16.msra.mxu0 %v10926
  %11465 = vmatprep.subr.bf16.mxu0 %v10931
  %11466 = vmatpush1.bf16.msra.mxu0 %v10930
  %11467 = vmatprep.subr.bf16.mxu0 %v10935
  %11468 = vmatpush1.bf16.msra.mxu0 %v10934
  %11469 = vmatprep.subr.bf16.mxu0 %v10939
  %11470 = vmatpush1.bf16.msra.mxu0 %v10938
  %11471 = vmatprep.subr.bf16.mxu0 %v10943
  %11472 = vmatpush1.bf16.msra.mxu0 %v10942
  %11473 = vmatprep.subr.bf16.mxu0 %v10947
  %11474 = vmatpush1.bf16.msra.mxu0 %v10946
  %11475 = vmatprep.subr.bf16.mxu0 %v10951
  %11476 = vmatpush1.bf16.msra.mxu0 %v10950
  %11477 = vmatprep.subr.bf16.mxu0 %v10955
  %11478 = vmatpush1.bf16.msra.mxu0 %v10954
  %11479 = vmatprep.subr.bf16.mxu0 %v10959
  %11480 = vmatpush1.bf16.msra.mxu0 %v10958
  %11481 = vmatprep.subr.bf16.mxu0 %v10963
  %11482 = vmatpush1.bf16.msra.mxu0 %v10962
  %11483 = vmatprep.subr.bf16.mxu0 %v10967
  %11484 = vmatpush1.bf16.msra.mxu0 %v10966
  %11485 = vmatprep.subr.bf16.mxu0 %v10971
  %11486 = vmatpush1.bf16.msra.mxu0 %v10970
  %11487 = vmatprep.subr.bf16.mxu0 %v10975
  %11488 = vmatpush1.bf16.msra.mxu0 %v10974
  %11489 = vmatprep.subr.bf16.mxu0 %v10979
  %11490 = vmatpush1.bf16.msra.mxu0 %v10978
  %11491 = vmatprep.mubr.bf16.mxu0 %v731
  %11492 = vmatmul.mubr.bf16.gmra.mrb[0].mxu0 %v730
  %v11493 = vpop.f32.mrb[0].mxu0
  %v11494 = vadd.f32 %v11451, %v11493
  %v11495 = vpop.f32.mrb[0].mxu0
  %v11496 = vadd.f32 %v11453, %v11495
  %v11497 = vpop.f32.mrb[0].mxu0
  %v11498 = vadd.f32 %v11455, %v11497
  %v11499 = vpop.f32.mrb[0].mxu0
  %v11500 = vadd.f32 %v11457, %v11499
  %11501 = vdwg.mxu0
  %11502 = vmatprep.subr.bf16.mxu0 %v10983
  %11503 = vmatpush1.bf16.msra.mxu0 %v10982
  %11504 = vmatprep.subr.bf16.mxu0 %v10987
  %11505 = vmatpush1.bf16.msra.mxu0 %v10986
  %11506 = vmatprep.subr.bf16.mxu0 %v10991
  %11507 = vmatpush1.bf16.msra.mxu0 %v10990
  %11508 = vmatprep.subr.bf16.mxu0 %v10995
  %11509 = vmatpush1.bf16.msra.mxu0 %v10994
  %11510 = vmatprep.subr.bf16.mxu0 %v10999
  %11511 = vmatpush1.bf16.msra.mxu0 %v10998
  %11512 = vmatprep.subr.bf16.mxu0 %v11003
  %11513 = vmatpush1.bf16.msra.mxu0 %v11002
  %11514 = vmatprep.subr.bf16.mxu0 %v11007
  %11515 = vmatpush1.bf16.msra.mxu0 %v11006
  %11516 = vmatprep.subr.bf16.mxu0 %v11011
  %11517 = vmatpush1.bf16.msra.mxu0 %v11010
  %11518 = vmatprep.subr.bf16.mxu0 %v11015
  %11519 = vmatpush1.bf16.msra.mxu0 %v11014
  %11520 = vmatprep.subr.bf16.mxu0 %v11019
  %11521 = vmatpush1.bf16.msra.mxu0 %v11018
  %11522 = vmatprep.subr.bf16.mxu0 %v11023
  %11523 = vmatpush1.bf16.msra.mxu0 %v11022
  %11524 = vmatprep.subr.bf16.mxu0 %v11027
  %11525 = vmatpush1.bf16.msra.mxu0 %v11026
  %11526 = vmatprep.subr.bf16.mxu0 %v11031
  %11527 = vmatpush1.bf16.msra.mxu0 %v11030
  %11528 = vmatprep.subr.bf16.mxu0 %v11035
  %11529 = vmatpush1.bf16.msra.mxu0 %v11034
  %11530 = vmatprep.subr.bf16.mxu0 %v11039
  %11531 = vmatpush1.bf16.msra.mxu0 %v11038
  %11532 = vmatprep.subr.bf16.mxu0 %v11043
  %11533 = vmatpush1.bf16.msra.mxu0 %v11042
  %11534 = vmatprep.mubr.bf16.mxu0 %v733
  %11535 = vmatmul.mubr.bf16.gmra.mrb[0].mxu0 %v732
  %v11536 = vpop.f32.mrb[0].mxu0
  %v11537 = vadd.f32 %v11494, %v11536
  %v11538 = vpop.f32.mrb[0].mxu0
  %v11539 = vadd.f32 %v11496, %v11538
  %v11540 = vpop.f32.mrb[0].mxu0
  %v11541 = vadd.f32 %v11498, %v11540
  %v11542 = vpop.f32.mrb[0].mxu0
  %v11543 = vadd.f32 %v11500, %v11542
  %11544 = vdwg.mxu0
  %11545 = vmatprep.subr.bf16.mxu0 %v11047
  %11546 = vmatpush1.bf16.msra.mxu0 %v11046
  %11547 = vmatprep.subr.bf16.mxu0 0
  %11548 = vmatpush1.bf16.msra.mxu0 0
  %11549 = vmatprep.subr.bf16.mxu0 0
  %11550 = vmatpush1.bf16.msra.mxu0 0
  %11551 = vmatprep.subr.bf16.mxu0 0
  %11552 = vmatpush1.bf16.msra.mxu0 0
  %11553 = vmatprep.subr.bf16.mxu0 0
  %11554 = vmatpush1.bf16.msra.mxu0 0
  %11555 = vmatprep.subr.bf16.mxu0 0
  %11556 = vmatpush1.bf16.msra.mxu0 0
  %11557 = vmatprep.subr.bf16.mxu0 0
  %11558 = vmatpush1.bf16.msra.mxu0 0
  %11559 = vmatprep.subr.bf16.mxu0 0
  %11560 = vmatpush1.bf16.msra.mxu0 0
  %11561 = vmatprep.subr.bf16.mxu0 0
  %11562 = vmatpush1.bf16.msra.mxu0 0
  %11563 = vmatprep.subr.bf16.mxu0 0
  %11564 = vmatpush1.bf16.msra.mxu0 0
  %11565 = vmatprep.subr.bf16.mxu0 0
  %11566 = vmatpush1.bf16.msra.mxu0 0
  %11567 = vmatprep.subr.bf16.mxu0 0
  %11568 = vmatpush1.bf16.msra.mxu0 0
  %11569 = vmatprep.subr.bf16.mxu0 0
  %11570 = vmatpush1.bf16.msra.mxu0 0
  %11571 = vmatprep.subr.bf16.mxu0 0
  %11572 = vmatpush1.bf16.msra.mxu0 0
  %11573 = vmatprep.subr.bf16.mxu0 0
  %11574 = vmatpush1.bf16.msra.mxu0 0
  %11575 = vmatprep.subr.bf16.mxu0 0
  %11576 = vmatpush1.bf16.msra.mxu0 0
  %11577 = vmatprep.mubr.bf16.mxu0 0
  %11578 = vmatmul.mubr.bf16.gmra.mrb[0].mxu0 %v1788
  %v11579 = vpop.f32.mrb[0].mxu0
  %v11580 = vadd.f32 %v11537, %v11579
  %v11581 = vpop.f32.mrb[0].mxu0
  %v11582 = vadd.f32 %v11539, %v11581
  %v11583 = vpop.f32.mrb[0].mxu0
  %v11584 = vadd.f32 %v11541, %v11583
  %v11585 = vpop.f32.mrb[0].mxu0
  %v11586 = vadd.f32 %v11543, %v11585
  %11587 = vdwg.mxu0
  %v11588 = vmax.f32 %v11408, 0.0
  %v11589 = vmax.f32 %v11410, 0.0
  %v11590 = vmax.f32 %v11580, 0.0
  %v11591 = vmax.f32 %v11582, 0.0
  %v11592 = vmax.f32 %v11412, 0.0
  %v11593 = vmax.f32 %v11414, 0.0
  %v11594 = vmax.f32 %v11584, 0.0
  %v11595 = vmax.f32 %v11586, 0.0
  %v11596 = vpack.c.bf16 %v11592, %v11588
  %v11597 = vpack.c.bf16 %v11593, %v11589
  %v11598 = vpack.c.bf16 %v11594, %v11590
  %v11599 = vpack.c.bf16 %v11595, %v11591
  %v11600 = vld [vmem:[%s21] sm:$0xff]
  %v11601 = vld [vmem:[%s21 + $0x8] sm:$0xff]
  %v11602 = vld [vmem:[%s21 + $0x10] sm:$0xff]
  %v11603 = vld [vmem:[%s21 + $0x18] sm:$0xff]
  %v11604 = vld [vmem:[%s21 + $0x20] sm:$0xff]
  %v11605 = vld [vmem:[%s21 + $0x28] sm:$0xff]
  %v11606 = vld [vmem:[%s21 + $0x30] sm:$0xff]
  %v11607 = vld [vmem:[%s21 + $0x38] sm:$0xff]
  %v11608 = vld [vmem:[%s21 + $0x40] sm:$0xff]
  %v11609 = vld [vmem:[%s21 + $0x48] sm:$0xff]
  %v11610 = vld [vmem:[%s21 + $0x50] sm:$0xff]
  %v11611 = vld [vmem:[%s21 + $0x58] sm:$0xff]
  %v11612 = vld [vmem:[%s21 + $0x60] sm:$0xff]
  %v11613 = vld [vmem:[%s21 + $0x68] sm:$0xff]
  %v11614 = vld [vmem:[%s21 + $0x70] sm:$0xff]
  %v11615 = vld [vmem:[%s21 + $0x78] sm:$0xff]
  %v11616 = vld [vmem:[%s21 + $0x80] sm:$0xff]
  %v11617 = vld [vmem:[%s21 + $0x88] sm:$0xff]
  %v11618 = vld [vmem:[%s21 + $0x90] sm:$0xff]
  %v11619 = vld [vmem:[%s21 + $0x98] sm:$0xff]
  %v11620 = vld [vmem:[%s21 + $0xa0] sm:$0xff]
  %v11621 = vld [vmem:[%s21 + $0xa8] sm:$0xff]
  %v11622 = vld [vmem:[%s21 + $0xb0] sm:$0xff]
  %v11623 = vld [vmem:[%s21 + $0xb8] sm:$0xff]
  %v11624 = vld [vmem:[%s21 + $0xc0] sm:$0xff]
  %v11625 = vld [vmem:[%s21 + $0xc8] sm:$0xff]
  %v11626 = vld [vmem:[%s21 + $0xd0] sm:$0xff]
  %v11627 = vld [vmem:[%s21 + $0xd8] sm:$0xff]
  %v11628 = vld [vmem:[%s21 + $0xe0] sm:$0xff]
  %v11629 = vld [vmem:[%s21 + $0xe8] sm:$0xff]
  %v11630 = vld [vmem:[%s21 + $0xf0] sm:$0xff]
  %v11631 = vld [vmem:[%s21 + $0xf8] sm:$0xff]
  %v11632 = vld [vmem:[%s21 + $0x100] sm:$0xff]
  %v11633 = vld [vmem:[%s21 + $0x108] sm:$0xff]
  %v11634 = vld [vmem:[%s21 + $0x110] sm:$0xff]
  %v11635 = vld [vmem:[%s21 + $0x118] sm:$0xff]
  %v11636 = vld [vmem:[%s21 + $0x120] sm:$0xff]
  %v11637 = vld [vmem:[%s21 + $0x128] sm:$0xff]
  %v11638 = vld [vmem:[%s21 + $0x130] sm:$0xff]
  %v11639 = vld [vmem:[%s21 + $0x138] sm:$0xff]
  %v11640 = vld [vmem:[%s21 + $0x140] sm:$0xff]
  %v11641 = vld [vmem:[%s21 + $0x148] sm:$0xff]
  %v11642 = vld [vmem:[%s21 + $0x150] sm:$0xff]
  %v11643 = vld [vmem:[%s21 + $0x158] sm:$0xff]
  %v11644 = vld [vmem:[%s21 + $0x160] sm:$0xff]
  %v11645 = vld [vmem:[%s21 + $0x168] sm:$0xff]
  %v11646 = vld [vmem:[%s21 + $0x170] sm:$0xff]
  %v11647 = vld [vmem:[%s21 + $0x178] sm:$0xff]
  %v11648 = vld [vmem:[%s21 + $0x180] sm:$0xff]
  %v11649 = vld [vmem:[%s21 + $0x188] sm:$0xff]
  %v11650 = vld [vmem:[%s21 + $0x190] sm:$0xff]
  %v11651 = vld [vmem:[%s21 + $0x198] sm:$0xff]
  %v11652 = vld [vmem:[%s21 + $0x1a0] sm:$0xff]
  %v11653 = vld [vmem:[%s21 + $0x1a8] sm:$0xff]
  %v11654 = vld [vmem:[%s21 + $0x1b0] sm:$0xff]
  %v11655 = vld [vmem:[%s21 + $0x1b8] sm:$0xff]
  %v11656 = vld [vmem:[%s21 + $0x1c0] sm:$0xff]
  %v11657 = vld [vmem:[%s21 + $0x1c8] sm:$0xff]
  %v11658 = vld [vmem:[%s21 + $0x1d0] sm:$0xff]
  %v11659 = vld [vmem:[%s21 + $0x1d8] sm:$0xff]
  %v11660 = vld [vmem:[%s21 + $0x1e0] sm:$0xff]
  %v11661 = vld [vmem:[%s21 + $0x1e8] sm:$0xff]
  %v11662 = vld [vmem:[%s21 + $0x1f0] sm:$0xff]
  %v11663 = vld [vmem:[%s21 + $0x1f8] sm:$0xff]
  %v11664 = vld [vmem:[%s21 + $0x200] sm:$0xff]
  %v11665 = vld [vmem:[%s21 + $0x208] sm:$0xff]
  %v11666 = vld [vmem:[%s21 + $0x210] sm:$0xff]
  %v11667 = vld [vmem:[%s21 + $0x218] sm:$0xff]
  %v11668 = vld [vmem:[%s21 + $0x220] sm:$0xff]
  %v11669 = vld [vmem:[%s21 + $0x228] sm:$0xff]
  %v11670 = vld [vmem:[%s21 + $0x230] sm:$0xff]
  %v11671 = vld [vmem:[%s21 + $0x238] sm:$0xff]
  %v11672 = vld [vmem:[%s21 + $0x240] sm:$0xff]
  %v11673 = vld [vmem:[%s21 + $0x248] sm:$0xff]
  %v11674 = vld [vmem:[%s21 + $0x250] sm:$0xff]
  %v11675 = vld [vmem:[%s21 + $0x258] sm:$0xff]
  %v11676 = vld [vmem:[%s21 + $0x260] sm:$0xff]
  %v11677 = vld [vmem:[%s21 + $0x268] sm:$0xff]
  %v11678 = vld [vmem:[%s21 + $0x270] sm:$0xff]
  %v11679 = vld [vmem:[%s21 + $0x278] sm:$0xff]
  %v11680 = vld [vmem:[%s21 + $0x280] sm:$0xff]
  %v11681 = vld [vmem:[%s21 + $0x288] sm:$0xff]
  %v11682 = vld [vmem:[%s21 + $0x290] sm:$0xff]
  %v11683 = vld [vmem:[%s21 + $0x298] sm:$0xff]
  %v11684 = vld [vmem:[%s21 + $0x2a0] sm:$0xff]
  %v11685 = vld [vmem:[%s21 + $0x2a8] sm:$0xff]
  %v11686 = vld [vmem:[%s21 + $0x2b0] sm:$0xff]
  %v11687 = vld [vmem:[%s21 + $0x2b8] sm:$0xff]
  %v11688 = vld [vmem:[%s21 + $0x2c0] sm:$0xff]
  %v11689 = vld [vmem:[%s21 + $0x2c8] sm:$0xff]
  %v11690 = vld [vmem:[%s21 + $0x2d0] sm:$0xff]
  %v11691 = vld [vmem:[%s21 + $0x2d8] sm:$0xff]
  %v11692 = vld [vmem:[%s21 + $0x2e0] sm:$0xff]
  %v11693 = vld [vmem:[%s21 + $0x2e8] sm:$0xff]
  %v11694 = vld [vmem:[%s21 + $0x2f0] sm:$0xff]
  %v11695 = vld [vmem:[%s21 + $0x2f8] sm:$0xff]
  %v11696 = vld [vmem:[%s21 + $0x300] sm:$0xff]
  %v11697 = vld [vmem:[%s21 + $0x308] sm:$0xff]
  %v11698 = vld [vmem:[%s21 + $0x310] sm:$0xff]
  %v11699 = vld [vmem:[%s21 + $0x318] sm:$0xff]
  %v11700 = vld [vmem:[%s21 + $0x320] sm:$0xff]
  %v11701 = vld [vmem:[%s21 + $0x328] sm:$0xff]
  %v11702 = vld [vmem:[%s21 + $0x330] sm:$0xff]
  %v11703 = vld [vmem:[%s21 + $0x338] sm:$0xff]
  %v11704 = vld [vmem:[%s21 + $0x340] sm:$0xff]
  %v11705 = vld [vmem:[%s21 + $0x348] sm:$0xff]
  %v11706 = vld [vmem:[%s21 + $0x350] sm:$0xff]
  %v11707 = vld [vmem:[%s21 + $0x358] sm:$0xff]
  %v11708 = vld [vmem:[%s21 + $0x360] sm:$0xff]
  %v11709 = vld [vmem:[%s21 + $0x368] sm:$0xff]
  %v11710 = vld [vmem:[%s21 + $0x370] sm:$0xff]
  %v11711 = vld [vmem:[%s21 + $0x378] sm:$0xff]
  %v11712 = vld [vmem:[%s21 + $0x380] sm:$0xff]
  %v11713 = vld [vmem:[%s21 + $0x388] sm:$0xff]
  %v11714 = vld [vmem:[%s21 + $0x390] sm:$0xff]
  %v11715 = vld [vmem:[%s21 + $0x398] sm:$0xff]
  %v11716 = vld [vmem:[%s21 + $0x3a0] sm:$0xff]
  %v11717 = vld [vmem:[%s21 + $0x3a8] sm:$0xff]
  %v11718 = vld [vmem:[%s21 + $0x3b0] sm:$0xff]
  %v11719 = vld [vmem:[%s21 + $0x3b8] sm:$0xff]
  %v11720 = vld [vmem:[%s21 + $0x3c0] sm:$0xff]
  %v11721 = vld [vmem:[%s21 + $0x3c8] sm:$0xff]
  %v11722 = vld [vmem:[%s21 + $0x3d0] sm:$0xff]
  %v11723 = vld [vmem:[%s21 + $0x3d8] sm:$0xff]
  %v11724 = vld [vmem:[%s21 + $0x3e0] sm:$0xff]
  %v11725 = vld [vmem:[%s21 + $0x3e8] sm:$0xff]
  %v11726 = vld [vmem:[%s21 + $0x3f0] sm:$0xff]
  %v11727 = vld [vmem:[%s21 + $0x3f8] sm:$0xff]
  %v11728 = vld [vmem:[%s22] sm:$0xf]
  %v11730 = vlaneseq
  %v11731 = vshrl.u32 %v11730, 7
  %v11732 = vsub.s32 0, %v11731
  %v11733 = vrot.slane %v11728, %v11732
  %v11734 = vlaneseq
  %v11735 = vshrl.u32 %v11734, 7
  %v11736 = vsub.s32 1, %v11735
  %v11737 = vrot.slane %v11728, %v11736
  %v11738 = vlaneseq
  %v11739 = vshrl.u32 %v11738, 7
  %v11740 = vsub.s32 2, %v11739
  %v11741 = vrot.slane %v11728, %v11740
  %v11742 = vlaneseq
  %v11743 = vshrl.u32 %v11742, 7
  %v11744 = vsub.s32 3, %v11743
  %v11745 = vrot.slane %v11728, %v11744
  %v11878 = vunpack.c.l.b16 %v11600
  %v11879 = vunpack.c.h.b16 %v11600
  %v11880 = vunpack.c.l.b16 %v11601
  %v11881 = vunpack.c.h.b16 %v11601
  %v11882 = vunpack.c.l.b16 %v11602
  %v11883 = vunpack.c.h.b16 %v11602
  %v11884 = vunpack.c.l.b16 %v11603
  %v11885 = vunpack.c.h.b16 %v11603
  %v11886 = vunpack.c.l.b16 %v11604
  %v11887 = vunpack.c.h.b16 %v11604
  %v11888 = vunpack.c.l.b16 %v11605
  %v11889 = vunpack.c.h.b16 %v11605
  %v11890 = vunpack.c.l.b16 %v11606
  %v11891 = vunpack.c.h.b16 %v11606
  %v11892 = vunpack.c.l.b16 %v11607
  %v11893 = vunpack.c.h.b16 %v11607
  %v11894 = vunpack.c.l.b16 %v11608
  %v11895 = vunpack.c.h.b16 %v11608
  %v11896 = vunpack.c.l.b16 %v11609
  %v11897 = vunpack.c.h.b16 %v11609
  %v11898 = vunpack.c.l.b16 %v11610
  %v11899 = vunpack.c.h.b16 %v11610
  %v11900 = vunpack.c.l.b16 %v11611
  %v11901 = vunpack.c.h.b16 %v11611
  %v11902 = vunpack.c.l.b16 %v11612
  %v11903 = vunpack.c.h.b16 %v11612
  %v11904 = vunpack.c.l.b16 %v11613
  %v11905 = vunpack.c.h.b16 %v11613
  %v11906 = vunpack.c.l.b16 %v11614
  %v11907 = vunpack.c.h.b16 %v11614
  %v11908 = vunpack.c.l.b16 %v11615
  %v11909 = vunpack.c.h.b16 %v11615
  %v11910 = vunpack.c.l.b16 %v11616
  %v11911 = vunpack.c.h.b16 %v11616
  %v11912 = vunpack.c.l.b16 %v11617
  %v11913 = vunpack.c.h.b16 %v11617
  %v11914 = vunpack.c.l.b16 %v11618
  %v11915 = vunpack.c.h.b16 %v11618
  %v11916 = vunpack.c.l.b16 %v11619
  %v11917 = vunpack.c.h.b16 %v11619
  %v11918 = vunpack.c.l.b16 %v11620
  %v11919 = vunpack.c.h.b16 %v11620
  %v11920 = vunpack.c.l.b16 %v11621
  %v11921 = vunpack.c.h.b16 %v11621
  %v11922 = vunpack.c.l.b16 %v11622
  %v11923 = vunpack.c.h.b16 %v11622
  %v11924 = vunpack.c.l.b16 %v11623
  %v11925 = vunpack.c.h.b16 %v11623
  %v11926 = vunpack.c.l.b16 %v11624
  %v11927 = vunpack.c.h.b16 %v11624
  %v11928 = vunpack.c.l.b16 %v11625
  %v11929 = vunpack.c.h.b16 %v11625
  %v11930 = vunpack.c.l.b16 %v11626
  %v11931 = vunpack.c.h.b16 %v11626
  %v11932 = vunpack.c.l.b16 %v11627
  %v11933 = vunpack.c.h.b16 %v11627
  %v11934 = vunpack.c.l.b16 %v11628
  %v11935 = vunpack.c.h.b16 %v11628
  %v11936 = vunpack.c.l.b16 %v11629
  %v11937 = vunpack.c.h.b16 %v11629
  %v11938 = vunpack.c.l.b16 %v11630
  %v11939 = vunpack.c.h.b16 %v11630
  %v11940 = vunpack.c.l.b16 %v11631
  %v11941 = vunpack.c.h.b16 %v11631
  %v11942 = vunpack.c.l.b16 %v11632
  %v11943 = vunpack.c.h.b16 %v11632
  %v11944 = vunpack.c.l.b16 %v11633
  %v11945 = vunpack.c.h.b16 %v11633
  %v11946 = vunpack.c.l.b16 %v11634
  %v11947 = vunpack.c.h.b16 %v11634
  %v11948 = vunpack.c.l.b16 %v11635
  %v11949 = vunpack.c.h.b16 %v11635
  %v11950 = vunpack.c.l.b16 %v11636
  %v11951 = vunpack.c.h.b16 %v11636
  %v11952 = vunpack.c.l.b16 %v11637
  %v11953 = vunpack.c.h.b16 %v11637
  %v11954 = vunpack.c.l.b16 %v11638
  %v11955 = vunpack.c.h.b16 %v11638
  %v11956 = vunpack.c.l.b16 %v11639
  %v11957 = vunpack.c.h.b16 %v11639
  %v11958 = vunpack.c.l.b16 %v11640
  %v11959 = vunpack.c.h.b16 %v11640
  %v11960 = vunpack.c.l.b16 %v11641
  %v11961 = vunpack.c.h.b16 %v11641
  %v11962 = vunpack.c.l.b16 %v11642
  %v11963 = vunpack.c.h.b16 %v11642
  %v11964 = vunpack.c.l.b16 %v11643
  %v11965 = vunpack.c.h.b16 %v11643
  %v11966 = vunpack.c.l.b16 %v11644
  %v11967 = vunpack.c.h.b16 %v11644
  %v11968 = vunpack.c.l.b16 %v11645
  %v11969 = vunpack.c.h.b16 %v11645
  %v11970 = vunpack.c.l.b16 %v11646
  %v11971 = vunpack.c.h.b16 %v11646
  %v11972 = vunpack.c.l.b16 %v11647
  %v11973 = vunpack.c.h.b16 %v11647
  %v11974 = vunpack.c.l.b16 %v11648
  %v11975 = vunpack.c.h.b16 %v11648
  %v11976 = vunpack.c.l.b16 %v11649
  %v11977 = vunpack.c.h.b16 %v11649
  %v11978 = vunpack.c.l.b16 %v11650
  %v11979 = vunpack.c.h.b16 %v11650
  %v11980 = vunpack.c.l.b16 %v11651
  %v11981 = vunpack.c.h.b16 %v11651
  %v11982 = vunpack.c.l.b16 %v11652
  %v11983 = vunpack.c.h.b16 %v11652
  %v11984 = vunpack.c.l.b16 %v11653
  %v11985 = vunpack.c.h.b16 %v11653
  %v11986 = vunpack.c.l.b16 %v11654
  %v11987 = vunpack.c.h.b16 %v11654
  %v11988 = vunpack.c.l.b16 %v11655
  %v11989 = vunpack.c.h.b16 %v11655
  %v11990 = vunpack.c.l.b16 %v11656
  %v11991 = vunpack.c.h.b16 %v11656
  %v11992 = vunpack.c.l.b16 %v11657
  %v11993 = vunpack.c.h.b16 %v11657
  %v11994 = vunpack.c.l.b16 %v11658
  %v11995 = vunpack.c.h.b16 %v11658
  %v11996 = vunpack.c.l.b16 %v11659
  %v11997 = vunpack.c.h.b16 %v11659
  %v11998 = vunpack.c.l.b16 %v11660
  %v11999 = vunpack.c.h.b16 %v11660
  %v12000 = vunpack.c.l.b16 %v11661
  %v12001 = vunpack.c.h.b16 %v11661
  %v12002 = vunpack.c.l.b16 %v11662
  %v12003 = vunpack.c.h.b16 %v11662
  %v12004 = vunpack.c.l.b16 %v11663
  %v12005 = vunpack.c.h.b16 %v11663
  %v12006 = vunpack.c.l.b16 %v11664
  %v12007 = vunpack.c.h.b16 %v11664
  %v12008 = vunpack.c.l.b16 %v11665
  %v12009 = vunpack.c.h.b16 %v11665
  %v12010 = vunpack.c.l.b16 %v11666
  %v12011 = vunpack.c.h.b16 %v11666
  %v12012 = vunpack.c.l.b16 %v11667
  %v12013 = vunpack.c.h.b16 %v11667
  %v12014 = vunpack.c.l.b16 %v11668
  %v12015 = vunpack.c.h.b16 %v11668
  %v12016 = vunpack.c.l.b16 %v11669
  %v12017 = vunpack.c.h.b16 %v11669
  %v12018 = vunpack.c.l.b16 %v11670
  %v12019 = vunpack.c.h.b16 %v11670
  %v12020 = vunpack.c.l.b16 %v11671
  %v12021 = vunpack.c.h.b16 %v11671
  %v12022 = vunpack.c.l.b16 %v11672
  %v12023 = vunpack.c.h.b16 %v11672
  %v12024 = vunpack.c.l.b16 %v11673
  %v12025 = vunpack.c.h.b16 %v11673
  %v12026 = vunpack.c.l.b16 %v11674
  %v12027 = vunpack.c.h.b16 %v11674
  %v12028 = vunpack.c.l.b16 %v11675
  %v12029 = vunpack.c.h.b16 %v11675
  %v12030 = vunpack.c.l.b16 %v11676
  %v12031 = vunpack.c.h.b16 %v11676
  %v12032 = vunpack.c.l.b16 %v11677
  %v12033 = vunpack.c.h.b16 %v11677
  %v12034 = vunpack.c.l.b16 %v11678
  %v12035 = vunpack.c.h.b16 %v11678
  %v12036 = vunpack.c.l.b16 %v11679
  %v12037 = vunpack.c.h.b16 %v11679
  %v12038 = vunpack.c.l.b16 %v11680
  %v12039 = vunpack.c.h.b16 %v11680
  %v12040 = vunpack.c.l.b16 %v11681
  %v12041 = vunpack.c.h.b16 %v11681
  %v12042 = vunpack.c.l.b16 %v11682
  %v12043 = vunpack.c.h.b16 %v11682
  %v12044 = vunpack.c.l.b16 %v11683
  %v12045 = vunpack.c.h.b16 %v11683
  %v12046 = vunpack.c.l.b16 %v11684
  %v12047 = vunpack.c.h.b16 %v11684
  %v12048 = vunpack.c.l.b16 %v11685
  %v12049 = vunpack.c.h.b16 %v11685
  %v12050 = vunpack.c.l.b16 %v11686
  %v12051 = vunpack.c.h.b16 %v11686
  %v12052 = vunpack.c.l.b16 %v11687
  %v12053 = vunpack.c.h.b16 %v11687
  %v12054 = vunpack.c.l.b16 %v11688
  %v12055 = vunpack.c.h.b16 %v11688
  %v12056 = vunpack.c.l.b16 %v11689
  %v12057 = vunpack.c.h.b16 %v11689
  %v12058 = vunpack.c.l.b16 %v11690
  %v12059 = vunpack.c.h.b16 %v11690
  %v12060 = vunpack.c.l.b16 %v11691
  %v12061 = vunpack.c.h.b16 %v11691
  %v12062 = vunpack.c.l.b16 %v11692
  %v12063 = vunpack.c.h.b16 %v11692
  %v12064 = vunpack.c.l.b16 %v11693
  %v12065 = vunpack.c.h.b16 %v11693
  %v12066 = vunpack.c.l.b16 %v11694
  %v12067 = vunpack.c.h.b16 %v11694
  %v12068 = vunpack.c.l.b16 %v11695
  %v12069 = vunpack.c.h.b16 %v11695
  %v12070 = vunpack.c.l.b16 %v11696
  %v12071 = vunpack.c.h.b16 %v11696
  %v12072 = vunpack.c.l.b16 %v11697
  %v12073 = vunpack.c.h.b16 %v11697
  %v12074 = vunpack.c.l.b16 %v11698
  %v12075 = vunpack.c.h.b16 %v11698
  %v12076 = vunpack.c.l.b16 %v11699
  %v12077 = vunpack.c.h.b16 %v11699
  %v12078 = vunpack.c.l.b16 %v11700
  %v12079 = vunpack.c.h.b16 %v11700
  %v12080 = vunpack.c.l.b16 %v11701
  %v12081 = vunpack.c.h.b16 %v11701
  %v12082 = vunpack.c.l.b16 %v11702
  %v12083 = vunpack.c.h.b16 %v11702
  %v12084 = vunpack.c.l.b16 %v11703
  %v12085 = vunpack.c.h.b16 %v11703
  %v12086 = vunpack.c.l.b16 %v11704
  %v12087 = vunpack.c.h.b16 %v11704
  %v12088 = vunpack.c.l.b16 %v11705
  %v12089 = vunpack.c.h.b16 %v11705
  %v12090 = vunpack.c.l.b16 %v11706
  %v12091 = vunpack.c.h.b16 %v11706
  %v12092 = vunpack.c.l.b16 %v11707
  %v12093 = vunpack.c.h.b16 %v11707
  %v12094 = vunpack.c.l.b16 %v11708
  %v12095 = vunpack.c.h.b16 %v11708
  %v12096 = vunpack.c.l.b16 %v11709
  %v12097 = vunpack.c.h.b16 %v11709
  %v12098 = vunpack.c.l.b16 %v11710
  %v12099 = vunpack.c.h.b16 %v11710
  %v12100 = vunpack.c.l.b16 %v11711
  %v12101 = vunpack.c.h.b16 %v11711
  %v12102 = vunpack.c.l.b16 %v11712
  %v12103 = vunpack.c.h.b16 %v11712
  %v12104 = vunpack.c.l.b16 %v11713
  %v12105 = vunpack.c.h.b16 %v11713
  %v12106 = vunpack.c.l.b16 %v11714
  %v12107 = vunpack.c.h.b16 %v11714
  %v12108 = vunpack.c.l.b16 %v11715
  %v12109 = vunpack.c.h.b16 %v11715
  %v12110 = vunpack.c.l.b16 %v11716
  %v12111 = vunpack.c.h.b16 %v11716
  %v12112 = vunpack.c.l.b16 %v11717
  %v12113 = vunpack.c.h.b16 %v11717
  %v12114 = vunpack.c.l.b16 %v11718
  %v12115 = vunpack.c.h.b16 %v11718
  %v12116 = vunpack.c.l.b16 %v11719
  %v12117 = vunpack.c.h.b16 %v11719
  %v12118 = vunpack.c.l.b16 %v11720
  %v12119 = vunpack.c.h.b16 %v11720
  %v12120 = vunpack.c.l.b16 %v11721
  %v12121 = vunpack.c.h.b16 %v11721
  %v12122 = vunpack.c.l.b16 %v11722
  %v12123 = vunpack.c.h.b16 %v11722
  %v12124 = vunpack.c.l.b16 %v11723
  %v12125 = vunpack.c.h.b16 %v11723
  %v12126 = vunpack.c.l.b16 %v11724
  %v12127 = vunpack.c.h.b16 %v11724
  %v12128 = vunpack.c.l.b16 %v11725
  %v12129 = vunpack.c.h.b16 %v11725
  %v12130 = vunpack.c.l.b16 %v11726
  %v12131 = vunpack.c.h.b16 %v11726
  %v12132 = vunpack.c.l.b16 %v11727
  %v12133 = vunpack.c.h.b16 %v11727
  %v12134 = vpack.c.b16 %v11882, %v11878
  %v12135 = vpack.c.b16 %v11883, %v11879
  %v12136 = vpack.c.b16 %v11884, %v11880
  %v12137 = vpack.c.b16 %v11885, %v11881
  %v12138 = vpack.c.b16 %v11890, %v11886
  %v12139 = vpack.c.b16 %v11891, %v11887
  %v12140 = vpack.c.b16 %v11892, %v11888
  %v12141 = vpack.c.b16 %v11893, %v11889
  %v12142 = vpack.c.b16 %v11898, %v11894
  %v12143 = vpack.c.b16 %v11899, %v11895
  %v12144 = vpack.c.b16 %v11900, %v11896
  %v12145 = vpack.c.b16 %v11901, %v11897
  %v12146 = vpack.c.b16 %v11906, %v11902
  %v12147 = vpack.c.b16 %v11907, %v11903
  %v12148 = vpack.c.b16 %v11908, %v11904
  %v12149 = vpack.c.b16 %v11909, %v11905
  %v12150 = vpack.c.b16 %v11914, %v11910
  %v12151 = vpack.c.b16 %v11915, %v11911
  %v12152 = vpack.c.b16 %v11916, %v11912
  %v12153 = vpack.c.b16 %v11917, %v11913
  %v12154 = vpack.c.b16 %v11922, %v11918
  %v12155 = vpack.c.b16 %v11923, %v11919
  %v12156 = vpack.c.b16 %v11924, %v11920
  %v12157 = vpack.c.b16 %v11925, %v11921
  %v12158 = vpack.c.b16 %v11930, %v11926
  %v12159 = vpack.c.b16 %v11931, %v11927
  %v12160 = vpack.c.b16 %v11932, %v11928
  %v12161 = vpack.c.b16 %v11933, %v11929
  %v12162 = vpack.c.b16 %v11938, %v11934
  %v12163 = vpack.c.b16 %v11939, %v11935
  %v12164 = vpack.c.b16 %v11940, %v11936
  %v12165 = vpack.c.b16 %v11941, %v11937
  %v12166 = vpack.c.b16 %v11946, %v11942
  %v12167 = vpack.c.b16 %v11947, %v11943
  %v12168 = vpack.c.b16 %v11948, %v11944
  %v12169 = vpack.c.b16 %v11949, %v11945
  %v12170 = vpack.c.b16 %v11954, %v11950
  %v12171 = vpack.c.b16 %v11955, %v11951
  %v12172 = vpack.c.b16 %v11956, %v11952
  %v12173 = vpack.c.b16 %v11957, %v11953
  %v12174 = vpack.c.b16 %v11962, %v11958
  %v12175 = vpack.c.b16 %v11963, %v11959
  %v12176 = vpack.c.b16 %v11964, %v11960
  %v12177 = vpack.c.b16 %v11965, %v11961
  %v12178 = vpack.c.b16 %v11970, %v11966
  %v12179 = vpack.c.b16 %v11971, %v11967
  %v12180 = vpack.c.b16 %v11972, %v11968
  %v12181 = vpack.c.b16 %v11973, %v11969
  %v12182 = vpack.c.b16 %v11978, %v11974
  %v12183 = vpack.c.b16 %v11979, %v11975
  %v12184 = vpack.c.b16 %v11980, %v11976
  %v12185 = vpack.c.b16 %v11981, %v11977
  %v12186 = vpack.c.b16 %v11986, %v11982
  %v12187 = vpack.c.b16 %v11987, %v11983
  %v12188 = vpack.c.b16 %v11988, %v11984
  %v12189 = vpack.c.b16 %v11989, %v11985
  %v12190 = vpack.c.b16 %v11994, %v11990
  %v12191 = vpack.c.b16 %v11995, %v11991
  %v12192 = vpack.c.b16 %v11996, %v11992
  %v12193 = vpack.c.b16 %v11997, %v11993
  %v12194 = vpack.c.b16 %v12002, %v11998
  %v12195 = vpack.c.b16 %v12003, %v11999
  %v12196 = vpack.c.b16 %v12004, %v12000
  %v12197 = vpack.c.b16 %v12005, %v12001
  %v12198 = vpack.c.b16 %v12010, %v12006
  %v12199 = vpack.c.b16 %v12011, %v12007
  %v12200 = vpack.c.b16 %v12012, %v12008
  %v12201 = vpack.c.b16 %v12013, %v12009
  %v12202 = vpack.c.b16 %v12018, %v12014
  %v12203 = vpack.c.b16 %v12019, %v12015
  %v12204 = vpack.c.b16 %v12020, %v12016
  %v12205 = vpack.c.b16 %v12021, %v12017
  %v12206 = vpack.c.b16 %v12026, %v12022
  %v12207 = vpack.c.b16 %v12027, %v12023
  %v12208 = vpack.c.b16 %v12028, %v12024
  %v12209 = vpack.c.b16 %v12029, %v12025
  %v12210 = vpack.c.b16 %v12034, %v12030
  %v12211 = vpack.c.b16 %v12035, %v12031
  %v12212 = vpack.c.b16 %v12036, %v12032
  %v12213 = vpack.c.b16 %v12037, %v12033
  %v12214 = vpack.c.b16 %v12042, %v12038
  %v12215 = vpack.c.b16 %v12043, %v12039
  %v12216 = vpack.c.b16 %v12044, %v12040
  %v12217 = vpack.c.b16 %v12045, %v12041
  %v12218 = vpack.c.b16 %v12050, %v12046
  %v12219 = vpack.c.b16 %v12051, %v12047
  %v12220 = vpack.c.b16 %v12052, %v12048
  %v12221 = vpack.c.b16 %v12053, %v12049
  %v12222 = vpack.c.b16 %v12058, %v12054
  %v12223 = vpack.c.b16 %v12059, %v12055
  %v12224 = vpack.c.b16 %v12060, %v12056
  %v12225 = vpack.c.b16 %v12061, %v12057
  %v12226 = vpack.c.b16 %v12066, %v12062
  %v12227 = vpack.c.b16 %v12067, %v12063
  %v12228 = vpack.c.b16 %v12068, %v12064
  %v12229 = vpack.c.b16 %v12069, %v12065
  %v12230 = vpack.c.b16 %v12074, %v12070
  %v12231 = vpack.c.b16 %v12075, %v12071
  %v12232 = vpack.c.b16 %v12076, %v12072
  %v12233 = vpack.c.b16 %v12077, %v12073
  %v12234 = vpack.c.b16 %v12082, %v12078
  %v12235 = vpack.c.b16 %v12083, %v12079
  %v12236 = vpack.c.b16 %v12084, %v12080
  %v12237 = vpack.c.b16 %v12085, %v12081
  %v12238 = vpack.c.b16 %v12090, %v12086
  %v12239 = vpack.c.b16 %v12091, %v12087
  %v12240 = vpack.c.b16 %v12092, %v12088
  %v12241 = vpack.c.b16 %v12093, %v12089
  %v12242 = vpack.c.b16 %v12098, %v12094
  %v12243 = vpack.c.b16 %v12099, %v12095
  %v12244 = vpack.c.b16 %v12100, %v12096
  %v12245 = vpack.c.b16 %v12101, %v12097
  %v12246 = vpack.c.b16 %v12106, %v12102
  %v12247 = vpack.c.b16 %v12107, %v12103
  %v12248 = vpack.c.b16 %v12108, %v12104
  %v12249 = vpack.c.b16 %v12109, %v12105
  %v12250 = vpack.c.b16 %v12114, %v12110
  %v12251 = vpack.c.b16 %v12115, %v12111
  %v12252 = vpack.c.b16 %v12116, %v12112
  %v12253 = vpack.c.b16 %v12117, %v12113
  %v12254 = vpack.c.b16 %v12122, %v12118
  %v12255 = vpack.c.b16 %v12123, %v12119
  %v12256 = vpack.c.b16 %v12124, %v12120
  %v12257 = vpack.c.b16 %v12125, %v12121
  %v12258 = vpack.c.b16 %v12130, %v12126
  %v12259 = vpack.c.b16 %v12131, %v12127
  %v12260 = vpack.c.b16 %v12132, %v12128
  %v12261 = vpack.c.b16 %v12133, %v12129
  %12390 = vmatprep.subr.bf16.mxu0 %v12135
  %12391 = vmatpush1.bf16.msra.mxu0 %v12134
  %12392 = vmatprep.subr.bf16.mxu0 %v12139
  %12393 = vmatpush1.bf16.msra.mxu0 %v12138
  %12394 = vmatprep.subr.bf16.mxu0 %v12143
  %12395 = vmatpush1.bf16.msra.mxu0 %v12142
  %12396 = vmatprep.subr.bf16.mxu0 %v12147
  %12397 = vmatpush1.bf16.msra.mxu0 %v12146
  %12398 = vmatprep.subr.bf16.mxu0 %v12151
  %12399 = vmatpush1.bf16.msra.mxu0 %v12150
  %12400 = vmatprep.subr.bf16.mxu0 %v12155
  %12401 = vmatpush1.bf16.msra.mxu0 %v12154
  %12402 = vmatprep.subr.bf16.mxu0 %v12159
  %12403 = vmatpush1.bf16.msra.mxu0 %v12158
  %12404 = vmatprep.subr.bf16.mxu0 %v12163
  %12405 = vmatpush1.bf16.msra.mxu0 %v12162
  %12406 = vmatprep.subr.bf16.mxu0 %v12167
  %12407 = vmatpush1.bf16.msra.mxu0 %v12166
  %12408 = vmatprep.subr.bf16.mxu0 %v12171
  %12409 = vmatpush1.bf16.msra.mxu0 %v12170
  %12410 = vmatprep.subr.bf16.mxu0 %v12175
  %12411 = vmatpush1.bf16.msra.mxu0 %v12174
  %12412 = vmatprep.subr.bf16.mxu0 %v12179
  %12413 = vmatpush1.bf16.msra.mxu0 %v12178
  %12414 = vmatprep.subr.bf16.mxu0 %v12183
  %12415 = vmatpush1.bf16.msra.mxu0 %v12182
  %12416 = vmatprep.subr.bf16.mxu0 %v12187
  %12417 = vmatpush1.bf16.msra.mxu0 %v12186
  %12418 = vmatprep.subr.bf16.mxu0 %v12191
  %12419 = vmatpush1.bf16.msra.mxu0 %v12190
  %12420 = vmatprep.subr.bf16.mxu0 %v12195
  %12421 = vmatpush1.bf16.msra.mxu0 %v12194
  %12422 = vmatprep.mubr.bf16.mxu0 %v11597
  %12423 = vmatmul.mubr.bf16.gmra.mrb[0].mxu0 %v11596
  %v12424 = vpop.f32.mrb[0].mxu0
  %v12425 = vadd.f32 %v11733, %v12424
  %v12426 = vpop.f32.mrb[0].mxu0
  %v12427 = vadd.f32 %v11737, %v12426
  %v12428 = vpop.f32.mrb[0].mxu0
  %v12429 = vadd.f32 %v11733, %v12428
  %v12430 = vpop.f32.mrb[0].mxu0
  %v12431 = vadd.f32 %v11737, %v12430
  %12432 = vdwg.mxu0
  %12433 = vmatprep.subr.bf16.mxu0 %v12199
  %12434 = vmatpush1.bf16.msra.mxu0 %v12198
  %12435 = vmatprep.subr.bf16.mxu0 %v12203
  %12436 = vmatpush1.bf16.msra.mxu0 %v12202
  %12437 = vmatprep.subr.bf16.mxu0 %v12207
  %12438 = vmatpush1.bf16.msra.mxu0 %v12206
  %12439 = vmatprep.subr.bf16.mxu0 %v12211
  %12440 = vmatpush1.bf16.msra.mxu0 %v12210
  %12441 = vmatprep.subr.bf16.mxu0 %v12215
  %12442 = vmatpush1.bf16.msra.mxu0 %v12214
  %12443 = vmatprep.subr.bf16.mxu0 %v12219
  %12444 = vmatpush1.bf16.msra.mxu0 %v12218
  %12445 = vmatprep.subr.bf16.mxu0 %v12223
  %12446 = vmatpush1.bf16.msra.mxu0 %v12222
  %12447 = vmatprep.subr.bf16.mxu0 %v12227
  %12448 = vmatpush1.bf16.msra.mxu0 %v12226
  %12449 = vmatprep.subr.bf16.mxu0 %v12231
  %12450 = vmatpush1.bf16.msra.mxu0 %v12230
  %12451 = vmatprep.subr.bf16.mxu0 %v12235
  %12452 = vmatpush1.bf16.msra.mxu0 %v12234
  %12453 = vmatprep.subr.bf16.mxu0 %v12239
  %12454 = vmatpush1.bf16.msra.mxu0 %v12238
  %12455 = vmatprep.subr.bf16.mxu0 %v12243
  %12456 = vmatpush1.bf16.msra.mxu0 %v12242
  %12457 = vmatprep.subr.bf16.mxu0 %v12247
  %12458 = vmatpush1.bf16.msra.mxu0 %v12246
  %12459 = vmatprep.subr.bf16.mxu0 %v12251
  %12460 = vmatpush1.bf16.msra.mxu0 %v12250
  %12461 = vmatprep.subr.bf16.mxu0 %v12255
  %12462 = vmatpush1.bf16.msra.mxu0 %v12254
  %12463 = vmatprep.subr.bf16.mxu0 %v12259
  %12464 = vmatpush1.bf16.msra.mxu0 %v12258
  %12465 = vmatprep.mubr.bf16.mxu0 %v11599
  %12466 = vmatmul.mubr.bf16.gmra.mrb[0].mxu0 %v11598
  %v12467 = vpop.f32.mrb[0].mxu0
  %v12468 = vadd.f32 %v12425, %v12467
  %v12469 = vpop.f32.mrb[0].mxu0
  %v12470 = vadd.f32 %v12427, %v12469
  %v12471 = vpop.f32.mrb[0].mxu0
  %v12472 = vadd.f32 %v12429, %v12471
  %v12473 = vpop.f32.mrb[0].mxu0
  %v12474 = vadd.f32 %v12431, %v12473
  %12475 = vdwg.mxu0
  %12476 = vmatprep.subr.bf16.mxu0 %v12137
  %12477 = vmatpush1.bf16.msra.mxu0 %v12136
  %12478 = vmatprep.subr.bf16.mxu0 %v12141
  %12479 = vmatpush1.bf16.msra.mxu0 %v12140
  %12480 = vmatprep.subr.bf16.mxu0 %v12145
  %12481 = vmatpush1.bf16.msra.mxu0 %v12144
  %12482 = vmatprep.subr.bf16.mxu0 %v12149
  %12483 = vmatpush1.bf16.msra.mxu0 %v12148
  %12484 = vmatprep.subr.bf16.mxu0 %v12153
  %12485 = vmatpush1.bf16.msra.mxu0 %v12152
  %12486 = vmatprep.subr.bf16.mxu0 %v12157
  %12487 = vmatpush1.bf16.msra.mxu0 %v12156
  %12488 = vmatprep.subr.bf16.mxu0 %v12161
  %12489 = vmatpush1.bf16.msra.mxu0 %v12160
  %12490 = vmatprep.subr.bf16.mxu0 %v12165
  %12491 = vmatpush1.bf16.msra.mxu0 %v12164
  %12492 = vmatprep.subr.bf16.mxu0 %v12169
  %12493 = vmatpush1.bf16.msra.mxu0 %v12168
  %12494 = vmatprep.subr.bf16.mxu0 %v12173
  %12495 = vmatpush1.bf16.msra.mxu0 %v12172
  %12496 = vmatprep.subr.bf16.mxu0 %v12177
  %12497 = vmatpush1.bf16.msra.mxu0 %v12176
  %12498 = vmatprep.subr.bf16.mxu0 %v12181
  %12499 = vmatpush1.bf16.msra.mxu0 %v12180
  %12500 = vmatprep.subr.bf16.mxu0 %v12185
  %12501 = vmatpush1.bf16.msra.mxu0 %v12184
  %12502 = vmatprep.subr.bf16.mxu0 %v12189
  %12503 = vmatpush1.bf16.msra.mxu0 %v12188
  %12504 = vmatprep.subr.bf16.mxu0 %v12193
  %12505 = vmatpush1.bf16.msra.mxu0 %v12192
  %12506 = vmatprep.subr.bf16.mxu0 %v12197
  %12507 = vmatpush1.bf16.msra.mxu0 %v12196
  %12508 = vmatprep.mubr.bf16.mxu0 %v11597
  %12509 = vmatmul.mubr.bf16.gmra.mrb[0].mxu0 %v11596
  %v12510 = vpop.f32.mrb[0].mxu0
  %v12511 = vadd.f32 %v11741, %v12510
  %v12512 = vpop.f32.mrb[0].mxu0
  %v12513 = vadd.f32 %v11745, %v12512
  %v12514 = vpop.f32.mrb[0].mxu0
  %v12515 = vadd.f32 %v11741, %v12514
  %v12516 = vpop.f32.mrb[0].mxu0
  %v12517 = vadd.f32 %v11745, %v12516
  %12518 = vdwg.mxu0
  %12519 = vmatprep.subr.bf16.mxu0 %v12201
  %12520 = vmatpush1.bf16.msra.mxu0 %v12200
  %12521 = vmatprep.subr.bf16.mxu0 %v12205
  %12522 = vmatpush1.bf16.msra.mxu0 %v12204
  %12523 = vmatprep.subr.bf16.mxu0 %v12209
  %12524 = vmatpush1.bf16.msra.mxu0 %v12208
  %12525 = vmatprep.subr.bf16.mxu0 %v12213
  %12526 = vmatpush1.bf16.msra.mxu0 %v12212
  %12527 = vmatprep.subr.bf16.mxu0 %v12217
  %12528 = vmatpush1.bf16.msra.mxu0 %v12216
  %12529 = vmatprep.subr.bf16.mxu0 %v12221
  %12530 = vmatpush1.bf16.msra.mxu0 %v12220
  %12531 = vmatprep.subr.bf16.mxu0 %v12225
  %12532 = vmatpush1.bf16.msra.mxu0 %v12224
  %12533 = vmatprep.subr.bf16.mxu0 %v12229
  %12534 = vmatpush1.bf16.msra.mxu0 %v12228
  %12535 = vmatprep.subr.bf16.mxu0 %v12233
  %12536 = vmatpush1.bf16.msra.mxu0 %v12232
  %12537 = vmatprep.subr.bf16.mxu0 %v12237
  %12538 = vmatpush1.bf16.msra.mxu0 %v12236
  %12539 = vmatprep.subr.bf16.mxu0 %v12241
  %12540 = vmatpush1.bf16.msra.mxu0 %v12240
  %12541 = vmatprep.subr.bf16.mxu0 %v12245
  %12542 = vmatpush1.bf16.msra.mxu0 %v12244
  %12543 = vmatprep.subr.bf16.mxu0 %v12249
  %12544 = vmatpush1.bf16.msra.mxu0 %v12248
  %12545 = vmatprep.subr.bf16.mxu0 %v12253
  %12546 = vmatpush1.bf16.msra.mxu0 %v12252
  %12547 = vmatprep.subr.bf16.mxu0 %v12257
  %12548 = vmatpush1.bf16.msra.mxu0 %v12256
  %12549 = vmatprep.subr.bf16.mxu0 %v12261
  %12550 = vmatpush1.bf16.msra.mxu0 %v12260
  %12551 = vmatprep.mubr.bf16.mxu0 %v11599
  %12552 = vmatmul.mubr.bf16.gmra.mrb[0].mxu0 %v11598
  %v12553 = vpop.f32.mrb[0].mxu0
  %v12554 = vadd.f32 %v12511, %v12553
  %v12555 = vpop.f32.mrb[0].mxu0
  %v12556 = vadd.f32 %v12513, %v12555
  %v12557 = vpop.f32.mrb[0].mxu0
  %v12558 = vadd.f32 %v12515, %v12557
  %v12559 = vpop.f32.mrb[0].mxu0
  %v12560 = vadd.f32 %v12517, %v12559
  %12561 = vdwg.mxu0
  %v12562 = vmax.f32 %v12468, 0.0
  %v12563 = vmax.f32 %v12470, 0.0
  %v12564 = vmax.f32 %v12554, 0.0
  %v12565 = vmax.f32 %v12556, 0.0
  %v12566 = vmax.f32 %v12472, 0.0
  %v12567 = vmax.f32 %v12474, 0.0
  %v12568 = vmax.f32 %v12558, 0.0
  %v12569 = vmax.f32 %v12560, 0.0
  %v12570 = vpack.c.bf16 %v12566, %v12562
  %v12571 = vpack.c.bf16 %v12567, %v12563
  %v12572 = vpack.c.bf16 %v12568, %v12564
  %v12573 = vpack.c.bf16 %v12569, %v12565
  %v12574 = vld [vmem:[%s23] sm:$0xf]
  %v12575 = vld [vmem:[%s23 + $0x4] sm:$0xf]
  %v12576 = vld [vmem:[%s23 + $0x8] sm:$0xf]
  %v12577 = vld [vmem:[%s23 + $0xc] sm:$0xf]
  %v12578 = vld [vmem:[%s23 + $0x10] sm:$0xf]
  %v12579 = vld [vmem:[%s23 + $0x14] sm:$0xf]
  %v12580 = vld [vmem:[%s23 + $0x18] sm:$0xf]
  %v12581 = vld [vmem:[%s23 + $0x1c] sm:$0xf]
  %v12582 = vld [vmem:[%s23 + $0x20] sm:$0xf]
  %v12583 = vld [vmem:[%s23 + $0x24] sm:$0xf]
  %v12584 = vld [vmem:[%s23 + $0x28] sm:$0xf]
  %v12585 = vld [vmem:[%s23 + $0x2c] sm:$0xf]
  %v12586 = vld [vmem:[%s23 + $0x30] sm:$0xf]
  %v12587 = vld [vmem:[%s23 + $0x34] sm:$0xf]
  %v12588 = vld [vmem:[%s23 + $0x38] sm:$0xf]
  %v12589 = vld [vmem:[%s23 + $0x3c] sm:$0xf]
  %v12590 = vld [vmem:[%s23 + $0x40] sm:$0xf]
  %v12591 = vld [vmem:[%s23 + $0x44] sm:$0xf]
  %v12592 = vld [vmem:[%s23 + $0x48] sm:$0xf]
  %v12593 = vld [vmem:[%s23 + $0x4c] sm:$0xf]
  %v12594 = vld [vmem:[%s23 + $0x50] sm:$0xf]
  %v12595 = vld [vmem:[%s23 + $0x54] sm:$0xf]
  %v12596 = vld [vmem:[%s23 + $0x58] sm:$0xf]
  %v12597 = vld [vmem:[%s23 + $0x5c] sm:$0xf]
  %v12598 = vld [vmem:[%s23 + $0x60] sm:$0xf]
  %v12599 = vld [vmem:[%s23 + $0x64] sm:$0xf]
  %v12600 = vld [vmem:[%s23 + $0x68] sm:$0xf]
  %v12601 = vld [vmem:[%s23 + $0x6c] sm:$0xf]
  %v12602 = vld [vmem:[%s23 + $0x70] sm:$0xf]
  %v12603 = vld [vmem:[%s23 + $0x74] sm:$0xf]
  %v12604 = vld [vmem:[%s23 + $0x78] sm:$0xf]
  %v12605 = vld [vmem:[%s23 + $0x7c] sm:$0xf]
  %v12606 = vld [vmem:[%s23 + $0x80] sm:$0xf]
  %v12607 = vld [vmem:[%s23 + $0x84] sm:$0xf]
  %v12608 = vld [vmem:[%s23 + $0x88] sm:$0xf]
  %v12609 = vld [vmem:[%s23 + $0x8c] sm:$0xf]
  %v12610 = vld [vmem:[%s23 + $0x90] sm:$0xf]
  %v12611 = vld [vmem:[%s23 + $0x94] sm:$0xf]
  %v12612 = vld [vmem:[%s23 + $0x98] sm:$0xf]
  %v12613 = vld [vmem:[%s23 + $0x9c] sm:$0xf]
  %v12614 = vld [vmem:[%s23 + $0xa0] sm:$0xf]
  %v12615 = vld [vmem:[%s23 + $0xa4] sm:$0xf]
  %v12616 = vld [vmem:[%s23 + $0xa8] sm:$0xf]
  %v12617 = vld [vmem:[%s23 + $0xac] sm:$0xf]
  %v12618 = vld [vmem:[%s23 + $0xb0] sm:$0xf]
  %v12619 = vld [vmem:[%s23 + $0xb4] sm:$0xf]
  %v12620 = vld [vmem:[%s23 + $0xb8] sm:$0xf]
  %v12621 = vld [vmem:[%s23 + $0xbc] sm:$0xf]
  %v12622 = vld [vmem:[%s23 + $0xc0] sm:$0xf]
  %v12623 = vld [vmem:[%s23 + $0xc4] sm:$0xf]
  %v12624 = vld [vmem:[%s23 + $0xc8] sm:$0xf]
  %v12625 = vld [vmem:[%s23 + $0xcc] sm:$0xf]
  %v12626 = vld [vmem:[%s23 + $0xd0] sm:$0xf]
  %v12627 = vld [vmem:[%s23 + $0xd4] sm:$0xf]
  %v12628 = vld [vmem:[%s23 + $0xd8] sm:$0xf]
  %v12629 = vld [vmem:[%s23 + $0xdc] sm:$0xf]
  %v12630 = vld [vmem:[%s23 + $0xe0] sm:$0xf]
  %v12631 = vld [vmem:[%s23 + $0xe4] sm:$0xf]
  %v12632 = vld [vmem:[%s23 + $0xe8] sm:$0xf]
  %v12633 = vld [vmem:[%s23 + $0xec] sm:$0xf]
  %v12634 = vld [vmem:[%s23 + $0xf0] sm:$0xf]
  %v12635 = vld [vmem:[%s23 + $0xf4] sm:$0xf]
  %v12636 = vld [vmem:[%s23 + $0xf8] sm:$0xf]
  %v12637 = vld [vmem:[%s23 + $0xfc] sm:$0xf]
  %v12638 = vld [vmem:[%s24] sm:$0x1]
  %v12640 = vlaneseq
  %v12641 = vshrl.u32 %v12640, 7
  %v12642 = vsub.s32 0, %v12641
  %v12643 = vrot.slane %v12638, %v12642
  %v12709 = vunpack.c.l.b16 %v12574
  %v12710 = vunpack.c.l.b16 %v12575
  %v12711 = vunpack.c.l.b16 %v12576
  %v12712 = vunpack.c.l.b16 %v12577
  %v12713 = vunpack.c.l.b16 %v12578
  %v12714 = vunpack.c.l.b16 %v12579
  %v12715 = vunpack.c.l.b16 %v12580
  %v12716 = vunpack.c.l.b16 %v12581
  %v12717 = vunpack.c.l.b16 %v12582
  %v12718 = vunpack.c.l.b16 %v12583
  %v12719 = vunpack.c.l.b16 %v12584
  %v12720 = vunpack.c.l.b16 %v12585
  %v12721 = vunpack.c.l.b16 %v12586
  %v12722 = vunpack.c.l.b16 %v12587
  %v12723 = vunpack.c.l.b16 %v12588
  %v12724 = vunpack.c.l.b16 %v12589
  %v12725 = vunpack.c.l.b16 %v12590
  %v12726 = vunpack.c.l.b16 %v12591
  %v12727 = vunpack.c.l.b16 %v12592
  %v12728 = vunpack.c.l.b16 %v12593
  %v12729 = vunpack.c.l.b16 %v12594
  %v12730 = vunpack.c.l.b16 %v12595
  %v12731 = vunpack.c.l.b16 %v12596
  %v12732 = vunpack.c.l.b16 %v12597
  %v12733 = vunpack.c.l.b16 %v12598
  %v12734 = vunpack.c.l.b16 %v12599
  %v12735 = vunpack.c.l.b16 %v12600
  %v12736 = vunpack.c.l.b16 %v12601
  %v12737 = vunpack.c.l.b16 %v12602
  %v12738 = vunpack.c.l.b16 %v12603
  %v12739 = vunpack.c.l.b16 %v12604
  %v12740 = vunpack.c.l.b16 %v12605
  %v12741 = vunpack.c.l.b16 %v12606
  %v12742 = vunpack.c.l.b16 %v12607
  %v12743 = vunpack.c.l.b16 %v12608
  %v12744 = vunpack.c.l.b16 %v12609
  %v12745 = vunpack.c.l.b16 %v12610
  %v12746 = vunpack.c.l.b16 %v12611
  %v12747 = vunpack.c.l.b16 %v12612
  %v12748 = vunpack.c.l.b16 %v12613
  %v12749 = vunpack.c.l.b16 %v12614
  %v12750 = vunpack.c.l.b16 %v12615
  %v12751 = vunpack.c.l.b16 %v12616
  %v12752 = vunpack.c.l.b16 %v12617
  %v12753 = vunpack.c.l.b16 %v12618
  %v12754 = vunpack.c.l.b16 %v12619
  %v12755 = vunpack.c.l.b16 %v12620
  %v12756 = vunpack.c.l.b16 %v12621
  %v12757 = vunpack.c.l.b16 %v12622
  %v12758 = vunpack.c.l.b16 %v12623
  %v12759 = vunpack.c.l.b16 %v12624
  %v12760 = vunpack.c.l.b16 %v12625
  %v12761 = vunpack.c.l.b16 %v12626
  %v12762 = vunpack.c.l.b16 %v12627
  %v12763 = vunpack.c.l.b16 %v12628
  %v12764 = vunpack.c.l.b16 %v12629
  %v12765 = vunpack.c.l.b16 %v12630
  %v12766 = vunpack.c.l.b16 %v12631
  %v12767 = vunpack.c.l.b16 %v12632
  %v12768 = vunpack.c.l.b16 %v12633
  %v12769 = vunpack.c.l.b16 %v12634
  %v12770 = vunpack.c.l.b16 %v12635
  %v12771 = vunpack.c.l.b16 %v12636
  %v12772 = vunpack.c.l.b16 %v12637
  %v12773 = vpack.c.b16 %v12710, %v12709
  %v12774 = vpack.c.b16 %v12712, %v12711
  %v12775 = vpack.c.b16 %v12714, %v12713
  %v12776 = vpack.c.b16 %v12716, %v12715
  %v12777 = vpack.c.b16 %v12718, %v12717
  %v12778 = vpack.c.b16 %v12720, %v12719
  %v12779 = vpack.c.b16 %v12722, %v12721
  %v12780 = vpack.c.b16 %v12724, %v12723
  %v12781 = vpack.c.b16 %v12726, %v12725
  %v12782 = vpack.c.b16 %v12728, %v12727
  %v12783 = vpack.c.b16 %v12730, %v12729
  %v12784 = vpack.c.b16 %v12732, %v12731
  %v12785 = vpack.c.b16 %v12734, %v12733
  %v12786 = vpack.c.b16 %v12736, %v12735
  %v12787 = vpack.c.b16 %v12738, %v12737
  %v12788 = vpack.c.b16 %v12740, %v12739
  %v12789 = vpack.c.b16 %v12742, %v12741
  %v12790 = vpack.c.b16 %v12744, %v12743
  %v12791 = vpack.c.b16 %v12746, %v12745
  %v12792 = vpack.c.b16 %v12748, %v12747
  %v12793 = vpack.c.b16 %v12750, %v12749
  %v12794 = vpack.c.b16 %v12752, %v12751
  %v12795 = vpack.c.b16 %v12754, %v12753
  %v12796 = vpack.c.b16 %v12756, %v12755
  %v12797 = vpack.c.b16 %v12758, %v12757
  %v12798 = vpack.c.b16 %v12760, %v12759
  %v12799 = vpack.c.b16 %v12762, %v12761
  %v12800 = vpack.c.b16 %v12764, %v12763
  %v12801 = vpack.c.b16 %v12766, %v12765
  %v12802 = vpack.c.b16 %v12768, %v12767
  %v12803 = vpack.c.b16 %v12770, %v12769
  %v12804 = vpack.c.b16 %v12772, %v12771
  %12837 = vmatprep.subr.bf16.mxu0 0
  %12838 = vmatpush1.bf16.msra.mxu0 %v12773
  %12839 = vmatprep.subr.bf16.mxu0 0
  %12840 = vmatpush1.bf16.msra.mxu0 %v12774
  %12841 = vmatprep.subr.bf16.mxu0 0
  %12842 = vmatpush1.bf16.msra.mxu0 %v12775
  %12843 = vmatprep.subr.bf16.mxu0 0
  %12844 = vmatpush1.bf16.msra.mxu0 %v12776
  %12845 = vmatprep.subr.bf16.mxu0 0
  %12846 = vmatpush1.bf16.msra.mxu0 %v12777
  %12847 = vmatprep.subr.bf16.mxu0 0
  %12848 = vmatpush1.bf16.msra.mxu0 %v12778
  %12849 = vmatprep.subr.bf16.mxu0 0
  %12850 = vmatpush1.bf16.msra.mxu0 %v12779
  %12851 = vmatprep.subr.bf16.mxu0 0
  %12852 = vmatpush1.bf16.msra.mxu0 %v12780
  %12853 = vmatprep.subr.bf16.mxu0 0
  %12854 = vmatpush1.bf16.msra.mxu0 %v12781
  %12855 = vmatprep.subr.bf16.mxu0 0
  %12856 = vmatpush1.bf16.msra.mxu0 %v12782
  %12857 = vmatprep.subr.bf16.mxu0 0
  %12858 = vmatpush1.bf16.msra.mxu0 %v12783
  %12859 = vmatprep.subr.bf16.mxu0 0
  %12860 = vmatpush1.bf16.msra.mxu0 %v12784
  %12861 = vmatprep.subr.bf16.mxu0 0
  %12862 = vmatpush1.bf16.msra.mxu0 %v12785
  %12863 = vmatprep.subr.bf16.mxu0 0
  %12864 = vmatpush1.bf16.msra.mxu0 %v12786
  %12865 = vmatprep.subr.bf16.mxu0 0
  %12866 = vmatpush1.bf16.msra.mxu0 %v12787
  %12867 = vmatprep.subr.bf16.mxu0 0
  %12868 = vmatpush1.bf16.msra.mxu0 %v12788
  %12869 = vmatprep.mubr.bf16.mxu0 %v12571
  %12870 = vmatmul.mubr.bf16.gmra.mrb[0].mxu0 %v12570
  %v12871 = vpop.f32.mrb[0].mxu0
  %v12872 = vadd.f32 %v12643, %v12871
  %v12873 = vpop.f32.mrb[0].mxu0
  %v12874 = vpop.f32.mrb[0].mxu0
  %v12875 = vadd.f32 %v12643, %v12874
  %v12876 = vpop.f32.mrb[0].mxu0
  %12877 = vdwg.mxu0
  %12878 = vmatprep.subr.bf16.mxu0 0
  %12879 = vmatpush1.bf16.msra.mxu0 %v12789
  %12880 = vmatprep.subr.bf16.mxu0 0
  %12881 = vmatpush1.bf16.msra.mxu0 %v12790
  %12882 = vmatprep.subr.bf16.mxu0 0
  %12883 = vmatpush1.bf16.msra.mxu0 %v12791
  %12884 = vmatprep.subr.bf16.mxu0 0
  %12885 = vmatpush1.bf16.msra.mxu0 %v12792
  %12886 = vmatprep.subr.bf16.mxu0 0
  %12887 = vmatpush1.bf16.msra.mxu0 %v12793
  %12888 = vmatprep.subr.bf16.mxu0 0
  %12889 = vmatpush1.bf16.msra.mxu0 %v12794
  %12890 = vmatprep.subr.bf16.mxu0 0
  %12891 = vmatpush1.bf16.msra.mxu0 %v12795
  %12892 = vmatprep.subr.bf16.mxu0 0
  %12893 = vmatpush1.bf16.msra.mxu0 %v12796
  %12894 = vmatprep.subr.bf16.mxu0 0
  %12895 = vmatpush1.bf16.msra.mxu0 %v12797
  %12896 = vmatprep.subr.bf16.mxu0 0
  %12897 = vmatpush1.bf16.msra.mxu0 %v12798
  %12898 = vmatprep.subr.bf16.mxu0 0
  %12899 = vmatpush1.bf16.msra.mxu0 %v12799
  %12900 = vmatprep.subr.bf16.mxu0 0
  %12901 = vmatpush1.bf16.msra.mxu0 %v12800
  %12902 = vmatprep.subr.bf16.mxu0 0
  %12903 = vmatpush1.bf16.msra.mxu0 %v12801
  %12904 = vmatprep.subr.bf16.mxu0 0
  %12905 = vmatpush1.bf16.msra.mxu0 %v12802
  %12906 = vmatprep.subr.bf16.mxu0 0
  %12907 = vmatpush1.bf16.msra.mxu0 %v12803
  %12908 = vmatprep.subr.bf16.mxu0 0
  %12909 = vmatpush1.bf16.msra.mxu0 %v12804
  %12910 = vmatprep.mubr.bf16.mxu0 %v12573
  %12911 = vmatmul.mubr.bf16.gmra.mrb[0].mxu0 %v12572
  %v12912 = vpop.f32.mrb[0].mxu0
  %v12913 = vadd.f32 %v12872, %v12912
  %v12914 = vpop.f32.mrb[0].mxu0
  %v12915 = vpop.f32.mrb[0].mxu0
  %v12916 = vadd.f32 %v12875, %v12915
  %v12917 = vpop.f32.mrb[0].mxu0
  %12918 = vdwg.mxu0
  %12919 = vst [vmem:[%s26] sm:$0xff] %v12913
  %12920 = vst [vmem:[%s26 + $0x8] sm:$0xff] %v12916
  // Predicated region
  $region102: #{_forward_impl.1} parent=0 // pred_check
    _
  $region103: #{_forward_impl.1} parent=0 // pred_check_branch
    %12922 = sbr.rel (0) target = $region105
  $region104: #{_forward_impl.1} parent=0 // pred_region
    _
  $region105: #{_forward_impl.1} parent=0 // pred_fallthru
    _
  // Predicated region
  $region106: #{_forward_impl.1} parent=0 // pred_check
    _
  $region107: #{_forward_impl.1} parent=0 // pred_check_branch
    %12924 = sbr.rel (0) target = $region109
  $region108: #{_forward_impl.1} parent=0 // pred_region
    _
  $region109: #{_forward_impl.1} parent=0 // pred_fallthru
    _
  // Predicated region
  $region110: #{_forward_impl.1} parent=0 // pred_check
    _
  $region111: #{_forward_impl.1} parent=0 // pred_check_branch
    %12926 = sbr.rel (0) target = $region113
  $region112: #{_forward_impl.1} parent=0 // pred_region
    _
  $region113: #{_forward_impl.1} parent=0 // pred_fallthru
    _
  // Predicated region
  $region114: #{_forward_impl.1} parent=0 // pred_check
    _
  $region115: #{_forward_impl.1} parent=0 // pred_check_branch
    %12928 = sbr.rel (0) target = $region117
  $region116: #{_forward_impl.1} parent=0 // pred_region
    _
  $region117: #{_forward_impl.1} parent=0 // pred_fallthru
    _

</llo_original>
